<compile_context>
chip_gen: v7x
topology: tpu7x:2x2x1
jax: 0.10.0
libtpu: 0.0.40
codegen_flags: <defaults>
</compile_context>

<pallas_src>
import functools
import math

import jax
import jax.numpy as jnp
from jax import lax
from jax.experimental import pallas as pl
from jax.experimental.pallas import tpu as pltpu

LANE = 128   # spmm-path outputs are lane-padded to this width


def _round_up(n, m):
    return ((n + m - 1) // m) * m


def _agg_tiling(n):
    """(tm, tk, n_pad) for the fused aggregation kernel.

    Small graphs: one full block.  Large graphs: tm=512 (keeps >=2 row blocks on the
    'parallel' axis so v7x megacore gets work), tk=1024 (VMEM footprint ~4-5 MiB,
    safe on every generation).
    """
    if n <= 1024:
        npad = _round_up(n, 8)
        return npad, npad, npad
    npad = _round_up(n, 512)
    tk = 1024 if npad % 1024 == 0 else 512
    return 512, tk, npad


def _row_tile(npad, target=512):
    if npad <= target:
        return npad
    t = target
    while npad % t:
        t -= 8
    return t


def _att_row_tiling(n, target=512):
    if n <= target:
        return n, n
    npad = _round_up(n, target)
    return target, npad


def _pad_lanes(x):
    pad = (-x.shape[-1]) % LANE
    if pad == 0:
        return x
    return jnp.pad(x, ((0, 0), (0, pad)))


def _pad_rows(x, rows):
    if x.shape[0] == rows:
        return x
    return jnp.pad(x, ((0, rows - x.shape[0]), (0, 0)))


# ----------------------------------------------------------------------------------
# Kernel A: Y = X @ W   (small matmul against the lane-padded output width)
# ----------------------------------------------------------------------------------
def _linear_kernel(x_ref, w_ref, o_ref):
    o_ref[...] = jnp.dot(x_ref[...], w_ref[...],
                         preferred_element_type=jnp.float32).astype(o_ref.dtype)


def linear_pallas(x_bf16, w_pad_bf16):
    n, d_in = x_bf16.shape
    dp = w_pad_bf16.shape[1]
    tr = _row_tile(n)
    return pl.pallas_call(
        _linear_kernel,
        out_shape=jax.ShapeDtypeStruct((n, dp), jnp.bfloat16),
        grid=(n // tr,),
        in_specs=[pl.BlockSpec((tr, d_in), lambda i: (i, 0)),
                  pl.BlockSpec((d_in, dp), lambda i: (0, 0))],
        out_specs=pl.BlockSpec((tr, dp), lambda i: (i, 0)),
        compiler_params=pltpu.CompilerParams(dimension_semantics=("parallel",)),
    )(x_bf16, w_pad_bf16)


# ----------------------------------------------------------------------------------
# Kernel B (fused): out = relu(L@y1 + y1 + b1) + relu(L@y2 + b2)
# Single pass over L per layer; Y = [y1 | y2] fills a 256-wide MXU matmul.
# The self-loop (L + I) is folded by initialising the accumulator with y1's row tile.
# ----------------------------------------------------------------------------------
def _fused_agg_kernel(l_ref, y_ref, yself_ref, b_ref, o_ref, acc_ref, *, dp):
    k = pl.program_id(1)

    @pl.when(k == 0)
    def _():
        acc_ref[:, :dp] = yself_ref[...].astype(jnp.float32)     # identity contribution
        acc_ref[:, dp:] = jnp.zeros(yself_ref.shape, jnp.float32)

    acc_ref[...] += jnp.dot(l_ref[...], y_ref[...],
                            preferred_element_type=jnp.float32)

    @pl.when(k == pl.num_programs(1) - 1)
    def _():
        r = acc_ref[...] + b_ref[...]
        o_ref[...] = (jnp.maximum(r[:, :dp], 0.0)
                      + jnp.maximum(r[:, dp:], 0.0)).astype(o_ref.dtype)


def fused_agg(l_pad_bf16, y_cat_bf16, y_self_bf16, b_cat_f32, tm, tk):
    npad = l_pad_bf16.shape[0]
    dp2 = y_cat_bf16.shape[1]
    dp = y_self_bf16.shape[1]
    grid = (npad // tm, npad // tk)

    flops = 2 * npad * npad * dp2
    bytes_accessed = (l_pad_bf16.size * 2                   # L streamed once
                      + y_cat_bf16.size * 2 * grid[0]       # Y re-streamed per row block
                      + y_self_bf16.size * 2
                      + npad * dp * 2)                       # bf16 output writeback

    return pl.pallas_call(
        functools.partial(_fused_agg_kernel, dp=dp),
        out_shape=jax.ShapeDtypeStruct((npad, dp), jnp.bfloat16),
        grid=grid,
        in_specs=[pl.BlockSpec((tm, tk), lambda i, k: (i, k)),    # L tile
                  pl.BlockSpec((tk, dp2), lambda i, k: (k, 0)),   # [y1 | y2] tile
                  pl.BlockSpec((tm, dp), lambda i, k: (i, 0)),    # y1 self-loop tile
                  pl.BlockSpec((1, dp2), lambda i, k: (0, 0))],   # [b1 | b2]
        out_specs=pl.BlockSpec((tm, dp), lambda i, k: (i, 0)),
        scratch_shapes=[pltpu.VMEM((tm, dp2), jnp.float32)],
        compiler_params=pltpu.CompilerParams(
            dimension_semantics=("parallel", "arbitrary"),
            vmem_limit_bytes=32 * 1024 * 1024),
        cost_estimate=pl.CostEstimate(flops=flops, transcendentals=0,
                                      bytes_accessed=bytes_accessed),
    )(l_pad_bf16, y_cat_bf16, y_self_bf16, b_cat_f32)


# ----------------------------------------------------------------------------------
# Kernel C: one cross-attention direction (query partition -> opposite partition),
# out-projection and W2 pre-folded so the kernel emits the lane-dense (tq, 128) y2.
# ----------------------------------------------------------------------------------
def _cross_att_kernel(q_ref, kv_ref, wq_ref, wk_ref, wv_ref, wow2_ref,
                      bqkv_ref, bow2_ref, o_ref, ctx_ref, *, heads, head_dim):
    scale = 1.0 / math.sqrt(head_dim)
    qf = q_ref[...]
    kvf = kv_ref[...]
    bq = bqkv_ref[0:1, :]
    bk = bqkv_ref[1:2, :]
    bv = bqkv_ref[2:3, :]

    q = (jnp.dot(qf, wq_ref[...], preferred_element_type=jnp.float32) + bq
         ).astype(jnp.bfloat16)
    k = (jnp.dot(kvf, wk_ref[...], preferred_element_type=jnp.float32) + bk
         ).astype(jnp.bfloat16)
    v = (jnp.dot(kvf, wv_ref[...], preferred_element_type=jnp.float32) + bv
         ).astype(jnp.bfloat16)

    # TODO(synk): head_dim is tiny at these demo widths (4 / 2) so the per-head
    # slices are narrow; at production d>=128 a head-batched (heads, rows, hd)
    # einsum layout would be preferable.
    for h in range(heads):
        sl = slice(h * head_dim, (h + 1) * head_dim)
        s = lax.dot_general(q[:, sl], k[:, sl], (((1,), (1,)), ((), ())),
                            preferred_element_type=jnp.float32) * scale
        s = s - jnp.max(s, axis=-1, keepdims=True)
        p = jnp.exp(s)
        p = p * pl.reciprocal(jnp.sum(p, axis=-1, keepdims=True), approx=True)
        ctx = jnp.dot(p.astype(jnp.bfloat16), v[:, sl],
                      preferred_element_type=jnp.float32)
        ctx_ref[:, sl] = ctx

    # Single K=d output matmul against the pre-folded bf16 (Wo @ W2) instead of
    # heads separate K=head_dim matmuls; result is a full-lane 128-wide store.
    out = jnp.dot(ctx_ref[...].astype(jnp.bfloat16), wow2_ref[...],
                  preferred_element_type=jnp.float32) + bow2_ref[...]
    o_ref[...] = out.astype(o_ref.dtype)


def cross_attention_dir(q_feat_bf16, kv_feat_bf16, wq_t, wk_t, wv_t,
                        wo_w2_bf16, b_qkv, bo_w2, heads):
    nq, d = q_feat_bf16.shape
    nk = kv_feat_bf16.shape[0]
    dp = wo_w2_bf16.shape[1]
    assert d % heads == 0
    hd = d // heads

    tq, nq_pad = _att_row_tiling(nq)
    q_feat_bf16 = _pad_rows(q_feat_bf16, nq_pad)

    kernel = functools.partial(_cross_att_kernel, heads=heads, head_dim=hd)
    out = pl.pallas_call(
        kernel,
        out_shape=jax.ShapeDtypeStruct((nq_pad, dp), jnp.bfloat16),
        grid=(nq_pad // tq,),
        in_specs=[pl.BlockSpec((tq, d), lambda i: (i, 0)),    # query rows
                  pl.BlockSpec((nk, d), lambda i: (0, 0)),    # opposite partition (resident)
                  pl.BlockSpec((d, d), lambda i: (0, 0)),     # Wq^T
                  pl.BlockSpec((d, d), lambda i: (0, 0)),     # Wk^T
                  pl.BlockSpec((d, d), lambda i: (0, 0)),     # Wv^T
                  pl.BlockSpec((d, dp), lambda i: (0, 0)),    # Wo^T @ W2 (bf16, lane-padded)
                  pl.BlockSpec((3, d), lambda i: (0, 0)),     # [bq; bk; bv]
                  pl.BlockSpec((1, dp), lambda i: (0, 0))],   # bo @ W2
        out_specs=pl.BlockSpec((tq, dp), lambda i: (i, 0)),
        scratch_shapes=[pltpu.VMEM((tq, d), jnp.float32)],
        compiler_params=pltpu.CompilerParams(
            dimension_semantics=("parallel",),
            vmem_limit_bytes=32 * 1024 * 1024),
    )(q_feat_bf16, kv_feat_bf16, wq_t, wk_t, wv_t, wo_w2_bf16, b_qkv, bo_w2)
    return out[:nq]


# ----------------------------------------------------------------------------------
# Parameter init (deterministic; weights pre-sliced / transposed / padded / pre-cast)
# ----------------------------------------------------------------------------------
def xavier_uniform(key, out_dim, in_dim):
    bound = math.sqrt(6.0 / (in_dim + out_dim))
    return jax.random.uniform(key, (out_dim, in_dim), jnp.float32, -bound, bound)


def init_params(key, userNum, itemNum, embedSize, layers, heads):
    del heads
    keys = jax.random.split(key, 2 + 4 * (len(layers) - 1))
    params = {
        "uEmbd": 0.01 * jax.random.normal(keys[0], (userNum, embedSize), jnp.float32),
        "iEmbd": 0.01 * jax.random.normal(keys[1], (itemNum, embedSize), jnp.float32),
        "ga_layers": [],
    }
    kidx = 2
    for From, To in zip(layers[:-1], layers[1:]):
        k1, k2, k3, k4 = keys[kidx:kidx + 4]
        kidx += 4
        w1 = _pad_lanes(xavier_uniform(k1, To, From).T)     # (From, 128) lane-padded
        w2 = _pad_lanes(xavier_uniform(k2, To, From).T)
        in_proj = xavier_uniform(k3, 3 * From, From)        # torch MHA in_proj layout
        out_proj = xavier_uniform(k4, From, From)
        layer = {
            "w1_t_pad": w1.astype(jnp.bfloat16),
            "b1_pad": jnp.zeros((1, w1.shape[1]), jnp.float32),
            "w2_t_pad": w2.astype(jnp.bfloat16),
            "b2_pad": jnp.zeros((1, w2.shape[1]), jnp.float32),
            "wq_t": in_proj[:From, :].T.astype(jnp.bfloat16),
            "wk_t": in_proj[From:2 * From, :].T.astype(jnp.bfloat16),
            "wv_t": in_proj[2 * From:, :].T.astype(jnp.bfloat16),
            "wo_t": out_proj.T.astype(jnp.float32),          # folded with W2 in forward
            "att_b": jnp.zeros((4, From), jnp.float32),      # rows: bq, bk, bv, bo
        }
        params["ga_layers"].append(layer)
    return params


def build_laplacian(key, userNum, itemNum):
    """Deterministic normalized bipartite adjacency D^-1/2 A D^-1/2 (dense stand-in)."""
    N = userNum + itemNum
    R = (jax.random.uniform(key, (userNum, itemNum)) < 0.3).astype(jnp.float32)
    A = jnp.zeros((N, N), jnp.float32)
    A = A.at[:userNum, userNum:].set(R)
    A = A.at[userNum:, :userNum].set(R.T)
    deg = jnp.clip(jnp.sum(A, axis=1), 1.0, None)
    d_inv_sqrt = 1.0 / jnp.sqrt(deg)
    return A * d_inv_sqrt[:, None] * d_inv_sqrt[None, :]


# ----------------------------------------------------------------------------------
# Forward pass (mirrors GACFV5_layer.forward / GALayer.forward)
# ----------------------------------------------------------------------------------
def gacfv5_forward(params, lap_pad_bf16, userNum, itemNum, layer_dims, heads):
    N = userNum + itemNum
    tm, tk, npad = _agg_tiling(N)
    assert lap_pad_bf16.shape == (npad, npad), (lap_pad_bf16.shape, npad)

    features = jnp.concatenate([params["uEmbd"], params["iEmbd"]], axis=0)  # (N, E) f32
    final_embd = features

    for layer, d_out in zip(params["ga_layers"], layer_dims[1:]):
        x_bf = features.astype(jnp.bfloat16)
        x_pad = _pad_rows(x_bf, npad)

        # y1 = x @ W1 (lane-padded).  Pad rows are zero -> contribute nothing later.
        y1 = linear_pallas(x_pad, layer["w1_t_pad"])                        # (npad, 128)

        # ATTLayer (shared MHA cross-attention), split along the bipartite structure;
        # out_proj and W2 folded so each call emits lane-dense y2 rows directly.
        w2_f32 = layer["w2_t_pad"].astype(jnp.float32)
        wo_w2 = jnp.dot(layer["wo_t"], w2_f32).astype(jnp.bfloat16)         # (d, 128)
        bo_w2 = jnp.dot(layer["att_b"][3], w2_f32)[None, :]                 # (1, 128)
        b_qkv = layer["att_b"][:3]                                          # (3, d)
        u_feat = x_bf[:userNum]
        i_feat = x_bf[userNum:]
        y2_u = cross_attention_dir(u_feat, i_feat, layer["wq_t"], layer["wk_t"],
                                   layer["wv_t"], wo_w2, b_qkv, bo_w2, heads)
        y2_i = cross_attention_dir(i_feat, u_feat, layer["wq_t"], layer["wk_t"],
                                   layer["wv_t"], wo_w2, b_qkv, bo_w2, heads)
        y2 = _pad_rows(jnp.concatenate([y2_u, y2_i], axis=0), npad)         # (npad, 128)

        # Fused aggregation: one pass over L for both branches.
        y_cat = jnp.concatenate([y1, y2], axis=1)                           # (npad, 256)
        b_cat = jnp.concatenate([layer["b1_pad"], layer["b2_pad"]], axis=1)  # (1, 256)
        f = fused_agg(lap_pad_bf16, y_cat, y1, b_cat, tm, tk)               # (npad, 128) bf16

        features = f[:N, :d_out]
        final_embd = jnp.concatenate([final_embd, features.astype(jnp.float32)], axis=1)
    return final_embd


# Pure-JAX f32 reference of the same math (for a loose numerical check).
def reference_forward(params, laplacian_f32, userNum, itemNum, layer_dims, heads):
    N = userNum + itemNum
    feats = jnp.concatenate([params["uEmbd"], params["iEmbd"]], axis=0)
    final = feats
    eye = jnp.eye(N, dtype=jnp.float32)
    for layer, d_out in zip(params["ga_layers"], layer_dims[1:]):
        D = feats.shape[1]
        w1 = layer["w1_t_pad"].astype(jnp.float32)
        w2 = layer["w2_t_pad"].astype(jnp.float32)
        b1 = layer["b1_pad"][0]
        b2 = layer["b2_pad"][0]
        f1 = jax.nn.relu((laplacian_f32 + eye) @ feats @ w1 + b1)

        wq = layer["wq_t"].astype(jnp.float32)
        wk = layer["wk_t"].astype(jnp.float32)
        wv = layer["wv_t"].astype(jnp.float32)
        wo = layer["wo_t"]
        bq, bk, bv, bo = layer["att_b"]
        q = feats @ wq + bq
        k = feats @ wk + bk
        v = feats @ wv + bv
        hd = D // heads
        allowed = (jnp.arange(N)[:, None] < userNum) != (jnp.arange(N)[None, :] < userNum)
        ctx = []
        for h in range(heads):
            sl = slice(h * hd, (h + 1) * hd)
            s = (q[:, sl] @ k[:, sl].T) / math.sqrt(hd)
            s = jnp.where(allowed, s, -1e30)
            ctx.append(jax.nn.softmax(s, axis=-1) @ v[:, sl])
        att = jnp.concatenate(ctx, axis=-1) @ wo + bo

        f2 = jax.nn.relu(laplacian_f32 @ att @ w2 + b2)
        feats = (f1 + f2)[:, :d_out]
        final = jnp.concatenate([final, feats], axis=1)
    return final


# ----------------------------------------------------------------------------------
if __name__ == "__main__":
    userNum, itemNum = 12, 20
    embedSize = 32
    layers = [32, 16, 8]
    heads = 8

    key = jax.random.PRNGKey(0)
    k_params, k_adj = jax.random.split(key)
    params = init_params(k_params, userNum, itemNum, embedSize, layers, heads)
    laplacian = build_laplacian(k_adj, userNum, itemNum)

    # Pad + cast L once, outside the jitted forward (constant across layers / calls).
    N = userNum + itemNum
    _, _, npad = _agg_tiling(N)
    lap_pad_bf16 = jnp.pad(laplacian, ((0, npad - N), (0, npad - N))).astype(jnp.bfloat16)

    fwd = jax.jit(gacfv5_forward, static_argnums=(2, 3, 4, 5))
    out = fwd(params, lap_pad_bf16, userNum, itemNum, tuple(layers), heads)
    out = jax.block_until_ready(out)

    assert out.shape == (N, sum(layers)), out.shape
    assert bool(jnp.all(jnp.isfinite(out)))

    ref = reference_forward(params, laplacian, userNum, itemNum, tuple(layers), heads)
    diff = float(jnp.max(jnp.abs(out - ref)))
    scale = float(jnp.max(jnp.abs(ref))) + 1e-6
    assert diff / scale < 5e-2, (diff, scale)   # loose: bf16 operands vs f32 reference

    print("KERNEL_OK")
</pallas_src>

<mosaic_0001>
module attributes {stable_mosaic.version = 11 : i64} {
  func.func @_linear_kernel(%arg0: i32, %arg1: memref<32x32xbf16, #tpu.memory_space<vmem>>, %arg2: memref<32x128xbf16, #tpu.memory_space<vmem>>, %arg3: memref<32x128xbf16, #tpu.memory_space<vmem>>) attributes {dimension_semantics = [#tpu.dimension_semantics<parallel>], iteration_bounds = array<i64: 1>, scalar_prefetch = 0 : i64, scratch_operands = 0 : i64, tpu.core_type = #tpu.core_type<tc>, window_params = [{transform_indices = @transform_0, window_bounds = array<i64: 32, 32>}, {pipeline_mode = #tpu.pipeline_mode<synchronous>, transform_indices = @transform_1, window_bounds = array<i64: 32, 128>}, {transform_indices = @transform_2, window_bounds = array<i64: 32, 128>}]} {
    %c0 = arith.constant 0 : index
    %c0_0 = arith.constant 0 : index
    %0 = vector.load %arg1[%c0, %c0_0] : memref<32x32xbf16, #tpu.memory_space<vmem>>, vector<32x32xbf16>
    %c0_1 = arith.constant 0 : index
    %c0_2 = arith.constant 0 : index
    %1 = vector.load %arg2[%c0_1, %c0_2] : memref<32x128xbf16, #tpu.memory_space<vmem>>, vector<32x128xbf16>
    %cst = arith.constant dense<0.000000e+00> : vector<32x128xf32>
    %2 = tpu.matmul %0, %1, %cst {dimension_numbers = #tpu.dot_dimension_numbers<[1], [0], [0], [1], [0, 0, 1, 1], [], []>} : vector<32x32xbf16>, vector<32x128xbf16>, vector<32x128xf32> -> vector<32x128xf32>
    %3 = arith.truncf %2 : vector<32x128xf32> to vector<32x128xbf16>
    %c0_3 = arith.constant 0 : index
    %c0_4 = arith.constant 0 : index
    %4 = vector.load %arg3[%c0_3, %c0_4] : memref<32x128xbf16, #tpu.memory_space<vmem>>, vector<32x128xbf16>
    tpu.vector_store %arg3[%c0_3, %c0_4], %3 {strides = array<i32>} : memref<32x128xbf16, #tpu.memory_space<vmem>>, vector<32x128xbf16>,
    return
  }
  func.func @transform_0(%arg0: i32) -> (i32, i32) {
    %c0_i32 = arith.constant 0 : i32
    %c0_i32_0 = arith.constant 0 : i32
    return %arg0, %c0_i32 : i32, i32
  }
  func.func @transform_1(%arg0: i32) -> (i32, i32) {
    %c0_i32 = arith.constant 0 : i32
    %c0_i32_0 = arith.constant 0 : i32
    %c0_i32_1 = arith.constant 0 : i32
    return %c0_i32, %c0_i32_0 : i32, i32
  }
  func.func @transform_2(%arg0: i32) -> (i32, i32) {
    %c0_i32 = arith.constant 0 : i32
    %c0_i32_0 = arith.constant 0 : i32
    return %arg0, %c0_i32 : i32, i32
  }
}

module attributes {stable_mosaic.version = 11 : i64} {
  func.func @_cross_att_kernel(%arg0: i32, %arg1: memref<12x32xbf16, #tpu.memory_space<vmem>>, %arg2: memref<20x32xbf16, #tpu.memory_space<vmem>>, %arg3: memref<32x32xbf16, #tpu.memory_space<vmem>>, %arg4: memref<32x32xbf16, #tpu.memory_space<vmem>>, %arg5: memref<32x32xbf16, #tpu.memory_space<vmem>>, %arg6: memref<32x128xbf16, #tpu.memory_space<vmem>>, %arg7: memref<3x32xf32, #tpu.memory_space<vmem>>, %arg8: memref<1x128xf32, #tpu.memory_space<vmem>>, %arg9: memref<12x128xbf16, #tpu.memory_space<vmem>>, %arg10: memref<12x32xf32, #tpu.memory_space<vmem>>) attributes {dimension_semantics = [#tpu.dimension_semantics<parallel>], iteration_bounds = array<i64: 1>, scalar_prefetch = 0 : i64, scratch_operands = 1 : i64, tpu.core_type = #tpu.core_type<tc>, window_params = [{transform_indices = @transform_0, window_bounds = array<i64: 12, 32>}, {pipeline_mode = #tpu.pipeline_mode<synchronous>, transform_indices = @transform_1, window_bounds = array<i64: 20, 32>}, {pipeline_mode = #tpu.pipeline_mode<synchronous>, transform_indices = @transform_2, window_bounds = array<i64: 32, 32>}, {pipeline_mode = #tpu.pipeline_mode<synchronous>, transform_indices = @transform_3, window_bounds = array<i64: 32, 32>}, {pipeline_mode = #tpu.pipeline_mode<synchronous>, transform_indices = @transform_4, window_bounds = array<i64: 32, 32>}, {pipeline_mode = #tpu.pipeline_mode<synchronous>, transform_indices = @transform_5, window_bounds = array<i64: 32, 128>}, {pipeline_mode = #tpu.pipeline_mode<synchronous>, transform_indices = @transform_6, window_bounds = array<i64: 3, 32>}, {pipeline_mode = #tpu.pipeline_mode<synchronous>, transform_indices = @transform_7, window_bounds = array<i64: 1, 128>}, {transform_indices = @transform_8, window_bounds = array<i64: 12, 128>}]} {
    %c0 = arith.constant 0 : index
    %c0_0 = arith.constant 0 : index
    %0 = vector.load %arg1[%c0, %c0_0] : memref<12x32xbf16, #tpu.memory_space<vmem>>, vector<12x32xbf16>
    %c0_1 = arith.constant 0 : index
    %c0_2 = arith.constant 0 : index
    %1 = vector.load %arg2[%c0_1, %c0_2] : memref<20x32xbf16, #tpu.memory_space<vmem>>, vector<20x32xbf16>
    %c0_3 = arith.constant 0 : index
    %c0_4 = arith.constant 0 : index
    %2 = vector.load %arg7[%c0_3, %c0_4] : memref<3x32xf32, #tpu.memory_space<vmem>>, vector<1x32xf32>
    %c1 = arith.constant 1 : index
    %c0_5 = arith.constant 0 : index
    %3 = vector.load %arg7[%c1, %c0_5] : memref<3x32xf32, #tpu.memory_space<vmem>>, vector<1x32xf32>
    %c2 = arith.constant 2 : index
    %c0_6 = arith.constant 0 : index
    %4 = vector.load %arg7[%c2, %c0_6] : memref<3x32xf32, #tpu.memory_space<vmem>>, vector<1x32xf32>
    %c0_7 = arith.constant 0 : index
    %c0_8 = arith.constant 0 : index
    %5 = vector.load %arg3[%c0_7, %c0_8] : memref<32x32xbf16, #tpu.memory_space<vmem>>, vector<32x32xbf16>
    %cst = arith.constant dense<0.000000e+00> : vector<12x32xf32>
    %6 = tpu.matmul %0, %5, %cst {dimension_numbers = #tpu.dot_dimension_numbers<[1], [0], [0], [1], [0, 0, 1, 1], [], []>} : vector<12x32xbf16>, vector<32x32xbf16>, vector<12x32xf32> -> vector<12x32xf32>
    %7 = vector.broadcast %2 : vector<1x32xf32> to vector<12x32xf32>
    %8 = arith.addf %6, %7 : vector<12x32xf32>
    %9 = arith.truncf %8 : vector<12x32xf32> to vector<12x32xbf16>
    %c0_9 = arith.constant 0 : index
    %c0_10 = arith.constant 0 : index
    %10 = vector.load %arg4[%c0_9, %c0_10] : memref<32x32xbf16, #tpu.memory_space<vmem>>, vector<32x32xbf16>
    %cst_11 = arith.constant dense<0.000000e+00> : vector<20x32xf32>
    %11 = tpu.matmul %1, %10, %cst_11 {dimension_numbers = #tpu.dot_dimension_numbers<[1], [0], [0], [1], [0, 0, 1, 1], [], []>} : vector<20x32xbf16>, vector<32x32xbf16>, vector<20x32xf32> -> vector<20x32xf32>
    %12 = vector.broadcast %3 : vector<1x32xf32> to vector<20x32xf32>
    %13 = arith.addf %11, %12 : vector<20x32xf32>
    %14 = arith.truncf %13 : vector<20x32xf32> to vector<20x32xbf16>
    %c0_12 = arith.constant 0 : index
    %c0_13 = arith.constant 0 : index
    %15 = vector.load %arg5[%c0_12, %c0_13] : memref<32x32xbf16, #tpu.memory_space<vmem>>, vector<32x32xbf16>
    %cst_14 = arith.constant dense<0.000000e+00> : vector<20x32xf32>
    %16 = tpu.matmul %1, %15, %cst_14 {dimension_numbers = #tpu.dot_dimension_numbers<[1], [0], [0], [1], [0, 0, 1, 1], [], []>} : vector<20x32xbf16>, vector<32x32xbf16>, vector<20x32xf32> -> vector<20x32xf32>
    %17 = vector.broadcast %4 : vector<1x32xf32> to vector<20x32xf32>
    %18 = arith.addf %16, %17 : vector<20x32xf32>
    %19 = arith.truncf %18 : vector<20x32xf32> to vector<20x32xbf16>
    %20 = vector.extract_strided_slice %9 {offsets = [0, 0], sizes = [12, 4], strides = [1, 1]} : vector<12x32xbf16> to vector<12x4xbf16>
    %21 = vector.extract_strided_slice %14 {offsets = [0, 0], sizes = [20, 4], strides = [1, 1]} : vector<20x32xbf16> to vector<20x4xbf16>
    %cst_15 = arith.constant dense<0.000000e+00> : vector<12x20xf32>
    %22 = tpu.matmul %20, %21, %cst_15 {dimension_numbers = #tpu.dot_dimension_numbers<[1], [1], [0], [0], [0, 0, 1, 0], [], []>} : vector<12x4xbf16>, vector<20x4xbf16>, vector<12x20xf32> -> vector<12x20xf32>
    %cst_16 = arith.constant 5.000000e-01 : f32
    %23 = vector.broadcast %cst_16 : f32 to vector<12x20xf32>
    %24 = arith.mulf %22, %23 : vector<12x20xf32>
    %cst_17 = arith.constant dense<0xFF800000> : vector<12xf32>
    %25 = vector.multi_reduction <maximumf>, %24, %cst_17 [1] : vector<12x20xf32> to vector<12xf32>
    %26 = vector.shape_cast %25 : vector<12xf32> to vector<12x1xf32>
    %27 = vector.broadcast %26 : vector<12x1xf32> to vector<12x20xf32>
    %28 = arith.subf %24, %27 : vector<12x20xf32>
    %29 = math.exp %28 : vector<12x20xf32>
    %cst_18 = arith.constant dense<0.000000e+00> : vector<12xf32>
    %30 = vector.multi_reduction <add>, %29, %cst_18 [1] : vector<12x20xf32> to vector<12xf32>
    %31 = vector.shape_cast %30 : vector<12xf32> to vector<12x1xf32>
    %32 = tpu.reciprocal %31 {approx = true} : vector<12x1xf32> -> vector<12x1xf32>
    %33 = vector.broadcast %32 : vector<12x1xf32> to vector<12x20xf32>
    %34 = arith.mulf %29, %33 : vector<12x20xf32>
    %35 = arith.truncf %34 : vector<12x20xf32> to vector<12x20xbf16>
    %36 = vector.extract_strided_slice %19 {offsets = [0, 0], sizes = [20, 4], strides = [1, 1]} : vector<20x32xbf16> to vector<20x4xbf16>
    %cst_19 = arith.constant dense<0.000000e+00> : vector<12x4xf32>
    %37 = tpu.matmul %35, %36, %cst_19 {dimension_numbers = #tpu.dot_dimension_numbers<[1], [0], [0], [1], [0, 0, 1, 1], [], []>} : vector<12x20xbf16>, vector<20x4xbf16>, vector<12x4xf32> -> vector<12x4xf32>
    %c0_20 = arith.constant 0 : index
    %c0_21 = arith.constant 0 : index
    %38 = vector.load %arg10[%c0_20, %c0_21] : memref<12x32xf32, #tpu.memory_space<vmem>>, vector<12x4xf32>
    tpu.vector_store %arg10[%c0_20, %c0_21], %37 {strides = array<i32>} : memref<12x32xf32, #tpu.memory_space<vmem>>, vector<12x4xf32>,
    %39 = vector.extract_strided_slice %9 {offsets = [0, 4], sizes = [12, 4], strides = [1, 1]} : vector<12x32xbf16> to vector<12x4xbf16>
    %40 = vector.extract_strided_slice %14 {offsets = [0, 4], sizes = [20, 4], strides = [1, 1]} : vector<20x32xbf16> to vector<20x4xbf16>
    %cst_22 = arith.constant dense<0.000000e+00> : vector<12x20xf32>
    %41 = tpu.matmul %39, %40, %cst_22 {dimension_numbers = #tpu.dot_dimension_numbers<[1], [1], [0], [0], [0, 0, 1, 0], [], []>} : vector<12x4xbf16>, vector<20x4xbf16>, vector<12x20xf32> -> vector<12x20xf32>
    %cst_23 = arith.constant 5.000000e-01 : f32
    %42 = vector.broadcast %cst_23 : f32 to vector<12x20xf32>
    %43 = arith.mulf %41, %42 : vector<12x20xf32>
    %cst_24 = arith.constant dense<0xFF800000> : vector<12xf32>
    %44 = vector.multi_reduction <maximumf>, %43, %cst_24 [1] : vector<12x20xf32> to vector<12xf32>
    %45 = vector.shape_cast %44 : vector<12xf32> to vector<12x1xf32>
    %46 = vector.broadcast %45 : vector<12x1xf32> to vector<12x20xf32>
    %47 = arith.subf %43, %46 : vector<12x20xf32>
    %48 = math.exp %47 : vector<12x20xf32>
    %cst_25 = arith.constant dense<0.000000e+00> : vector<12xf32>
    %49 = vector.multi_reduction <add>, %48, %cst_25 [1] : vector<12x20xf32> to vector<12xf32>
    %50 = vector.shape_cast %49 : vector<12xf32> to vector<12x1xf32>
    %51 = tpu.reciprocal %50 {approx = true} : vector<12x1xf32> -> vector<12x1xf32>
    %52 = vector.broadcast %51 : vector<12x1xf32> to vector<12x20xf32>
    %53 = arith.mulf %48, %52 : vector<12x20xf32>
    %54 = arith.truncf %53 : vector<12x20xf32> to vector<12x20xbf16>
    %55 = vector.extract_strided_slice %19 {offsets = [0, 4], sizes = [20, 4], strides = [1, 1]} : vector<20x32xbf16> to vector<20x4xbf16>
    %cst_26 = arith.constant dense<0.000000e+00> : vector<12x4xf32>
    %56 = tpu.matmul %54, %55, %cst_26 {dimension_numbers = #tpu.dot_dimension_numbers<[1], [0], [0], [1], [0, 0, 1, 1], [], []>} : vector<12x20xbf16>, vector<20x4xbf16>, vector<12x4xf32> -> vector<12x4xf32>
    %c0_27 = arith.constant 0 : index
    %c4 = arith.constant 4 : index
    %57 = vector.load %arg10[%c0_27, %c4] : memref<12x32xf32, #tpu.memory_space<vmem>>, vector<12x4xf32>
    tpu.vector_store %arg10[%c0_27, %c4], %56 {strides = array<i32>} : memref<12x32xf32, #tpu.memory_space<vmem>>, vector<12x4xf32>,
    %58 = vector.extract_strided_slice %9 {offsets = [0, 8], sizes = [12, 4], strides = [1, 1]} : vector<12x32xbf16> to vector<12x4xbf16>
    %59 = vector.extract_strided_slice %14 {offsets = [0, 8], sizes = [20, 4], strides = [1, 1]} : vector<20x32xbf16> to vector<20x4xbf16>
    %cst_28 = arith.constant dense<0.000000e+00> : vector<12x20xf32>
    %60 = tpu.matmul %58, %59, %cst_28 {dimension_numbers = #tpu.dot_dimension_numbers<[1], [1], [0], [0], [0, 0, 1, 0], [], []>} : vector<12x4xbf16>, vector<20x4xbf16>, vector<12x20xf32> -> vector<12x20xf32>
    %cst_29 = arith.constant 5.000000e-01 : f32
    %61 = vector.broadcast %cst_29 : f32 to vector<12x20xf32>
    %62 = arith.mulf %60, %61 : vector<12x20xf32>
    %cst_30 = arith.constant dense<0xFF800000> : vector<12xf32>
    %63 = vector.multi_reduction <maximumf>, %62, %cst_30 [1] : vector<12x20xf32> to vector<12xf32>
    %64 = vector.shape_cast %63 : vector<12xf32> to vector<12x1xf32>
    %65 = vector.broadcast %64 : vector<12x1xf32> to vector<12x20xf32>
    %66 = arith.subf %62, %65 : vector<12x20xf32>
    %67 = math.exp %66 : vector<12x20xf32>
    %cst_31 = arith.constant dense<0.000000e+00> : vector<12xf32>
    %68 = vector.multi_reduction <add>, %67, %cst_31 [1] : vector<12x20xf32> to vector<12xf32>
    %69 = vector.shape_cast %68 : vector<12xf32> to vector<12x1xf32>
    %70 = tpu.reciprocal %69 {approx = true} : vector<12x1xf32> -> vector<12x1xf32>
    %71 = vector.broadcast %70 : vector<12x1xf32> to vector<12x20xf32>
    %72 = arith.mulf %67, %71 : vector<12x20xf32>
    %73 = arith.truncf %72 : vector<12x20xf32> to vector<12x20xbf16>
    %74 = vector.extract_strided_slice %19 {offsets = [0, 8], sizes = [20, 4], strides = [1, 1]} : vector<20x32xbf16> to vector<20x4xbf16>
    %cst_32 = arith.constant dense<0.000000e+00> : vector<12x4xf32>
    %75 = tpu.matmul %73, %74, %cst_32 {dimension_numbers = #tpu.dot_dimension_numbers<[1], [0], [0], [1], [0, 0, 1, 1], [], []>} : vector<12x20xbf16>, vector<20x4xbf16>, vector<12x4xf32> -> vector<12x4xf32>
    %c0_33 = arith.constant 0 : index
    %c8 = arith.constant 8 : index
    %76 = vector.load %arg10[%c0_33, %c8] : memref<12x32xf32, #tpu.memory_space<vmem>>, vector<12x4xf32>
    tpu.vector_store %arg10[%c0_33, %c8], %75 {strides = array<i32>} : memref<12x32xf32, #tpu.memory_space<vmem>>, vector<12x4xf32>,
    %77 = vector.extract_strided_slice %9 {offsets = [0, 12], sizes = [12, 4], strides = [1, 1]} : vector<12x32xbf16> to vector<12x4xbf16>
    %78 = vector.extract_strided_slice %14 {offsets = [0, 12], sizes = [20, 4], strides = [1, 1]} : vector<20x32xbf16> to vector<20x4xbf16>
    %cst_34 = arith.constant dense<0.000000e+00> : vector<12x20xf32>
    %79 = tpu.matmul %77, %78, %cst_34 {dimension_numbers = #tpu.dot_dimension_numbers<[1], [1], [0], [0], [0, 0, 1, 0], [], []>} : vector<12x4xbf16>, vector<20x4xbf16>, vector<12x20xf32> -> vector<12x20xf32>
    %cst_35 = arith.constant 5.000000e-01 : f32
    %80 = vector.broadcast %cst_35 : f32 to vector<12x20xf32>
    %81 = arith.mulf %79, %80 : vector<12x20xf32>
    %cst_36 = arith.constant dense<0xFF800000> : vector<12xf32>
    %82 = vector.multi_reduction <maximumf>, %81, %cst_36 [1] : vector<12x20xf32> to vector<12xf32>
    %83 = vector.shape_cast %82 : vector<12xf32> to vector<12x1xf32>
    %84 = vector.broadcast %83 : vector<12x1xf32> to vector<12x20xf32>
    %85 = arith.subf %81, %84 : vector<12x20xf32>
    %86 = math.exp %85 : vector<12x20xf32>
    %cst_37 = arith.constant dense<0.000000e+00> : vector<12xf32>
    %87 = vector.multi_reduction <add>, %86, %cst_37 [1] : vector<12x20xf32> to vector<12xf32>
    %88 = vector.shape_cast %87 : vector<12xf32> to vector<12x1xf32>
    %89 = tpu.reciprocal %88 {approx = true} : vector<12x1xf32> -> vector<12x1xf32>
    %90 = vector.broadcast %89 : vector<12x1xf32> to vector<12x20xf32>
    %91 = arith.mulf %86, %90 : vector<12x20xf32>
    %92 = arith.truncf %91 : vector<12x20xf32> to vector<12x20xbf16>
    %93 = vector.extract_strided_slice %19 {offsets = [0, 12], sizes = [20, 4], strides = [1, 1]} : vector<20x32xbf16> to vector<20x4xbf16>
    %cst_38 = arith.constant dense<0.000000e+00> : vector<12x4xf32>
    %94 = tpu.matmul %92, %93, %cst_38 {dimension_numbers = #tpu.dot_dimension_numbers<[1], [0], [0], [1], [0, 0, 1, 1], [], []>} : vector<12x20xbf16>, vector<20x4xbf16>, vector<12x4xf32> -> vector<12x4xf32>
    %c0_39 = arith.constant 0 : index
    %c12 = arith.constant 12 : index
    %95 = vector.load %arg10[%c0_39, %c12] : memref<12x32xf32, #tpu.memory_space<vmem>>, vector<12x4xf32>
    tpu.vector_store %arg10[%c0_39, %c12], %94 {strides = array<i32>} : memref<12x32xf32, #tpu.memory_space<vmem>>, vector<12x4xf32>,
    %96 = vector.extract_strided_slice %9 {offsets = [0, 16], sizes = [12, 4], strides = [1, 1]} : vector<12x32xbf16> to vector<12x4xbf16>
    %97 = vector.extract_strided_slice %14 {offsets = [0, 16], sizes = [20, 4], strides = [1, 1]} : vector<20x32xbf16> to vector<20x4xbf16>
    %cst_40 = arith.constant dense<0.000000e+00> : vector<12x20xf32>
    %98 = tpu.matmul %96, %97, %cst_40 {dimension_numbers = #tpu.dot_dimension_numbers<[1], [1], [0], [0], [0, 0, 1, 0], [], []>} : vector<12x4xbf16>, vector<20x4xbf16>, vector<12x20xf32> -> vector<12x20xf32>
    %cst_41 = arith.constant 5.000000e-01 : f32
    %99 = vector.broadcast %cst_41 : f32 to vector<12x20xf32>
    %100 = arith.mulf %98, %99 : vector<12x20xf32>
    %cst_42 = arith.constant dense<0xFF800000> : vector<12xf32>
    %101 = vector.multi_reduction <maximumf>, %100, %cst_42 [1] : vector<12x20xf32> to vector<12xf32>
    %102 = vector.shape_cast %101 : vector<12xf32> to vector<12x1xf32>
    %103 = vector.broadcast %102 : vector<12x1xf32> to vector<12x20xf32>
    %104 = arith.subf %100, %103 : vector<12x20xf32>
    %105 = math.exp %104 : vector<12x20xf32>
    %cst_43 = arith.constant dense<0.000000e+00> : vector<12xf32>
    %106 = vector.multi_reduction <add>, %105, %cst_43 [1] : vector<12x20xf32> to vector<12xf32>
    %107 = vector.shape_cast %106 : vector<12xf32> to vector<12x1xf32>
    %108 = tpu.reciprocal %107 {approx = true} : vector<12x1xf32> -> vector<12x1xf32>
    %109 = vector.broadcast %108 : vector<12x1xf32> to vector<12x20xf32>
    %110 = arith.mulf %105, %109 : vector<12x20xf32>
    %111 = arith.truncf %110 : vector<12x20xf32> to vector<12x20xbf16>
    %112 = vector.extract_strided_slice %19 {offsets = [0, 16], sizes = [20, 4], strides = [1, 1]} : vector<20x32xbf16> to vector<20x4xbf16>
    %cst_44 = arith.constant dense<0.000000e+00> : vector<12x4xf32>
    %113 = tpu.matmul %111, %112, %cst_44 {dimension_numbers = #tpu.dot_dimension_numbers<[1], [0], [0], [1], [0, 0, 1, 1], [], []>} : vector<12x20xbf16>, vector<20x4xbf16>, vector<12x4xf32> -> vector<12x4xf32>
    %c0_45 = arith.constant 0 : index
    %c16 = arith.constant 16 : index
    %114 = vector.load %arg10[%c0_45, %c16] : memref<12x32xf32, #tpu.memory_space<vmem>>, vector<12x4xf32>
    tpu.vector_store %arg10[%c0_45, %c16], %113 {strides = array<i32>} : memref<12x32xf32, #tpu.memory_space<vmem>>, vector<12x4xf32>,
    %115 = vector.extract_strided_slice %9 {offsets = [0, 20], sizes = [12, 4], strides = [1, 1]} : vector<12x32xbf16> to vector<12x4xbf16>
    %116 = vector.extract_strided_slice %14 {offsets = [0, 20], sizes = [20, 4], strides = [1, 1]} : vector<20x32xbf16> to vector<20x4xbf16>
    %cst_46 = arith.constant dense<0.000000e+00> : vector<12x20xf32>
    %117 = tpu.matmul %115, %116, %cst_46 {dimension_numbers = #tpu.dot_dimension_numbers<[1], [1], [0], [0], [0, 0, 1, 0], [], []>} : vector<12x4xbf16>, vector<20x4xbf16>, vector<12x20xf32> -> vector<12x20xf32>
    %cst_47 = arith.constant 5.000000e-01 : f32
    %118 = vector.broadcast %cst_47 : f32 to vector<12x20xf32>
    %119 = arith.mulf %117, %118 : vector<12x20xf32>
    %cst_48 = arith.constant dense<0xFF800000> : vector<12xf32>
    %120 = vector.multi_reduction <maximumf>, %119, %cst_48 [1] : vector<12x20xf32> to vector<12xf32>
    %121 = vector.shape_cast %120 : vector<12xf32> to vector<12x1xf32>
    %122 = vector.broadcast %121 : vector<12x1xf32> to vector<12x20xf32>
    %123 = arith.subf %119, %122 : vector<12x20xf32>
    %124 = math.exp %123 : vector<12x20xf32>
    %cst_49 = arith.constant dense<0.000000e+00> : vector<12xf32>
    %125 = vector.multi_reduction <add>, %124, %cst_49 [1] : vector<12x20xf32> to vector<12xf32>
    %126 = vector.shape_cast %125 : vector<12xf32> to vector<12x1xf32>
    %127 = tpu.reciprocal %126 {approx = true} : vector<12x1xf32> -> vector<12x1xf32>
    %128 = vector.broadcast %127 : vector<12x1xf32> to vector<12x20xf32>
    %129 = arith.mulf %124, %128 : vector<12x20xf32>
    %130 = arith.truncf %129 : vector<12x20xf32> to vector<12x20xbf16>
    %131 = vector.extract_strided_slice %19 {offsets = [0, 20], sizes = [20, 4], strides = [1, 1]} : vector<20x32xbf16> to vector<20x4xbf16>
    %cst_50 = arith.constant dense<0.000000e+00> : vector<12x4xf32>
    %132 = tpu.matmul %130, %131, %cst_50 {dimension_numbers = #tpu.dot_dimension_numbers<[1], [0], [0], [1], [0, 0, 1, 1], [], []>} : vector<12x20xbf16>, vector<20x4xbf16>, vector<12x4xf32> -> vector<12x4xf32>
    %c0_51 = arith.constant 0 : index
    %c20 = arith.constant 20 : index
    %133 = vector.load %arg10[%c0_51, %c20] : memref<12x32xf32, #tpu.memory_space<vmem>>, vector<12x4xf32>
    tpu.vector_store %arg10[%c0_51, %c20], %132 {strides = array<i32>} : memref<12x32xf32, #tpu.memory_space<vmem>>, vector<12x4xf32>,
    %134 = vector.extract_strided_slice %9 {offsets = [0, 24], sizes = [12, 4], strides = [1, 1]} : vector<12x32xbf16> to vector<12x4xbf16>
    %135 = vector.extract_strided_slice %14 {offsets = [0, 24], sizes = [20, 4], strides = [1, 1]} : vector<20x32xbf16> to vector<20x4xbf16>
    %cst_52 = arith.constant dense<0.000000e+00> : vector<12x20xf32>
    %136 = tpu.matmul %134, %135, %cst_52 {dimension_numbers = #tpu.dot_dimension_numbers<[1], [1], [0], [0], [0, 0, 1, 0], [], []>} : vector<12x4xbf16>, vector<20x4xbf16>, vector<12x20xf32> -> vector<12x20xf32>
    %cst_53 = arith.constant 5.000000e-01 : f32
    %137 = vector.broadcast %cst_53 : f32 to vector<12x20xf32>
    %138 = arith.mulf %136, %137 : vector<12x20xf32>
    %cst_54 = arith.constant dense<0xFF800000> : vector<12xf32>
    %139 = vector.multi_reduction <maximumf>, %138, %cst_54 [1] : vector<12x20xf32> to vector<12xf32>
    %140 = vector.shape_cast %139 : vector<12xf32> to vector<12x1xf32>
    %141 = vector.broadcast %140 : vector<12x1xf32> to vector<12x20xf32>
    %142 = arith.subf %138, %141 : vector<12x20xf32>
    %143 = math.exp %142 : vector<12x20xf32>
    %cst_55 = arith.constant dense<0.000000e+00> : vector<12xf32>
    %144 = vector.multi_reduction <add>, %143, %cst_55 [1] : vector<12x20xf32> to vector<12xf32>
    %145 = vector.shape_cast %144 : vector<12xf32> to vector<12x1xf32>
    %146 = tpu.reciprocal %145 {approx = true} : vector<12x1xf32> -> vector<12x1xf32>
    %147 = vector.broadcast %146 : vector<12x1xf32> to vector<12x20xf32>
    %148 = arith.mulf %143, %147 : vector<12x20xf32>
    %149 = arith.truncf %148 : vector<12x20xf32> to vector<12x20xbf16>
    %150 = vector.extract_strided_slice %19 {offsets = [0, 24], sizes = [20, 4], strides = [1, 1]} : vector<20x32xbf16> to vector<20x4xbf16>
    %cst_56 = arith.constant dense<0.000000e+00> : vector<12x4xf32>
    %151 = tpu.matmul %149, %150, %cst_56 {dimension_numbers = #tpu.dot_dimension_numbers<[1], [0], [0], [1], [0, 0, 1, 1], [], []>} : vector<12x20xbf16>, vector<20x4xbf16>, vector<12x4xf32> -> vector<12x4xf32>
    %c0_57 = arith.constant 0 : index
    %c24 = arith.constant 24 : index
    %152 = vector.load %arg10[%c0_57, %c24] : memref<12x32xf32, #tpu.memory_space<vmem>>, vector<12x4xf32>
    tpu.vector_store %arg10[%c0_57, %c24], %151 {strides = array<i32>} : memref<12x32xf32, #tpu.memory_space<vmem>>, vector<12x4xf32>,
    %153 = vector.extract_strided_slice %9 {offsets = [0, 28], sizes = [12, 4], strides = [1, 1]} : vector<12x32xbf16> to vector<12x4xbf16>
    %154 = vector.extract_strided_slice %14 {offsets = [0, 28], sizes = [20, 4], strides = [1, 1]} : vector<20x32xbf16> to vector<20x4xbf16>
    %cst_58 = arith.constant dense<0.000000e+00> : vector<12x20xf32>
    %155 = tpu.matmul %153, %154, %cst_58 {dimension_numbers = #tpu.dot_dimension_numbers<[1], [1], [0], [0], [0, 0, 1, 0], [], []>} : vector<12x4xbf16>, vector<20x4xbf16>, vector<12x20xf32> -> vector<12x20xf32>
    %cst_59 = arith.constant 5.000000e-01 : f32
    %156 = vector.broadcast %cst_59 : f32 to vector<12x20xf32>
    %157 = arith.mulf %155, %156 : vector<12x20xf32>
    %cst_60 = arith.constant dense<0xFF800000> : vector<12xf32>
    %158 = vector.multi_reduction <maximumf>, %157, %cst_60 [1] : vector<12x20xf32> to vector<12xf32>
    %159 = vector.shape_cast %158 : vector<12xf32> to vector<12x1xf32>
    %160 = vector.broadcast %159 : vector<12x1xf32> to vector<12x20xf32>
    %161 = arith.subf %157, %160 : vector<12x20xf32>
    %162 = math.exp %161 : vector<12x20xf32>
    %cst_61 = arith.constant dense<0.000000e+00> : vector<12xf32>
    %163 = vector.multi_reduction <add>, %162, %cst_61 [1] : vector<12x20xf32> to vector<12xf32>
    %164 = vector.shape_cast %163 : vector<12xf32> to vector<12x1xf32>
    %165 = tpu.reciprocal %164 {approx = true} : vector<12x1xf32> -> vector<12x1xf32>
    %166 = vector.broadcast %165 : vector<12x1xf32> to vector<12x20xf32>
    %167 = arith.mulf %162, %166 : vector<12x20xf32>
    %168 = arith.truncf %167 : vector<12x20xf32> to vector<12x20xbf16>
    %169 = vector.extract_strided_slice %19 {offsets = [0, 28], sizes = [20, 4], strides = [1, 1]} : vector<20x32xbf16> to vector<20x4xbf16>
    %cst_62 = arith.constant dense<0.000000e+00> : vector<12x4xf32>
    %170 = tpu.matmul %168, %169, %cst_62 {dimension_numbers = #tpu.dot_dimension_numbers<[1], [0], [0], [1], [0, 0, 1, 1], [], []>} : vector<12x20xbf16>, vector<20x4xbf16>, vector<12x4xf32> -> vector<12x4xf32>
    %c0_63 = arith.constant 0 : index
    %c28 = arith.constant 28 : index
    %171 = vector.load %arg10[%c0_63, %c28] : memref<12x32xf32, #tpu.memory_space<vmem>>, vector<12x4xf32>
    tpu.vector_store %arg10[%c0_63, %c28], %170 {strides = array<i32>} : memref<12x32xf32, #tpu.memory_space<vmem>>, vector<12x4xf32>,
    %c0_64 = arith.constant 0 : index
    %c0_65 = arith.constant 0 : index
    %172 = vector.load %arg10[%c0_64, %c0_65] : memref<12x32xf32, #tpu.memory_space<vmem>>, vector<12x32xf32>
    %173 = arith.truncf %172 : vector<12x32xf32> to vector<12x32xbf16>
    %c0_66 = arith.constant 0 : index
    %c0_67 = arith.constant 0 : index
    %174 = vector.load %arg6[%c0_66, %c0_67] : memref<32x128xbf16, #tpu.memory_space<vmem>>, vector<32x128xbf16>
    %cst_68 = arith.constant dense<0.000000e+00> : vector<12x128xf32>
    %175 = tpu.matmul %173, %174, %cst_68 {dimension_numbers = #tpu.dot_dimension_numbers<[1], [0], [0], [1], [0, 0, 1, 1], [], []>} : vector<12x32xbf16>, vector<32x128xbf16>, vector<12x128xf32> -> vector<12x128xf32>
    %c0_69 = arith.constant 0 : index
    %c0_70 = arith.constant 0 : index
    %176 = vector.load %arg8[%c0_69, %c0_70] : memref<1x128xf32, #tpu.memory_space<vmem>>, vector<1x128xf32>
    %177 = vector.broadcast %176 : vector<1x128xf32> to vector<12x128xf32>
    %178 = arith.addf %175, %177 : vector<12x128xf32>
    %179 = arith.truncf %178 : vector<12x128xf32> to vector<12x128xbf16>
    %c0_71 = arith.constant 0 : index
    %c0_72 = arith.constant 0 : index
    %180 = vector.load %arg9[%c0_71, %c0_72] : memref<12x128xbf16, #tpu.memory_space<vmem>>, vector<12x128xbf16>
    tpu.vector_store %arg9[%c0_71, %c0_72], %179 {strides = array<i32>} : memref<12x128xbf16, #tpu.memory_space<vmem>>, vector<12x128xbf16>,
    return
  }
  func.func @transform_0(%arg0: i32) -> (i32, i32) {
    %c0_i32 = arith.constant 0 : i32
    %c0_i32_0 = arith.constant 0 : i32
    return %arg0, %c0_i32 : i32, i32
  }
  func.func @transform_1(%arg0: i32) -> (i32, i32) {
    %c0_i32 = arith.constant 0 : i32
    %c0_i32_0 = arith.constant 0 : i32
    %c0_i32_1 = arith.constant 0 : i32
    return %c0_i32, %c0_i32_0 : i32, i32
  }
  func.func @transform_2(%arg0: i32) -> (i32, i32) {
    %c0_i32 = arith.constant 0 : i32
    %c0_i32_0 = arith.constant 0 : i32
    %c0_i32_1 = arith.constant 0 : i32
    return %c0_i32, %c0_i32_0 : i32, i32
  }
  func.func @transform_3(%arg0: i32) -> (i32, i32) {
    %c0_i32 = arith.constant 0 : i32
    %c0_i32_0 = arith.constant 0 : i32
    %c0_i32_1 = arith.constant 0 : i32
    return %c0_i32, %c0_i32_0 : i32, i32
  }
  func.func @transform_4(%arg0: i32) -> (i32, i32) {
    %c0_i32 = arith.constant 0 : i32
    %c0_i32_0 = arith.constant 0 : i32
    %c0_i32_1 = arith.constant 0 : i32
    return %c0_i32, %c0_i32_0 : i32, i32
  }
  func.func @transform_5(%arg0: i32) -> (i32, i32) {
    %c0_i32 = arith.constant 0 : i32
    %c0_i32_0 = arith.constant 0 : i32
    %c0_i32_1 = arith.constant 0 : i32
    return %c0_i32, %c0_i32_0 : i32, i32
  }
  func.func @transform_6(%arg0: i32) -> (i32, i32) {
    %c0_i32 = arith.constant 0 : i32
    %c0_i32_0 = arith.constant 0 : i32
    %c0_i32_1 = arith.constant 0 : i32
    return %c0_i32, %c0_i32_0 : i32, i32
  }
  func.func @transform_7(%arg0: i32) -> (i32, i32) {
    %c0_i32 = arith.constant 0 : i32
    %c0_i32_0 = arith.constant 0 : i32
    %c0_i32_1 = arith.constant 0 : i32
    return %c0_i32, %c0_i32_0 : i32, i32
  }
  func.func @transform_8(%arg0: i32) -> (i32, i32) {
    %c0_i32 = arith.constant 0 : i32
    %c0_i32_0 = arith.constant 0 : i32
    return %arg0, %c0_i32 : i32, i32
  }
}

module attributes {stable_mosaic.version = 11 : i64} {
  func.func @_cross_att_kernel(%arg0: i32, %arg1: memref<20x32xbf16, #tpu.memory_space<vmem>>, %arg2: memref<12x32xbf16, #tpu.memory_space<vmem>>, %arg3: memref<32x32xbf16, #tpu.memory_space<vmem>>, %arg4: memref<32x32xbf16, #tpu.memory_space<vmem>>, %arg5: memref<32x32xbf16, #tpu.memory_space<vmem>>, %arg6: memref<32x128xbf16, #tpu.memory_space<vmem>>, %arg7: memref<3x32xf32, #tpu.memory_space<vmem>>, %arg8: memref<1x128xf32, #tpu.memory_space<vmem>>, %arg9: memref<20x128xbf16, #tpu.memory_space<vmem>>, %arg10: memref<20x32xf32, #tpu.memory_space<vmem>>) attributes {dimension_semantics = [#tpu.dimension_semantics<parallel>], iteration_bounds = array<i64: 1>, scalar_prefetch = 0 : i64, scratch_operands = 1 : i64, tpu.core_type = #tpu.core_type<tc>, window_params = [{transform_indices = @transform_0, window_bounds = array<i64: 20, 32>}, {pipeline_mode = #tpu.pipeline_mode<synchronous>, transform_indices = @transform_1, window_bounds = array<i64: 12, 32>}, {pipeline_mode = #tpu.pipeline_mode<synchronous>, transform_indices = @transform_2, window_bounds = array<i64: 32, 32>}, {pipeline_mode = #tpu.pipeline_mode<synchronous>, transform_indices = @transform_3, window_bounds = array<i64: 32, 32>}, {pipeline_mode = #tpu.pipeline_mode<synchronous>, transform_indices = @transform_4, window_bounds = array<i64: 32, 32>}, {pipeline_mode = #tpu.pipeline_mode<synchronous>, transform_indices = @transform_5, window_bounds = array<i64: 32, 128>}, {pipeline_mode = #tpu.pipeline_mode<synchronous>, transform_indices = @transform_6, window_bounds = array<i64: 3, 32>}, {pipeline_mode = #tpu.pipeline_mode<synchronous>, transform_indices = @transform_7, window_bounds = array<i64: 1, 128>}, {transform_indices = @transform_8, window_bounds = array<i64: 20, 128>}]} {
    %c0 = arith.constant 0 : index
    %c0_0 = arith.constant 0 : index
    %0 = vector.load %arg1[%c0, %c0_0] : memref<20x32xbf16, #tpu.memory_space<vmem>>, vector<20x32xbf16>
    %c0_1 = arith.constant 0 : index
    %c0_2 = arith.constant 0 : index
    %1 = vector.load %arg2[%c0_1, %c0_2] : memref<12x32xbf16, #tpu.memory_space<vmem>>, vector<12x32xbf16>
    %c0_3 = arith.constant 0 : index
    %c0_4 = arith.constant 0 : index
    %2 = vector.load %arg7[%c0_3, %c0_4] : memref<3x32xf32, #tpu.memory_space<vmem>>, vector<1x32xf32>
    %c1 = arith.constant 1 : index
    %c0_5 = arith.constant 0 : index
    %3 = vector.load %arg7[%c1, %c0_5] : memref<3x32xf32, #tpu.memory_space<vmem>>, vector<1x32xf32>
    %c2 = arith.constant 2 : index
    %c0_6 = arith.constant 0 : index
    %4 = vector.load %arg7[%c2, %c0_6] : memref<3x32xf32, #tpu.memory_space<vmem>>, vector<1x32xf32>
    %c0_7 = arith.constant 0 : index
    %c0_8 = arith.constant 0 : index
    %5 = vector.load %arg3[%c0_7, %c0_8] : memref<32x32xbf16, #tpu.memory_space<vmem>>, vector<32x32xbf16>
    %cst = arith.constant dense<0.000000e+00> : vector<20x32xf32>
    %6 = tpu.matmul %0, %5, %cst {dimension_numbers = #tpu.dot_dimension_numbers<[1], [0], [0], [1], [0, 0, 1, 1], [], []>} : vector<20x32xbf16>, vector<32x32xbf16>, vector<20x32xf32> -> vector<20x32xf32>
    %7 = vector.broadcast %2 : vector<1x32xf32> to vector<20x32xf32>
    %8 = arith.addf %6, %7 : vector<20x32xf32>
    %9 = arith.truncf %8 : vector<20x32xf32> to vector<20x32xbf16>
    %c0_9 = arith.constant 0 : index
    %c0_10 = arith.constant 0 : index
    %10 = vector.load %arg4[%c0_9, %c0_10] : memref<32x32xbf16, #tpu.memory_space<vmem>>, vector<32x32xbf16>
    %cst_11 = arith.constant dense<0.000000e+00> : vector<12x32xf32>
    %11 = tpu.matmul %1, %10, %cst_11 {dimension_numbers = #tpu.dot_dimension_numbers<[1], [0], [0], [1], [0, 0, 1, 1], [], []>} : vector<12x32xbf16>, vector<32x32xbf16>, vector<12x32xf32> -> vector<12x32xf32>
    %12 = vector.broadcast %3 : vector<1x32xf32> to vector<12x32xf32>
    %13 = arith.addf %11, %12 : vector<12x32xf32>
    %14 = arith.truncf %13 : vector<12x32xf32> to vector<12x32xbf16>
    %c0_12 = arith.constant 0 : index
    %c0_13 = arith.constant 0 : index
    %15 = vector.load %arg5[%c0_12, %c0_13] : memref<32x32xbf16, #tpu.memory_space<vmem>>, vector<32x32xbf16>
    %cst_14 = arith.constant dense<0.000000e+00> : vector<12x32xf32>
    %16 = tpu.matmul %1, %15, %cst_14 {dimension_numbers = #tpu.dot_dimension_numbers<[1], [0], [0], [1], [0, 0, 1, 1], [], []>} : vector<12x32xbf16>, vector<32x32xbf16>, vector<12x32xf32> -> vector<12x32xf32>
    %17 = vector.broadcast %4 : vector<1x32xf32> to vector<12x32xf32>
    %18 = arith.addf %16, %17 : vector<12x32xf32>
    %19 = arith.truncf %18 : vector<12x32xf32> to vector<12x32xbf16>
    %20 = vector.extract_strided_slice %9 {offsets = [0, 0], sizes = [20, 4], strides = [1, 1]} : vector<20x32xbf16> to vector<20x4xbf16>
    %21 = vector.extract_strided_slice %14 {offsets = [0, 0], sizes = [12, 4], strides = [1, 1]} : vector<12x32xbf16> to vector<12x4xbf16>
    %cst_15 = arith.constant dense<0.000000e+00> : vector<20x12xf32>
    %22 = tpu.matmul %20, %21, %cst_15 {dimension_numbers = #tpu.dot_dimension_numbers<[1], [1], [0], [0], [0, 0, 1, 0], [], []>} : vector<20x4xbf16>, vector<12x4xbf16>, vector<20x12xf32> -> vector<20x12xf32>
    %cst_16 = arith.constant 5.000000e-01 : f32
    %23 = vector.broadcast %cst_16 : f32 to vector<20x12xf32>
    %24 = arith.mulf %22, %23 : vector<20x12xf32>
    %cst_17 = arith.constant dense<0xFF800000> : vector<20xf32>
    %25 = vector.multi_reduction <maximumf>, %24, %cst_17 [1] : vector<20x12xf32> to vector<20xf32>
    %26 = vector.shape_cast %25 : vector<20xf32> to vector<20x1xf32>
    %27 = vector.broadcast %26 : vector<20x1xf32> to vector<20x12xf32>
    %28 = arith.subf %24, %27 : vector<20x12xf32>
    %29 = math.exp %28 : vector<20x12xf32>
    %cst_18 = arith.constant dense<0.000000e+00> : vector<20xf32>
    %30 = vector.multi_reduction <add>, %29, %cst_18 [1] : vector<20x12xf32> to vector<20xf32>
    %31 = vector.shape_cast %30 : vector<20xf32> to vector<20x1xf32>
    %32 = tpu.reciprocal %31 {approx = true} : vector<20x1xf32> -> vector<20x1xf32>
    %33 = vector.broadcast %32 : vector<20x1xf32> to vector<20x12xf32>
    %34 = arith.mulf %29, %33 : vector<20x12xf32>
    %35 = arith.truncf %34 : vector<20x12xf32> to vector<20x12xbf16>
    %36 = vector.extract_strided_slice %19 {offsets = [0, 0], sizes = [12, 4], strides = [1, 1]} : vector<12x32xbf16> to vector<12x4xbf16>
    %cst_19 = arith.constant dense<0.000000e+00> : vector<20x4xf32>
    %37 = tpu.matmul %35, %36, %cst_19 {dimension_numbers = #tpu.dot_dimension_numbers<[1], [0], [0], [1], [0, 0, 1, 1], [], []>} : vector<20x12xbf16>, vector<12x4xbf16>, vector<20x4xf32> -> vector<20x4xf32>
    %c0_20 = arith.constant 0 : index
    %c0_21 = arith.constant 0 : index
    %38 = vector.load %arg10[%c0_20, %c0_21] : memref<20x32xf32, #tpu.memory_space<vmem>>, vector<20x4xf32>
    tpu.vector_store %arg10[%c0_20, %c0_21], %37 {strides = array<i32>} : memref<20x32xf32, #tpu.memory_space<vmem>>, vector<20x4xf32>,
    %39 = vector.extract_strided_slice %9 {offsets = [0, 4], sizes = [20, 4], strides = [1, 1]} : vector<20x32xbf16> to vector<20x4xbf16>
    %40 = vector.extract_strided_slice %14 {offsets = [0, 4], sizes = [12, 4], strides = [1, 1]} : vector<12x32xbf16> to vector<12x4xbf16>
    %cst_22 = arith.constant dense<0.000000e+00> : vector<20x12xf32>
    %41 = tpu.matmul %39, %40, %cst_22 {dimension_numbers = #tpu.dot_dimension_numbers<[1], [1], [0], [0], [0, 0, 1, 0], [], []>} : vector<20x4xbf16>, vector<12x4xbf16>, vector<20x12xf32> -> vector<20x12xf32>
    %cst_23 = arith.constant 5.000000e-01 : f32
    %42 = vector.broadcast %cst_23 : f32 to vector<20x12xf32>
    %43 = arith.mulf %41, %42 : vector<20x12xf32>
    %cst_24 = arith.constant dense<0xFF800000> : vector<20xf32>
    %44 = vector.multi_reduction <maximumf>, %43, %cst_24 [1] : vector<20x12xf32> to vector<20xf32>
    %45 = vector.shape_cast %44 : vector<20xf32> to vector<20x1xf32>
    %46 = vector.broadcast %45 : vector<20x1xf32> to vector<20x12xf32>
    %47 = arith.subf %43, %46 : vector<20x12xf32>
    %48 = math.exp %47 : vector<20x12xf32>
    %cst_25 = arith.constant dense<0.000000e+00> : vector<20xf32>
    %49 = vector.multi_reduction <add>, %48, %cst_25 [1] : vector<20x12xf32> to vector<20xf32>
    %50 = vector.shape_cast %49 : vector<20xf32> to vector<20x1xf32>
    %51 = tpu.reciprocal %50 {approx = true} : vector<20x1xf32> -> vector<20x1xf32>
    %52 = vector.broadcast %51 : vector<20x1xf32> to vector<20x12xf32>
    %53 = arith.mulf %48, %52 : vector<20x12xf32>
    %54 = arith.truncf %53 : vector<20x12xf32> to vector<20x12xbf16>
    %55 = vector.extract_strided_slice %19 {offsets = [0, 4], sizes = [12, 4], strides = [1, 1]} : vector<12x32xbf16> to vector<12x4xbf16>
    %cst_26 = arith.constant dense<0.000000e+00> : vector<20x4xf32>
    %56 = tpu.matmul %54, %55, %cst_26 {dimension_numbers = #tpu.dot_dimension_numbers<[1], [0], [0], [1], [0, 0, 1, 1], [], []>} : vector<20x12xbf16>, vector<12x4xbf16>, vector<20x4xf32> -> vector<20x4xf32>
    %c0_27 = arith.constant 0 : index
    %c4 = arith.constant 4 : index
    %57 = vector.load %arg10[%c0_27, %c4] : memref<20x32xf32, #tpu.memory_space<vmem>>, vector<20x4xf32>
    tpu.vector_store %arg10[%c0_27, %c4], %56 {strides = array<i32>} : memref<20x32xf32, #tpu.memory_space<vmem>>, vector<20x4xf32>,
    %58 = vector.extract_strided_slice %9 {offsets = [0, 8], sizes = [20, 4], strides = [1, 1]} : vector<20x32xbf16> to vector<20x4xbf16>
    %59 = vector.extract_strided_slice %14 {offsets = [0, 8], sizes = [12, 4], strides = [1, 1]} : vector<12x32xbf16> to vector<12x4xbf16>
    %cst_28 = arith.constant dense<0.000000e+00> : vector<20x12xf32>
    %60 = tpu.matmul %58, %59, %cst_28 {dimension_numbers = #tpu.dot_dimension_numbers<[1], [1], [0], [0], [0, 0, 1, 0], [], []>} : vector<20x4xbf16>, vector<12x4xbf16>, vector<20x12xf32> -> vector<20x12xf32>
    %cst_29 = arith.constant 5.000000e-01 : f32
    %61 = vector.broadcast %cst_29 : f32 to vector<20x12xf32>
    %62 = arith.mulf %60, %61 : vector<20x12xf32>
    %cst_30 = arith.constant dense<0xFF800000> : vector<20xf32>
    %63 = vector.multi_reduction <maximumf>, %62, %cst_30 [1] : vector<20x12xf32> to vector<20xf32>
    %64 = vector.shape_cast %63 : vector<20xf32> to vector<20x1xf32>
    %65 = vector.broadcast %64 : vector<20x1xf32> to vector<20x12xf32>
    %66 = arith.subf %62, %65 : vector<20x12xf32>
    %67 = math.exp %66 : vector<20x12xf32>
    %cst_31 = arith.constant dense<0.000000e+00> : vector<20xf32>
    %68 = vector.multi_reduction <add>, %67, %cst_31 [1] : vector<20x12xf32> to vector<20xf32>
    %69 = vector.shape_cast %68 : vector<20xf32> to vector<20x1xf32>
    %70 = tpu.reciprocal %69 {approx = true} : vector<20x1xf32> -> vector<20x1xf32>
    %71 = vector.broadcast %70 : vector<20x1xf32> to vector<20x12xf32>
    %72 = arith.mulf %67, %71 : vector<20x12xf32>
    %73 = arith.truncf %72 : vector<20x12xf32> to vector<20x12xbf16>
    %74 = vector.extract_strided_slice %19 {offsets = [0, 8], sizes = [12, 4], strides = [1, 1]} : vector<12x32xbf16> to vector<12x4xbf16>
    %cst_32 = arith.constant dense<0.000000e+00> : vector<20x4xf32>
    %75 = tpu.matmul %73, %74, %cst_32 {dimension_numbers = #tpu.dot_dimension_numbers<[1], [0], [0], [1], [0, 0, 1, 1], [], []>} : vector<20x12xbf16>, vector<12x4xbf16>, vector<20x4xf32> -> vector<20x4xf32>
    %c0_33 = arith.constant 0 : index
    %c8 = arith.constant 8 : index
    %76 = vector.load %arg10[%c0_33, %c8] : memref<20x32xf32, #tpu.memory_space<vmem>>, vector<20x4xf32>
    tpu.vector_store %arg10[%c0_33, %c8], %75 {strides = array<i32>} : memref<20x32xf32, #tpu.memory_space<vmem>>, vector<20x4xf32>,
    %77 = vector.extract_strided_slice %9 {offsets = [0, 12], sizes = [20, 4], strides = [1, 1]} : vector<20x32xbf16> to vector<20x4xbf16>
    %78 = vector.extract_strided_slice %14 {offsets = [0, 12], sizes = [12, 4], strides = [1, 1]} : vector<12x32xbf16> to vector<12x4xbf16>
    %cst_34 = arith.constant dense<0.000000e+00> : vector<20x12xf32>
    %79 = tpu.matmul %77, %78, %cst_34 {dimension_numbers = #tpu.dot_dimension_numbers<[1], [1], [0], [0], [0, 0, 1, 0], [], []>} : vector<20x4xbf16>, vector<12x4xbf16>, vector<20x12xf32> -> vector<20x12xf32>
    %cst_35 = arith.constant 5.000000e-01 : f32
    %80 = vector.broadcast %cst_35 : f32 to vector<20x12xf32>
    %81 = arith.mulf %79, %80 : vector<20x12xf32>
    %cst_36 = arith.constant dense<0xFF800000> : vector<20xf32>
    %82 = vector.multi_reduction <maximumf>, %81, %cst_36 [1] : vector<20x12xf32> to vector<20xf32>
    %83 = vector.shape_cast %82 : vector<20xf32> to vector<20x1xf32>
    %84 = vector.broadcast %83 : vector<20x1xf32> to vector<20x12xf32>
    %85 = arith.subf %81, %84 : vector<20x12xf32>
    %86 = math.exp %85 : vector<20x12xf32>
    %cst_37 = arith.constant dense<0.000000e+00> : vector<20xf32>
    %87 = vector.multi_reduction <add>, %86, %cst_37 [1] : vector<20x12xf32> to vector<20xf32>
    %88 = vector.shape_cast %87 : vector<20xf32> to vector<20x1xf32>
    %89 = tpu.reciprocal %88 {approx = true} : vector<20x1xf32> -> vector<20x1xf32>
    %90 = vector.broadcast %89 : vector<20x1xf32> to vector<20x12xf32>
    %91 = arith.mulf %86, %90 : vector<20x12xf32>
    %92 = arith.truncf %91 : vector<20x12xf32> to vector<20x12xbf16>
    %93 = vector.extract_strided_slice %19 {offsets = [0, 12], sizes = [12, 4], strides = [1, 1]} : vector<12x32xbf16> to vector<12x4xbf16>
    %cst_38 = arith.constant dense<0.000000e+00> : vector<20x4xf32>
    %94 = tpu.matmul %92, %93, %cst_38 {dimension_numbers = #tpu.dot_dimension_numbers<[1], [0], [0], [1], [0, 0, 1, 1], [], []>} : vector<20x12xbf16>, vector<12x4xbf16>, vector<20x4xf32> -> vector<20x4xf32>
    %c0_39 = arith.constant 0 : index
    %c12 = arith.constant 12 : index
    %95 = vector.load %arg10[%c0_39, %c12] : memref<20x32xf32, #tpu.memory_space<vmem>>, vector<20x4xf32>
    tpu.vector_store %arg10[%c0_39, %c12], %94 {strides = array<i32>} : memref<20x32xf32, #tpu.memory_space<vmem>>, vector<20x4xf32>,
    %96 = vector.extract_strided_slice %9 {offsets = [0, 16], sizes = [20, 4], strides = [1, 1]} : vector<20x32xbf16> to vector<20x4xbf16>
    %97 = vector.extract_strided_slice %14 {offsets = [0, 16], sizes = [12, 4], strides = [1, 1]} : vector<12x32xbf16> to vector<12x4xbf16>
    %cst_40 = arith.constant dense<0.000000e+00> : vector<20x12xf32>
    %98 = tpu.matmul %96, %97, %cst_40 {dimension_numbers = #tpu.dot_dimension_numbers<[1], [1], [0], [0], [0, 0, 1, 0], [], []>} : vector<20x4xbf16>, vector<12x4xbf16>, vector<20x12xf32> -> vector<20x12xf32>
    %cst_41 = arith.constant 5.000000e-01 : f32
    %99 = vector.broadcast %cst_41 : f32 to vector<20x12xf32>
    %100 = arith.mulf %98, %99 : vector<20x12xf32>
    %cst_42 = arith.constant dense<0xFF800000> : vector<20xf32>
    %101 = vector.multi_reduction <maximumf>, %100, %cst_42 [1] : vector<20x12xf32> to vector<20xf32>
    %102 = vector.shape_cast %101 : vector<20xf32> to vector<20x1xf32>
    %103 = vector.broadcast %102 : vector<20x1xf32> to vector<20x12xf32>
    %104 = arith.subf %100, %103 : vector<20x12xf32>
    %105 = math.exp %104 : vector<20x12xf32>
    %cst_43 = arith.constant dense<0.000000e+00> : vector<20xf32>
    %106 = vector.multi_reduction <add>, %105, %cst_43 [1] : vector<20x12xf32> to vector<20xf32>
    %107 = vector.shape_cast %106 : vector<20xf32> to vector<20x1xf32>
    %108 = tpu.reciprocal %107 {approx = true} : vector<20x1xf32> -> vector<20x1xf32>
    %109 = vector.broadcast %108 : vector<20x1xf32> to vector<20x12xf32>
    %110 = arith.mulf %105, %109 : vector<20x12xf32>
    %111 = arith.truncf %110 : vector<20x12xf32> to vector<20x12xbf16>
    %112 = vector.extract_strided_slice %19 {offsets = [0, 16], sizes = [12, 4], strides = [1, 1]} : vector<12x32xbf16> to vector<12x4xbf16>
    %cst_44 = arith.constant dense<0.000000e+00> : vector<20x4xf32>
    %113 = tpu.matmul %111, %112, %cst_44 {dimension_numbers = #tpu.dot_dimension_numbers<[1], [0], [0], [1], [0, 0, 1, 1], [], []>} : vector<20x12xbf16>, vector<12x4xbf16>, vector<20x4xf32> -> vector<20x4xf32>
    %c0_45 = arith.constant 0 : index
    %c16 = arith.constant 16 : index
    %114 = vector.load %arg10[%c0_45, %c16] : memref<20x32xf32, #tpu.memory_space<vmem>>, vector<20x4xf32>
    tpu.vector_store %arg10[%c0_45, %c16], %113 {strides = array<i32>} : memref<20x32xf32, #tpu.memory_space<vmem>>, vector<20x4xf32>,
    %115 = vector.extract_strided_slice %9 {offsets = [0, 20], sizes = [20, 4], strides = [1, 1]} : vector<20x32xbf16> to vector<20x4xbf16>
    %116 = vector.extract_strided_slice %14 {offsets = [0, 20], sizes = [12, 4], strides = [1, 1]} : vector<12x32xbf16> to vector<12x4xbf16>
    %cst_46 = arith.constant dense<0.000000e+00> : vector<20x12xf32>
    %117 = tpu.matmul %115, %116, %cst_46 {dimension_numbers = #tpu.dot_dimension_numbers<[1], [1], [0], [0], [0, 0, 1, 0], [], []>} : vector<20x4xbf16>, vector<12x4xbf16>, vector<20x12xf32> -> vector<20x12xf32>
    %cst_47 = arith.constant 5.000000e-01 : f32
    %118 = vector.broadcast %cst_47 : f32 to vector<20x12xf32>
    %119 = arith.mulf %117, %118 : vector<20x12xf32>
    %cst_48 = arith.constant dense<0xFF800000> : vector<20xf32>
    %120 = vector.multi_reduction <maximumf>, %119, %cst_48 [1] : vector<20x12xf32> to vector<20xf32>
    %121 = vector.shape_cast %120 : vector<20xf32> to vector<20x1xf32>
    %122 = vector.broadcast %121 : vector<20x1xf32> to vector<20x12xf32>
    %123 = arith.subf %119, %122 : vector<20x12xf32>
    %124 = math.exp %123 : vector<20x12xf32>
    %cst_49 = arith.constant dense<0.000000e+00> : vector<20xf32>
    %125 = vector.multi_reduction <add>, %124, %cst_49 [1] : vector<20x12xf32> to vector<20xf32>
    %126 = vector.shape_cast %125 : vector<20xf32> to vector<20x1xf32>
    %127 = tpu.reciprocal %126 {approx = true} : vector<20x1xf32> -> vector<20x1xf32>
    %128 = vector.broadcast %127 : vector<20x1xf32> to vector<20x12xf32>
    %129 = arith.mulf %124, %128 : vector<20x12xf32>
    %130 = arith.truncf %129 : vector<20x12xf32> to vector<20x12xbf16>
    %131 = vector.extract_strided_slice %19 {offsets = [0, 20], sizes = [12, 4], strides = [1, 1]} : vector<12x32xbf16> to vector<12x4xbf16>
    %cst_50 = arith.constant dense<0.000000e+00> : vector<20x4xf32>
    %132 = tpu.matmul %130, %131, %cst_50 {dimension_numbers = #tpu.dot_dimension_numbers<[1], [0], [0], [1], [0, 0, 1, 1], [], []>} : vector<20x12xbf16>, vector<12x4xbf16>, vector<20x4xf32> -> vector<20x4xf32>
    %c0_51 = arith.constant 0 : index
    %c20 = arith.constant 20 : index
    %133 = vector.load %arg10[%c0_51, %c20] : memref<20x32xf32, #tpu.memory_space<vmem>>, vector<20x4xf32>
    tpu.vector_store %arg10[%c0_51, %c20], %132 {strides = array<i32>} : memref<20x32xf32, #tpu.memory_space<vmem>>, vector<20x4xf32>,
    %134 = vector.extract_strided_slice %9 {offsets = [0, 24], sizes = [20, 4], strides = [1, 1]} : vector<20x32xbf16> to vector<20x4xbf16>
    %135 = vector.extract_strided_slice %14 {offsets = [0, 24], sizes = [12, 4], strides = [1, 1]} : vector<12x32xbf16> to vector<12x4xbf16>
    %cst_52 = arith.constant dense<0.000000e+00> : vector<20x12xf32>
    %136 = tpu.matmul %134, %135, %cst_52 {dimension_numbers = #tpu.dot_dimension_numbers<[1], [1], [0], [0], [0, 0, 1, 0], [], []>} : vector<20x4xbf16>, vector<12x4xbf16>, vector<20x12xf32> -> vector<20x12xf32>
    %cst_53 = arith.constant 5.000000e-01 : f32
    %137 = vector.broadcast %cst_53 : f32 to vector<20x12xf32>
    %138 = arith.mulf %136, %137 : vector<20x12xf32>
    %cst_54 = arith.constant dense<0xFF800000> : vector<20xf32>
    %139 = vector.multi_reduction <maximumf>, %138, %cst_54 [1] : vector<20x12xf32> to vector<20xf32>
    %140 = vector.shape_cast %139 : vector<20xf32> to vector<20x1xf32>
    %141 = vector.broadcast %140 : vector<20x1xf32> to vector<20x12xf32>
    %142 = arith.subf %138, %141 : vector<20x12xf32>
    %143 = math.exp %142 : vector<20x12xf32>
    %cst_55 = arith.constant dense<0.000000e+00> : vector<20xf32>
    %144 = vector.multi_reduction <add>, %143, %cst_55 [1] : vector<20x12xf32> to vector<20xf32>
    %145 = vector.shape_cast %144 : vector<20xf32> to vector<20x1xf32>
    %146 = tpu.reciprocal %145 {approx = true} : vector<20x1xf32> -> vector<20x1xf32>
    %147 = vector.broadcast %146 : vector<20x1xf32> to vector<20x12xf32>
    %148 = arith.mulf %143, %147 : vector<20x12xf32>
    %149 = arith.truncf %148 : vector<20x12xf32> to vector<20x12xbf16>
    %150 = vector.extract_strided_slice %19 {offsets = [0, 24], sizes = [12, 4], strides = [1, 1]} : vector<12x32xbf16> to vector<12x4xbf16>
    %cst_56 = arith.constant dense<0.000000e+00> : vector<20x4xf32>
    %151 = tpu.matmul %149, %150, %cst_56 {dimension_numbers = #tpu.dot_dimension_numbers<[1], [0], [0], [1], [0, 0, 1, 1], [], []>} : vector<20x12xbf16>, vector<12x4xbf16>, vector<20x4xf32> -> vector<20x4xf32>
    %c0_57 = arith.constant 0 : index
    %c24 = arith.constant 24 : index
    %152 = vector.load %arg10[%c0_57, %c24] : memref<20x32xf32, #tpu.memory_space<vmem>>, vector<20x4xf32>
    tpu.vector_store %arg10[%c0_57, %c24], %151 {strides = array<i32>} : memref<20x32xf32, #tpu.memory_space<vmem>>, vector<20x4xf32>,
    %153 = vector.extract_strided_slice %9 {offsets = [0, 28], sizes = [20, 4], strides = [1, 1]} : vector<20x32xbf16> to vector<20x4xbf16>
    %154 = vector.extract_strided_slice %14 {offsets = [0, 28], sizes = [12, 4], strides = [1, 1]} : vector<12x32xbf16> to vector<12x4xbf16>
    %cst_58 = arith.constant dense<0.000000e+00> : vector<20x12xf32>
    %155 = tpu.matmul %153, %154, %cst_58 {dimension_numbers = #tpu.dot_dimension_numbers<[1], [1], [0], [0], [0, 0, 1, 0], [], []>} : vector<20x4xbf16>, vector<12x4xbf16>, vector<20x12xf32> -> vector<20x12xf32>
    %cst_59 = arith.constant 5.000000e-01 : f32
    %156 = vector.broadcast %cst_59 : f32 to vector<20x12xf32>
    %157 = arith.mulf %155, %156 : vector<20x12xf32>
    %cst_60 = arith.constant dense<0xFF800000> : vector<20xf32>
    %158 = vector.multi_reduction <maximumf>, %157, %cst_60 [1] : vector<20x12xf32> to vector<20xf32>
    %159 = vector.shape_cast %158 : vector<20xf32> to vector<20x1xf32>
    %160 = vector.broadcast %159 : vector<20x1xf32> to vector<20x12xf32>
    %161 = arith.subf %157, %160 : vector<20x12xf32>
    %162 = math.exp %161 : vector<20x12xf32>
    %cst_61 = arith.constant dense<0.000000e+00> : vector<20xf32>
    %163 = vector.multi_reduction <add>, %162, %cst_61 [1] : vector<20x12xf32> to vector<20xf32>
    %164 = vector.shape_cast %163 : vector<20xf32> to vector<20x1xf32>
    %165 = tpu.reciprocal %164 {approx = true} : vector<20x1xf32> -> vector<20x1xf32>
    %166 = vector.broadcast %165 : vector<20x1xf32> to vector<20x12xf32>
    %167 = arith.mulf %162, %166 : vector<20x12xf32>
    %168 = arith.truncf %167 : vector<20x12xf32> to vector<20x12xbf16>
    %169 = vector.extract_strided_slice %19 {offsets = [0, 28], sizes = [12, 4], strides = [1, 1]} : vector<12x32xbf16> to vector<12x4xbf16>
    %cst_62 = arith.constant dense<0.000000e+00> : vector<20x4xf32>
    %170 = tpu.matmul %168, %169, %cst_62 {dimension_numbers = #tpu.dot_dimension_numbers<[1], [0], [0], [1], [0, 0, 1, 1], [], []>} : vector<20x12xbf16>, vector<12x4xbf16>, vector<20x4xf32> -> vector<20x4xf32>
    %c0_63 = arith.constant 0 : index
    %c28 = arith.constant 28 : index
    %171 = vector.load %arg10[%c0_63, %c28] : memref<20x32xf32, #tpu.memory_space<vmem>>, vector<20x4xf32>
    tpu.vector_store %arg10[%c0_63, %c28], %170 {strides = array<i32>} : memref<20x32xf32, #tpu.memory_space<vmem>>, vector<20x4xf32>,
    %c0_64 = arith.constant 0 : index
    %c0_65 = arith.constant 0 : index
    %172 = vector.load %arg10[%c0_64, %c0_65] : memref<20x32xf32, #tpu.memory_space<vmem>>, vector<20x32xf32>
    %173 = arith.truncf %172 : vector<20x32xf32> to vector<20x32xbf16>
    %c0_66 = arith.constant 0 : index
    %c0_67 = arith.constant 0 : index
    %174 = vector.load %arg6[%c0_66, %c0_67] : memref<32x128xbf16, #tpu.memory_space<vmem>>, vector<32x128xbf16>
    %cst_68 = arith.constant dense<0.000000e+00> : vector<20x128xf32>
    %175 = tpu.matmul %173, %174, %cst_68 {dimension_numbers = #tpu.dot_dimension_numbers<[1], [0], [0], [1], [0, 0, 1, 1], [], []>} : vector<20x32xbf16>, vector<32x128xbf16>, vector<20x128xf32> -> vector<20x128xf32>
    %c0_69 = arith.constant 0 : index
    %c0_70 = arith.constant 0 : index
    %176 = vector.load %arg8[%c0_69, %c0_70] : memref<1x128xf32, #tpu.memory_space<vmem>>, vector<1x128xf32>
    %177 = vector.broadcast %176 : vector<1x128xf32> to vector<20x128xf32>
    %178 = arith.addf %175, %177 : vector<20x128xf32>
    %179 = arith.truncf %178 : vector<20x128xf32> to vector<20x128xbf16>
    %c0_71 = arith.constant 0 : index
    %c0_72 = arith.constant 0 : index
    %180 = vector.load %arg9[%c0_71, %c0_72] : memref<20x128xbf16, #tpu.memory_space<vmem>>, vector<20x128xbf16>
    tpu.vector_store %arg9[%c0_71, %c0_72], %179 {strides = array<i32>} : memref<20x128xbf16, #tpu.memory_space<vmem>>, vector<20x128xbf16>,
    return
  }
  func.func @transform_0(%arg0: i32) -> (i32, i32) {
    %c0_i32 = arith.constant 0 : i32
    %c0_i32_0 = arith.constant 0 : i32
    return %arg0, %c0_i32 : i32, i32
  }
  func.func @transform_1(%arg0: i32) -> (i32, i32) {
    %c0_i32 = arith.constant 0 : i32
    %c0_i32_0 = arith.constant 0 : i32
    %c0_i32_1 = arith.constant 0 : i32
    return %c0_i32, %c0_i32_0 : i32, i32
  }
  func.func @transform_2(%arg0: i32) -> (i32, i32) {
    %c0_i32 = arith.constant 0 : i32
    %c0_i32_0 = arith.constant 0 : i32
    %c0_i32_1 = arith.constant 0 : i32
    return %c0_i32, %c0_i32_0 : i32, i32
  }
  func.func @transform_3(%arg0: i32) -> (i32, i32) {
    %c0_i32 = arith.constant 0 : i32
    %c0_i32_0 = arith.constant 0 : i32
    %c0_i32_1 = arith.constant 0 : i32
    return %c0_i32, %c0_i32_0 : i32, i32
  }
  func.func @transform_4(%arg0: i32) -> (i32, i32) {
    %c0_i32 = arith.constant 0 : i32
    %c0_i32_0 = arith.constant 0 : i32
    %c0_i32_1 = arith.constant 0 : i32
    return %c0_i32, %c0_i32_0 : i32, i32
  }
  func.func @transform_5(%arg0: i32) -> (i32, i32) {
    %c0_i32 = arith.constant 0 : i32
    %c0_i32_0 = arith.constant 0 : i32
    %c0_i32_1 = arith.constant 0 : i32
    return %c0_i32, %c0_i32_0 : i32, i32
  }
  func.func @transform_6(%arg0: i32) -> (i32, i32) {
    %c0_i32 = arith.constant 0 : i32
    %c0_i32_0 = arith.constant 0 : i32
    %c0_i32_1 = arith.constant 0 : i32
    return %c0_i32, %c0_i32_0 : i32, i32
  }
  func.func @transform_7(%arg0: i32) -> (i32, i32) {
    %c0_i32 = arith.constant 0 : i32
    %c0_i32_0 = arith.constant 0 : i32
    %c0_i32_1 = arith.constant 0 : i32
    return %c0_i32, %c0_i32_0 : i32, i32
  }
  func.func @transform_8(%arg0: i32) -> (i32, i32) {
    %c0_i32 = arith.constant 0 : i32
    %c0_i32_0 = arith.constant 0 : i32
    return %arg0, %c0_i32 : i32, i32
  }
}

module attributes {stable_mosaic.version = 11 : i64} {
  func.func @_fused_agg_kernel(%arg0: i32, %arg1: i32, %arg2: memref<32x32xbf16, #tpu.memory_space<vmem>>, %arg3: memref<32x256xbf16, #tpu.memory_space<vmem>>, %arg4: memref<32x128xbf16, #tpu.memory_space<vmem>>, %arg5: memref<1x256xf32, #tpu.memory_space<vmem>>, %arg6: memref<32x128xbf16, #tpu.memory_space<vmem>>, %arg7: memref<32x256xf32, #tpu.memory_space<vmem>>) attributes {dimension_semantics = [#tpu.dimension_semantics<parallel>, #tpu.dimension_semantics<arbitrary>], iteration_bounds = array<i64: 1, 1>, scalar_prefetch = 0 : i64, scratch_operands = 1 : i64, tpu.core_type = #tpu.core_type<tc>, window_params = [{transform_indices = @transform_0, window_bounds = array<i64: 32, 32>}, {transform_indices = @transform_1, window_bounds = array<i64: 32, 256>}, {transform_indices = @transform_2, window_bounds = array<i64: 32, 128>}, {pipeline_mode = #tpu.pipeline_mode<synchronous>, transform_indices = @transform_3, window_bounds = array<i64: 1, 256>}, {transform_indices = @transform_4, window_bounds = array<i64: 32, 128>}]} {
    %c0_i32 = arith.constant 0 : i32
    %0 = arith.cmpi eq, %arg1, %c0_i32 : i32
    %1 = arith.extui %0 : i1 to i32
    %c0_i32_0 = arith.constant 0 : i32
    %2 = arith.cmpi ne, %1, %c0_i32_0 : i32
    scf.if %2 {
      %c0_10 = arith.constant 0 : index
      %c0_11 = arith.constant 0 : index
      %12 = vector.load %arg4[%c0_10, %c0_11] : memref<32x128xbf16, #tpu.memory_space<vmem>>, vector<32x128xbf16>
      %13 = arith.extf %12 : vector<32x128xbf16> to vector<32x128xf32>
      %c0_12 = arith.constant 0 : index
      %c0_13 = arith.constant 0 : index
      %14 = vector.load %arg7[%c0_12, %c0_13] : memref<32x256xf32, #tpu.memory_space<vmem>>, vector<32x128xf32>
      tpu.vector_store %arg7[%c0_12, %c0_13], %13 {strides = array<i32>} : memref<32x256xf32, #tpu.memory_space<vmem>>, vector<32x128xf32>,
      %cst_14 = arith.constant 0.000000e+00 : f32
      %15 = vector.broadcast %cst_14 : f32 to vector<32x128xf32>
      %c0_15 = arith.constant 0 : index
      %c128 = arith.constant 128 : index
      %16 = vector.load %arg7[%c0_15, %c128] : memref<32x256xf32, #tpu.memory_space<vmem>>, vector<32x128xf32>
      tpu.vector_store %arg7[%c0_15, %c128], %15 {strides = array<i32>} : memref<32x256xf32, #tpu.memory_space<vmem>>, vector<32x128xf32>,
    } else {
    }
    %c0 = arith.constant 0 : index
    %c0_1 = arith.constant 0 : index
    %3 = vector.load %arg7[%c0, %c0_1] : memref<32x256xf32, #tpu.memory_space<vmem>>, vector<32x256xf32>
    %c0_2 = arith.constant 0 : index
    %c0_3 = arith.constant 0 : index
    %4 = vector.load %arg2[%c0_2, %c0_3] : memref<32x32xbf16, #tpu.memory_space<vmem>>, vector<32x32xbf16>
    %c0_4 = arith.constant 0 : index
    %c0_5 = arith.constant 0 : index
    %5 = vector.load %arg3[%c0_4, %c0_5] : memref<32x256xbf16, #tpu.memory_space<vmem>>, vector<32x256xbf16>
    %cst = arith.constant dense<0.000000e+00> : vector<32x256xf32>
    %6 = tpu.matmul %4, %5, %cst {dimension_numbers = #tpu.dot_dimension_numbers<[1], [0], [0], [1], [0, 0, 1, 1], [], []>} : vector<32x32xbf16>, vector<32x256xbf16>, vector<32x256xf32> -> vector<32x256xf32>
    %7 = arith.addf %3, %6 : vector<32x256xf32>
    %c0_6 = arith.constant 0 : index
    %c0_7 = arith.constant 0 : index
    %8 = vector.load %arg7[%c0_6, %c0_7] : memref<32x256xf32, #tpu.memory_space<vmem>>, vector<32x256xf32>
    tpu.vector_store %arg7[%c0_6, %c0_7], %7 {strides = array<i32>} : memref<32x256xf32, #tpu.memory_space<vmem>>, vector<32x256xf32>,
    %c0_i32_8 = arith.constant 0 : i32
    %9 = arith.cmpi eq, %arg1, %c0_i32_8 : i32
    %10 = arith.extui %9 : i1 to i32
    %c0_i32_9 = arith.constant 0 : i32
    %11 = arith.cmpi ne, %10, %c0_i32_9 : i32
    scf.if %11 {
      %c0_10 = arith.constant 0 : index
      %c0_11 = arith.constant 0 : index
      %12 = vector.load %arg7[%c0_10, %c0_11] : memref<32x256xf32, #tpu.memory_space<vmem>>, vector<32x256xf32>
      %c0_12 = arith.constant 0 : index
      %c0_13 = arith.constant 0 : index
      %13 = vector.load %arg5[%c0_12, %c0_13] : memref<1x256xf32, #tpu.memory_space<vmem>>, vector<1x256xf32>
      %14 = vector.broadcast %13 : vector<1x256xf32> to vector<32x256xf32>
      %15 = arith.addf %12, %14 : vector<32x256xf32>
      %16 = vector.extract_strided_slice %15 {offsets = [0, 0], sizes = [32, 128], strides = [1, 1]} : vector<32x256xf32> to vector<32x128xf32>
      %cst_14 = arith.constant 0.000000e+00 : f32
      %17 = vector.broadcast %cst_14 : f32 to vector<32x128xf32>
      %18 = arith.maximumf %16, %17 : vector<32x128xf32>
      %19 = vector.extract_strided_slice %15 {offsets = [0, 128], sizes = [32, 128], strides = [1, 1]} : vector<32x256xf32> to vector<32x128xf32>
      %cst_15 = arith.constant 0.000000e+00 : f32
      %20 = vector.broadcast %cst_15 : f32 to vector<32x128xf32>
      %21 = arith.maximumf %19, %20 : vector<32x128xf32>
      %22 = arith.addf %18, %21 : vector<32x128xf32>
      %23 = arith.truncf %22 : vector<32x128xf32> to vector<32x128xbf16>
      %c0_16 = arith.constant 0 : index
      %c0_17 = arith.constant 0 : index
      %24 = vector.load %arg6[%c0_16, %c0_17] : memref<32x128xbf16, #tpu.memory_space<vmem>>, vector<32x128xbf16>
      tpu.vector_store %arg6[%c0_16, %c0_17], %23 {strides = array<i32>} : memref<32x128xbf16, #tpu.memory_space<vmem>>, vector<32x128xbf16>,
    } else {
    }
    return
  }
  func.func @transform_0(%arg0: i32, %arg1: i32) -> (i32, i32) {
    %c0_i32 = arith.constant 0 : i32
    return %arg0, %arg1 : i32, i32
  }
  func.func @transform_1(%arg0: i32, %arg1: i32) -> (i32, i32) {
    %c0_i32 = arith.constant 0 : i32
    %c0_i32_0 = arith.constant 0 : i32
    return %arg1, %c0_i32 : i32, i32
  }
  func.func @transform_2(%arg0: i32, %arg1: i32) -> (i32, i32) {
    %c0_i32 = arith.constant 0 : i32
    %c0_i32_0 = arith.constant 0 : i32
    return %arg0, %c0_i32 : i32, i32
  }
  func.func @transform_3(%arg0: i32, %arg1: i32) -> (i32, i32) {
    %c0_i32 = arith.constant 0 : i32
    %c0_i32_0 = arith.constant 0 : i32
    %c0_i32_1 = arith.constant 0 : i32
    return %c0_i32, %c0_i32_0 : i32, i32
  }
  func.func @transform_4(%arg0: i32, %arg1: i32) -> (i32, i32) {
    %c0_i32 = arith.constant 0 : i32
    %c0_i32_0 = arith.constant 0 : i32
    return %arg0, %c0_i32 : i32, i32
  }
}

module attributes {stable_mosaic.version = 11 : i64} {
  func.func @_cross_att_kernel(%arg0: i32, %arg1: memref<20x16xbf16, #tpu.memory_space<vmem>>, %arg2: memref<12x16xbf16, #tpu.memory_space<vmem>>, %arg3: memref<16x16xbf16, #tpu.memory_space<vmem>>, %arg4: memref<16x16xbf16, #tpu.memory_space<vmem>>, %arg5: memref<16x16xbf16, #tpu.memory_space<vmem>>, %arg6: memref<16x128xbf16, #tpu.memory_space<vmem>>, %arg7: memref<3x16xf32, #tpu.memory_space<vmem>>, %arg8: memref<1x128xf32, #tpu.memory_space<vmem>>, %arg9: memref<20x128xbf16, #tpu.memory_space<vmem>>, %arg10: memref<20x16xf32, #tpu.memory_space<vmem>>) attributes {dimension_semantics = [#tpu.dimension_semantics<parallel>], iteration_bounds = array<i64: 1>, scalar_prefetch = 0 : i64, scratch_operands = 1 : i64, tpu.core_type = #tpu.core_type<tc>, window_params = [{transform_indices = @transform_0, window_bounds = array<i64: 20, 16>}, {pipeline_mode = #tpu.pipeline_mode<synchronous>, transform_indices = @transform_1, window_bounds = array<i64: 12, 16>}, {pipeline_mode = #tpu.pipeline_mode<synchronous>, transform_indices = @transform_2, window_bounds = array<i64: 16, 16>}, {pipeline_mode = #tpu.pipeline_mode<synchronous>, transform_indices = @transform_3, window_bounds = array<i64: 16, 16>}, {pipeline_mode = #tpu.pipeline_mode<synchronous>, transform_indices = @transform_4, window_bounds = array<i64: 16, 16>}, {pipeline_mode = #tpu.pipeline_mode<synchronous>, transform_indices = @transform_5, window_bounds = array<i64: 16, 128>}, {pipeline_mode = #tpu.pipeline_mode<synchronous>, transform_indices = @transform_6, window_bounds = array<i64: 3, 16>}, {pipeline_mode = #tpu.pipeline_mode<synchronous>, transform_indices = @transform_7, window_bounds = array<i64: 1, 128>}, {transform_indices = @transform_8, window_bounds = array<i64: 20, 128>}]} {
    %c0 = arith.constant 0 : index
    %c0_0 = arith.constant 0 : index
    %0 = vector.load %arg1[%c0, %c0_0] : memref<20x16xbf16, #tpu.memory_space<vmem>>, vector<20x16xbf16>
    %c0_1 = arith.constant 0 : index
    %c0_2 = arith.constant 0 : index
    %1 = vector.load %arg2[%c0_1, %c0_2] : memref<12x16xbf16, #tpu.memory_space<vmem>>, vector<12x16xbf16>
    %c0_3 = arith.constant 0 : index
    %c0_4 = arith.constant 0 : index
    %2 = vector.load %arg7[%c0_3, %c0_4] : memref<3x16xf32, #tpu.memory_space<vmem>>, vector<1x16xf32>
    %c1 = arith.constant 1 : index
    %c0_5 = arith.constant 0 : index
    %3 = vector.load %arg7[%c1, %c0_5] : memref<3x16xf32, #tpu.memory_space<vmem>>, vector<1x16xf32>
    %c2 = arith.constant 2 : index
    %c0_6 = arith.constant 0 : index
    %4 = vector.load %arg7[%c2, %c0_6] : memref<3x16xf32, #tpu.memory_space<vmem>>, vector<1x16xf32>
    %c0_7 = arith.constant 0 : index
    %c0_8 = arith.constant 0 : index
    %5 = vector.load %arg3[%c0_7, %c0_8] : memref<16x16xbf16, #tpu.memory_space<vmem>>, vector<16x16xbf16>
    %cst = arith.constant dense<0.000000e+00> : vector<20x16xf32>
    %6 = tpu.matmul %0, %5, %cst {dimension_numbers = #tpu.dot_dimension_numbers<[1], [0], [0], [1], [0, 0, 1, 1], [], []>} : vector<20x16xbf16>, vector<16x16xbf16>, vector<20x16xf32> -> vector<20x16xf32>
    %7 = vector.broadcast %2 : vector<1x16xf32> to vector<20x16xf32>
    %8 = arith.addf %6, %7 : vector<20x16xf32>
    %9 = arith.truncf %8 : vector<20x16xf32> to vector<20x16xbf16>
    %c0_9 = arith.constant 0 : index
    %c0_10 = arith.constant 0 : index
    %10 = vector.load %arg4[%c0_9, %c0_10] : memref<16x16xbf16, #tpu.memory_space<vmem>>, vector<16x16xbf16>
    %cst_11 = arith.constant dense<0.000000e+00> : vector<12x16xf32>
    %11 = tpu.matmul %1, %10, %cst_11 {dimension_numbers = #tpu.dot_dimension_numbers<[1], [0], [0], [1], [0, 0, 1, 1], [], []>} : vector<12x16xbf16>, vector<16x16xbf16>, vector<12x16xf32> -> vector<12x16xf32>
    %12 = vector.broadcast %3 : vector<1x16xf32> to vector<12x16xf32>
    %13 = arith.addf %11, %12 : vector<12x16xf32>
    %14 = arith.truncf %13 : vector<12x16xf32> to vector<12x16xbf16>
    %c0_12 = arith.constant 0 : index
    %c0_13 = arith.constant 0 : index
    %15 = vector.load %arg5[%c0_12, %c0_13] : memref<16x16xbf16, #tpu.memory_space<vmem>>, vector<16x16xbf16>
    %cst_14 = arith.constant dense<0.000000e+00> : vector<12x16xf32>
    %16 = tpu.matmul %1, %15, %cst_14 {dimension_numbers = #tpu.dot_dimension_numbers<[1], [0], [0], [1], [0, 0, 1, 1], [], []>} : vector<12x16xbf16>, vector<16x16xbf16>, vector<12x16xf32> -> vector<12x16xf32>
    %17 = vector.broadcast %4 : vector<1x16xf32> to vector<12x16xf32>
    %18 = arith.addf %16, %17 : vector<12x16xf32>
    %19 = arith.truncf %18 : vector<12x16xf32> to vector<12x16xbf16>
    %20 = vector.extract_strided_slice %9 {offsets = [0, 0], sizes = [20, 2], strides = [1, 1]} : vector<20x16xbf16> to vector<20x2xbf16>
    %21 = vector.extract_strided_slice %14 {offsets = [0, 0], sizes = [12, 2], strides = [1, 1]} : vector<12x16xbf16> to vector<12x2xbf16>
    %cst_15 = arith.constant dense<0.000000e+00> : vector<20x12xf32>
    %22 = tpu.matmul %20, %21, %cst_15 {dimension_numbers = #tpu.dot_dimension_numbers<[1], [1], [0], [0], [0, 0, 1, 0], [], []>} : vector<20x2xbf16>, vector<12x2xbf16>, vector<20x12xf32> -> vector<20x12xf32>
    %cst_16 = arith.constant 0.707106769 : f32
    %23 = vector.broadcast %cst_16 : f32 to vector<20x12xf32>
    %24 = arith.mulf %22, %23 : vector<20x12xf32>
    %cst_17 = arith.constant dense<0xFF800000> : vector<20xf32>
    %25 = vector.multi_reduction <maximumf>, %24, %cst_17 [1] : vector<20x12xf32> to vector<20xf32>
    %26 = vector.shape_cast %25 : vector<20xf32> to vector<20x1xf32>
    %27 = vector.broadcast %26 : vector<20x1xf32> to vector<20x12xf32>
    %28 = arith.subf %24, %27 : vector<20x12xf32>
    %29 = math.exp %28 : vector<20x12xf32>
    %cst_18 = arith.constant dense<0.000000e+00> : vector<20xf32>
    %30 = vector.multi_reduction <add>, %29, %cst_18 [1] : vector<20x12xf32> to vector<20xf32>
    %31 = vector.shape_cast %30 : vector<20xf32> to vector<20x1xf32>
    %32 = tpu.reciprocal %31 {approx = true} : vector<20x1xf32> -> vector<20x1xf32>
    %33 = vector.broadcast %32 : vector<20x1xf32> to vector<20x12xf32>
    %34 = arith.mulf %29, %33 : vector<20x12xf32>
    %35 = arith.truncf %34 : vector<20x12xf32> to vector<20x12xbf16>
    %36 = vector.extract_strided_slice %19 {offsets = [0, 0], sizes = [12, 2], strides = [1, 1]} : vector<12x16xbf16> to vector<12x2xbf16>
    %cst_19 = arith.constant dense<0.000000e+00> : vector<20x2xf32>
    %37 = tpu.matmul %35, %36, %cst_19 {dimension_numbers = #tpu.dot_dimension_numbers<[1], [0], [0], [1], [0, 0, 1, 1], [], []>} : vector<20x12xbf16>, vector<12x2xbf16>, vector<20x2xf32> -> vector<20x2xf32>
    %c0_20 = arith.constant 0 : index
    %c0_21 = arith.constant 0 : index
    %38 = vector.load %arg10[%c0_20, %c0_21] : memref<20x16xf32, #tpu.memory_space<vmem>>, vector<20x2xf32>
    tpu.vector_store %arg10[%c0_20, %c0_21], %37 {strides = array<i32>} : memref<20x16xf32, #tpu.memory_space<vmem>>, vector<20x2xf32>,
    %39 = vector.extract_strided_slice %9 {offsets = [0, 2], sizes = [20, 2], strides = [1, 1]} : vector<20x16xbf16> to vector<20x2xbf16>
    %40 = vector.extract_strided_slice %14 {offsets = [0, 2], sizes = [12, 2], strides = [1, 1]} : vector<12x16xbf16> to vector<12x2xbf16>
    %cst_22 = arith.constant dense<0.000000e+00> : vector<20x12xf32>
    %41 = tpu.matmul %39, %40, %cst_22 {dimension_numbers = #tpu.dot_dimension_numbers<[1], [1], [0], [0], [0, 0, 1, 0], [], []>} : vector<20x2xbf16>, vector<12x2xbf16>, vector<20x12xf32> -> vector<20x12xf32>
    %cst_23 = arith.constant 0.707106769 : f32
    %42 = vector.broadcast %cst_23 : f32 to vector<20x12xf32>
    %43 = arith.mulf %41, %42 : vector<20x12xf32>
    %cst_24 = arith.constant dense<0xFF800000> : vector<20xf32>
    %44 = vector.multi_reduction <maximumf>, %43, %cst_24 [1] : vector<20x12xf32> to vector<20xf32>
    %45 = vector.shape_cast %44 : vector<20xf32> to vector<20x1xf32>
    %46 = vector.broadcast %45 : vector<20x1xf32> to vector<20x12xf32>
    %47 = arith.subf %43, %46 : vector<20x12xf32>
    %48 = math.exp %47 : vector<20x12xf32>
    %cst_25 = arith.constant dense<0.000000e+00> : vector<20xf32>
    %49 = vector.multi_reduction <add>, %48, %cst_25 [1] : vector<20x12xf32> to vector<20xf32>
    %50 = vector.shape_cast %49 : vector<20xf32> to vector<20x1xf32>
    %51 = tpu.reciprocal %50 {approx = true} : vector<20x1xf32> -> vector<20x1xf32>
    %52 = vector.broadcast %51 : vector<20x1xf32> to vector<20x12xf32>
    %53 = arith.mulf %48, %52 : vector<20x12xf32>
    %54 = arith.truncf %53 : vector<20x12xf32> to vector<20x12xbf16>
    %55 = vector.extract_strided_slice %19 {offsets = [0, 2], sizes = [12, 2], strides = [1, 1]} : vector<12x16xbf16> to vector<12x2xbf16>
    %cst_26 = arith.constant dense<0.000000e+00> : vector<20x2xf32>
    %56 = tpu.matmul %54, %55, %cst_26 {dimension_numbers = #tpu.dot_dimension_numbers<[1], [0], [0], [1], [0, 0, 1, 1], [], []>} : vector<20x12xbf16>, vector<12x2xbf16>, vector<20x2xf32> -> vector<20x2xf32>
    %c0_27 = arith.constant 0 : index
    %c2_28 = arith.constant 2 : index
    %57 = vector.load %arg10[%c0_27, %c2_28] : memref<20x16xf32, #tpu.memory_space<vmem>>, vector<20x2xf32>
    tpu.vector_store %arg10[%c0_27, %c2_28], %56 {strides = array<i32>} : memref<20x16xf32, #tpu.memory_space<vmem>>, vector<20x2xf32>,
    %58 = vector.extract_strided_slice %9 {offsets = [0, 4], sizes = [20, 2], strides = [1, 1]} : vector<20x16xbf16> to vector<20x2xbf16>
    %59 = vector.extract_strided_slice %14 {offsets = [0, 4], sizes = [12, 2], strides = [1, 1]} : vector<12x16xbf16> to vector<12x2xbf16>
    %cst_29 = arith.constant dense<0.000000e+00> : vector<20x12xf32>
    %60 = tpu.matmul %58, %59, %cst_29 {dimension_numbers = #tpu.dot_dimension_numbers<[1], [1], [0], [0], [0, 0, 1, 0], [], []>} : vector<20x2xbf16>, vector<12x2xbf16>, vector<20x12xf32> -> vector<20x12xf32>
    %cst_30 = arith.constant 0.707106769 : f32
    %61 = vector.broadcast %cst_30 : f32 to vector<20x12xf32>
    %62 = arith.mulf %60, %61 : vector<20x12xf32>
    %cst_31 = arith.constant dense<0xFF800000> : vector<20xf32>
    %63 = vector.multi_reduction <maximumf>, %62, %cst_31 [1] : vector<20x12xf32> to vector<20xf32>
    %64 = vector.shape_cast %63 : vector<20xf32> to vector<20x1xf32>
    %65 = vector.broadcast %64 : vector<20x1xf32> to vector<20x12xf32>
    %66 = arith.subf %62, %65 : vector<20x12xf32>
    %67 = math.exp %66 : vector<20x12xf32>
    %cst_32 = arith.constant dense<0.000000e+00> : vector<20xf32>
    %68 = vector.multi_reduction <add>, %67, %cst_32 [1] : vector<20x12xf32> to vector<20xf32>
    %69 = vector.shape_cast %68 : vector<20xf32> to vector<20x1xf32>
    %70 = tpu.reciprocal %69 {approx = true} : vector<20x1xf32> -> vector<20x1xf32>
    %71 = vector.broadcast %70 : vector<20x1xf32> to vector<20x12xf32>
    %72 = arith.mulf %67, %71 : vector<20x12xf32>
    %73 = arith.truncf %72 : vector<20x12xf32> to vector<20x12xbf16>
    %74 = vector.extract_strided_slice %19 {offsets = [0, 4], sizes = [12, 2], strides = [1, 1]} : vector<12x16xbf16> to vector<12x2xbf16>
    %cst_33 = arith.constant dense<0.000000e+00> : vector<20x2xf32>
    %75 = tpu.matmul %73, %74, %cst_33 {dimension_numbers = #tpu.dot_dimension_numbers<[1], [0], [0], [1], [0, 0, 1, 1], [], []>} : vector<20x12xbf16>, vector<12x2xbf16>, vector<20x2xf32> -> vector<20x2xf32>
    %c0_34 = arith.constant 0 : index
    %c4 = arith.constant 4 : index
    %76 = vector.load %arg10[%c0_34, %c4] : memref<20x16xf32, #tpu.memory_space<vmem>>, vector<20x2xf32>
    tpu.vector_store %arg10[%c0_34, %c4], %75 {strides = array<i32>} : memref<20x16xf32, #tpu.memory_space<vmem>>, vector<20x2xf32>,
    %77 = vector.extract_strided_slice %9 {offsets = [0, 6], sizes = [20, 2], strides = [1, 1]} : vector<20x16xbf16> to vector<20x2xbf16>
    %78 = vector.extract_strided_slice %14 {offsets = [0, 6], sizes = [12, 2], strides = [1, 1]} : vector<12x16xbf16> to vector<12x2xbf16>
    %cst_35 = arith.constant dense<0.000000e+00> : vector<20x12xf32>
    %79 = tpu.matmul %77, %78, %cst_35 {dimension_numbers = #tpu.dot_dimension_numbers<[1], [1], [0], [0], [0, 0, 1, 0], [], []>} : vector<20x2xbf16>, vector<12x2xbf16>, vector<20x12xf32> -> vector<20x12xf32>
    %cst_36 = arith.constant 0.707106769 : f32
    %80 = vector.broadcast %cst_36 : f32 to vector<20x12xf32>
    %81 = arith.mulf %79, %80 : vector<20x12xf32>
    %cst_37 = arith.constant dense<0xFF800000> : vector<20xf32>
    %82 = vector.multi_reduction <maximumf>, %81, %cst_37 [1] : vector<20x12xf32> to vector<20xf32>
    %83 = vector.shape_cast %82 : vector<20xf32> to vector<20x1xf32>
    %84 = vector.broadcast %83 : vector<20x1xf32> to vector<20x12xf32>
    %85 = arith.subf %81, %84 : vector<20x12xf32>
    %86 = math.exp %85 : vector<20x12xf32>
    %cst_38 = arith.constant dense<0.000000e+00> : vector<20xf32>
    %87 = vector.multi_reduction <add>, %86, %cst_38 [1] : vector<20x12xf32> to vector<20xf32>
    %88 = vector.shape_cast %87 : vector<20xf32> to vector<20x1xf32>
    %89 = tpu.reciprocal %88 {approx = true} : vector<20x1xf32> -> vector<20x1xf32>
    %90 = vector.broadcast %89 : vector<20x1xf32> to vector<20x12xf32>
    %91 = arith.mulf %86, %90 : vector<20x12xf32>
    %92 = arith.truncf %91 : vector<20x12xf32> to vector<20x12xbf16>
    %93 = vector.extract_strided_slice %19 {offsets = [0, 6], sizes = [12, 2], strides = [1, 1]} : vector<12x16xbf16> to vector<12x2xbf16>
    %cst_39 = arith.constant dense<0.000000e+00> : vector<20x2xf32>
    %94 = tpu.matmul %92, %93, %cst_39 {dimension_numbers = #tpu.dot_dimension_numbers<[1], [0], [0], [1], [0, 0, 1, 1], [], []>} : vector<20x12xbf16>, vector<12x2xbf16>, vector<20x2xf32> -> vector<20x2xf32>
    %c0_40 = arith.constant 0 : index
    %c6 = arith.constant 6 : index
    %95 = vector.load %arg10[%c0_40, %c6] : memref<20x16xf32, #tpu.memory_space<vmem>>, vector<20x2xf32>
    tpu.vector_store %arg10[%c0_40, %c6], %94 {strides = array<i32>} : memref<20x16xf32, #tpu.memory_space<vmem>>, vector<20x2xf32>,
    %96 = vector.extract_strided_slice %9 {offsets = [0, 8], sizes = [20, 2], strides = [1, 1]} : vector<20x16xbf16> to vector<20x2xbf16>
    %97 = vector.extract_strided_slice %14 {offsets = [0, 8], sizes = [12, 2], strides = [1, 1]} : vector<12x16xbf16> to vector<12x2xbf16>
    %cst_41 = arith.constant dense<0.000000e+00> : vector<20x12xf32>
    %98 = tpu.matmul %96, %97, %cst_41 {dimension_numbers = #tpu.dot_dimension_numbers<[1], [1], [0], [0], [0, 0, 1, 0], [], []>} : vector<20x2xbf16>, vector<12x2xbf16>, vector<20x12xf32> -> vector<20x12xf32>
    %cst_42 = arith.constant 0.707106769 : f32
    %99 = vector.broadcast %cst_42 : f32 to vector<20x12xf32>
    %100 = arith.mulf %98, %99 : vector<20x12xf32>
    %cst_43 = arith.constant dense<0xFF800000> : vector<20xf32>
    %101 = vector.multi_reduction <maximumf>, %100, %cst_43 [1] : vector<20x12xf32> to vector<20xf32>
    %102 = vector.shape_cast %101 : vector<20xf32> to vector<20x1xf32>
    %103 = vector.broadcast %102 : vector<20x1xf32> to vector<20x12xf32>
    %104 = arith.subf %100, %103 : vector<20x12xf32>
    %105 = math.exp %104 : vector<20x12xf32>
    %cst_44 = arith.constant dense<0.000000e+00> : vector<20xf32>
    %106 = vector.multi_reduction <add>, %105, %cst_44 [1] : vector<20x12xf32> to vector<20xf32>
    %107 = vector.shape_cast %106 : vector<20xf32> to vector<20x1xf32>
    %108 = tpu.reciprocal %107 {approx = true} : vector<20x1xf32> -> vector<20x1xf32>
    %109 = vector.broadcast %108 : vector<20x1xf32> to vector<20x12xf32>
    %110 = arith.mulf %105, %109 : vector<20x12xf32>
    %111 = arith.truncf %110 : vector<20x12xf32> to vector<20x12xbf16>
    %112 = vector.extract_strided_slice %19 {offsets = [0, 8], sizes = [12, 2], strides = [1, 1]} : vector<12x16xbf16> to vector<12x2xbf16>
    %cst_45 = arith.constant dense<0.000000e+00> : vector<20x2xf32>
    %113 = tpu.matmul %111, %112, %cst_45 {dimension_numbers = #tpu.dot_dimension_numbers<[1], [0], [0], [1], [0, 0, 1, 1], [], []>} : vector<20x12xbf16>, vector<12x2xbf16>, vector<20x2xf32> -> vector<20x2xf32>
    %c0_46 = arith.constant 0 : index
    %c8 = arith.constant 8 : index
    %114 = vector.load %arg10[%c0_46, %c8] : memref<20x16xf32, #tpu.memory_space<vmem>>, vector<20x2xf32>
    tpu.vector_store %arg10[%c0_46, %c8], %113 {strides = array<i32>} : memref<20x16xf32, #tpu.memory_space<vmem>>, vector<20x2xf32>,
    %115 = vector.extract_strided_slice %9 {offsets = [0, 10], sizes = [20, 2], strides = [1, 1]} : vector<20x16xbf16> to vector<20x2xbf16>
    %116 = vector.extract_strided_slice %14 {offsets = [0, 10], sizes = [12, 2], strides = [1, 1]} : vector<12x16xbf16> to vector<12x2xbf16>
    %cst_47 = arith.constant dense<0.000000e+00> : vector<20x12xf32>
    %117 = tpu.matmul %115, %116, %cst_47 {dimension_numbers = #tpu.dot_dimension_numbers<[1], [1], [0], [0], [0, 0, 1, 0], [], []>} : vector<20x2xbf16>, vector<12x2xbf16>, vector<20x12xf32> -> vector<20x12xf32>
    %cst_48 = arith.constant 0.707106769 : f32
    %118 = vector.broadcast %cst_48 : f32 to vector<20x12xf32>
    %119 = arith.mulf %117, %118 : vector<20x12xf32>
    %cst_49 = arith.constant dense<0xFF800000> : vector<20xf32>
    %120 = vector.multi_reduction <maximumf>, %119, %cst_49 [1] : vector<20x12xf32> to vector<20xf32>
    %121 = vector.shape_cast %120 : vector<20xf32> to vector<20x1xf32>
    %122 = vector.broadcast %121 : vector<20x1xf32> to vector<20x12xf32>
    %123 = arith.subf %119, %122 : vector<20x12xf32>
    %124 = math.exp %123 : vector<20x12xf32>
    %cst_50 = arith.constant dense<0.000000e+00> : vector<20xf32>
    %125 = vector.multi_reduction <add>, %124, %cst_50 [1] : vector<20x12xf32> to vector<20xf32>
    %126 = vector.shape_cast %125 : vector<20xf32> to vector<20x1xf32>
    %127 = tpu.reciprocal %126 {approx = true} : vector<20x1xf32> -> vector<20x1xf32>
    %128 = vector.broadcast %127 : vector<20x1xf32> to vector<20x12xf32>
    %129 = arith.mulf %124, %128 : vector<20x12xf32>
    %130 = arith.truncf %129 : vector<20x12xf32> to vector<20x12xbf16>
    %131 = vector.extract_strided_slice %19 {offsets = [0, 10], sizes = [12, 2], strides = [1, 1]} : vector<12x16xbf16> to vector<12x2xbf16>
    %cst_51 = arith.constant dense<0.000000e+00> : vector<20x2xf32>
    %132 = tpu.matmul %130, %131, %cst_51 {dimension_numbers = #tpu.dot_dimension_numbers<[1], [0], [0], [1], [0, 0, 1, 1], [], []>} : vector<20x12xbf16>, vector<12x2xbf16>, vector<20x2xf32> -> vector<20x2xf32>
    %c0_52 = arith.constant 0 : index
    %c10 = arith.constant 10 : index
    %133 = vector.load %arg10[%c0_52, %c10] : memref<20x16xf32, #tpu.memory_space<vmem>>, vector<20x2xf32>
    tpu.vector_store %arg10[%c0_52, %c10], %132 {strides = array<i32>} : memref<20x16xf32, #tpu.memory_space<vmem>>, vector<20x2xf32>,
    %134 = vector.extract_strided_slice %9 {offsets = [0, 12], sizes = [20, 2], strides = [1, 1]} : vector<20x16xbf16> to vector<20x2xbf16>
    %135 = vector.extract_strided_slice %14 {offsets = [0, 12], sizes = [12, 2], strides = [1, 1]} : vector<12x16xbf16> to vector<12x2xbf16>
    %cst_53 = arith.constant dense<0.000000e+00> : vector<20x12xf32>
    %136 = tpu.matmul %134, %135, %cst_53 {dimension_numbers = #tpu.dot_dimension_numbers<[1], [1], [0], [0], [0, 0, 1, 0], [], []>} : vector<20x2xbf16>, vector<12x2xbf16>, vector<20x12xf32> -> vector<20x12xf32>
    %cst_54 = arith.constant 0.707106769 : f32
    %137 = vector.broadcast %cst_54 : f32 to vector<20x12xf32>
    %138 = arith.mulf %136, %137 : vector<20x12xf32>
    %cst_55 = arith.constant dense<0xFF800000> : vector<20xf32>
    %139 = vector.multi_reduction <maximumf>, %138, %cst_55 [1] : vector<20x12xf32> to vector<20xf32>
    %140 = vector.shape_cast %139 : vector<20xf32> to vector<20x1xf32>
    %141 = vector.broadcast %140 : vector<20x1xf32> to vector<20x12xf32>
    %142 = arith.subf %138, %141 : vector<20x12xf32>
    %143 = math.exp %142 : vector<20x12xf32>
    %cst_56 = arith.constant dense<0.000000e+00> : vector<20xf32>
    %144 = vector.multi_reduction <add>, %143, %cst_56 [1] : vector<20x12xf32> to vector<20xf32>
    %145 = vector.shape_cast %144 : vector<20xf32> to vector<20x1xf32>
    %146 = tpu.reciprocal %145 {approx = true} : vector<20x1xf32> -> vector<20x1xf32>
    %147 = vector.broadcast %146 : vector<20x1xf32> to vector<20x12xf32>
    %148 = arith.mulf %143, %147 : vector<20x12xf32>
    %149 = arith.truncf %148 : vector<20x12xf32> to vector<20x12xbf16>
    %150 = vector.extract_strided_slice %19 {offsets = [0, 12], sizes = [12, 2], strides = [1, 1]} : vector<12x16xbf16> to vector<12x2xbf16>
    %cst_57 = arith.constant dense<0.000000e+00> : vector<20x2xf32>
    %151 = tpu.matmul %149, %150, %cst_57 {dimension_numbers = #tpu.dot_dimension_numbers<[1], [0], [0], [1], [0, 0, 1, 1], [], []>} : vector<20x12xbf16>, vector<12x2xbf16>, vector<20x2xf32> -> vector<20x2xf32>
    %c0_58 = arith.constant 0 : index
    %c12 = arith.constant 12 : index
    %152 = vector.load %arg10[%c0_58, %c12] : memref<20x16xf32, #tpu.memory_space<vmem>>, vector<20x2xf32>
    tpu.vector_store %arg10[%c0_58, %c12], %151 {strides = array<i32>} : memref<20x16xf32, #tpu.memory_space<vmem>>, vector<20x2xf32>,
    %153 = vector.extract_strided_slice %9 {offsets = [0, 14], sizes = [20, 2], strides = [1, 1]} : vector<20x16xbf16> to vector<20x2xbf16>
    %154 = vector.extract_strided_slice %14 {offsets = [0, 14], sizes = [12, 2], strides = [1, 1]} : vector<12x16xbf16> to vector<12x2xbf16>
    %cst_59 = arith.constant dense<0.000000e+00> : vector<20x12xf32>
    %155 = tpu.matmul %153, %154, %cst_59 {dimension_numbers = #tpu.dot_dimension_numbers<[1], [1], [0], [0], [0, 0, 1, 0], [], []>} : vector<20x2xbf16>, vector<12x2xbf16>, vector<20x12xf32> -> vector<20x12xf32>
    %cst_60 = arith.constant 0.707106769 : f32
    %156 = vector.broadcast %cst_60 : f32 to vector<20x12xf32>
    %157 = arith.mulf %155, %156 : vector<20x12xf32>
    %cst_61 = arith.constant dense<0xFF800000> : vector<20xf32>
    %158 = vector.multi_reduction <maximumf>, %157, %cst_61 [1] : vector<20x12xf32> to vector<20xf32>
    %159 = vector.shape_cast %158 : vector<20xf32> to vector<20x1xf32>
    %160 = vector.broadcast %159 : vector<20x1xf32> to vector<20x12xf32>
    %161 = arith.subf %157, %160 : vector<20x12xf32>
    %162 = math.exp %161 : vector<20x12xf32>
    %cst_62 = arith.constant dense<0.000000e+00> : vector<20xf32>
    %163 = vector.multi_reduction <add>, %162, %cst_62 [1] : vector<20x12xf32> to vector<20xf32>
    %164 = vector.shape_cast %163 : vector<20xf32> to vector<20x1xf32>
    %165 = tpu.reciprocal %164 {approx = true} : vector<20x1xf32> -> vector<20x1xf32>
    %166 = vector.broadcast %165 : vector<20x1xf32> to vector<20x12xf32>
    %167 = arith.mulf %162, %166 : vector<20x12xf32>
    %168 = arith.truncf %167 : vector<20x12xf32> to vector<20x12xbf16>
    %169 = vector.extract_strided_slice %19 {offsets = [0, 14], sizes = [12, 2], strides = [1, 1]} : vector<12x16xbf16> to vector<12x2xbf16>
    %cst_63 = arith.constant dense<0.000000e+00> : vector<20x2xf32>
    %170 = tpu.matmul %168, %169, %cst_63 {dimension_numbers = #tpu.dot_dimension_numbers<[1], [0], [0], [1], [0, 0, 1, 1], [], []>} : vector<20x12xbf16>, vector<12x2xbf16>, vector<20x2xf32> -> vector<20x2xf32>
    %c0_64 = arith.constant 0 : index
    %c14 = arith.constant 14 : index
    %171 = vector.load %arg10[%c0_64, %c14] : memref<20x16xf32, #tpu.memory_space<vmem>>, vector<20x2xf32>
    tpu.vector_store %arg10[%c0_64, %c14], %170 {strides = array<i32>} : memref<20x16xf32, #tpu.memory_space<vmem>>, vector<20x2xf32>,
    %c0_65 = arith.constant 0 : index
    %c0_66 = arith.constant 0 : index
    %172 = vector.load %arg10[%c0_65, %c0_66] : memref<20x16xf32, #tpu.memory_space<vmem>>, vector<20x16xf32>
    %173 = arith.truncf %172 : vector<20x16xf32> to vector<20x16xbf16>
    %c0_67 = arith.constant 0 : index
    %c0_68 = arith.constant 0 : index
    %174 = vector.load %arg6[%c0_67, %c0_68] : memref<16x128xbf16, #tpu.memory_space<vmem>>, vector<16x128xbf16>
    %cst_69 = arith.constant dense<0.000000e+00> : vector<20x128xf32>
    %175 = tpu.matmul %173, %174, %cst_69 {dimension_numbers = #tpu.dot_dimension_numbers<[1], [0], [0], [1], [0, 0, 1, 1], [], []>} : vector<20x16xbf16>, vector<16x128xbf16>, vector<20x128xf32> -> vector<20x128xf32>
    %c0_70 = arith.constant 0 : index
    %c0_71 = arith.constant 0 : index
    %176 = vector.load %arg8[%c0_70, %c0_71] : memref<1x128xf32, #tpu.memory_space<vmem>>, vector<1x128xf32>
    %177 = vector.broadcast %176 : vector<1x128xf32> to vector<20x128xf32>
    %178 = arith.addf %175, %177 : vector<20x128xf32>
    %179 = arith.truncf %178 : vector<20x128xf32> to vector<20x128xbf16>
    %c0_72 = arith.constant 0 : index
    %c0_73 = arith.constant 0 : index
    %180 = vector.load %arg9[%c0_72, %c0_73] : memref<20x128xbf16, #tpu.memory_space<vmem>>, vector<20x128xbf16>
    tpu.vector_store %arg9[%c0_72, %c0_73], %179 {strides = array<i32>} : memref<20x128xbf16, #tpu.memory_space<vmem>>, vector<20x128xbf16>,
    return
  }
  func.func @transform_0(%arg0: i32) -> (i32, i32) {
    %c0_i32 = arith.constant 0 : i32
    %c0_i32_0 = arith.constant 0 : i32
    return %arg0, %c0_i32 : i32, i32
  }
  func.func @transform_1(%arg0: i32) -> (i32, i32) {
    %c0_i32 = arith.constant 0 : i32
    %c0_i32_0 = arith.constant 0 : i32
    %c0_i32_1 = arith.constant 0 : i32
    return %c0_i32, %c0_i32_0 : i32, i32
  }
  func.func @transform_2(%arg0: i32) -> (i32, i32) {
    %c0_i32 = arith.constant 0 : i32
    %c0_i32_0 = arith.constant 0 : i32
    %c0_i32_1 = arith.constant 0 : i32
    return %c0_i32, %c0_i32_0 : i32, i32
  }
  func.func @transform_3(%arg0: i32) -> (i32, i32) {
    %c0_i32 = arith.constant 0 : i32
    %c0_i32_0 = arith.constant 0 : i32
    %c0_i32_1 = arith.constant 0 : i32
    return %c0_i32, %c0_i32_0 : i32, i32
  }
  func.func @transform_4(%arg0: i32) -> (i32, i32) {
    %c0_i32 = arith.constant 0 : i32
    %c0_i32_0 = arith.constant 0 : i32
    %c0_i32_1 = arith.constant 0 : i32
    return %c0_i32, %c0_i32_0 : i32, i32
  }
  func.func @transform_5(%arg0: i32) -> (i32, i32) {
    %c0_i32 = arith.constant 0 : i32
    %c0_i32_0 = arith.constant 0 : i32
    %c0_i32_1 = arith.constant 0 : i32
    return %c0_i32, %c0_i32_0 : i32, i32
  }
  func.func @transform_6(%arg0: i32) -> (i32, i32) {
    %c0_i32 = arith.constant 0 : i32
    %c0_i32_0 = arith.constant 0 : i32
    %c0_i32_1 = arith.constant 0 : i32
    return %c0_i32, %c0_i32_0 : i32, i32
  }
  func.func @transform_7(%arg0: i32) -> (i32, i32) {
    %c0_i32 = arith.constant 0 : i32
    %c0_i32_0 = arith.constant 0 : i32
    %c0_i32_1 = arith.constant 0 : i32
    return %c0_i32, %c0_i32_0 : i32, i32
  }
  func.func @transform_8(%arg0: i32) -> (i32, i32) {
    %c0_i32 = arith.constant 0 : i32
    %c0_i32_0 = arith.constant 0 : i32
    return %arg0, %c0_i32 : i32, i32
  }
}

module attributes {stable_mosaic.version = 11 : i64} {
  func.func @_cross_att_kernel(%arg0: i32, %arg1: memref<12x16xbf16, #tpu.memory_space<vmem>>, %arg2: memref<20x16xbf16, #tpu.memory_space<vmem>>, %arg3: memref<16x16xbf16, #tpu.memory_space<vmem>>, %arg4: memref<16x16xbf16, #tpu.memory_space<vmem>>, %arg5: memref<16x16xbf16, #tpu.memory_space<vmem>>, %arg6: memref<16x128xbf16, #tpu.memory_space<vmem>>, %arg7: memref<3x16xf32, #tpu.memory_space<vmem>>, %arg8: memref<1x128xf32, #tpu.memory_space<vmem>>, %arg9: memref<12x128xbf16, #tpu.memory_space<vmem>>, %arg10: memref<12x16xf32, #tpu.memory_space<vmem>>) attributes {dimension_semantics = [#tpu.dimension_semantics<parallel>], iteration_bounds = array<i64: 1>, scalar_prefetch = 0 : i64, scratch_operands = 1 : i64, tpu.core_type = #tpu.core_type<tc>, window_params = [{transform_indices = @transform_0, window_bounds = array<i64: 12, 16>}, {pipeline_mode = #tpu.pipeline_mode<synchronous>, transform_indices = @transform_1, window_bounds = array<i64: 20, 16>}, {pipeline_mode = #tpu.pipeline_mode<synchronous>, transform_indices = @transform_2, window_bounds = array<i64: 16, 16>}, {pipeline_mode = #tpu.pipeline_mode<synchronous>, transform_indices = @transform_3, window_bounds = array<i64: 16, 16>}, {pipeline_mode = #tpu.pipeline_mode<synchronous>, transform_indices = @transform_4, window_bounds = array<i64: 16, 16>}, {pipeline_mode = #tpu.pipeline_mode<synchronous>, transform_indices = @transform_5, window_bounds = array<i64: 16, 128>}, {pipeline_mode = #tpu.pipeline_mode<synchronous>, transform_indices = @transform_6, window_bounds = array<i64: 3, 16>}, {pipeline_mode = #tpu.pipeline_mode<synchronous>, transform_indices = @transform_7, window_bounds = array<i64: 1, 128>}, {transform_indices = @transform_8, window_bounds = array<i64: 12, 128>}]} {
    %c0 = arith.constant 0 : index
    %c0_0 = arith.constant 0 : index
    %0 = vector.load %arg1[%c0, %c0_0] : memref<12x16xbf16, #tpu.memory_space<vmem>>, vector<12x16xbf16>
    %c0_1 = arith.constant 0 : index
    %c0_2 = arith.constant 0 : index
    %1 = vector.load %arg2[%c0_1, %c0_2] : memref<20x16xbf16, #tpu.memory_space<vmem>>, vector<20x16xbf16>
    %c0_3 = arith.constant 0 : index
    %c0_4 = arith.constant 0 : index
    %2 = vector.load %arg7[%c0_3, %c0_4] : memref<3x16xf32, #tpu.memory_space<vmem>>, vector<1x16xf32>
    %c1 = arith.constant 1 : index
    %c0_5 = arith.constant 0 : index
    %3 = vector.load %arg7[%c1, %c0_5] : memref<3x16xf32, #tpu.memory_space<vmem>>, vector<1x16xf32>
    %c2 = arith.constant 2 : index
    %c0_6 = arith.constant 0 : index
    %4 = vector.load %arg7[%c2, %c0_6] : memref<3x16xf32, #tpu.memory_space<vmem>>, vector<1x16xf32>
    %c0_7 = arith.constant 0 : index
    %c0_8 = arith.constant 0 : index
    %5 = vector.load %arg3[%c0_7, %c0_8] : memref<16x16xbf16, #tpu.memory_space<vmem>>, vector<16x16xbf16>
    %cst = arith.constant dense<0.000000e+00> : vector<12x16xf32>
    %6 = tpu.matmul %0, %5, %cst {dimension_numbers = #tpu.dot_dimension_numbers<[1], [0], [0], [1], [0, 0, 1, 1], [], []>} : vector<12x16xbf16>, vector<16x16xbf16>, vector<12x16xf32> -> vector<12x16xf32>
    %7 = vector.broadcast %2 : vector<1x16xf32> to vector<12x16xf32>
    %8 = arith.addf %6, %7 : vector<12x16xf32>
    %9 = arith.truncf %8 : vector<12x16xf32> to vector<12x16xbf16>
    %c0_9 = arith.constant 0 : index
    %c0_10 = arith.constant 0 : index
    %10 = vector.load %arg4[%c0_9, %c0_10] : memref<16x16xbf16, #tpu.memory_space<vmem>>, vector<16x16xbf16>
    %cst_11 = arith.constant dense<0.000000e+00> : vector<20x16xf32>
    %11 = tpu.matmul %1, %10, %cst_11 {dimension_numbers = #tpu.dot_dimension_numbers<[1], [0], [0], [1], [0, 0, 1, 1], [], []>} : vector<20x16xbf16>, vector<16x16xbf16>, vector<20x16xf32> -> vector<20x16xf32>
    %12 = vector.broadcast %3 : vector<1x16xf32> to vector<20x16xf32>
    %13 = arith.addf %11, %12 : vector<20x16xf32>
    %14 = arith.truncf %13 : vector<20x16xf32> to vector<20x16xbf16>
    %c0_12 = arith.constant 0 : index
    %c0_13 = arith.constant 0 : index
    %15 = vector.load %arg5[%c0_12, %c0_13] : memref<16x16xbf16, #tpu.memory_space<vmem>>, vector<16x16xbf16>
    %cst_14 = arith.constant dense<0.000000e+00> : vector<20x16xf32>
    %16 = tpu.matmul %1, %15, %cst_14 {dimension_numbers = #tpu.dot_dimension_numbers<[1], [0], [0], [1], [0, 0, 1, 1], [], []>} : vector<20x16xbf16>, vector<16x16xbf16>, vector<20x16xf32> -> vector<20x16xf32>
    %17 = vector.broadcast %4 : vector<1x16xf32> to vector<20x16xf32>
    %18 = arith.addf %16, %17 : vector<20x16xf32>
    %19 = arith.truncf %18 : vector<20x16xf32> to vector<20x16xbf16>
    %20 = vector.extract_strided_slice %9 {offsets = [0, 0], sizes = [12, 2], strides = [1, 1]} : vector<12x16xbf16> to vector<12x2xbf16>
    %21 = vector.extract_strided_slice %14 {offsets = [0, 0], sizes = [20, 2], strides = [1, 1]} : vector<20x16xbf16> to vector<20x2xbf16>
    %cst_15 = arith.constant dense<0.000000e+00> : vector<12x20xf32>
    %22 = tpu.matmul %20, %21, %cst_15 {dimension_numbers = #tpu.dot_dimension_numbers<[1], [1], [0], [0], [0, 0, 1, 0], [], []>} : vector<12x2xbf16>, vector<20x2xbf16>, vector<12x20xf32> -> vector<12x20xf32>
    %cst_16 = arith.constant 0.707106769 : f32
    %23 = vector.broadcast %cst_16 : f32 to vector<12x20xf32>
    %24 = arith.mulf %22, %23 : vector<12x20xf32>
    %cst_17 = arith.constant dense<0xFF800000> : vector<12xf32>
    %25 = vector.multi_reduction <maximumf>, %24, %cst_17 [1] : vector<12x20xf32> to vector<12xf32>
    %26 = vector.shape_cast %25 : vector<12xf32> to vector<12x1xf32>
    %27 = vector.broadcast %26 : vector<12x1xf32> to vector<12x20xf32>
    %28 = arith.subf %24, %27 : vector<12x20xf32>
    %29 = math.exp %28 : vector<12x20xf32>
    %cst_18 = arith.constant dense<0.000000e+00> : vector<12xf32>
    %30 = vector.multi_reduction <add>, %29, %cst_18 [1] : vector<12x20xf32> to vector<12xf32>
    %31 = vector.shape_cast %30 : vector<12xf32> to vector<12x1xf32>
    %32 = tpu.reciprocal %31 {approx = true} : vector<12x1xf32> -> vector<12x1xf32>
    %33 = vector.broadcast %32 : vector<12x1xf32> to vector<12x20xf32>
    %34 = arith.mulf %29, %33 : vector<12x20xf32>
    %35 = arith.truncf %34 : vector<12x20xf32> to vector<12x20xbf16>
    %36 = vector.extract_strided_slice %19 {offsets = [0, 0], sizes = [20, 2], strides = [1, 1]} : vector<20x16xbf16> to vector<20x2xbf16>
    %cst_19 = arith.constant dense<0.000000e+00> : vector<12x2xf32>
    %37 = tpu.matmul %35, %36, %cst_19 {dimension_numbers = #tpu.dot_dimension_numbers<[1], [0], [0], [1], [0, 0, 1, 1], [], []>} : vector<12x20xbf16>, vector<20x2xbf16>, vector<12x2xf32> -> vector<12x2xf32>
    %c0_20 = arith.constant 0 : index
    %c0_21 = arith.constant 0 : index
    %38 = vector.load %arg10[%c0_20, %c0_21] : memref<12x16xf32, #tpu.memory_space<vmem>>, vector<12x2xf32>
    tpu.vector_store %arg10[%c0_20, %c0_21], %37 {strides = array<i32>} : memref<12x16xf32, #tpu.memory_space<vmem>>, vector<12x2xf32>,
    %39 = vector.extract_strided_slice %9 {offsets = [0, 2], sizes = [12, 2], strides = [1, 1]} : vector<12x16xbf16> to vector<12x2xbf16>
    %40 = vector.extract_strided_slice %14 {offsets = [0, 2], sizes = [20, 2], strides = [1, 1]} : vector<20x16xbf16> to vector<20x2xbf16>
    %cst_22 = arith.constant dense<0.000000e+00> : vector<12x20xf32>
    %41 = tpu.matmul %39, %40, %cst_22 {dimension_numbers = #tpu.dot_dimension_numbers<[1], [1], [0], [0], [0, 0, 1, 0], [], []>} : vector<12x2xbf16>, vector<20x2xbf16>, vector<12x20xf32> -> vector<12x20xf32>
    %cst_23 = arith.constant 0.707106769 : f32
    %42 = vector.broadcast %cst_23 : f32 to vector<12x20xf32>
    %43 = arith.mulf %41, %42 : vector<12x20xf32>
    %cst_24 = arith.constant dense<0xFF800000> : vector<12xf32>
    %44 = vector.multi_reduction <maximumf>, %43, %cst_24 [1] : vector<12x20xf32> to vector<12xf32>
    %45 = vector.shape_cast %44 : vector<12xf32> to vector<12x1xf32>
    %46 = vector.broadcast %45 : vector<12x1xf32> to vector<12x20xf32>
    %47 = arith.subf %43, %46 : vector<12x20xf32>
    %48 = math.exp %47 : vector<12x20xf32>
    %cst_25 = arith.constant dense<0.000000e+00> : vector<12xf32>
    %49 = vector.multi_reduction <add>, %48, %cst_25 [1] : vector<12x20xf32> to vector<12xf32>
    %50 = vector.shape_cast %49 : vector<12xf32> to vector<12x1xf32>
    %51 = tpu.reciprocal %50 {approx = true} : vector<12x1xf32> -> vector<12x1xf32>
    %52 = vector.broadcast %51 : vector<12x1xf32> to vector<12x20xf32>
    %53 = arith.mulf %48, %52 : vector<12x20xf32>
    %54 = arith.truncf %53 : vector<12x20xf32> to vector<12x20xbf16>
    %55 = vector.extract_strided_slice %19 {offsets = [0, 2], sizes = [20, 2], strides = [1, 1]} : vector<20x16xbf16> to vector<20x2xbf16>
    %cst_26 = arith.constant dense<0.000000e+00> : vector<12x2xf32>
    %56 = tpu.matmul %54, %55, %cst_26 {dimension_numbers = #tpu.dot_dimension_numbers<[1], [0], [0], [1], [0, 0, 1, 1], [], []>} : vector<12x20xbf16>, vector<20x2xbf16>, vector<12x2xf32> -> vector<12x2xf32>
    %c0_27 = arith.constant 0 : index
    %c2_28 = arith.constant 2 : index
    %57 = vector.load %arg10[%c0_27, %c2_28] : memref<12x16xf32, #tpu.memory_space<vmem>>, vector<12x2xf32>
    tpu.vector_store %arg10[%c0_27, %c2_28], %56 {strides = array<i32>} : memref<12x16xf32, #tpu.memory_space<vmem>>, vector<12x2xf32>,
    %58 = vector.extract_strided_slice %9 {offsets = [0, 4], sizes = [12, 2], strides = [1, 1]} : vector<12x16xbf16> to vector<12x2xbf16>
    %59 = vector.extract_strided_slice %14 {offsets = [0, 4], sizes = [20, 2], strides = [1, 1]} : vector<20x16xbf16> to vector<20x2xbf16>
    %cst_29 = arith.constant dense<0.000000e+00> : vector<12x20xf32>
    %60 = tpu.matmul %58, %59, %cst_29 {dimension_numbers = #tpu.dot_dimension_numbers<[1], [1], [0], [0], [0, 0, 1, 0], [], []>} : vector<12x2xbf16>, vector<20x2xbf16>, vector<12x20xf32> -> vector<12x20xf32>
    %cst_30 = arith.constant 0.707106769 : f32
    %61 = vector.broadcast %cst_30 : f32 to vector<12x20xf32>
    %62 = arith.mulf %60, %61 : vector<12x20xf32>
    %cst_31 = arith.constant dense<0xFF800000> : vector<12xf32>
    %63 = vector.multi_reduction <maximumf>, %62, %cst_31 [1] : vector<12x20xf32> to vector<12xf32>
    %64 = vector.shape_cast %63 : vector<12xf32> to vector<12x1xf32>
    %65 = vector.broadcast %64 : vector<12x1xf32> to vector<12x20xf32>
    %66 = arith.subf %62, %65 : vector<12x20xf32>
    %67 = math.exp %66 : vector<12x20xf32>
    %cst_32 = arith.constant dense<0.000000e+00> : vector<12xf32>
    %68 = vector.multi_reduction <add>, %67, %cst_32 [1] : vector<12x20xf32> to vector<12xf32>
    %69 = vector.shape_cast %68 : vector<12xf32> to vector<12x1xf32>
    %70 = tpu.reciprocal %69 {approx = true} : vector<12x1xf32> -> vector<12x1xf32>
    %71 = vector.broadcast %70 : vector<12x1xf32> to vector<12x20xf32>
    %72 = arith.mulf %67, %71 : vector<12x20xf32>
    %73 = arith.truncf %72 : vector<12x20xf32> to vector<12x20xbf16>
    %74 = vector.extract_strided_slice %19 {offsets = [0, 4], sizes = [20, 2], strides = [1, 1]} : vector<20x16xbf16> to vector<20x2xbf16>
    %cst_33 = arith.constant dense<0.000000e+00> : vector<12x2xf32>
    %75 = tpu.matmul %73, %74, %cst_33 {dimension_numbers = #tpu.dot_dimension_numbers<[1], [0], [0], [1], [0, 0, 1, 1], [], []>} : vector<12x20xbf16>, vector<20x2xbf16>, vector<12x2xf32> -> vector<12x2xf32>
    %c0_34 = arith.constant 0 : index
    %c4 = arith.constant 4 : index
    %76 = vector.load %arg10[%c0_34, %c4] : memref<12x16xf32, #tpu.memory_space<vmem>>, vector<12x2xf32>
    tpu.vector_store %arg10[%c0_34, %c4], %75 {strides = array<i32>} : memref<12x16xf32, #tpu.memory_space<vmem>>, vector<12x2xf32>,
    %77 = vector.extract_strided_slice %9 {offsets = [0, 6], sizes = [12, 2], strides = [1, 1]} : vector<12x16xbf16> to vector<12x2xbf16>
    %78 = vector.extract_strided_slice %14 {offsets = [0, 6], sizes = [20, 2], strides = [1, 1]} : vector<20x16xbf16> to vector<20x2xbf16>
    %cst_35 = arith.constant dense<0.000000e+00> : vector<12x20xf32>
    %79 = tpu.matmul %77, %78, %cst_35 {dimension_numbers = #tpu.dot_dimension_numbers<[1], [1], [0], [0], [0, 0, 1, 0], [], []>} : vector<12x2xbf16>, vector<20x2xbf16>, vector<12x20xf32> -> vector<12x20xf32>
    %cst_36 = arith.constant 0.707106769 : f32
    %80 = vector.broadcast %cst_36 : f32 to vector<12x20xf32>
    %81 = arith.mulf %79, %80 : vector<12x20xf32>
    %cst_37 = arith.constant dense<0xFF800000> : vector<12xf32>
    %82 = vector.multi_reduction <maximumf>, %81, %cst_37 [1] : vector<12x20xf32> to vector<12xf32>
    %83 = vector.shape_cast %82 : vector<12xf32> to vector<12x1xf32>
    %84 = vector.broadcast %83 : vector<12x1xf32> to vector<12x20xf32>
    %85 = arith.subf %81, %84 : vector<12x20xf32>
    %86 = math.exp %85 : vector<12x20xf32>
    %cst_38 = arith.constant dense<0.000000e+00> : vector<12xf32>
    %87 = vector.multi_reduction <add>, %86, %cst_38 [1] : vector<12x20xf32> to vector<12xf32>
    %88 = vector.shape_cast %87 : vector<12xf32> to vector<12x1xf32>
    %89 = tpu.reciprocal %88 {approx = true} : vector<12x1xf32> -> vector<12x1xf32>
    %90 = vector.broadcast %89 : vector<12x1xf32> to vector<12x20xf32>
    %91 = arith.mulf %86, %90 : vector<12x20xf32>
    %92 = arith.truncf %91 : vector<12x20xf32> to vector<12x20xbf16>
    %93 = vector.extract_strided_slice %19 {offsets = [0, 6], sizes = [20, 2], strides = [1, 1]} : vector<20x16xbf16> to vector<20x2xbf16>
    %cst_39 = arith.constant dense<0.000000e+00> : vector<12x2xf32>
    %94 = tpu.matmul %92, %93, %cst_39 {dimension_numbers = #tpu.dot_dimension_numbers<[1], [0], [0], [1], [0, 0, 1, 1], [], []>} : vector<12x20xbf16>, vector<20x2xbf16>, vector<12x2xf32> -> vector<12x2xf32>
    %c0_40 = arith.constant 0 : index
    %c6 = arith.constant 6 : index
    %95 = vector.load %arg10[%c0_40, %c6] : memref<12x16xf32, #tpu.memory_space<vmem>>, vector<12x2xf32>
    tpu.vector_store %arg10[%c0_40, %c6], %94 {strides = array<i32>} : memref<12x16xf32, #tpu.memory_space<vmem>>, vector<12x2xf32>,
    %96 = vector.extract_strided_slice %9 {offsets = [0, 8], sizes = [12, 2], strides = [1, 1]} : vector<12x16xbf16> to vector<12x2xbf16>
    %97 = vector.extract_strided_slice %14 {offsets = [0, 8], sizes = [20, 2], strides = [1, 1]} : vector<20x16xbf16> to vector<20x2xbf16>
    %cst_41 = arith.constant dense<0.000000e+00> : vector<12x20xf32>
    %98 = tpu.matmul %96, %97, %cst_41 {dimension_numbers = #tpu.dot_dimension_numbers<[1], [1], [0], [0], [0, 0, 1, 0], [], []>} : vector<12x2xbf16>, vector<20x2xbf16>, vector<12x20xf32> -> vector<12x20xf32>
    %cst_42 = arith.constant 0.707106769 : f32
    %99 = vector.broadcast %cst_42 : f32 to vector<12x20xf32>
    %100 = arith.mulf %98, %99 : vector<12x20xf32>
    %cst_43 = arith.constant dense<0xFF800000> : vector<12xf32>
    %101 = vector.multi_reduction <maximumf>, %100, %cst_43 [1] : vector<12x20xf32> to vector<12xf32>
    %102 = vector.shape_cast %101 : vector<12xf32> to vector<12x1xf32>
    %103 = vector.broadcast %102 : vector<12x1xf32> to vector<12x20xf32>
    %104 = arith.subf %100, %103 : vector<12x20xf32>
    %105 = math.exp %104 : vector<12x20xf32>
    %cst_44 = arith.constant dense<0.000000e+00> : vector<12xf32>
    %106 = vector.multi_reduction <add>, %105, %cst_44 [1] : vector<12x20xf32> to vector<12xf32>
    %107 = vector.shape_cast %106 : vector<12xf32> to vector<12x1xf32>
    %108 = tpu.reciprocal %107 {approx = true} : vector<12x1xf32> -> vector<12x1xf32>
    %109 = vector.broadcast %108 : vector<12x1xf32> to vector<12x20xf32>
    %110 = arith.mulf %105, %109 : vector<12x20xf32>
    %111 = arith.truncf %110 : vector<12x20xf32> to vector<12x20xbf16>
    %112 = vector.extract_strided_slice %19 {offsets = [0, 8], sizes = [20, 2], strides = [1, 1]} : vector<20x16xbf16> to vector<20x2xbf16>
    %cst_45 = arith.constant dense<0.000000e+00> : vector<12x2xf32>
    %113 = tpu.matmul %111, %112, %cst_45 {dimension_numbers = #tpu.dot_dimension_numbers<[1], [0], [0], [1], [0, 0, 1, 1], [], []>} : vector<12x20xbf16>, vector<20x2xbf16>, vector<12x2xf32> -> vector<12x2xf32>
    %c0_46 = arith.constant 0 : index
    %c8 = arith.constant 8 : index
    %114 = vector.load %arg10[%c0_46, %c8] : memref<12x16xf32, #tpu.memory_space<vmem>>, vector<12x2xf32>
    tpu.vector_store %arg10[%c0_46, %c8], %113 {strides = array<i32>} : memref<12x16xf32, #tpu.memory_space<vmem>>, vector<12x2xf32>,
    %115 = vector.extract_strided_slice %9 {offsets = [0, 10], sizes = [12, 2], strides = [1, 1]} : vector<12x16xbf16> to vector<12x2xbf16>
    %116 = vector.extract_strided_slice %14 {offsets = [0, 10], sizes = [20, 2], strides = [1, 1]} : vector<20x16xbf16> to vector<20x2xbf16>
    %cst_47 = arith.constant dense<0.000000e+00> : vector<12x20xf32>
    %117 = tpu.matmul %115, %116, %cst_47 {dimension_numbers = #tpu.dot_dimension_numbers<[1], [1], [0], [0], [0, 0, 1, 0], [], []>} : vector<12x2xbf16>, vector<20x2xbf16>, vector<12x20xf32> -> vector<12x20xf32>
    %cst_48 = arith.constant 0.707106769 : f32
    %118 = vector.broadcast %cst_48 : f32 to vector<12x20xf32>
    %119 = arith.mulf %117, %118 : vector<12x20xf32>
    %cst_49 = arith.constant dense<0xFF800000> : vector<12xf32>
    %120 = vector.multi_reduction <maximumf>, %119, %cst_49 [1] : vector<12x20xf32> to vector<12xf32>
    %121 = vector.shape_cast %120 : vector<12xf32> to vector<12x1xf32>
    %122 = vector.broadcast %121 : vector<12x1xf32> to vector<12x20xf32>
    %123 = arith.subf %119, %122 : vector<12x20xf32>
    %124 = math.exp %123 : vector<12x20xf32>
    %cst_50 = arith.constant dense<0.000000e+00> : vector<12xf32>
    %125 = vector.multi_reduction <add>, %124, %cst_50 [1] : vector<12x20xf32> to vector<12xf32>
    %126 = vector.shape_cast %125 : vector<12xf32> to vector<12x1xf32>
    %127 = tpu.reciprocal %126 {approx = true} : vector<12x1xf32> -> vector<12x1xf32>
    %128 = vector.broadcast %127 : vector<12x1xf32> to vector<12x20xf32>
    %129 = arith.mulf %124, %128 : vector<12x20xf32>
    %130 = arith.truncf %129 : vector<12x20xf32> to vector<12x20xbf16>
    %131 = vector.extract_strided_slice %19 {offsets = [0, 10], sizes = [20, 2], strides = [1, 1]} : vector<20x16xbf16> to vector<20x2xbf16>
    %cst_51 = arith.constant dense<0.000000e+00> : vector<12x2xf32>
    %132 = tpu.matmul %130, %131, %cst_51 {dimension_numbers = #tpu.dot_dimension_numbers<[1], [0], [0], [1], [0, 0, 1, 1], [], []>} : vector<12x20xbf16>, vector<20x2xbf16>, vector<12x2xf32> -> vector<12x2xf32>
    %c0_52 = arith.constant 0 : index
    %c10 = arith.constant 10 : index
    %133 = vector.load %arg10[%c0_52, %c10] : memref<12x16xf32, #tpu.memory_space<vmem>>, vector<12x2xf32>
    tpu.vector_store %arg10[%c0_52, %c10], %132 {strides = array<i32>} : memref<12x16xf32, #tpu.memory_space<vmem>>, vector<12x2xf32>,
    %134 = vector.extract_strided_slice %9 {offsets = [0, 12], sizes = [12, 2], strides = [1, 1]} : vector<12x16xbf16> to vector<12x2xbf16>
    %135 = vector.extract_strided_slice %14 {offsets = [0, 12], sizes = [20, 2], strides = [1, 1]} : vector<20x16xbf16> to vector<20x2xbf16>
    %cst_53 = arith.constant dense<0.000000e+00> : vector<12x20xf32>
    %136 = tpu.matmul %134, %135, %cst_53 {dimension_numbers = #tpu.dot_dimension_numbers<[1], [1], [0], [0], [0, 0, 1, 0], [], []>} : vector<12x2xbf16>, vector<20x2xbf16>, vector<12x20xf32> -> vector<12x20xf32>
    %cst_54 = arith.constant 0.707106769 : f32
    %137 = vector.broadcast %cst_54 : f32 to vector<12x20xf32>
    %138 = arith.mulf %136, %137 : vector<12x20xf32>
    %cst_55 = arith.constant dense<0xFF800000> : vector<12xf32>
    %139 = vector.multi_reduction <maximumf>, %138, %cst_55 [1] : vector<12x20xf32> to vector<12xf32>
    %140 = vector.shape_cast %139 : vector<12xf32> to vector<12x1xf32>
    %141 = vector.broadcast %140 : vector<12x1xf32> to vector<12x20xf32>
    %142 = arith.subf %138, %141 : vector<12x20xf32>
    %143 = math.exp %142 : vector<12x20xf32>
    %cst_56 = arith.constant dense<0.000000e+00> : vector<12xf32>
    %144 = vector.multi_reduction <add>, %143, %cst_56 [1] : vector<12x20xf32> to vector<12xf32>
    %145 = vector.shape_cast %144 : vector<12xf32> to vector<12x1xf32>
    %146 = tpu.reciprocal %145 {approx = true} : vector<12x1xf32> -> vector<12x1xf32>
    %147 = vector.broadcast %146 : vector<12x1xf32> to vector<12x20xf32>
    %148 = arith.mulf %143, %147 : vector<12x20xf32>
    %149 = arith.truncf %148 : vector<12x20xf32> to vector<12x20xbf16>
    %150 = vector.extract_strided_slice %19 {offsets = [0, 12], sizes = [20, 2], strides = [1, 1]} : vector<20x16xbf16> to vector<20x2xbf16>
    %cst_57 = arith.constant dense<0.000000e+00> : vector<12x2xf32>
    %151 = tpu.matmul %149, %150, %cst_57 {dimension_numbers = #tpu.dot_dimension_numbers<[1], [0], [0], [1], [0, 0, 1, 1], [], []>} : vector<12x20xbf16>, vector<20x2xbf16>, vector<12x2xf32> -> vector<12x2xf32>
    %c0_58 = arith.constant 0 : index
    %c12 = arith.constant 12 : index
    %152 = vector.load %arg10[%c0_58, %c12] : memref<12x16xf32, #tpu.memory_space<vmem>>, vector<12x2xf32>
    tpu.vector_store %arg10[%c0_58, %c12], %151 {strides = array<i32>} : memref<12x16xf32, #tpu.memory_space<vmem>>, vector<12x2xf32>,
    %153 = vector.extract_strided_slice %9 {offsets = [0, 14], sizes = [12, 2], strides = [1, 1]} : vector<12x16xbf16> to vector<12x2xbf16>
    %154 = vector.extract_strided_slice %14 {offsets = [0, 14], sizes = [20, 2], strides = [1, 1]} : vector<20x16xbf16> to vector<20x2xbf16>
    %cst_59 = arith.constant dense<0.000000e+00> : vector<12x20xf32>
    %155 = tpu.matmul %153, %154, %cst_59 {dimension_numbers = #tpu.dot_dimension_numbers<[1], [1], [0], [0], [0, 0, 1, 0], [], []>} : vector<12x2xbf16>, vector<20x2xbf16>, vector<12x20xf32> -> vector<12x20xf32>
    %cst_60 = arith.constant 0.707106769 : f32
    %156 = vector.broadcast %cst_60 : f32 to vector<12x20xf32>
    %157 = arith.mulf %155, %156 : vector<12x20xf32>
    %cst_61 = arith.constant dense<0xFF800000> : vector<12xf32>
    %158 = vector.multi_reduction <maximumf>, %157, %cst_61 [1] : vector<12x20xf32> to vector<12xf32>
    %159 = vector.shape_cast %158 : vector<12xf32> to vector<12x1xf32>
    %160 = vector.broadcast %159 : vector<12x1xf32> to vector<12x20xf32>
    %161 = arith.subf %157, %160 : vector<12x20xf32>
    %162 = math.exp %161 : vector<12x20xf32>
    %cst_62 = arith.constant dense<0.000000e+00> : vector<12xf32>
    %163 = vector.multi_reduction <add>, %162, %cst_62 [1] : vector<12x20xf32> to vector<12xf32>
    %164 = vector.shape_cast %163 : vector<12xf32> to vector<12x1xf32>
    %165 = tpu.reciprocal %164 {approx = true} : vector<12x1xf32> -> vector<12x1xf32>
    %166 = vector.broadcast %165 : vector<12x1xf32> to vector<12x20xf32>
    %167 = arith.mulf %162, %166 : vector<12x20xf32>
    %168 = arith.truncf %167 : vector<12x20xf32> to vector<12x20xbf16>
    %169 = vector.extract_strided_slice %19 {offsets = [0, 14], sizes = [20, 2], strides = [1, 1]} : vector<20x16xbf16> to vector<20x2xbf16>
    %cst_63 = arith.constant dense<0.000000e+00> : vector<12x2xf32>
    %170 = tpu.matmul %168, %169, %cst_63 {dimension_numbers = #tpu.dot_dimension_numbers<[1], [0], [0], [1], [0, 0, 1, 1], [], []>} : vector<12x20xbf16>, vector<20x2xbf16>, vector<12x2xf32> -> vector<12x2xf32>
    %c0_64 = arith.constant 0 : index
    %c14 = arith.constant 14 : index
    %171 = vector.load %arg10[%c0_64, %c14] : memref<12x16xf32, #tpu.memory_space<vmem>>, vector<12x2xf32>
    tpu.vector_store %arg10[%c0_64, %c14], %170 {strides = array<i32>} : memref<12x16xf32, #tpu.memory_space<vmem>>, vector<12x2xf32>,
    %c0_65 = arith.constant 0 : index
    %c0_66 = arith.constant 0 : index
    %172 = vector.load %arg10[%c0_65, %c0_66] : memref<12x16xf32, #tpu.memory_space<vmem>>, vector<12x16xf32>
    %173 = arith.truncf %172 : vector<12x16xf32> to vector<12x16xbf16>
    %c0_67 = arith.constant 0 : index
    %c0_68 = arith.constant 0 : index
    %174 = vector.load %arg6[%c0_67, %c0_68] : memref<16x128xbf16, #tpu.memory_space<vmem>>, vector<16x128xbf16>
    %cst_69 = arith.constant dense<0.000000e+00> : vector<12x128xf32>
    %175 = tpu.matmul %173, %174, %cst_69 {dimension_numbers = #tpu.dot_dimension_numbers<[1], [0], [0], [1], [0, 0, 1, 1], [], []>} : vector<12x16xbf16>, vector<16x128xbf16>, vector<12x128xf32> -> vector<12x128xf32>
    %c0_70 = arith.constant 0 : index
    %c0_71 = arith.constant 0 : index
    %176 = vector.load %arg8[%c0_70, %c0_71] : memref<1x128xf32, #tpu.memory_space<vmem>>, vector<1x128xf32>
    %177 = vector.broadcast %176 : vector<1x128xf32> to vector<12x128xf32>
    %178 = arith.addf %175, %177 : vector<12x128xf32>
    %179 = arith.truncf %178 : vector<12x128xf32> to vector<12x128xbf16>
    %c0_72 = arith.constant 0 : index
    %c0_73 = arith.constant 0 : index
    %180 = vector.load %arg9[%c0_72, %c0_73] : memref<12x128xbf16, #tpu.memory_space<vmem>>, vector<12x128xbf16>
    tpu.vector_store %arg9[%c0_72, %c0_73], %179 {strides = array<i32>} : memref<12x128xbf16, #tpu.memory_space<vmem>>, vector<12x128xbf16>,
    return
  }
  func.func @transform_0(%arg0: i32) -> (i32, i32) {
    %c0_i32 = arith.constant 0 : i32
    %c0_i32_0 = arith.constant 0 : i32
    return %arg0, %c0_i32 : i32, i32
  }
  func.func @transform_1(%arg0: i32) -> (i32, i32) {
    %c0_i32 = arith.constant 0 : i32
    %c0_i32_0 = arith.constant 0 : i32
    %c0_i32_1 = arith.constant 0 : i32
    return %c0_i32, %c0_i32_0 : i32, i32
  }
  func.func @transform_2(%arg0: i32) -> (i32, i32) {
    %c0_i32 = arith.constant 0 : i32
    %c0_i32_0 = arith.constant 0 : i32
    %c0_i32_1 = arith.constant 0 : i32
    return %c0_i32, %c0_i32_0 : i32, i32
  }
  func.func @transform_3(%arg0: i32) -> (i32, i32) {
    %c0_i32 = arith.constant 0 : i32
    %c0_i32_0 = arith.constant 0 : i32
    %c0_i32_1 = arith.constant 0 : i32
    return %c0_i32, %c0_i32_0 : i32, i32
  }
  func.func @transform_4(%arg0: i32) -> (i32, i32) {
    %c0_i32 = arith.constant 0 : i32
    %c0_i32_0 = arith.constant 0 : i32
    %c0_i32_1 = arith.constant 0 : i32
    return %c0_i32, %c0_i32_0 : i32, i32
  }
  func.func @transform_5(%arg0: i32) -> (i32, i32) {
    %c0_i32 = arith.constant 0 : i32
    %c0_i32_0 = arith.constant 0 : i32
    %c0_i32_1 = arith.constant 0 : i32
    return %c0_i32, %c0_i32_0 : i32, i32
  }
  func.func @transform_6(%arg0: i32) -> (i32, i32) {
    %c0_i32 = arith.constant 0 : i32
    %c0_i32_0 = arith.constant 0 : i32
    %c0_i32_1 = arith.constant 0 : i32
    return %c0_i32, %c0_i32_0 : i32, i32
  }
  func.func @transform_7(%arg0: i32) -> (i32, i32) {
    %c0_i32 = arith.constant 0 : i32
    %c0_i32_0 = arith.constant 0 : i32
    %c0_i32_1 = arith.constant 0 : i32
    return %c0_i32, %c0_i32_0 : i32, i32
  }
  func.func @transform_8(%arg0: i32) -> (i32, i32) {
    %c0_i32 = arith.constant 0 : i32
    %c0_i32_0 = arith.constant 0 : i32
    return %arg0, %c0_i32 : i32, i32
  }
}

module attributes {stable_mosaic.version = 11 : i64} {
  func.func @_linear_kernel(%arg0: i32, %arg1: memref<32x16xbf16, #tpu.memory_space<vmem>>, %arg2: memref<16x128xbf16, #tpu.memory_space<vmem>>, %arg3: memref<32x128xbf16, #tpu.memory_space<vmem>>) attributes {dimension_semantics = [#tpu.dimension_semantics<parallel>], iteration_bounds = array<i64: 1>, scalar_prefetch = 0 : i64, scratch_operands = 0 : i64, tpu.core_type = #tpu.core_type<tc>, window_params = [{transform_indices = @transform_0, window_bounds = array<i64: 32, 16>}, {pipeline_mode = #tpu.pipeline_mode<synchronous>, transform_indices = @transform_1, window_bounds = array<i64: 16, 128>}, {transform_indices = @transform_2, window_bounds = array<i64: 32, 128>}]} {
    %c0 = arith.constant 0 : index
    %c0_0 = arith.constant 0 : index
    %0 = vector.load %arg1[%c0, %c0_0] : memref<32x16xbf16, #tpu.memory_space<vmem>>, vector<32x16xbf16>
    %c0_1 = arith.constant 0 : index
    %c0_2 = arith.constant 0 : index
    %1 = vector.load %arg2[%c0_1, %c0_2] : memref<16x128xbf16, #tpu.memory_space<vmem>>, vector<16x128xbf16>
    %cst = arith.constant dense<0.000000e+00> : vector<32x128xf32>
    %2 = tpu.matmul %0, %1, %cst {dimension_numbers = #tpu.dot_dimension_numbers<[1], [0], [0], [1], [0, 0, 1, 1], [], []>} : vector<32x16xbf16>, vector<16x128xbf16>, vector<32x128xf32> -> vector<32x128xf32>
    %3 = arith.truncf %2 : vector<32x128xf32> to vector<32x128xbf16>
    %c0_3 = arith.constant 0 : index
    %c0_4 = arith.constant 0 : index
    %4 = vector.load %arg3[%c0_3, %c0_4] : memref<32x128xbf16, #tpu.memory_space<vmem>>, vector<32x128xbf16>
    tpu.vector_store %arg3[%c0_3, %c0_4], %3 {strides = array<i32>} : memref<32x128xbf16, #tpu.memory_space<vmem>>, vector<32x128xbf16>,
    return
  }
  func.func @transform_0(%arg0: i32) -> (i32, i32) {
    %c0_i32 = arith.constant 0 : i32
    %c0_i32_0 = arith.constant 0 : i32
    return %arg0, %c0_i32 : i32, i32
  }
  func.func @transform_1(%arg0: i32) -> (i32, i32) {
    %c0_i32 = arith.constant 0 : i32
    %c0_i32_0 = arith.constant 0 : i32
    %c0_i32_1 = arith.constant 0 : i32
    return %c0_i32, %c0_i32_0 : i32, i32
  }
  func.func @transform_2(%arg0: i32) -> (i32, i32) {
    %c0_i32 = arith.constant 0 : i32
    %c0_i32_0 = arith.constant 0 : i32
    return %arg0, %c0_i32 : i32, i32
  }
}

</mosaic_0001>

<llo_original>
// kernel: gacfv5_forward.8
$region0: #{gacfv5_forward.8}
  #allocation0 [shape = 'u32[]', space=smem, size = 0x4, offset = 0x4, fixed_abs, tag = 'smem constant byte address 0x4 - core index']
  #allocation1 [shape = 'u32[144,128]{1,0:T(1,128)}', space=vmem, size = 0x12000, scoped, tag = 'internal scratch']
  %s0 = inlined_call_operand.vmem [shape: bf16[32,32], index: 0, kind: input, shape index: {}]
  %s1 = inlined_call_operand.vmem [shape: bf16[32,128], index: 1, kind: input, shape index: {}]
  %s2 = inlined_call_operand.vmem [shape: bf16[32,128], index: 2, kind: output, shape index: {}]
  %s3 = sld [smem:[#allocation0]]
  $region18: #{gacfv5_forward.8} parent=0
    _
  %s5 = ssub.s32 1, %s3
  %s6 = scalar_select 0, %s5, %s3
  // Predicated region
  $region2: #{gacfv5_forward.8} parent=0 // pred_check
    _
  $region3: #{gacfv5_forward.8} parent=0 // pred_check_branch
    %8 = sbr.rel (0) target = $region5
  $region4: #{gacfv5_forward.8} parent=0 // pred_region
    _
  $region5: #{gacfv5_forward.8} parent=0 // pred_fallthru
    _
  // Predicated region
  $region6: #{gacfv5_forward.8} parent=0 // pred_check
    _
  $region7: #{gacfv5_forward.8} parent=0 // pred_check_branch
    %10 = sbr.rel (0) target = $region9
  $region8: #{gacfv5_forward.8} parent=0 // pred_region
    _
  $region9: #{gacfv5_forward.8} parent=0 // pred_fallthru
    _
  %v12 = vld [vmem:[%s0] sm:$0xf]
  %v13 = vld [vmem:[%s0 + $0x4] sm:$0xf]
  %v14 = vld [vmem:[%s0 + $0x8] sm:$0xf]
  %v15 = vld [vmem:[%s0 + $0xc] sm:$0xf]
  %v16 = vld [vmem:[%s1] sm:$0xf]
  %v17 = vld [vmem:[%s1 + $0x4] sm:$0xf]
  %v18 = vld [vmem:[%s1 + $0x8] sm:$0xf]
  %v19 = vld [vmem:[%s1 + $0xc] sm:$0xf]
  %v24 = vunpack.c.l.b16 %v12
  %v25 = vunpack.c.l.b16 %v13
  %v26 = vunpack.c.l.b16 %v14
  %v27 = vunpack.c.l.b16 %v15
  %v28 = vpack.c.b16 %v25, %v24
  %v29 = vpack.c.b16 %v27, %v26
  %v34 = vunpack.c.l.b16 %v16
  %v35 = vunpack.c.l.b16 %v17
  %v36 = vunpack.c.l.b16 %v18
  %v37 = vunpack.c.l.b16 %v19
  %v38 = vpack.c.b16 %v35, %v34
  %v39 = vpack.c.b16 %v37, %v36
  %vm42 = vcmask 261120
  %v44 = vsel %vm42, %v28, 0
  %v47 = vsel %vm42, %v29, 0
  %49 = vmatprep.subr.bf16.mxu0 0
  %50 = vmatpush1.bf16.msra.mxu0 %v38
  %51 = vmatprep.subr.bf16.mxu0 0
  %52 = vmatpush1.bf16.msra.mxu0 %v39
  %53 = vmatprep.subr.bf16.mxu0 0
  %54 = vmatpush1.bf16.msra.mxu0 0
  %55 = vmatprep.subr.bf16.mxu0 0
  %56 = vmatpush1.bf16.msra.mxu0 0
  %57 = vmatprep.subr.bf16.mxu0 0
  %58 = vmatpush1.bf16.msra.mxu0 0
  %59 = vmatprep.subr.bf16.mxu0 0
  %60 = vmatpush1.bf16.msra.mxu0 0
  %61 = vmatprep.subr.bf16.mxu0 0
  %62 = vmatpush1.bf16.msra.mxu0 0
  %63 = vmatprep.subr.bf16.mxu0 0
  %64 = vmatpush1.bf16.msra.mxu0 0
  %65 = vmatprep.subr.bf16.mxu0 0
  %66 = vmatpush1.bf16.msra.mxu0 0
  %67 = vmatprep.subr.bf16.mxu0 0
  %68 = vmatpush1.bf16.msra.mxu0 0
  %69 = vmatprep.subr.bf16.mxu0 0
  %70 = vmatpush1.bf16.msra.mxu0 0
  %71 = vmatprep.subr.bf16.mxu0 0
  %72 = vmatpush1.bf16.msra.mxu0 0
  %73 = vmatprep.subr.bf16.mxu0 0
  %74 = vmatpush1.bf16.msra.mxu0 0
  %75 = vmatprep.subr.bf16.mxu0 0
  %76 = vmatpush1.bf16.msra.mxu0 0
  %77 = vmatprep.subr.bf16.mxu0 0
  %78 = vmatpush1.bf16.msra.mxu0 0
  %79 = vmatprep.subr.bf16.mxu0 0
  %80 = vmatpush1.bf16.msra.mxu0 0
  %81 = vmatprep.mubr.bf16.mxu0 0
  %82 = vmatmul.mubr.bf16.gmra.mrb[0].mxu0 %v44
  %v83 = vpop.f32.mrb[0].mxu0
  %v84 = vadd.f32 0.0, %v83
  %v85 = vpop.f32.mrb[0].mxu0
  %v86 = vpop.f32.mrb[0].mxu0
  %v87 = vadd.f32 0.0, %v86
  %v88 = vpop.f32.mrb[0].mxu0
  %89 = vmatprep.mubr.bf16.mxu0 0
  %90 = vmatmul.mubr.bf16.gmra.mrb[0].mxu0 %v47
  %v91 = vpop.f32.mrb[0].mxu0
  %v92 = vadd.f32 0.0, %v91
  %v93 = vpop.f32.mrb[0].mxu0
  %v94 = vpop.f32.mrb[0].mxu0
  %v95 = vadd.f32 0.0, %v94
  %v96 = vpop.f32.mrb[0].mxu0
  %97 = vdwg.mxu0
  %v98 = vpack.c.bf16 %v87, %v84
  %v99 = vpack.c.bf16 %v95, %v92
  %v102 = vunpack.c.l.b16 %v98
  %v103 = vunpack.c.h.b16 %v98
  %v104 = vunpack.c.l.b16 %v99
  %v105 = vunpack.c.h.b16 %v99
  %v106 = vpack.c.b16 %v102, %v102
  %v107 = vpack.c.b16 %v103, %v103
  %v108 = vpack.c.b16 %v104, %v104
  %v109 = vpack.c.b16 %v105, %v105
  %114 = vst [vmem:[%s2] sm:$0xf] %v106
  %115 = vst [vmem:[%s2 + $0x4] sm:$0xf] %v107
  %116 = vst [vmem:[%s2 + $0x8] sm:$0xf] %v108
  %117 = vst [vmem:[%s2 + $0xc] sm:$0xf] %v109
  // Predicated region
  $region10: #{gacfv5_forward.8} parent=0 // pred_check
    _
  $region11: #{gacfv5_forward.8} parent=0 // pred_check_branch
    %119 = sbr.rel (0) target = $region13
  $region12: #{gacfv5_forward.8} parent=0 // pred_region
    _
  $region13: #{gacfv5_forward.8} parent=0 // pred_fallthru
    _
  // Predicated region
  $region14: #{gacfv5_forward.8} parent=0 // pred_check
    _
  $region15: #{gacfv5_forward.8} parent=0 // pred_check_branch
    %121 = sbr.rel (0) target = $region17
  $region16: #{gacfv5_forward.8} parent=0 // pred_region
    _
  $region17: #{gacfv5_forward.8} parent=0 // pred_fallthru
    _

// kernel: gacfv5_forward.11
$region0: #{gacfv5_forward.11}
  #allocation0 [shape = 'u32[]', space=smem, size = 0x4, offset = 0x4, fixed_abs, tag = 'smem constant byte address 0x4 - core index']
  #allocation1 [shape = 'u32[144,128]{1,0:T(1,128)}', space=vmem, size = 0x12000, scoped, tag = 'internal scratch']
  #allocation2 [shape = 'f32[32,256]{1,0:T(8,128)}', space=vmem, size = 0x8000, scoped, tag = 'scratch operand']
  %s0 = inlined_call_operand.vmem [shape: bf16[32,32], index: 0, kind: input, shape index: {}]
  %s1 = inlined_call_operand.vmem [shape: bf16[32,256], index: 1, kind: input, shape index: {}]
  %s2 = inlined_call_operand.vmem [shape: bf16[32,128], index: 2, kind: input, shape index: {}]
  %s3 = inlined_call_operand.vmem [shape: f32[1,256], index: 3, kind: input, shape index: {}]
  %s4 = inlined_call_operand.vmem [shape: bf16[32,128], index: 4, kind: output, shape index: {}]
  %s5 = sld [smem:[#allocation0]]
  $region34: #{gacfv5_forward.11} parent=0
    _
  %s7 = ssub.s32 1, %s5
  %s8 = scalar_select 0, %s7, %s5
  // Predicated region
  $region2: #{gacfv5_forward.11} parent=0 // pred_check
    _
  $region3: #{gacfv5_forward.11} parent=0 // pred_check_branch
    %10 = sbr.rel (0) target = $region5
  $region4: #{gacfv5_forward.11} parent=0 // pred_region
    _
  $region5: #{gacfv5_forward.11} parent=0 // pred_fallthru
    _
  // Predicated region
  $region6: #{gacfv5_forward.11} parent=0 // pred_check
    _
  $region7: #{gacfv5_forward.11} parent=0 // pred_check_branch
    %12 = sbr.rel (0) target = $region9
  $region8: #{gacfv5_forward.11} parent=0 // pred_region
    _
  $region9: #{gacfv5_forward.11} parent=0 // pred_fallthru
    _
  // Predicated region
  $region10: #{gacfv5_forward.11} parent=0 // pred_check
    _
  $region11: #{gacfv5_forward.11} parent=0 // pred_check_branch
    %14 = sbr.rel (0) target = $region13
  $region12: #{gacfv5_forward.11} parent=0 // pred_region
    _
  $region13: #{gacfv5_forward.11} parent=0 // pred_fallthru
    _
  // Predicated region
  $region14: #{gacfv5_forward.11} parent=0 // pred_check
    _
  $region15: #{gacfv5_forward.11} parent=0 // pred_check_branch
    %16 = sbr.rel (0) target = $region17
  $region16: #{gacfv5_forward.11} parent=0 // pred_region
    _
  $region17: #{gacfv5_forward.11} parent=0 // pred_fallthru
    _
  %p18 = scmp.eq.s32.totalorder 0, 0
  // Predicated region
  $region18: #{gacfv5_forward.11} parent=0 // pred_check
    %p19 = pneg %p18
  $region19: #{gacfv5_forward.11} parent=0 // pred_check_branch
    %21 = sbr.rel (%p19) target = $region21
  $region20: #{gacfv5_forward.11} parent=0 // pred_region
    %v22 = vld [vmem:[%s2] sm:$0xf]
    %v23 = vld [vmem:[%s2 + $0x4] sm:$0xf]
    %v24 = vld [vmem:[%s2 + $0x8] sm:$0xf]
    %v25 = vld [vmem:[%s2 + $0xc] sm:$0xf]
    %v26 = vunpack.c.l.bf16 %v22
    %v27 = vunpack.c.l.bf16 %v23
    %v28 = vunpack.c.l.bf16 %v24
    %v29 = vunpack.c.l.bf16 %v25
    %30 = vst [vmem:[#allocation2] sm:$0xff] %v26
    %31 = vst [vmem:[#allocation2 + $0x10] sm:$0xff] %v27
    %32 = vst [vmem:[#allocation2 + $0x20] sm:$0xff] %v28
    %33 = vst [vmem:[#allocation2 + $0x30] sm:$0xff] %v29
    %34 = vst [vmem:[#allocation2 + $0x8] sm:$0xff] 0.0
    %35 = vst [vmem:[#allocation2 + $0x18] sm:$0xff] 0.0
    %36 = vst [vmem:[#allocation2 + $0x28] sm:$0xff] 0.0
    %37 = vst [vmem:[#allocation2 + $0x38] sm:$0xff] 0.0
  $region21: #{gacfv5_forward.11} parent=0 // pred_fallthru
    _
  %v38 = vld [vmem:[#allocation2] sm:$0xff]
  %v39 = vld [vmem:[#allocation2 + $0x8] sm:$0xff]
  %v40 = vld [vmem:[#allocation2 + $0x10] sm:$0xff]
  %v41 = vld [vmem:[#allocation2 + $0x18] sm:$0xff]
  %v42 = vld [vmem:[#allocation2 + $0x20] sm:$0xff]
  %v43 = vld [vmem:[#allocation2 + $0x28] sm:$0xff]
  %v44 = vld [vmem:[#allocation2 + $0x30] sm:$0xff]
  %v45 = vld [vmem:[#allocation2 + $0x38] sm:$0xff]
  %v46 = vld [vmem:[%s0] sm:$0xf]
  %v47 = vld [vmem:[%s0 + $0x4] sm:$0xf]
  %v48 = vld [vmem:[%s0 + $0x8] sm:$0xf]
  %v49 = vld [vmem:[%s0 + $0xc] sm:$0xf]
  %v50 = vld [vmem:[%s1] sm:$0xff]
  %v51 = vld [vmem:[%s1 + $0x8] sm:$0xff]
  %v52 = vld [vmem:[%s1 + $0x10] sm:$0xff]
  %v53 = vld [vmem:[%s1 + $0x18] sm:$0xff]
  %v58 = vunpack.c.l.b16 %v46
  %v59 = vunpack.c.l.b16 %v47
  %v60 = vunpack.c.l.b16 %v48
  %v61 = vunpack.c.l.b16 %v49
  %v62 = vpack.c.b16 %v59, %v58
  %v63 = vpack.c.b16 %v61, %v60
  %v68 = vunpack.c.l.b16 %v50
  %v69 = vunpack.c.h.b16 %v50
  %v70 = vunpack.c.l.b16 %v51
  %v71 = vunpack.c.h.b16 %v51
  %v72 = vunpack.c.l.b16 %v52
  %v73 = vunpack.c.h.b16 %v52
  %v74 = vunpack.c.l.b16 %v53
  %v75 = vunpack.c.h.b16 %v53
  %v76 = vpack.c.b16 %v70, %v68
  %v77 = vpack.c.b16 %v71, %v69
  %v78 = vpack.c.b16 %v74, %v72
  %v79 = vpack.c.b16 %v75, %v73
  %vm84 = vcmask 261120
  %v86 = vsel %vm84, %v62, 0
  %v89 = vsel %vm84, %v63, 0
  %91 = vmatprep.subr.bf16.mxu0 %v77
  %92 = vmatpush1.bf16.msra.mxu0 %v76
  %93 = vmatprep.subr.bf16.mxu0 %v79
  %94 = vmatpush1.bf16.msra.mxu0 %v78
  %95 = vmatprep.subr.bf16.mxu0 0
  %96 = vmatpush1.bf16.msra.mxu0 0
  %97 = vmatprep.subr.bf16.mxu0 0
  %98 = vmatpush1.bf16.msra.mxu0 0
  %99 = vmatprep.subr.bf16.mxu0 0
  %100 = vmatpush1.bf16.msra.mxu0 0
  %101 = vmatprep.subr.bf16.mxu0 0
  %102 = vmatpush1.bf16.msra.mxu0 0
  %103 = vmatprep.subr.bf16.mxu0 0
  %104 = vmatpush1.bf16.msra.mxu0 0
  %105 = vmatprep.subr.bf16.mxu0 0
  %106 = vmatpush1.bf16.msra.mxu0 0
  %107 = vmatprep.subr.bf16.mxu0 0
  %108 = vmatpush1.bf16.msra.mxu0 0
  %109 = vmatprep.subr.bf16.mxu0 0
  %110 = vmatpush1.bf16.msra.mxu0 0
  %111 = vmatprep.subr.bf16.mxu0 0
  %112 = vmatpush1.bf16.msra.mxu0 0
  %113 = vmatprep.subr.bf16.mxu0 0
  %114 = vmatpush1.bf16.msra.mxu0 0
  %115 = vmatprep.subr.bf16.mxu0 0
  %116 = vmatpush1.bf16.msra.mxu0 0
  %117 = vmatprep.subr.bf16.mxu0 0
  %118 = vmatpush1.bf16.msra.mxu0 0
  %119 = vmatprep.subr.bf16.mxu0 0
  %120 = vmatpush1.bf16.msra.mxu0 0
  %121 = vmatprep.subr.bf16.mxu0 0
  %122 = vmatpush1.bf16.msra.mxu0 0
  %123 = vmatprep.mubr.bf16.mxu0 0
  %124 = vmatmul.mubr.bf16.gmra.mrb[0].mxu0 %v86
  %v125 = vpop.f32.mrb[0].mxu0
  %v126 = vadd.f32 0.0, %v125
  %v127 = vpop.f32.mrb[0].mxu0
  %v128 = vadd.f32 0.0, %v127
  %v129 = vpop.f32.mrb[0].mxu0
  %v130 = vadd.f32 0.0, %v129
  %v131 = vpop.f32.mrb[0].mxu0
  %v132 = vadd.f32 0.0, %v131
  %133 = vmatprep.mubr.bf16.mxu0 0
  %134 = vmatmul.mubr.bf16.gmra.mrb[0].mxu0 %v89
  %v135 = vpop.f32.mrb[0].mxu0
  %v136 = vadd.f32 0.0, %v135
  %v137 = vpop.f32.mrb[0].mxu0
  %v138 = vadd.f32 0.0, %v137
  %v139 = vpop.f32.mrb[0].mxu0
  %v140 = vadd.f32 0.0, %v139
  %v141 = vpop.f32.mrb[0].mxu0
  %v142 = vadd.f32 0.0, %v141
  %143 = vdwg.mxu0
  %v144 = vadd.f32 %v38, %v126
  %v145 = vadd.f32 %v39, %v128
  %v146 = vadd.f32 %v40, %v130
  %v147 = vadd.f32 %v41, %v132
  %v148 = vadd.f32 %v42, %v136
  %v149 = vadd.f32 %v43, %v138
  %v150 = vadd.f32 %v44, %v140
  %v151 = vadd.f32 %v45, %v142
  %152 = vst [vmem:[#allocation2] sm:$0xff] %v144
  %153 = vst [vmem:[#allocation2 + $0x8] sm:$0xff] %v145
  %154 = vst [vmem:[#allocation2 + $0x10] sm:$0xff] %v146
  %155 = vst [vmem:[#allocation2 + $0x18] sm:$0xff] %v147
  %156 = vst [vmem:[#allocation2 + $0x20] sm:$0xff] %v148
  %157 = vst [vmem:[#allocation2 + $0x28] sm:$0xff] %v149
  %158 = vst [vmem:[#allocation2 + $0x30] sm:$0xff] %v150
  %159 = vst [vmem:[#allocation2 + $0x38] sm:$0xff] %v151
  // Predicated region
  $region22: #{gacfv5_forward.11} parent=0 // pred_check
    %p160 = pneg %p18
  $region23: #{gacfv5_forward.11} parent=0 // pred_check_branch
    %162 = sbr.rel (%p160) target = $region25
  $region24: #{gacfv5_forward.11} parent=0 // pred_region
    %v163 = vld [vmem:[#allocation2] sm:$0xff]
    %v164 = vld [vmem:[#allocation2 + $0x8] sm:$0xff]
    %v165 = vld [vmem:[#allocation2 + $0x10] sm:$0xff]
    %v166 = vld [vmem:[#allocation2 + $0x18] sm:$0xff]
    %v167 = vld [vmem:[#allocation2 + $0x20] sm:$0xff]
    %v168 = vld [vmem:[#allocation2 + $0x28] sm:$0xff]
    %v169 = vld [vmem:[#allocation2 + $0x30] sm:$0xff]
    %v170 = vld [vmem:[#allocation2 + $0x38] sm:$0xff]
    %v171 = vld [vmem:[%s3] sm:$0x3]
    %v173 = vlaneseq
    %v174 = vshrl.u32 %v173, 7
    %v175 = vsub.s32 0, %v174
    %v176 = vrot.slane %v171, %v175
    %v177 = vlaneseq
    %v178 = vshrl.u32 %v177, 7
    %v179 = vsub.s32 1, %v178
    %v180 = vrot.slane %v171, %v179
    %v183 = vadd.f32 %v163, %v176
    %v184 = vadd.f32 %v164, %v180
    %v185 = vadd.f32 %v165, %v176
    %v186 = vadd.f32 %v166, %v180
    %v187 = vadd.f32 %v167, %v176
    %v188 = vadd.f32 %v168, %v180
    %v189 = vadd.f32 %v169, %v176
    %v190 = vadd.f32 %v170, %v180
    %v191 = vmax.f32 %v183, 0.0
    %v192 = vmax.f32 %v185, 0.0
    %v193 = vmax.f32 %v187, 0.0
    %v194 = vmax.f32 %v189, 0.0
    %v195 = vmax.f32 %v184, 0.0
    %v196 = vmax.f32 %v186, 0.0
    %v197 = vmax.f32 %v188, 0.0
    %v198 = vmax.f32 %v190, 0.0
    %v199 = vadd.f32 %v191, %v195
    %v200 = vadd.f32 %v192, %v196
    %v201 = vadd.f32 %v193, %v197
    %v202 = vadd.f32 %v194, %v198
    %v203 = vpack.c.bf16 %v200, %v199
    %v204 = vpack.c.bf16 %v202, %v201
    %v207 = vunpack.c.l.b16 %v203
    %v208 = vunpack.c.h.b16 %v203
    %v209 = vunpack.c.l.b16 %v204
    %v210 = vunpack.c.h.b16 %v204
    %v211 = vpack.c.b16 %v207, %v207
    %v212 = vpack.c.b16 %v208, %v208
    %v213 = vpack.c.b16 %v209, %v209
    %v214 = vpack.c.b16 %v210, %v210
    %219 = vst [vmem:[%s4] sm:$0xf] %v211
    %220 = vst [vmem:[%s4 + $0x4] sm:$0xf] %v212
    %221 = vst [vmem:[%s4 + $0x8] sm:$0xf] %v213
    %222 = vst [vmem:[%s4 + $0xc] sm:$0xf] %v214
  $region25: #{gacfv5_forward.11} parent=0 // pred_fallthru
    _
  // Predicated region
  $region26: #{gacfv5_forward.11} parent=0 // pred_check
    _
  $region27: #{gacfv5_forward.11} parent=0 // pred_check_branch
    %224 = sbr.rel (0) target = $region29
  $region28: #{gacfv5_forward.11} parent=0 // pred_region
    _
  $region29: #{gacfv5_forward.11} parent=0 // pred_fallthru
    _
  // Predicated region
  $region30: #{gacfv5_forward.11} parent=0 // pred_check
    _
  $region31: #{gacfv5_forward.11} parent=0 // pred_check_branch
    %226 = sbr.rel (0) target = $region33
  $region32: #{gacfv5_forward.11} parent=0 // pred_region
    _
  $region33: #{gacfv5_forward.11} parent=0 // pred_fallthru
    _

// kernel: gacfv5_forward.9
$region0: #{gacfv5_forward.9}
  #allocation0 [shape = 'u32[]', space=smem, size = 0x4, offset = 0x4, fixed_abs, tag = 'smem constant byte address 0x4 - core index']
  #allocation1 [shape = 'u32[144,128]{1,0:T(1,128)}', space=vmem, size = 0x12000, scoped, tag = 'internal scratch']
  #allocation2 [shape = 'f32[12,32]{1,0:T(8,128)}', space=vmem, size = 0x2000, scoped, tag = 'scratch operand']
  %s0 = inlined_call_operand.vmem [shape: bf16[12,32], index: 0, kind: input, shape index: {}]
  %s1 = inlined_call_operand.vmem [shape: bf16[20,32], index: 1, kind: input, shape index: {}]
  %s2 = inlined_call_operand.vmem [shape: bf16[32,32], index: 2, kind: input, shape index: {}]
  %s3 = inlined_call_operand.vmem [shape: bf16[32,32], index: 3, kind: input, shape index: {}]
  %s4 = inlined_call_operand.vmem [shape: bf16[32,32], index: 4, kind: input, shape index: {}]
  %s5 = inlined_call_operand.vmem [shape: bf16[32,128], index: 5, kind: input, shape index: {}]
  %s6 = inlined_call_operand.vmem [shape: f32[3,32], index: 6, kind: input, shape index: {}]
  %s7 = inlined_call_operand.vmem [shape: f32[1,128], index: 7, kind: input, shape index: {}]
  %s8 = inlined_call_operand.vmem [shape: bf16[12,128], index: 8, kind: output, shape index: {}]
  %s9 = sld [smem:[#allocation0]]
  $region42: #{gacfv5_forward.9} parent=0
    _
  %s11 = ssub.s32 1, %s9
  %s12 = scalar_select 0, %s11, %s9
  // Predicated region
  $region2: #{gacfv5_forward.9} parent=0 // pred_check
    _
  $region3: #{gacfv5_forward.9} parent=0 // pred_check_branch
    %14 = sbr.rel (0) target = $region5
  $region4: #{gacfv5_forward.9} parent=0 // pred_region
    _
  $region5: #{gacfv5_forward.9} parent=0 // pred_fallthru
    _
  // Predicated region
  $region6: #{gacfv5_forward.9} parent=0 // pred_check
    _
  $region7: #{gacfv5_forward.9} parent=0 // pred_check_branch
    %16 = sbr.rel (0) target = $region9
  $region8: #{gacfv5_forward.9} parent=0 // pred_region
    _
  $region9: #{gacfv5_forward.9} parent=0 // pred_fallthru
    _
  // Predicated region
  $region10: #{gacfv5_forward.9} parent=0 // pred_check
    _
  $region11: #{gacfv5_forward.9} parent=0 // pred_check_branch
    %18 = sbr.rel (0) target = $region13
  $region12: #{gacfv5_forward.9} parent=0 // pred_region
    _
  $region13: #{gacfv5_forward.9} parent=0 // pred_fallthru
    _
  // Predicated region
  $region14: #{gacfv5_forward.9} parent=0 // pred_check
    _
  $region15: #{gacfv5_forward.9} parent=0 // pred_check_branch
    %20 = sbr.rel (0) target = $region17
  $region16: #{gacfv5_forward.9} parent=0 // pred_region
    _
  $region17: #{gacfv5_forward.9} parent=0 // pred_fallthru
    _
  // Predicated region
  $region18: #{gacfv5_forward.9} parent=0 // pred_check
    _
  $region19: #{gacfv5_forward.9} parent=0 // pred_check_branch
    %22 = sbr.rel (0) target = $region21
  $region20: #{gacfv5_forward.9} parent=0 // pred_region
    _
  $region21: #{gacfv5_forward.9} parent=0 // pred_fallthru
    _
  // Predicated region
  $region22: #{gacfv5_forward.9} parent=0 // pred_check
    _
  $region23: #{gacfv5_forward.9} parent=0 // pred_check_branch
    %24 = sbr.rel (0) target = $region25
  $region24: #{gacfv5_forward.9} parent=0 // pred_region
    _
  $region25: #{gacfv5_forward.9} parent=0 // pred_fallthru
    _
  // Predicated region
  $region26: #{gacfv5_forward.9} parent=0 // pred_check
    _
  $region27: #{gacfv5_forward.9} parent=0 // pred_check_branch
    %26 = sbr.rel (0) target = $region29
  $region28: #{gacfv5_forward.9} parent=0 // pred_region
    _
  $region29: #{gacfv5_forward.9} parent=0 // pred_fallthru
    _
  // Predicated region
  $region30: #{gacfv5_forward.9} parent=0 // pred_check
    _
  $region31: #{gacfv5_forward.9} parent=0 // pred_check_branch
    %28 = sbr.rel (0) target = $region33
  $region32: #{gacfv5_forward.9} parent=0 // pred_region
    _
  $region33: #{gacfv5_forward.9} parent=0 // pred_fallthru
    _
  %v30 = vld [vmem:[%s0] sm:$0xf]
  %v31 = vld [vmem:[%s0 + $0x4] sm:$0x3]
  %v32 = vld [vmem:[%s1] sm:$0xf]
  %v33 = vld [vmem:[%s1 + $0x4] sm:$0xf]
  %v34 = vld [vmem:[%s1 + $0x8] sm:$0x3]
  %v35 = vld [vmem:[%s6] sm:$0x1]
  %v36 = vld [vmem:[%s6 + $0x1] sm:$0x1]
  %v37 = vld [vmem:[%s6 + $0x2] sm:$0x1]
  %v38 = vld [vmem:[%s2] sm:$0xf]
  %v39 = vld [vmem:[%s2 + $0x4] sm:$0xf]
  %v40 = vld [vmem:[%s2 + $0x8] sm:$0xf]
  %v41 = vld [vmem:[%s2 + $0xc] sm:$0xf]
  %v42 = vlaneseq
  %v43 = vshrl.u32 %v42, 7
  %v44 = vsub.s32 0, %v43
  %v45 = vrot.slane %v35, %v44
  %v48 = vunpack.c.l.b16 %v30
  %v49 = vunpack.c.l.b16 %v31
  %v50 = vpack.c.b16 %v49, %v48
  %v55 = vunpack.c.l.b16 %v38
  %v56 = vunpack.c.l.b16 %v39
  %v57 = vunpack.c.l.b16 %v40
  %v58 = vunpack.c.l.b16 %v41
  %v59 = vpack.c.b16 %v56, %v55
  %v60 = vpack.c.b16 %v58, %v57
  %vm63 = vcmask 261120
  %v65 = vsel %vm63, %v50, 0
  %67 = vmatprep.subr.bf16.mxu0 0
  %68 = vmatpush1.bf16.msra.mxu0 %v59
  %69 = vmatprep.subr.bf16.mxu0 0
  %70 = vmatpush1.bf16.msra.mxu0 %v60
  %71 = vmatprep.subr.bf16.mxu0 0
  %72 = vmatpush1.bf16.msra.mxu0 0
  %73 = vmatprep.subr.bf16.mxu0 0
  %74 = vmatpush1.bf16.msra.mxu0 0
  %75 = vmatprep.subr.bf16.mxu0 0
  %76 = vmatpush1.bf16.msra.mxu0 0
  %77 = vmatprep.subr.bf16.mxu0 0
  %78 = vmatpush1.bf16.msra.mxu0 0
  %79 = vmatprep.subr.bf16.mxu0 0
  %80 = vmatpush1.bf16.msra.mxu0 0
  %81 = vmatprep.subr.bf16.mxu0 0
  %82 = vmatpush1.bf16.msra.mxu0 0
  %83 = vmatprep.subr.bf16.mxu0 0
  %84 = vmatpush1.bf16.msra.mxu0 0
  %85 = vmatprep.subr.bf16.mxu0 0
  %86 = vmatpush1.bf16.msra.mxu0 0
  %87 = vmatprep.subr.bf16.mxu0 0
  %88 = vmatpush1.bf16.msra.mxu0 0
  %89 = vmatprep.subr.bf16.mxu0 0
  %90 = vmatpush1.bf16.msra.mxu0 0
  %91 = vmatprep.subr.bf16.mxu0 0
  %92 = vmatpush1.bf16.msra.mxu0 0
  %93 = vmatprep.subr.bf16.mxu0 0
  %94 = vmatpush1.bf16.msra.mxu0 0
  %95 = vmatprep.subr.bf16.mxu0 0
  %96 = vmatpush1.bf16.msra.mxu0 0
  %97 = vmatprep.subr.bf16.mxu0 0
  %98 = vmatpush1.bf16.msra.mxu0 0
  %99 = vmatprep.mubr.bf16.mxu0 0
  %100 = vmatmul.mubr.bf16.gmra.mrb[0].mxu0 %v65
  %v101 = vpop.f32.mrb[0].mxu0
  %v102 = vadd.f32 %v45, %v101
  %v103 = vpop.f32.mrb[0].mxu0
  %v104 = vpop.f32.mrb[0].mxu0
  %v105 = vadd.f32 %v45, %v104
  %v106 = vpop.f32.mrb[0].mxu0
  %107 = vdwg.mxu0
  %v108 = vpack.c.bf16 %v105, %v102
  %v109 = vld [vmem:[%s3] sm:$0xf]
  %v110 = vld [vmem:[%s3 + $0x4] sm:$0xf]
  %v111 = vld [vmem:[%s3 + $0x8] sm:$0xf]
  %v112 = vld [vmem:[%s3 + $0xc] sm:$0xf]
  %v113 = vlaneseq
  %v114 = vshrl.u32 %v113, 7
  %v115 = vsub.s32 0, %v114
  %v116 = vrot.slane %v36, %v115
  %v120 = vunpack.c.l.b16 %v32
  %v121 = vunpack.c.l.b16 %v33
  %v122 = vunpack.c.l.b16 %v34
  %v123 = vpack.c.b16 %v121, %v120
  %v124 = vpack.c.b16 %v122, %v122
  %v129 = vunpack.c.l.b16 %v109
  %v130 = vunpack.c.l.b16 %v110
  %v131 = vunpack.c.l.b16 %v111
  %v132 = vunpack.c.l.b16 %v112
  %v133 = vpack.c.b16 %v130, %v129
  %v134 = vpack.c.b16 %v132, %v131
  %v138 = vsel %vm63, %v123, 0
  %v141 = vsel %vm63, %v124, 0
  %143 = vmatprep.subr.bf16.mxu0 0
  %144 = vmatpush1.bf16.msra.mxu0 %v133
  %145 = vmatprep.subr.bf16.mxu0 0
  %146 = vmatpush1.bf16.msra.mxu0 %v134
  %147 = vmatprep.subr.bf16.mxu0 0
  %148 = vmatpush1.bf16.msra.mxu0 0
  %149 = vmatprep.subr.bf16.mxu0 0
  %150 = vmatpush1.bf16.msra.mxu0 0
  %151 = vmatprep.subr.bf16.mxu0 0
  %152 = vmatpush1.bf16.msra.mxu0 0
  %153 = vmatprep.subr.bf16.mxu0 0
  %154 = vmatpush1.bf16.msra.mxu0 0
  %155 = vmatprep.subr.bf16.mxu0 0
  %156 = vmatpush1.bf16.msra.mxu0 0
  %157 = vmatprep.subr.bf16.mxu0 0
  %158 = vmatpush1.bf16.msra.mxu0 0
  %159 = vmatprep.subr.bf16.mxu0 0
  %160 = vmatpush1.bf16.msra.mxu0 0
  %161 = vmatprep.subr.bf16.mxu0 0
  %162 = vmatpush1.bf16.msra.mxu0 0
  %163 = vmatprep.subr.bf16.mxu0 0
  %164 = vmatpush1.bf16.msra.mxu0 0
  %165 = vmatprep.subr.bf16.mxu0 0
  %166 = vmatpush1.bf16.msra.mxu0 0
  %167 = vmatprep.subr.bf16.mxu0 0
  %168 = vmatpush1.bf16.msra.mxu0 0
  %169 = vmatprep.subr.bf16.mxu0 0
  %170 = vmatpush1.bf16.msra.mxu0 0
  %171 = vmatprep.subr.bf16.mxu0 0
  %172 = vmatpush1.bf16.msra.mxu0 0
  %173 = vmatprep.subr.bf16.mxu0 0
  %174 = vmatpush1.bf16.msra.mxu0 0
  %175 = vmatprep.mubr.bf16.mxu0 0
  %176 = vmatmul.mubr.bf16.gmra.mrb[0].mxu0 %v138
  %v177 = vpop.f32.mrb[0].mxu0
  %v178 = vadd.f32 %v116, %v177
  %v179 = vpop.f32.mrb[0].mxu0
  %v180 = vpop.f32.mrb[0].mxu0
  %v181 = vadd.f32 %v116, %v180
  %v182 = vpop.f32.mrb[0].mxu0
  %183 = vmatprep.mubr.bf16.mxu0 0
  %184 = vmatmul.mubr.bf16.gmra.mrb[0].mxu0 %v141
  %v185 = vpop.f32.mrb[0].mxu0
  %v186 = vadd.f32 %v116, %v185
  %v187 = vpop.f32.mrb[0].mxu0
  %v188 = vpop.f32.mrb[0].mxu0
  %v189 = vpop.f32.mrb[0].mxu0
  %190 = vdwg.mxu0
  %v191 = vpack.c.bf16 %v181, %v178
  %v192 = vpack.c.bf16 %v186, %v186
  %v193 = vld [vmem:[%s4] sm:$0xf]
  %v194 = vld [vmem:[%s4 + $0x4] sm:$0xf]
  %v195 = vld [vmem:[%s4 + $0x8] sm:$0xf]
  %v196 = vld [vmem:[%s4 + $0xc] sm:$0xf]
  %v197 = vlaneseq
  %v198 = vshrl.u32 %v197, 7
  %v199 = vsub.s32 0, %v198
  %v200 = vrot.slane %v37, %v199
  %v205 = vunpack.c.l.b16 %v193
  %v206 = vunpack.c.l.b16 %v194
  %v207 = vunpack.c.l.b16 %v195
  %v208 = vunpack.c.l.b16 %v196
  %v209 = vpack.c.b16 %v206, %v205
  %v210 = vpack.c.b16 %v208, %v207
  %213 = vmatprep.subr.bf16.mxu0 0
  %214 = vmatpush1.bf16.msra.mxu0 %v209
  %215 = vmatprep.subr.bf16.mxu0 0
  %216 = vmatpush1.bf16.msra.mxu0 %v210
  %217 = vmatprep.subr.bf16.mxu0 0
  %218 = vmatpush1.bf16.msra.mxu0 0
  %219 = vmatprep.subr.bf16.mxu0 0
  %220 = vmatpush1.bf16.msra.mxu0 0
  %221 = vmatprep.subr.bf16.mxu0 0
  %222 = vmatpush1.bf16.msra.mxu0 0
  %223 = vmatprep.subr.bf16.mxu0 0
  %224 = vmatpush1.bf16.msra.mxu0 0
  %225 = vmatprep.subr.bf16.mxu0 0
  %226 = vmatpush1.bf16.msra.mxu0 0
  %227 = vmatprep.subr.bf16.mxu0 0
  %228 = vmatpush1.bf16.msra.mxu0 0
  %229 = vmatprep.subr.bf16.mxu0 0
  %230 = vmatpush1.bf16.msra.mxu0 0
  %231 = vmatprep.subr.bf16.mxu0 0
  %232 = vmatpush1.bf16.msra.mxu0 0
  %233 = vmatprep.subr.bf16.mxu0 0
  %234 = vmatpush1.bf16.msra.mxu0 0
  %235 = vmatprep.subr.bf16.mxu0 0
  %236 = vmatpush1.bf16.msra.mxu0 0
  %237 = vmatprep.subr.bf16.mxu0 0
  %238 = vmatpush1.bf16.msra.mxu0 0
  %239 = vmatprep.subr.bf16.mxu0 0
  %240 = vmatpush1.bf16.msra.mxu0 0
  %241 = vmatprep.subr.bf16.mxu0 0
  %242 = vmatpush1.bf16.msra.mxu0 0
  %243 = vmatprep.subr.bf16.mxu0 0
  %244 = vmatpush1.bf16.msra.mxu0 0
  %245 = vmatprep.mubr.bf16.mxu0 0
  %246 = vmatmul.mubr.bf16.gmra.mrb[0].mxu0 %v138
  %v247 = vpop.f32.mrb[0].mxu0
  %v248 = vadd.f32 %v200, %v247
  %v249 = vpop.f32.mrb[0].mxu0
  %v250 = vpop.f32.mrb[0].mxu0
  %v251 = vadd.f32 %v200, %v250
  %v252 = vpop.f32.mrb[0].mxu0
  %253 = vmatprep.mubr.bf16.mxu0 0
  %254 = vmatmul.mubr.bf16.gmra.mrb[0].mxu0 %v141
  %v255 = vpop.f32.mrb[0].mxu0
  %v256 = vadd.f32 %v200, %v255
  %v257 = vpop.f32.mrb[0].mxu0
  %v258 = vpop.f32.mrb[0].mxu0
  %v259 = vpop.f32.mrb[0].mxu0
  %260 = vdwg.mxu0
  %v261 = vpack.c.bf16 %v251, %v248
  %v262 = vpack.c.bf16 %v256, %v256
  %vm263 = vcmask 31744
  %v265 = vsel %vm263, %v108, 0
  %v268 = vsel %vm263, %v191, 0
  %v271 = vsel %vm263, %v192, 0
  %273 = vmatprep.subr.bf16.mxu0 0
  %274 = vmatpush1.bf16.xpose.msra.mxu0 %v268
  %275 = vmatprep.subr.bf16.mxu0 0
  %276 = vmatpush1.bf16.xpose.msra.mxu0 %v271
  %277 = vmatprep.subr.bf16.mxu0 0
  %278 = vmatpush1.bf16.xpose.msra.mxu0 0
  %279 = vmatprep.subr.bf16.mxu0 0
  %280 = vmatpush1.bf16.xpose.msra.mxu0 0
  %281 = vmatprep.subr.bf16.mxu0 0
  %282 = vmatpush1.bf16.xpose.msra.mxu0 0
  %283 = vmatprep.subr.bf16.mxu0 0
  %284 = vmatpush1.bf16.xpose.msra.mxu0 0
  %285 = vmatprep.subr.bf16.mxu0 0
  %286 = vmatpush1.bf16.xpose.msra.mxu0 0
  %287 = vmatprep.subr.bf16.mxu0 0
  %288 = vmatpush1.bf16.xpose.msra.mxu0 0
  %289 = vmatprep.subr.bf16.mxu0 0
  %290 = vmatpush1.bf16.xpose.msra.mxu0 0
  %291 = vmatprep.subr.bf16.mxu0 0
  %292 = vmatpush1.bf16.xpose.msra.mxu0 0
  %293 = vmatprep.subr.bf16.mxu0 0
  %294 = vmatpush1.bf16.xpose.msra.mxu0 0
  %295 = vmatprep.subr.bf16.mxu0 0
  %296 = vmatpush1.bf16.xpose.msra.mxu0 0
  %297 = vmatprep.subr.bf16.mxu0 0
  %298 = vmatpush1.bf16.xpose.msra.mxu0 0
  %299 = vmatprep.subr.bf16.mxu0 0
  %300 = vmatpush1.bf16.xpose.msra.mxu0 0
  %301 = vmatprep.subr.bf16.mxu0 0
  %302 = vmatpush1.bf16.xpose.msra.mxu0 0
  %303 = vmatprep.subr.bf16.mxu0 0
  %304 = vmatpush1.bf16.xpose.msra.mxu0 0
  %305 = vmatprep.mubr.bf16.mxu0 0
  %306 = vmatmul.mubr.bf16.gmra.mrb[0].mxu0 %v265
  %v307 = vpop.f32.mrb[0].mxu0
  %v308 = vadd.f32 0.0, %v307
  %v309 = vpop.f32.mrb[0].mxu0
  %v310 = vpop.f32.mrb[0].mxu0
  %v311 = vadd.f32 0.0, %v310
  %v312 = vpop.f32.mrb[0].mxu0
  %313 = vdwg.mxu0
  %v314 = vmul.f32 %v308, 0.5
  %v315 = vmul.f32 %v311, 0.5
  %vm316 = vcmask 162816
  %v317 = vsel %vm316, %v314, -inf
  %318 = vmax.xlane.f32.xlu0 %v317
  %v319 = vpop.xlane.xlu0 %318
  %vm320 = vcmask 158720
  %v321 = vsel %vm320, %v315, -inf
  %322 = vmax.xlane.f32.xlu0 %v321
  %v323 = vpop.xlane.xlu0 %322
  %v324 = vsub.f32 %v314, %v319
  %v325 = vsub.f32 %v315, %v323
  %v326 = vmul.f32 %v324, 1.442695
  %v327 = vpow.pop %v326
  %v328 = vmul.f32 %v325, 1.442695
  %v329 = vpow.pop %v328
  %v330 = vsel %vm316, %v327, 0.0
  %331 = vadd.xlane.f32.xlu0 %v330
  %v332 = vpop.xlane.xlu0 %331
  %v333 = vsel %vm320, %v329, 0.0
  %334 = vadd.xlane.f32.xlu0 %v333
  %v335 = vpop.xlane.xlu0 %334
  %v336 = vrcp.pop %v332
  %v337 = vrcp.pop %v335
  %v338 = vmul.f32 %v327, %v336
  %v339 = vmul.f32 %v329, %v337
  %v340 = vpack.c.bf16 %v339, %v338
  %v342 = vsel %vm316, %v340, 0
  %vm344 = vcmask 1041408
  %v346 = vsel %vm344, %v262, 0
  %348 = vmatprep.subr.bf16.mxu0 0
  %349 = vmatpush1.bf16.msra.mxu0 %v261
  %350 = vmatprep.subr.bf16.mxu0 0
  %351 = vmatpush1.bf16.msra.mxu0 %v346
  %352 = vmatprep.subr.bf16.mxu0 0
  %353 = vmatpush1.bf16.msra.mxu0 0
  %354 = vmatprep.subr.bf16.mxu0 0
  %355 = vmatpush1.bf16.msra.mxu0 0
  %356 = vmatprep.subr.bf16.mxu0 0
  %357 = vmatpush1.bf16.msra.mxu0 0
  %358 = vmatprep.subr.bf16.mxu0 0
  %359 = vmatpush1.bf16.msra.mxu0 0
  %360 = vmatprep.subr.bf16.mxu0 0
  %361 = vmatpush1.bf16.msra.mxu0 0
  %362 = vmatprep.subr.bf16.mxu0 0
  %363 = vmatpush1.bf16.msra.mxu0 0
  %364 = vmatprep.subr.bf16.mxu0 0
  %365 = vmatpush1.bf16.msra.mxu0 0
  %366 = vmatprep.subr.bf16.mxu0 0
  %367 = vmatpush1.bf16.msra.mxu0 0
  %368 = vmatprep.subr.bf16.mxu0 0
  %369 = vmatpush1.bf16.msra.mxu0 0
  %370 = vmatprep.subr.bf16.mxu0 0
  %371 = vmatpush1.bf16.msra.mxu0 0
  %372 = vmatprep.subr.bf16.mxu0 0
  %373 = vmatpush1.bf16.msra.mxu0 0
  %374 = vmatprep.subr.bf16.mxu0 0
  %375 = vmatpush1.bf16.msra.mxu0 0
  %376 = vmatprep.subr.bf16.mxu0 0
  %377 = vmatpush1.bf16.msra.mxu0 0
  %378 = vmatprep.subr.bf16.mxu0 0
  %379 = vmatpush1.bf16.msra.mxu0 0
  %380 = vmatprep.mubr.bf16.mxu0 0
  %381 = vmatmul.mubr.bf16.gmra.mrb[0].mxu0 %v342
  %v382 = vpop.f32.mrb[0].mxu0
  %v383 = vadd.f32 0.0, %v382
  %v384 = vpop.f32.mrb[0].mxu0
  %v385 = vpop.f32.mrb[0].mxu0
  %v386 = vadd.f32 0.0, %v385
  %v387 = vpop.f32.mrb[0].mxu0
  %388 = vdwg.mxu0
  %389 = vst.msk [vmem:[#allocation2] sm:$0xff] %vm263, %v383
  %vm390 = vcmask 27648
  %391 = vst.msk [vmem:[#allocation2 + $0x8] sm:$0xf] %vm390, %v386
  %393 = vrot.lane.b32.xlu0 %v108, 124
  %v394 = vpop.permute.xlu0 %393
  %397 = vrot.lane.b32.xlu0 %v191, 124
  %v398 = vpop.permute.xlu0 %397
  %399 = vrot.lane.b32.xlu0 %v192, 124
  %v400 = vpop.permute.xlu0 %399
  %v402 = vsel %vm263, %v394, 0
  %v405 = vsel %vm263, %v398, 0
  %v408 = vsel %vm263, %v400, 0
  %410 = vmatprep.subr.bf16.mxu0 0
  %411 = vmatpush1.bf16.xpose.msra.mxu0 %v405
  %412 = vmatprep.subr.bf16.mxu0 0
  %413 = vmatpush1.bf16.xpose.msra.mxu0 %v408
  %414 = vmatprep.subr.bf16.mxu0 0
  %415 = vmatpush1.bf16.xpose.msra.mxu0 0
  %416 = vmatprep.subr.bf16.mxu0 0
  %417 = vmatpush1.bf16.xpose.msra.mxu0 0
  %418 = vmatprep.subr.bf16.mxu0 0
  %419 = vmatpush1.bf16.xpose.msra.mxu0 0
  %420 = vmatprep.subr.bf16.mxu0 0
  %421 = vmatpush1.bf16.xpose.msra.mxu0 0
  %422 = vmatprep.subr.bf16.mxu0 0
  %423 = vmatpush1.bf16.xpose.msra.mxu0 0
  %424 = vmatprep.subr.bf16.mxu0 0
  %425 = vmatpush1.bf16.xpose.msra.mxu0 0
  %426 = vmatprep.subr.bf16.mxu0 0
  %427 = vmatpush1.bf16.xpose.msra.mxu0 0
  %428 = vmatprep.subr.bf16.mxu0 0
  %429 = vmatpush1.bf16.xpose.msra.mxu0 0
  %430 = vmatprep.subr.bf16.mxu0 0
  %431 = vmatpush1.bf16.xpose.msra.mxu0 0
  %432 = vmatprep.subr.bf16.mxu0 0
  %433 = vmatpush1.bf16.xpose.msra.mxu0 0
  %434 = vmatprep.subr.bf16.mxu0 0
  %435 = vmatpush1.bf16.xpose.msra.mxu0 0
  %436 = vmatprep.subr.bf16.mxu0 0
  %437 = vmatpush1.bf16.xpose.msra.mxu0 0
  %438 = vmatprep.subr.bf16.mxu0 0
  %439 = vmatpush1.bf16.xpose.msra.mxu0 0
  %440 = vmatprep.subr.bf16.mxu0 0
  %441 = vmatpush1.bf16.xpose.msra.mxu0 0
  %442 = vmatprep.mubr.bf16.mxu0 0
  %443 = vmatmul.mubr.bf16.gmra.mrb[0].mxu0 %v402
  %v444 = vpop.f32.mrb[0].mxu0
  %v445 = vadd.f32 0.0, %v444
  %v446 = vpop.f32.mrb[0].mxu0
  %v447 = vpop.f32.mrb[0].mxu0
  %v448 = vadd.f32 0.0, %v447
  %v449 = vpop.f32.mrb[0].mxu0
  %450 = vdwg.mxu0
  %v451 = vmul.f32 %v445, 0.5
  %v452 = vmul.f32 %v448, 0.5
  %v453 = vsel %vm316, %v451, -inf
  %454 = vmax.xlane.f32.xlu0 %v453
  %v455 = vpop.xlane.xlu0 %454
  %v456 = vsel %vm320, %v452, -inf
  %457 = vmax.xlane.f32.xlu0 %v456
  %v458 = vpop.xlane.xlu0 %457
  %v459 = vsub.f32 %v451, %v455
  %v460 = vsub.f32 %v452, %v458
  %v461 = vmul.f32 %v459, 1.442695
  %v462 = vpow.pop %v461
  %v463 = vmul.f32 %v460, 1.442695
  %v464 = vpow.pop %v463
  %v465 = vsel %vm316, %v462, 0.0
  %466 = vadd.xlane.f32.xlu0 %v465
  %v467 = vpop.xlane.xlu0 %466
  %v468 = vsel %vm320, %v464, 0.0
  %469 = vadd.xlane.f32.xlu0 %v468
  %v470 = vpop.xlane.xlu0 %469
  %v471 = vrcp.pop %v467
  %v472 = vrcp.pop %v470
  %v473 = vmul.f32 %v462, %v471
  %v474 = vmul.f32 %v464, %v472
  %v475 = vpack.c.bf16 %v474, %v473
  %478 = vrot.lane.b32.xlu0 %v261, 124
  %v479 = vpop.permute.xlu0 %478
  %480 = vrot.lane.b32.xlu0 %v262, 124
  %v481 = vpop.permute.xlu0 %480
  %v484 = vsel %vm316, %v475, 0
  %v487 = vsel %vm344, %v481, 0
  %489 = vmatprep.subr.bf16.mxu0 0
  %490 = vmatpush1.bf16.msra.mxu0 %v479
  %491 = vmatprep.subr.bf16.mxu0 0
  %492 = vmatpush1.bf16.msra.mxu0 %v487
  %493 = vmatprep.subr.bf16.mxu0 0
  %494 = vmatpush1.bf16.msra.mxu0 0
  %495 = vmatprep.subr.bf16.mxu0 0
  %496 = vmatpush1.bf16.msra.mxu0 0
  %497 = vmatprep.subr.bf16.mxu0 0
  %498 = vmatpush1.bf16.msra.mxu0 0
  %499 = vmatprep.subr.bf16.mxu0 0
  %500 = vmatpush1.bf16.msra.mxu0 0
  %501 = vmatprep.subr.bf16.mxu0 0
  %502 = vmatpush1.bf16.msra.mxu0 0
  %503 = vmatprep.subr.bf16.mxu0 0
  %504 = vmatpush1.bf16.msra.mxu0 0
  %505 = vmatprep.subr.bf16.mxu0 0
  %506 = vmatpush1.bf16.msra.mxu0 0
  %507 = vmatprep.subr.bf16.mxu0 0
  %508 = vmatpush1.bf16.msra.mxu0 0
  %509 = vmatprep.subr.bf16.mxu0 0
  %510 = vmatpush1.bf16.msra.mxu0 0
  %511 = vmatprep.subr.bf16.mxu0 0
  %512 = vmatpush1.bf16.msra.mxu0 0
  %513 = vmatprep.subr.bf16.mxu0 0
  %514 = vmatpush1.bf16.msra.mxu0 0
  %515 = vmatprep.subr.bf16.mxu0 0
  %516 = vmatpush1.bf16.msra.mxu0 0
  %517 = vmatprep.subr.bf16.mxu0 0
  %518 = vmatpush1.bf16.msra.mxu0 0
  %519 = vmatprep.subr.bf16.mxu0 0
  %520 = vmatpush1.bf16.msra.mxu0 0
  %521 = vmatprep.mubr.bf16.mxu0 0
  %522 = vmatmul.mubr.bf16.gmra.mrb[0].mxu0 %v484
  %v523 = vpop.f32.mrb[0].mxu0
  %v524 = vadd.f32 0.0, %v523
  %v525 = vpop.f32.mrb[0].mxu0
  %v526 = vpop.f32.mrb[0].mxu0
  %v527 = vadd.f32 0.0, %v526
  %v528 = vpop.f32.mrb[0].mxu0
  %529 = vdwg.mxu0
  %532 = vrot.lane.b32.xlu0 %v524, 4
  %v533 = vpop.permute.xlu0 %532
  %534 = vrot.lane.b32.xlu0 %v527, 4
  %v535 = vpop.permute.xlu0 %534
  %vm538 = vcmask 64544
  %539 = vst.msk [vmem:[#allocation2] sm:$0xff] %vm538, %v533
  %vm540 = vcmask 60448
  %541 = vst.msk [vmem:[#allocation2 + $0x8] sm:$0xf] %vm540, %v535
  %542 = vrot.lane.b32.xlu0 %v108, 120
  %v543 = vpop.permute.xlu0 %542
  %544 = vrot.lane.b32.xlu0 %v191, 120
  %v545 = vpop.permute.xlu0 %544
  %546 = vrot.lane.b32.xlu0 %v192, 120
  %v547 = vpop.permute.xlu0 %546
  %v549 = vsel %vm263, %v543, 0
  %v552 = vsel %vm263, %v545, 0
  %v555 = vsel %vm263, %v547, 0
  %557 = vmatprep.subr.bf16.mxu0 0
  %558 = vmatpush1.bf16.xpose.msra.mxu0 %v552
  %559 = vmatprep.subr.bf16.mxu0 0
  %560 = vmatpush1.bf16.xpose.msra.mxu0 %v555
  %561 = vmatprep.subr.bf16.mxu0 0
  %562 = vmatpush1.bf16.xpose.msra.mxu0 0
  %563 = vmatprep.subr.bf16.mxu0 0
  %564 = vmatpush1.bf16.xpose.msra.mxu0 0
  %565 = vmatprep.subr.bf16.mxu0 0
  %566 = vmatpush1.bf16.xpose.msra.mxu0 0
  %567 = vmatprep.subr.bf16.mxu0 0
  %568 = vmatpush1.bf16.xpose.msra.mxu0 0
  %569 = vmatprep.subr.bf16.mxu0 0
  %570 = vmatpush1.bf16.xpose.msra.mxu0 0
  %571 = vmatprep.subr.bf16.mxu0 0
  %572 = vmatpush1.bf16.xpose.msra.mxu0 0
  %573 = vmatprep.subr.bf16.mxu0 0
  %574 = vmatpush1.bf16.xpose.msra.mxu0 0
  %575 = vmatprep.subr.bf16.mxu0 0
  %576 = vmatpush1.bf16.xpose.msra.mxu0 0
  %577 = vmatprep.subr.bf16.mxu0 0
  %578 = vmatpush1.bf16.xpose.msra.mxu0 0
  %579 = vmatprep.subr.bf16.mxu0 0
  %580 = vmatpush1.bf16.xpose.msra.mxu0 0
  %581 = vmatprep.subr.bf16.mxu0 0
  %582 = vmatpush1.bf16.xpose.msra.mxu0 0
  %583 = vmatprep.subr.bf16.mxu0 0
  %584 = vmatpush1.bf16.xpose.msra.mxu0 0
  %585 = vmatprep.subr.bf16.mxu0 0
  %586 = vmatpush1.bf16.xpose.msra.mxu0 0
  %587 = vmatprep.subr.bf16.mxu0 0
  %588 = vmatpush1.bf16.xpose.msra.mxu0 0
  %589 = vmatprep.mubr.bf16.mxu0 0
  %590 = vmatmul.mubr.bf16.gmra.mrb[0].mxu0 %v549
  %v591 = vpop.f32.mrb[0].mxu0
  %v592 = vadd.f32 0.0, %v591
  %v593 = vpop.f32.mrb[0].mxu0
  %v594 = vpop.f32.mrb[0].mxu0
  %v595 = vadd.f32 0.0, %v594
  %v596 = vpop.f32.mrb[0].mxu0
  %597 = vdwg.mxu0
  %v598 = vmul.f32 %v592, 0.5
  %v599 = vmul.f32 %v595, 0.5
  %v600 = vsel %vm316, %v598, -inf
  %601 = vmax.xlane.f32.xlu0 %v600
  %v602 = vpop.xlane.xlu0 %601
  %v603 = vsel %vm320, %v599, -inf
  %604 = vmax.xlane.f32.xlu0 %v603
  %v605 = vpop.xlane.xlu0 %604
  %v606 = vsub.f32 %v598, %v602
  %v607 = vsub.f32 %v599, %v605
  %v608 = vmul.f32 %v606, 1.442695
  %v609 = vpow.pop %v608
  %v610 = vmul.f32 %v607, 1.442695
  %v611 = vpow.pop %v610
  %v612 = vsel %vm316, %v609, 0.0
  %613 = vadd.xlane.f32.xlu0 %v612
  %v614 = vpop.xlane.xlu0 %613
  %v615 = vsel %vm320, %v611, 0.0
  %616 = vadd.xlane.f32.xlu0 %v615
  %v617 = vpop.xlane.xlu0 %616
  %v618 = vrcp.pop %v614
  %v619 = vrcp.pop %v617
  %v620 = vmul.f32 %v609, %v618
  %v621 = vmul.f32 %v611, %v619
  %v622 = vpack.c.bf16 %v621, %v620
  %623 = vrot.lane.b32.xlu0 %v261, 120
  %v624 = vpop.permute.xlu0 %623
  %625 = vrot.lane.b32.xlu0 %v262, 120
  %v626 = vpop.permute.xlu0 %625
  %v629 = vsel %vm316, %v622, 0
  %v632 = vsel %vm344, %v626, 0
  %634 = vmatprep.subr.bf16.mxu0 0
  %635 = vmatpush1.bf16.msra.mxu0 %v624
  %636 = vmatprep.subr.bf16.mxu0 0
  %637 = vmatpush1.bf16.msra.mxu0 %v632
  %638 = vmatprep.subr.bf16.mxu0 0
  %639 = vmatpush1.bf16.msra.mxu0 0
  %640 = vmatprep.subr.bf16.mxu0 0
  %641 = vmatpush1.bf16.msra.mxu0 0
  %642 = vmatprep.subr.bf16.mxu0 0
  %643 = vmatpush1.bf16.msra.mxu0 0
  %644 = vmatprep.subr.bf16.mxu0 0
  %645 = vmatpush1.bf16.msra.mxu0 0
  %646 = vmatprep.subr.bf16.mxu0 0
  %647 = vmatpush1.bf16.msra.mxu0 0
  %648 = vmatprep.subr.bf16.mxu0 0
  %649 = vmatpush1.bf16.msra.mxu0 0
  %650 = vmatprep.subr.bf16.mxu0 0
  %651 = vmatpush1.bf16.msra.mxu0 0
  %652 = vmatprep.subr.bf16.mxu0 0
  %653 = vmatpush1.bf16.msra.mxu0 0
  %654 = vmatprep.subr.bf16.mxu0 0
  %655 = vmatpush1.bf16.msra.mxu0 0
  %656 = vmatprep.subr.bf16.mxu0 0
  %657 = vmatpush1.bf16.msra.mxu0 0
  %658 = vmatprep.subr.bf16.mxu0 0
  %659 = vmatpush1.bf16.msra.mxu0 0
  %660 = vmatprep.subr.bf16.mxu0 0
  %661 = vmatpush1.bf16.msra.mxu0 0
  %662 = vmatprep.subr.bf16.mxu0 0
  %663 = vmatpush1.bf16.msra.mxu0 0
  %664 = vmatprep.subr.bf16.mxu0 0
  %665 = vmatpush1.bf16.msra.mxu0 0
  %666 = vmatprep.mubr.bf16.mxu0 0
  %667 = vmatmul.mubr.bf16.gmra.mrb[0].mxu0 %v629
  %v668 = vpop.f32.mrb[0].mxu0
  %v669 = vadd.f32 0.0, %v668
  %v670 = vpop.f32.mrb[0].mxu0
  %v671 = vpop.f32.mrb[0].mxu0
  %v672 = vadd.f32 0.0, %v671
  %v673 = vpop.f32.mrb[0].mxu0
  %674 = vdwg.mxu0
  %677 = vrot.lane.b32.xlu0 %v669, 8
  %v678 = vpop.permute.xlu0 %677
  %679 = vrot.lane.b32.xlu0 %v672, 8
  %v680 = vpop.permute.xlu0 %679
  %vm683 = vcmask 97344
  %684 = vst.msk [vmem:[#allocation2] sm:$0xff] %vm683, %v678
  %vm685 = vcmask 93248
  %686 = vst.msk [vmem:[#allocation2 + $0x8] sm:$0xf] %vm685, %v680
  %687 = vrot.lane.b32.xlu0 %v108, 116
  %v688 = vpop.permute.xlu0 %687
  %689 = vrot.lane.b32.xlu0 %v191, 116
  %v690 = vpop.permute.xlu0 %689
  %691 = vrot.lane.b32.xlu0 %v192, 116
  %v692 = vpop.permute.xlu0 %691
  %v694 = vsel %vm263, %v688, 0
  %v697 = vsel %vm263, %v690, 0
  %v700 = vsel %vm263, %v692, 0
  %702 = vmatprep.subr.bf16.mxu0 0
  %703 = vmatpush1.bf16.xpose.msra.mxu0 %v697
  %704 = vmatprep.subr.bf16.mxu0 0
  %705 = vmatpush1.bf16.xpose.msra.mxu0 %v700
  %706 = vmatprep.subr.bf16.mxu0 0
  %707 = vmatpush1.bf16.xpose.msra.mxu0 0
  %708 = vmatprep.subr.bf16.mxu0 0
  %709 = vmatpush1.bf16.xpose.msra.mxu0 0
  %710 = vmatprep.subr.bf16.mxu0 0
  %711 = vmatpush1.bf16.xpose.msra.mxu0 0
  %712 = vmatprep.subr.bf16.mxu0 0
  %713 = vmatpush1.bf16.xpose.msra.mxu0 0
  %714 = vmatprep.subr.bf16.mxu0 0
  %715 = vmatpush1.bf16.xpose.msra.mxu0 0
  %716 = vmatprep.subr.bf16.mxu0 0
  %717 = vmatpush1.bf16.xpose.msra.mxu0 0
  %718 = vmatprep.subr.bf16.mxu0 0
  %719 = vmatpush1.bf16.xpose.msra.mxu0 0
  %720 = vmatprep.subr.bf16.mxu0 0
  %721 = vmatpush1.bf16.xpose.msra.mxu0 0
  %722 = vmatprep.subr.bf16.mxu0 0
  %723 = vmatpush1.bf16.xpose.msra.mxu0 0
  %724 = vmatprep.subr.bf16.mxu0 0
  %725 = vmatpush1.bf16.xpose.msra.mxu0 0
  %726 = vmatprep.subr.bf16.mxu0 0
  %727 = vmatpush1.bf16.xpose.msra.mxu0 0
  %728 = vmatprep.subr.bf16.mxu0 0
  %729 = vmatpush1.bf16.xpose.msra.mxu0 0
  %730 = vmatprep.subr.bf16.mxu0 0
  %731 = vmatpush1.bf16.xpose.msra.mxu0 0
  %732 = vmatprep.subr.bf16.mxu0 0
  %733 = vmatpush1.bf16.xpose.msra.mxu0 0
  %734 = vmatprep.mubr.bf16.mxu0 0
  %735 = vmatmul.mubr.bf16.gmra.mrb[0].mxu0 %v694
  %v736 = vpop.f32.mrb[0].mxu0
  %v737 = vadd.f32 0.0, %v736
  %v738 = vpop.f32.mrb[0].mxu0
  %v739 = vpop.f32.mrb[0].mxu0
  %v740 = vadd.f32 0.0, %v739
  %v741 = vpop.f32.mrb[0].mxu0
  %742 = vdwg.mxu0
  %v743 = vmul.f32 %v737, 0.5
  %v744 = vmul.f32 %v740, 0.5
  %v745 = vsel %vm316, %v743, -inf
  %746 = vmax.xlane.f32.xlu0 %v745
  %v747 = vpop.xlane.xlu0 %746
  %v748 = vsel %vm320, %v744, -inf
  %749 = vmax.xlane.f32.xlu0 %v748
  %v750 = vpop.xlane.xlu0 %749
  %v751 = vsub.f32 %v743, %v747
  %v752 = vsub.f32 %v744, %v750
  %v753 = vmul.f32 %v751, 1.442695
  %v754 = vpow.pop %v753
  %v755 = vmul.f32 %v752, 1.442695
  %v756 = vpow.pop %v755
  %v757 = vsel %vm316, %v754, 0.0
  %758 = vadd.xlane.f32.xlu0 %v757
  %v759 = vpop.xlane.xlu0 %758
  %v760 = vsel %vm320, %v756, 0.0
  %761 = vadd.xlane.f32.xlu0 %v760
  %v762 = vpop.xlane.xlu0 %761
  %v763 = vrcp.pop %v759
  %v764 = vrcp.pop %v762
  %v765 = vmul.f32 %v754, %v763
  %v766 = vmul.f32 %v756, %v764
  %v767 = vpack.c.bf16 %v766, %v765
  %768 = vrot.lane.b32.xlu0 %v261, 116
  %v769 = vpop.permute.xlu0 %768
  %770 = vrot.lane.b32.xlu0 %v262, 116
  %v771 = vpop.permute.xlu0 %770
  %v774 = vsel %vm316, %v767, 0
  %v777 = vsel %vm344, %v771, 0
  %779 = vmatprep.subr.bf16.mxu0 0
  %780 = vmatpush1.bf16.msra.mxu0 %v769
  %781 = vmatprep.subr.bf16.mxu0 0
  %782 = vmatpush1.bf16.msra.mxu0 %v777
  %783 = vmatprep.subr.bf16.mxu0 0
  %784 = vmatpush1.bf16.msra.mxu0 0
  %785 = vmatprep.subr.bf16.mxu0 0
  %786 = vmatpush1.bf16.msra.mxu0 0
  %787 = vmatprep.subr.bf16.mxu0 0
  %788 = vmatpush1.bf16.msra.mxu0 0
  %789 = vmatprep.subr.bf16.mxu0 0
  %790 = vmatpush1.bf16.msra.mxu0 0
  %791 = vmatprep.subr.bf16.mxu0 0
  %792 = vmatpush1.bf16.msra.mxu0 0
  %793 = vmatprep.subr.bf16.mxu0 0
  %794 = vmatpush1.bf16.msra.mxu0 0
  %795 = vmatprep.subr.bf16.mxu0 0
  %796 = vmatpush1.bf16.msra.mxu0 0
  %797 = vmatprep.subr.bf16.mxu0 0
  %798 = vmatpush1.bf16.msra.mxu0 0
  %799 = vmatprep.subr.bf16.mxu0 0
  %800 = vmatpush1.bf16.msra.mxu0 0
  %801 = vmatprep.subr.bf16.mxu0 0
  %802 = vmatpush1.bf16.msra.mxu0 0
  %803 = vmatprep.subr.bf16.mxu0 0
  %804 = vmatpush1.bf16.msra.mxu0 0
  %805 = vmatprep.subr.bf16.mxu0 0
  %806 = vmatpush1.bf16.msra.mxu0 0
  %807 = vmatprep.subr.bf16.mxu0 0
  %808 = vmatpush1.bf16.msra.mxu0 0
  %809 = vmatprep.subr.bf16.mxu0 0
  %810 = vmatpush1.bf16.msra.mxu0 0
  %811 = vmatprep.mubr.bf16.mxu0 0
  %812 = vmatmul.mubr.bf16.gmra.mrb[0].mxu0 %v774
  %v813 = vpop.f32.mrb[0].mxu0
  %v814 = vadd.f32 0.0, %v813
  %v815 = vpop.f32.mrb[0].mxu0
  %v816 = vpop.f32.mrb[0].mxu0
  %v817 = vadd.f32 0.0, %v816
  %v818 = vpop.f32.mrb[0].mxu0
  %819 = vdwg.mxu0
  %822 = vrot.lane.b32.xlu0 %v814, 12
  %v823 = vpop.permute.xlu0 %822
  %824 = vrot.lane.b32.xlu0 %v817, 12
  %v825 = vpop.permute.xlu0 %824
  %vm828 = vcmask 130144
  %829 = vst.msk [vmem:[#allocation2] sm:$0xff] %vm828, %v823
  %vm830 = vcmask 126048
  %831 = vst.msk [vmem:[#allocation2 + $0x8] sm:$0xf] %vm830, %v825
  %832 = vrot.lane.b32.xlu0 %v108, 112
  %v833 = vpop.permute.xlu0 %832
  %834 = vrot.lane.b32.xlu0 %v191, 112
  %v835 = vpop.permute.xlu0 %834
  %836 = vrot.lane.b32.xlu0 %v192, 112
  %v837 = vpop.permute.xlu0 %836
  %v839 = vsel %vm263, %v833, 0
  %v842 = vsel %vm263, %v835, 0
  %v845 = vsel %vm263, %v837, 0
  %847 = vmatprep.subr.bf16.mxu0 0
  %848 = vmatpush1.bf16.xpose.msra.mxu0 %v842
  %849 = vmatprep.subr.bf16.mxu0 0
  %850 = vmatpush1.bf16.xpose.msra.mxu0 %v845
  %851 = vmatprep.subr.bf16.mxu0 0
  %852 = vmatpush1.bf16.xpose.msra.mxu0 0
  %853 = vmatprep.subr.bf16.mxu0 0
  %854 = vmatpush1.bf16.xpose.msra.mxu0 0
  %855 = vmatprep.subr.bf16.mxu0 0
  %856 = vmatpush1.bf16.xpose.msra.mxu0 0
  %857 = vmatprep.subr.bf16.mxu0 0
  %858 = vmatpush1.bf16.xpose.msra.mxu0 0
  %859 = vmatprep.subr.bf16.mxu0 0
  %860 = vmatpush1.bf16.xpose.msra.mxu0 0
  %861 = vmatprep.subr.bf16.mxu0 0
  %862 = vmatpush1.bf16.xpose.msra.mxu0 0
  %863 = vmatprep.subr.bf16.mxu0 0
  %864 = vmatpush1.bf16.xpose.msra.mxu0 0
  %865 = vmatprep.subr.bf16.mxu0 0
  %866 = vmatpush1.bf16.xpose.msra.mxu0 0
  %867 = vmatprep.subr.bf16.mxu0 0
  %868 = vmatpush1.bf16.xpose.msra.mxu0 0
  %869 = vmatprep.subr.bf16.mxu0 0
  %870 = vmatpush1.bf16.xpose.msra.mxu0 0
  %871 = vmatprep.subr.bf16.mxu0 0
  %872 = vmatpush1.bf16.xpose.msra.mxu0 0
  %873 = vmatprep.subr.bf16.mxu0 0
  %874 = vmatpush1.bf16.xpose.msra.mxu0 0
  %875 = vmatprep.subr.bf16.mxu0 0
  %876 = vmatpush1.bf16.xpose.msra.mxu0 0
  %877 = vmatprep.subr.bf16.mxu0 0
  %878 = vmatpush1.bf16.xpose.msra.mxu0 0
  %879 = vmatprep.mubr.bf16.mxu0 0
  %880 = vmatmul.mubr.bf16.gmra.mrb[0].mxu0 %v839
  %v881 = vpop.f32.mrb[0].mxu0
  %v882 = vadd.f32 0.0, %v881
  %v883 = vpop.f32.mrb[0].mxu0
  %v884 = vpop.f32.mrb[0].mxu0
  %v885 = vadd.f32 0.0, %v884
  %v886 = vpop.f32.mrb[0].mxu0
  %887 = vdwg.mxu0
  %v888 = vmul.f32 %v882, 0.5
  %v889 = vmul.f32 %v885, 0.5
  %v890 = vsel %vm316, %v888, -inf
  %891 = vmax.xlane.f32.xlu0 %v890
  %v892 = vpop.xlane.xlu0 %891
  %v893 = vsel %vm320, %v889, -inf
  %894 = vmax.xlane.f32.xlu0 %v893
  %v895 = vpop.xlane.xlu0 %894
  %v896 = vsub.f32 %v888, %v892
  %v897 = vsub.f32 %v889, %v895
  %v898 = vmul.f32 %v896, 1.442695
  %v899 = vpow.pop %v898
  %v900 = vmul.f32 %v897, 1.442695
  %v901 = vpow.pop %v900
  %v902 = vsel %vm316, %v899, 0.0
  %903 = vadd.xlane.f32.xlu0 %v902
  %v904 = vpop.xlane.xlu0 %903
  %v905 = vsel %vm320, %v901, 0.0
  %906 = vadd.xlane.f32.xlu0 %v905
  %v907 = vpop.xlane.xlu0 %906
  %v908 = vrcp.pop %v904
  %v909 = vrcp.pop %v907
  %v910 = vmul.f32 %v899, %v908
  %v911 = vmul.f32 %v901, %v909
  %v912 = vpack.c.bf16 %v911, %v910
  %913 = vrot.lane.b32.xlu0 %v261, 112
  %v914 = vpop.permute.xlu0 %913
  %915 = vrot.lane.b32.xlu0 %v262, 112
  %v916 = vpop.permute.xlu0 %915
  %v919 = vsel %vm316, %v912, 0
  %v922 = vsel %vm344, %v916, 0
  %924 = vmatprep.subr.bf16.mxu0 0
  %925 = vmatpush1.bf16.msra.mxu0 %v914
  %926 = vmatprep.subr.bf16.mxu0 0
  %927 = vmatpush1.bf16.msra.mxu0 %v922
  %928 = vmatprep.subr.bf16.mxu0 0
  %929 = vmatpush1.bf16.msra.mxu0 0
  %930 = vmatprep.subr.bf16.mxu0 0
  %931 = vmatpush1.bf16.msra.mxu0 0
  %932 = vmatprep.subr.bf16.mxu0 0
  %933 = vmatpush1.bf16.msra.mxu0 0
  %934 = vmatprep.subr.bf16.mxu0 0
  %935 = vmatpush1.bf16.msra.mxu0 0
  %936 = vmatprep.subr.bf16.mxu0 0
  %937 = vmatpush1.bf16.msra.mxu0 0
  %938 = vmatprep.subr.bf16.mxu0 0
  %939 = vmatpush1.bf16.msra.mxu0 0
  %940 = vmatprep.subr.bf16.mxu0 0
  %941 = vmatpush1.bf16.msra.mxu0 0
  %942 = vmatprep.subr.bf16.mxu0 0
  %943 = vmatpush1.bf16.msra.mxu0 0
  %944 = vmatprep.subr.bf16.mxu0 0
  %945 = vmatpush1.bf16.msra.mxu0 0
  %946 = vmatprep.subr.bf16.mxu0 0
  %947 = vmatpush1.bf16.msra.mxu0 0
  %948 = vmatprep.subr.bf16.mxu0 0
  %949 = vmatpush1.bf16.msra.mxu0 0
  %950 = vmatprep.subr.bf16.mxu0 0
  %951 = vmatpush1.bf16.msra.mxu0 0
  %952 = vmatprep.subr.bf16.mxu0 0
  %953 = vmatpush1.bf16.msra.mxu0 0
  %954 = vmatprep.subr.bf16.mxu0 0
  %955 = vmatpush1.bf16.msra.mxu0 0
  %956 = vmatprep.mubr.bf16.mxu0 0
  %957 = vmatmul.mubr.bf16.gmra.mrb[0].mxu0 %v919
  %v958 = vpop.f32.mrb[0].mxu0
  %v959 = vadd.f32 0.0, %v958
  %v960 = vpop.f32.mrb[0].mxu0
  %v961 = vpop.f32.mrb[0].mxu0
  %v962 = vadd.f32 0.0, %v961
  %v963 = vpop.f32.mrb[0].mxu0
  %964 = vdwg.mxu0
  %967 = vrot.lane.b32.xlu0 %v959, 16
  %v968 = vpop.permute.xlu0 %967
  %969 = vrot.lane.b32.xlu0 %v962, 16
  %v970 = vpop.permute.xlu0 %969
  %vm973 = vcmask 162944
  %974 = vst.msk [vmem:[#allocation2] sm:$0xff] %vm973, %v968
  %vm975 = vcmask 158848
  %976 = vst.msk [vmem:[#allocation2 + $0x8] sm:$0xf] %vm975, %v970
  %977 = vrot.lane.b32.xlu0 %v108, 108
  %v978 = vpop.permute.xlu0 %977
  %979 = vrot.lane.b32.xlu0 %v191, 108
  %v980 = vpop.permute.xlu0 %979
  %981 = vrot.lane.b32.xlu0 %v192, 108
  %v982 = vpop.permute.xlu0 %981
  %v984 = vsel %vm263, %v978, 0
  %v987 = vsel %vm263, %v980, 0
  %v990 = vsel %vm263, %v982, 0
  %992 = vmatprep.subr.bf16.mxu0 0
  %993 = vmatpush1.bf16.xpose.msra.mxu0 %v987
  %994 = vmatprep.subr.bf16.mxu0 0
  %995 = vmatpush1.bf16.xpose.msra.mxu0 %v990
  %996 = vmatprep.subr.bf16.mxu0 0
  %997 = vmatpush1.bf16.xpose.msra.mxu0 0
  %998 = vmatprep.subr.bf16.mxu0 0
  %999 = vmatpush1.bf16.xpose.msra.mxu0 0
  %1000 = vmatprep.subr.bf16.mxu0 0
  %1001 = vmatpush1.bf16.xpose.msra.mxu0 0
  %1002 = vmatprep.subr.bf16.mxu0 0
  %1003 = vmatpush1.bf16.xpose.msra.mxu0 0
  %1004 = vmatprep.subr.bf16.mxu0 0
  %1005 = vmatpush1.bf16.xpose.msra.mxu0 0
  %1006 = vmatprep.subr.bf16.mxu0 0
  %1007 = vmatpush1.bf16.xpose.msra.mxu0 0
  %1008 = vmatprep.subr.bf16.mxu0 0
  %1009 = vmatpush1.bf16.xpose.msra.mxu0 0
  %1010 = vmatprep.subr.bf16.mxu0 0
  %1011 = vmatpush1.bf16.xpose.msra.mxu0 0
  %1012 = vmatprep.subr.bf16.mxu0 0
  %1013 = vmatpush1.bf16.xpose.msra.mxu0 0
  %1014 = vmatprep.subr.bf16.mxu0 0
  %1015 = vmatpush1.bf16.xpose.msra.mxu0 0
  %1016 = vmatprep.subr.bf16.mxu0 0
  %1017 = vmatpush1.bf16.xpose.msra.mxu0 0
  %1018 = vmatprep.subr.bf16.mxu0 0
  %1019 = vmatpush1.bf16.xpose.msra.mxu0 0
  %1020 = vmatprep.subr.bf16.mxu0 0
  %1021 = vmatpush1.bf16.xpose.msra.mxu0 0
  %1022 = vmatprep.subr.bf16.mxu0 0
  %1023 = vmatpush1.bf16.xpose.msra.mxu0 0
  %1024 = vmatprep.mubr.bf16.mxu0 0
  %1025 = vmatmul.mubr.bf16.gmra.mrb[0].mxu0 %v984
  %v1026 = vpop.f32.mrb[0].mxu0
  %v1027 = vadd.f32 0.0, %v1026
  %v1028 = vpop.f32.mrb[0].mxu0
  %v1029 = vpop.f32.mrb[0].mxu0
  %v1030 = vadd.f32 0.0, %v1029
  %v1031 = vpop.f32.mrb[0].mxu0
  %1032 = vdwg.mxu0
  %v1033 = vmul.f32 %v1027, 0.5
  %v1034 = vmul.f32 %v1030, 0.5
  %v1035 = vsel %vm316, %v1033, -inf
  %1036 = vmax.xlane.f32.xlu0 %v1035
  %v1037 = vpop.xlane.xlu0 %1036
  %v1038 = vsel %vm320, %v1034, -inf
  %1039 = vmax.xlane.f32.xlu0 %v1038
  %v1040 = vpop.xlane.xlu0 %1039
  %v1041 = vsub.f32 %v1033, %v1037
  %v1042 = vsub.f32 %v1034, %v1040
  %v1043 = vmul.f32 %v1041, 1.442695
  %v1044 = vpow.pop %v1043
  %v1045 = vmul.f32 %v1042, 1.442695
  %v1046 = vpow.pop %v1045
  %v1047 = vsel %vm316, %v1044, 0.0
  %1048 = vadd.xlane.f32.xlu0 %v1047
  %v1049 = vpop.xlane.xlu0 %1048
  %v1050 = vsel %vm320, %v1046, 0.0
  %1051 = vadd.xlane.f32.xlu0 %v1050
  %v1052 = vpop.xlane.xlu0 %1051
  %v1053 = vrcp.pop %v1049
  %v1054 = vrcp.pop %v1052
  %v1055 = vmul.f32 %v1044, %v1053
  %v1056 = vmul.f32 %v1046, %v1054
  %v1057 = vpack.c.bf16 %v1056, %v1055
  %1058 = vrot.lane.b32.xlu0 %v261, 108
  %v1059 = vpop.permute.xlu0 %1058
  %1060 = vrot.lane.b32.xlu0 %v262, 108
  %v1061 = vpop.permute.xlu0 %1060
  %v1064 = vsel %vm316, %v1057, 0
  %v1067 = vsel %vm344, %v1061, 0
  %1069 = vmatprep.subr.bf16.mxu0 0
  %1070 = vmatpush1.bf16.msra.mxu0 %v1059
  %1071 = vmatprep.subr.bf16.mxu0 0
  %1072 = vmatpush1.bf16.msra.mxu0 %v1067
  %1073 = vmatprep.subr.bf16.mxu0 0
  %1074 = vmatpush1.bf16.msra.mxu0 0
  %1075 = vmatprep.subr.bf16.mxu0 0
  %1076 = vmatpush1.bf16.msra.mxu0 0
  %1077 = vmatprep.subr.bf16.mxu0 0
  %1078 = vmatpush1.bf16.msra.mxu0 0
  %1079 = vmatprep.subr.bf16.mxu0 0
  %1080 = vmatpush1.bf16.msra.mxu0 0
  %1081 = vmatprep.subr.bf16.mxu0 0
  %1082 = vmatpush1.bf16.msra.mxu0 0
  %1083 = vmatprep.subr.bf16.mxu0 0
  %1084 = vmatpush1.bf16.msra.mxu0 0
  %1085 = vmatprep.subr.bf16.mxu0 0
  %1086 = vmatpush1.bf16.msra.mxu0 0
  %1087 = vmatprep.subr.bf16.mxu0 0
  %1088 = vmatpush1.bf16.msra.mxu0 0
  %1089 = vmatprep.subr.bf16.mxu0 0
  %1090 = vmatpush1.bf16.msra.mxu0 0
  %1091 = vmatprep.subr.bf16.mxu0 0
  %1092 = vmatpush1.bf16.msra.mxu0 0
  %1093 = vmatprep.subr.bf16.mxu0 0
  %1094 = vmatpush1.bf16.msra.mxu0 0
  %1095 = vmatprep.subr.bf16.mxu0 0
  %1096 = vmatpush1.bf16.msra.mxu0 0
  %1097 = vmatprep.subr.bf16.mxu0 0
  %1098 = vmatpush1.bf16.msra.mxu0 0
  %1099 = vmatprep.subr.bf16.mxu0 0
  %1100 = vmatpush1.bf16.msra.mxu0 0
  %1101 = vmatprep.mubr.bf16.mxu0 0
  %1102 = vmatmul.mubr.bf16.gmra.mrb[0].mxu0 %v1064
  %v1103 = vpop.f32.mrb[0].mxu0
  %v1104 = vadd.f32 0.0, %v1103
  %v1105 = vpop.f32.mrb[0].mxu0
  %v1106 = vpop.f32.mrb[0].mxu0
  %v1107 = vadd.f32 0.0, %v1106
  %v1108 = vpop.f32.mrb[0].mxu0
  %1109 = vdwg.mxu0
  %1112 = vrot.lane.b32.xlu0 %v1104, 20
  %v1113 = vpop.permute.xlu0 %1112
  %1114 = vrot.lane.b32.xlu0 %v1107, 20
  %v1115 = vpop.permute.xlu0 %1114
  %vm1118 = vcmask 195744
  %1119 = vst.msk [vmem:[#allocation2] sm:$0xff] %vm1118, %v1113
  %vm1120 = vcmask 191648
  %1121 = vst.msk [vmem:[#allocation2 + $0x8] sm:$0xf] %vm1120, %v1115
  %1122 = vrot.lane.b32.xlu0 %v108, 104
  %v1123 = vpop.permute.xlu0 %1122
  %1124 = vrot.lane.b32.xlu0 %v191, 104
  %v1125 = vpop.permute.xlu0 %1124
  %1126 = vrot.lane.b32.xlu0 %v192, 104
  %v1127 = vpop.permute.xlu0 %1126
  %v1129 = vsel %vm263, %v1123, 0
  %v1132 = vsel %vm263, %v1125, 0
  %v1135 = vsel %vm263, %v1127, 0
  %1137 = vmatprep.subr.bf16.mxu0 0
  %1138 = vmatpush1.bf16.xpose.msra.mxu0 %v1132
  %1139 = vmatprep.subr.bf16.mxu0 0
  %1140 = vmatpush1.bf16.xpose.msra.mxu0 %v1135
  %1141 = vmatprep.subr.bf16.mxu0 0
  %1142 = vmatpush1.bf16.xpose.msra.mxu0 0
  %1143 = vmatprep.subr.bf16.mxu0 0
  %1144 = vmatpush1.bf16.xpose.msra.mxu0 0
  %1145 = vmatprep.subr.bf16.mxu0 0
  %1146 = vmatpush1.bf16.xpose.msra.mxu0 0
  %1147 = vmatprep.subr.bf16.mxu0 0
  %1148 = vmatpush1.bf16.xpose.msra.mxu0 0
  %1149 = vmatprep.subr.bf16.mxu0 0
  %1150 = vmatpush1.bf16.xpose.msra.mxu0 0
  %1151 = vmatprep.subr.bf16.mxu0 0
  %1152 = vmatpush1.bf16.xpose.msra.mxu0 0
  %1153 = vmatprep.subr.bf16.mxu0 0
  %1154 = vmatpush1.bf16.xpose.msra.mxu0 0
  %1155 = vmatprep.subr.bf16.mxu0 0
  %1156 = vmatpush1.bf16.xpose.msra.mxu0 0
  %1157 = vmatprep.subr.bf16.mxu0 0
  %1158 = vmatpush1.bf16.xpose.msra.mxu0 0
  %1159 = vmatprep.subr.bf16.mxu0 0
  %1160 = vmatpush1.bf16.xpose.msra.mxu0 0
  %1161 = vmatprep.subr.bf16.mxu0 0
  %1162 = vmatpush1.bf16.xpose.msra.mxu0 0
  %1163 = vmatprep.subr.bf16.mxu0 0
  %1164 = vmatpush1.bf16.xpose.msra.mxu0 0
  %1165 = vmatprep.subr.bf16.mxu0 0
  %1166 = vmatpush1.bf16.xpose.msra.mxu0 0
  %1167 = vmatprep.subr.bf16.mxu0 0
  %1168 = vmatpush1.bf16.xpose.msra.mxu0 0
  %1169 = vmatprep.mubr.bf16.mxu0 0
  %1170 = vmatmul.mubr.bf16.gmra.mrb[0].mxu0 %v1129
  %v1171 = vpop.f32.mrb[0].mxu0
  %v1172 = vadd.f32 0.0, %v1171
  %v1173 = vpop.f32.mrb[0].mxu0
  %v1174 = vpop.f32.mrb[0].mxu0
  %v1175 = vadd.f32 0.0, %v1174
  %v1176 = vpop.f32.mrb[0].mxu0
  %1177 = vdwg.mxu0
  %v1178 = vmul.f32 %v1172, 0.5
  %v1179 = vmul.f32 %v1175, 0.5
  %v1180 = vsel %vm316, %v1178, -inf
  %1181 = vmax.xlane.f32.xlu0 %v1180
  %v1182 = vpop.xlane.xlu0 %1181
  %v1183 = vsel %vm320, %v1179, -inf
  %1184 = vmax.xlane.f32.xlu0 %v1183
  %v1185 = vpop.xlane.xlu0 %1184
  %v1186 = vsub.f32 %v1178, %v1182
  %v1187 = vsub.f32 %v1179, %v1185
  %v1188 = vmul.f32 %v1186, 1.442695
  %v1189 = vpow.pop %v1188
  %v1190 = vmul.f32 %v1187, 1.442695
  %v1191 = vpow.pop %v1190
  %v1192 = vsel %vm316, %v1189, 0.0
  %1193 = vadd.xlane.f32.xlu0 %v1192
  %v1194 = vpop.xlane.xlu0 %1193
  %v1195 = vsel %vm320, %v1191, 0.0
  %1196 = vadd.xlane.f32.xlu0 %v1195
  %v1197 = vpop.xlane.xlu0 %1196
  %v1198 = vrcp.pop %v1194
  %v1199 = vrcp.pop %v1197
  %v1200 = vmul.f32 %v1189, %v1198
  %v1201 = vmul.f32 %v1191, %v1199
  %v1202 = vpack.c.bf16 %v1201, %v1200
  %1203 = vrot.lane.b32.xlu0 %v261, 104
  %v1204 = vpop.permute.xlu0 %1203
  %1205 = vrot.lane.b32.xlu0 %v262, 104
  %v1206 = vpop.permute.xlu0 %1205
  %v1209 = vsel %vm316, %v1202, 0
  %v1212 = vsel %vm344, %v1206, 0
  %1214 = vmatprep.subr.bf16.mxu0 0
  %1215 = vmatpush1.bf16.msra.mxu0 %v1204
  %1216 = vmatprep.subr.bf16.mxu0 0
  %1217 = vmatpush1.bf16.msra.mxu0 %v1212
  %1218 = vmatprep.subr.bf16.mxu0 0
  %1219 = vmatpush1.bf16.msra.mxu0 0
  %1220 = vmatprep.subr.bf16.mxu0 0
  %1221 = vmatpush1.bf16.msra.mxu0 0
  %1222 = vmatprep.subr.bf16.mxu0 0
  %1223 = vmatpush1.bf16.msra.mxu0 0
  %1224 = vmatprep.subr.bf16.mxu0 0
  %1225 = vmatpush1.bf16.msra.mxu0 0
  %1226 = vmatprep.subr.bf16.mxu0 0
  %1227 = vmatpush1.bf16.msra.mxu0 0
  %1228 = vmatprep.subr.bf16.mxu0 0
  %1229 = vmatpush1.bf16.msra.mxu0 0
  %1230 = vmatprep.subr.bf16.mxu0 0
  %1231 = vmatpush1.bf16.msra.mxu0 0
  %1232 = vmatprep.subr.bf16.mxu0 0
  %1233 = vmatpush1.bf16.msra.mxu0 0
  %1234 = vmatprep.subr.bf16.mxu0 0
  %1235 = vmatpush1.bf16.msra.mxu0 0
  %1236 = vmatprep.subr.bf16.mxu0 0
  %1237 = vmatpush1.bf16.msra.mxu0 0
  %1238 = vmatprep.subr.bf16.mxu0 0
  %1239 = vmatpush1.bf16.msra.mxu0 0
  %1240 = vmatprep.subr.bf16.mxu0 0
  %1241 = vmatpush1.bf16.msra.mxu0 0
  %1242 = vmatprep.subr.bf16.mxu0 0
  %1243 = vmatpush1.bf16.msra.mxu0 0
  %1244 = vmatprep.subr.bf16.mxu0 0
  %1245 = vmatpush1.bf16.msra.mxu0 0
  %1246 = vmatprep.mubr.bf16.mxu0 0
  %1247 = vmatmul.mubr.bf16.gmra.mrb[0].mxu0 %v1209
  %v1248 = vpop.f32.mrb[0].mxu0
  %v1249 = vadd.f32 0.0, %v1248
  %v1250 = vpop.f32.mrb[0].mxu0
  %v1251 = vpop.f32.mrb[0].mxu0
  %v1252 = vadd.f32 0.0, %v1251
  %v1253 = vpop.f32.mrb[0].mxu0
  %1254 = vdwg.mxu0
  %1257 = vrot.lane.b32.xlu0 %v1249, 24
  %v1258 = vpop.permute.xlu0 %1257
  %1259 = vrot.lane.b32.xlu0 %v1252, 24
  %v1260 = vpop.permute.xlu0 %1259
  %vm1263 = vcmask 228544
  %1264 = vst.msk [vmem:[#allocation2] sm:$0xff] %vm1263, %v1258
  %vm1265 = vcmask 224448
  %1266 = vst.msk [vmem:[#allocation2 + $0x8] sm:$0xf] %vm1265, %v1260
  %1267 = vrot.lane.b32.xlu0 %v108, 100
  %v1268 = vpop.permute.xlu0 %1267
  %1269 = vrot.lane.b32.xlu0 %v191, 100
  %v1270 = vpop.permute.xlu0 %1269
  %1271 = vrot.lane.b32.xlu0 %v192, 100
  %v1272 = vpop.permute.xlu0 %1271
  %v1274 = vsel %vm263, %v1268, 0
  %v1277 = vsel %vm263, %v1270, 0
  %v1280 = vsel %vm263, %v1272, 0
  %1282 = vmatprep.subr.bf16.mxu0 0
  %1283 = vmatpush1.bf16.xpose.msra.mxu0 %v1277
  %1284 = vmatprep.subr.bf16.mxu0 0
  %1285 = vmatpush1.bf16.xpose.msra.mxu0 %v1280
  %1286 = vmatprep.subr.bf16.mxu0 0
  %1287 = vmatpush1.bf16.xpose.msra.mxu0 0
  %1288 = vmatprep.subr.bf16.mxu0 0
  %1289 = vmatpush1.bf16.xpose.msra.mxu0 0
  %1290 = vmatprep.subr.bf16.mxu0 0
  %1291 = vmatpush1.bf16.xpose.msra.mxu0 0
  %1292 = vmatprep.subr.bf16.mxu0 0
  %1293 = vmatpush1.bf16.xpose.msra.mxu0 0
  %1294 = vmatprep.subr.bf16.mxu0 0
  %1295 = vmatpush1.bf16.xpose.msra.mxu0 0
  %1296 = vmatprep.subr.bf16.mxu0 0
  %1297 = vmatpush1.bf16.xpose.msra.mxu0 0
  %1298 = vmatprep.subr.bf16.mxu0 0
  %1299 = vmatpush1.bf16.xpose.msra.mxu0 0
  %1300 = vmatprep.subr.bf16.mxu0 0
  %1301 = vmatpush1.bf16.xpose.msra.mxu0 0
  %1302 = vmatprep.subr.bf16.mxu0 0
  %1303 = vmatpush1.bf16.xpose.msra.mxu0 0
  %1304 = vmatprep.subr.bf16.mxu0 0
  %1305 = vmatpush1.bf16.xpose.msra.mxu0 0
  %1306 = vmatprep.subr.bf16.mxu0 0
  %1307 = vmatpush1.bf16.xpose.msra.mxu0 0
  %1308 = vmatprep.subr.bf16.mxu0 0
  %1309 = vmatpush1.bf16.xpose.msra.mxu0 0
  %1310 = vmatprep.subr.bf16.mxu0 0
  %1311 = vmatpush1.bf16.xpose.msra.mxu0 0
  %1312 = vmatprep.subr.bf16.mxu0 0
  %1313 = vmatpush1.bf16.xpose.msra.mxu0 0
  %1314 = vmatprep.mubr.bf16.mxu0 0
  %1315 = vmatmul.mubr.bf16.gmra.mrb[0].mxu0 %v1274
  %v1316 = vpop.f32.mrb[0].mxu0
  %v1317 = vadd.f32 0.0, %v1316
  %v1318 = vpop.f32.mrb[0].mxu0
  %v1319 = vpop.f32.mrb[0].mxu0
  %v1320 = vadd.f32 0.0, %v1319
  %v1321 = vpop.f32.mrb[0].mxu0
  %1322 = vdwg.mxu0
  %v1323 = vmul.f32 %v1317, 0.5
  %v1324 = vmul.f32 %v1320, 0.5
  %v1325 = vsel %vm316, %v1323, -inf
  %1326 = vmax.xlane.f32.xlu0 %v1325
  %v1327 = vpop.xlane.xlu0 %1326
  %v1328 = vsel %vm320, %v1324, -inf
  %1329 = vmax.xlane.f32.xlu0 %v1328
  %v1330 = vpop.xlane.xlu0 %1329
  %v1331 = vsub.f32 %v1323, %v1327
  %v1332 = vsub.f32 %v1324, %v1330
  %v1333 = vmul.f32 %v1331, 1.442695
  %v1334 = vpow.pop %v1333
  %v1335 = vmul.f32 %v1332, 1.442695
  %v1336 = vpow.pop %v1335
  %v1337 = vsel %vm316, %v1334, 0.0
  %1338 = vadd.xlane.f32.xlu0 %v1337
  %v1339 = vpop.xlane.xlu0 %1338
  %v1340 = vsel %vm320, %v1336, 0.0
  %1341 = vadd.xlane.f32.xlu0 %v1340
  %v1342 = vpop.xlane.xlu0 %1341
  %v1343 = vrcp.pop %v1339
  %v1344 = vrcp.pop %v1342
  %v1345 = vmul.f32 %v1334, %v1343
  %v1346 = vmul.f32 %v1336, %v1344
  %v1347 = vpack.c.bf16 %v1346, %v1345
  %1348 = vrot.lane.b32.xlu0 %v261, 100
  %v1349 = vpop.permute.xlu0 %1348
  %1350 = vrot.lane.b32.xlu0 %v262, 100
  %v1351 = vpop.permute.xlu0 %1350
  %v1354 = vsel %vm316, %v1347, 0
  %v1357 = vsel %vm344, %v1351, 0
  %1359 = vmatprep.subr.bf16.mxu0 0
  %1360 = vmatpush1.bf16.msra.mxu0 %v1349
  %1361 = vmatprep.subr.bf16.mxu0 0
  %1362 = vmatpush1.bf16.msra.mxu0 %v1357
  %1363 = vmatprep.subr.bf16.mxu0 0
  %1364 = vmatpush1.bf16.msra.mxu0 0
  %1365 = vmatprep.subr.bf16.mxu0 0
  %1366 = vmatpush1.bf16.msra.mxu0 0
  %1367 = vmatprep.subr.bf16.mxu0 0
  %1368 = vmatpush1.bf16.msra.mxu0 0
  %1369 = vmatprep.subr.bf16.mxu0 0
  %1370 = vmatpush1.bf16.msra.mxu0 0
  %1371 = vmatprep.subr.bf16.mxu0 0
  %1372 = vmatpush1.bf16.msra.mxu0 0
  %1373 = vmatprep.subr.bf16.mxu0 0
  %1374 = vmatpush1.bf16.msra.mxu0 0
  %1375 = vmatprep.subr.bf16.mxu0 0
  %1376 = vmatpush1.bf16.msra.mxu0 0
  %1377 = vmatprep.subr.bf16.mxu0 0
  %1378 = vmatpush1.bf16.msra.mxu0 0
  %1379 = vmatprep.subr.bf16.mxu0 0
  %1380 = vmatpush1.bf16.msra.mxu0 0
  %1381 = vmatprep.subr.bf16.mxu0 0
  %1382 = vmatpush1.bf16.msra.mxu0 0
  %1383 = vmatprep.subr.bf16.mxu0 0
  %1384 = vmatpush1.bf16.msra.mxu0 0
  %1385 = vmatprep.subr.bf16.mxu0 0
  %1386 = vmatpush1.bf16.msra.mxu0 0
  %1387 = vmatprep.subr.bf16.mxu0 0
  %1388 = vmatpush1.bf16.msra.mxu0 0
  %1389 = vmatprep.subr.bf16.mxu0 0
  %1390 = vmatpush1.bf16.msra.mxu0 0
  %1391 = vmatprep.mubr.bf16.mxu0 0
  %1392 = vmatmul.mubr.bf16.gmra.mrb[0].mxu0 %v1354
  %v1393 = vpop.f32.mrb[0].mxu0
  %v1394 = vadd.f32 0.0, %v1393
  %v1395 = vpop.f32.mrb[0].mxu0
  %v1396 = vpop.f32.mrb[0].mxu0
  %v1397 = vadd.f32 0.0, %v1396
  %v1398 = vpop.f32.mrb[0].mxu0
  %1399 = vdwg.mxu0
  %1402 = vrot.lane.b32.xlu0 %v1394, 28
  %v1403 = vpop.permute.xlu0 %1402
  %1404 = vrot.lane.b32.xlu0 %v1397, 28
  %v1405 = vpop.permute.xlu0 %1404
  %vm1408 = vcmask 261344
  %1409 = vst.msk [vmem:[#allocation2] sm:$0xff] %vm1408, %v1403
  %vm1410 = vcmask 257248
  %1411 = vst.msk [vmem:[#allocation2 + $0x8] sm:$0xf] %vm1410, %v1405
  %v1412 = vld [vmem:[#allocation2] sm:$0xff]
  %v1413 = vld [vmem:[#allocation2 + $0x8] sm:$0xf]
  %v1414 = vpack.c.bf16 %v1413, %v1412
  %v1415 = vld [vmem:[%s5] sm:$0xf]
  %v1416 = vld [vmem:[%s5 + $0x4] sm:$0xf]
  %v1417 = vld [vmem:[%s5 + $0x8] sm:$0xf]
  %v1418 = vld [vmem:[%s5 + $0xc] sm:$0xf]
  %v1419 = vld [vmem:[%s7] sm:$0x1]
  %v1421 = vlaneseq
  %v1422 = vshrl.u32 %v1421, 7
  %v1423 = vsub.s32 0, %v1422
  %v1424 = vrot.slane %v1419, %v1423
  %v1430 = vunpack.c.l.b16 %v1415
  %v1431 = vunpack.c.l.b16 %v1416
  %v1432 = vunpack.c.l.b16 %v1417
  %v1433 = vunpack.c.l.b16 %v1418
  %v1434 = vpack.c.b16 %v1431, %v1430
  %v1435 = vpack.c.b16 %v1433, %v1432
  %v1439 = vsel %vm63, %v1414, 0
  %1441 = vmatprep.subr.bf16.mxu0 0
  %1442 = vmatpush1.bf16.msra.mxu0 %v1434
  %1443 = vmatprep.subr.bf16.mxu0 0
  %1444 = vmatpush1.bf16.msra.mxu0 %v1435
  %1445 = vmatprep.subr.bf16.mxu0 0
  %1446 = vmatpush1.bf16.msra.mxu0 0
  %1447 = vmatprep.subr.bf16.mxu0 0
  %1448 = vmatpush1.bf16.msra.mxu0 0
  %1449 = vmatprep.subr.bf16.mxu0 0
  %1450 = vmatpush1.bf16.msra.mxu0 0
  %1451 = vmatprep.subr.bf16.mxu0 0
  %1452 = vmatpush1.bf16.msra.mxu0 0
  %1453 = vmatprep.subr.bf16.mxu0 0
  %1454 = vmatpush1.bf16.msra.mxu0 0
  %1455 = vmatprep.subr.bf16.mxu0 0
  %1456 = vmatpush1.bf16.msra.mxu0 0
  %1457 = vmatprep.subr.bf16.mxu0 0
  %1458 = vmatpush1.bf16.msra.mxu0 0
  %1459 = vmatprep.subr.bf16.mxu0 0
  %1460 = vmatpush1.bf16.msra.mxu0 0
  %1461 = vmatprep.subr.bf16.mxu0 0
  %1462 = vmatpush1.bf16.msra.mxu0 0
  %1463 = vmatprep.subr.bf16.mxu0 0
  %1464 = vmatpush1.bf16.msra.mxu0 0
  %1465 = vmatprep.subr.bf16.mxu0 0
  %1466 = vmatpush1.bf16.msra.mxu0 0
  %1467 = vmatprep.subr.bf16.mxu0 0
  %1468 = vmatpush1.bf16.msra.mxu0 0
  %1469 = vmatprep.subr.bf16.mxu0 0
  %1470 = vmatpush1.bf16.msra.mxu0 0
  %1471 = vmatprep.subr.bf16.mxu0 0
  %1472 = vmatpush1.bf16.msra.mxu0 0
  %1473 = vmatprep.mubr.bf16.mxu0 0
  %1474 = vmatmul.mubr.bf16.gmra.mrb[0].mxu0 %v1439
  %v1475 = vpop.f32.mrb[0].mxu0
  %v1476 = vadd.f32 %v1424, %v1475
  %v1477 = vpop.f32.mrb[0].mxu0
  %v1478 = vpop.f32.mrb[0].mxu0
  %v1479 = vadd.f32 %v1424, %v1478
  %v1480 = vpop.f32.mrb[0].mxu0
  %1481 = vdwg.mxu0
  %v1482 = vpack.c.bf16 %v1479, %v1476
  %v1484 = vunpack.c.l.b16 %v1482
  %v1485 = vunpack.c.h.b16 %v1482
  %v1486 = vpack.c.b16 %v1484, %v1484
  %v1487 = vpack.c.b16 %v1485, %v1485
  %1490 = vst [vmem:[%s8] sm:$0xf] %v1486
  %1491 = vst [vmem:[%s8 + $0x4] sm:$0x3] %v1487
  // Predicated region
  $region34: #{gacfv5_forward.9} parent=0 // pred_check
    _
  $region35: #{gacfv5_forward.9} parent=0 // pred_check_branch
    %1493 = sbr.rel (0) target = $region37
  $region36: #{gacfv5_forward.9} parent=0 // pred_region
    _
  $region37: #{gacfv5_forward.9} parent=0 // pred_fallthru
    _
  // Predicated region
  $region38: #{gacfv5_forward.9} parent=0 // pred_check
    _
  $region39: #{gacfv5_forward.9} parent=0 // pred_check_branch
    %1495 = sbr.rel (0) target = $region41
  $region40: #{gacfv5_forward.9} parent=0 // pred_region
    _
  $region41: #{gacfv5_forward.9} parent=0 // pred_fallthru
    _

// kernel: gacfv5_forward.10
$region0: #{gacfv5_forward.10}
  #allocation0 [shape = 'u32[]', space=smem, size = 0x4, offset = 0x4, fixed_abs, tag = 'smem constant byte address 0x4 - core index']
  #allocation1 [shape = 'u32[144,128]{1,0:T(1,128)}', space=vmem, size = 0x12000, scoped, tag = 'internal scratch']
  #allocation2 [shape = 'f32[20,32]{1,0:T(8,128)}', space=vmem, size = 0x3000, scoped, tag = 'scratch operand']
  %s0 = inlined_call_operand.vmem [shape: bf16[20,32], index: 0, kind: input, shape index: {}]
  %s1 = inlined_call_operand.vmem [shape: bf16[12,32], index: 1, kind: input, shape index: {}]
  %s2 = inlined_call_operand.vmem [shape: bf16[32,32], index: 2, kind: input, shape index: {}]
  %s3 = inlined_call_operand.vmem [shape: bf16[32,32], index: 3, kind: input, shape index: {}]
  %s4 = inlined_call_operand.vmem [shape: bf16[32,32], index: 4, kind: input, shape index: {}]
  %s5 = inlined_call_operand.vmem [shape: bf16[32,128], index: 5, kind: input, shape index: {}]
  %s6 = inlined_call_operand.vmem [shape: f32[3,32], index: 6, kind: input, shape index: {}]
  %s7 = inlined_call_operand.vmem [shape: f32[1,128], index: 7, kind: input, shape index: {}]
  %s8 = inlined_call_operand.vmem [shape: bf16[20,128], index: 8, kind: output, shape index: {}]
  %s9 = sld [smem:[#allocation0]]
  $region42: #{gacfv5_forward.10} parent=0
    _
  %s11 = ssub.s32 1, %s9
  %s12 = scalar_select 0, %s11, %s9
  // Predicated region
  $region2: #{gacfv5_forward.10} parent=0 // pred_check
    _
  $region3: #{gacfv5_forward.10} parent=0 // pred_check_branch
    %14 = sbr.rel (0) target = $region5
  $region4: #{gacfv5_forward.10} parent=0 // pred_region
    _
  $region5: #{gacfv5_forward.10} parent=0 // pred_fallthru
    _
  // Predicated region
  $region6: #{gacfv5_forward.10} parent=0 // pred_check
    _
  $region7: #{gacfv5_forward.10} parent=0 // pred_check_branch
    %16 = sbr.rel (0) target = $region9
  $region8: #{gacfv5_forward.10} parent=0 // pred_region
    _
  $region9: #{gacfv5_forward.10} parent=0 // pred_fallthru
    _
  // Predicated region
  $region10: #{gacfv5_forward.10} parent=0 // pred_check
    _
  $region11: #{gacfv5_forward.10} parent=0 // pred_check_branch
    %18 = sbr.rel (0) target = $region13
  $region12: #{gacfv5_forward.10} parent=0 // pred_region
    _
  $region13: #{gacfv5_forward.10} parent=0 // pred_fallthru
    _
  // Predicated region
  $region14: #{gacfv5_forward.10} parent=0 // pred_check
    _
  $region15: #{gacfv5_forward.10} parent=0 // pred_check_branch
    %20 = sbr.rel (0) target = $region17
  $region16: #{gacfv5_forward.10} parent=0 // pred_region
    _
  $region17: #{gacfv5_forward.10} parent=0 // pred_fallthru
    _
  // Predicated region
  $region18: #{gacfv5_forward.10} parent=0 // pred_check
    _
  $region19: #{gacfv5_forward.10} parent=0 // pred_check_branch
    %22 = sbr.rel (0) target = $region21
  $region20: #{gacfv5_forward.10} parent=0 // pred_region
    _
  $region21: #{gacfv5_forward.10} parent=0 // pred_fallthru
    _
  // Predicated region
  $region22: #{gacfv5_forward.10} parent=0 // pred_check
    _
  $region23: #{gacfv5_forward.10} parent=0 // pred_check_branch
    %24 = sbr.rel (0) target = $region25
  $region24: #{gacfv5_forward.10} parent=0 // pred_region
    _
  $region25: #{gacfv5_forward.10} parent=0 // pred_fallthru
    _
  // Predicated region
  $region26: #{gacfv5_forward.10} parent=0 // pred_check
    _
  $region27: #{gacfv5_forward.10} parent=0 // pred_check_branch
    %26 = sbr.rel (0) target = $region29
  $region28: #{gacfv5_forward.10} parent=0 // pred_region
    _
  $region29: #{gacfv5_forward.10} parent=0 // pred_fallthru
    _
  // Predicated region
  $region30: #{gacfv5_forward.10} parent=0 // pred_check
    _
  $region31: #{gacfv5_forward.10} parent=0 // pred_check_branch
    %28 = sbr.rel (0) target = $region33
  $region32: #{gacfv5_forward.10} parent=0 // pred_region
    _
  $region33: #{gacfv5_forward.10} parent=0 // pred_fallthru
    _
  %v30 = vld [vmem:[%s0] sm:$0xf]
  %v31 = vld [vmem:[%s0 + $0x4] sm:$0xf]
  %v32 = vld [vmem:[%s0 + $0x8] sm:$0x3]
  %v33 = vld [vmem:[%s1] sm:$0xf]
  %v34 = vld [vmem:[%s1 + $0x4] sm:$0x3]
  %v35 = vld [vmem:[%s6] sm:$0x1]
  %v36 = vld [vmem:[%s6 + $0x1] sm:$0x1]
  %v37 = vld [vmem:[%s6 + $0x2] sm:$0x1]
  %v38 = vld [vmem:[%s2] sm:$0xf]
  %v39 = vld [vmem:[%s2 + $0x4] sm:$0xf]
  %v40 = vld [vmem:[%s2 + $0x8] sm:$0xf]
  %v41 = vld [vmem:[%s2 + $0xc] sm:$0xf]
  %v42 = vlaneseq
  %v43 = vshrl.u32 %v42, 7
  %v44 = vsub.s32 0, %v43
  %v45 = vrot.slane %v35, %v44
  %v49 = vunpack.c.l.b16 %v30
  %v50 = vunpack.c.l.b16 %v31
  %v51 = vunpack.c.l.b16 %v32
  %v52 = vpack.c.b16 %v50, %v49
  %v53 = vpack.c.b16 %v51, %v51
  %v58 = vunpack.c.l.b16 %v38
  %v59 = vunpack.c.l.b16 %v39
  %v60 = vunpack.c.l.b16 %v40
  %v61 = vunpack.c.l.b16 %v41
  %v62 = vpack.c.b16 %v59, %v58
  %v63 = vpack.c.b16 %v61, %v60
  %vm66 = vcmask 261120
  %v68 = vsel %vm66, %v52, 0
  %v71 = vsel %vm66, %v53, 0
  %73 = vmatprep.subr.bf16.mxu0 0
  %74 = vmatpush1.bf16.msra.mxu0 %v62
  %75 = vmatprep.subr.bf16.mxu0 0
  %76 = vmatpush1.bf16.msra.mxu0 %v63
  %77 = vmatprep.subr.bf16.mxu0 0
  %78 = vmatpush1.bf16.msra.mxu0 0
  %79 = vmatprep.subr.bf16.mxu0 0
  %80 = vmatpush1.bf16.msra.mxu0 0
  %81 = vmatprep.subr.bf16.mxu0 0
  %82 = vmatpush1.bf16.msra.mxu0 0
  %83 = vmatprep.subr.bf16.mxu0 0
  %84 = vmatpush1.bf16.msra.mxu0 0
  %85 = vmatprep.subr.bf16.mxu0 0
  %86 = vmatpush1.bf16.msra.mxu0 0
  %87 = vmatprep.subr.bf16.mxu0 0
  %88 = vmatpush1.bf16.msra.mxu0 0
  %89 = vmatprep.subr.bf16.mxu0 0
  %90 = vmatpush1.bf16.msra.mxu0 0
  %91 = vmatprep.subr.bf16.mxu0 0
  %92 = vmatpush1.bf16.msra.mxu0 0
  %93 = vmatprep.subr.bf16.mxu0 0
  %94 = vmatpush1.bf16.msra.mxu0 0
  %95 = vmatprep.subr.bf16.mxu0 0
  %96 = vmatpush1.bf16.msra.mxu0 0
  %97 = vmatprep.subr.bf16.mxu0 0
  %98 = vmatpush1.bf16.msra.mxu0 0
  %99 = vmatprep.subr.bf16.mxu0 0
  %100 = vmatpush1.bf16.msra.mxu0 0
  %101 = vmatprep.subr.bf16.mxu0 0
  %102 = vmatpush1.bf16.msra.mxu0 0
  %103 = vmatprep.subr.bf16.mxu0 0
  %104 = vmatpush1.bf16.msra.mxu0 0
  %105 = vmatprep.mubr.bf16.mxu0 0
  %106 = vmatmul.mubr.bf16.gmra.mrb[0].mxu0 %v68
  %v107 = vpop.f32.mrb[0].mxu0
  %v108 = vadd.f32 %v45, %v107
  %v109 = vpop.f32.mrb[0].mxu0
  %v110 = vpop.f32.mrb[0].mxu0
  %v111 = vadd.f32 %v45, %v110
  %v112 = vpop.f32.mrb[0].mxu0
  %113 = vmatprep.mubr.bf16.mxu0 0
  %114 = vmatmul.mubr.bf16.gmra.mrb[0].mxu0 %v71
  %v115 = vpop.f32.mrb[0].mxu0
  %v116 = vadd.f32 %v45, %v115
  %v117 = vpop.f32.mrb[0].mxu0
  %v118 = vpop.f32.mrb[0].mxu0
  %v119 = vpop.f32.mrb[0].mxu0
  %120 = vdwg.mxu0
  %v121 = vpack.c.bf16 %v111, %v108
  %v122 = vpack.c.bf16 %v116, %v116
  %v123 = vld [vmem:[%s3] sm:$0xf]
  %v124 = vld [vmem:[%s3 + $0x4] sm:$0xf]
  %v125 = vld [vmem:[%s3 + $0x8] sm:$0xf]
  %v126 = vld [vmem:[%s3 + $0xc] sm:$0xf]
  %v127 = vlaneseq
  %v128 = vshrl.u32 %v127, 7
  %v129 = vsub.s32 0, %v128
  %v130 = vrot.slane %v36, %v129
  %v133 = vunpack.c.l.b16 %v33
  %v134 = vunpack.c.l.b16 %v34
  %v135 = vpack.c.b16 %v134, %v133
  %v140 = vunpack.c.l.b16 %v123
  %v141 = vunpack.c.l.b16 %v124
  %v142 = vunpack.c.l.b16 %v125
  %v143 = vunpack.c.l.b16 %v126
  %v144 = vpack.c.b16 %v141, %v140
  %v145 = vpack.c.b16 %v143, %v142
  %v149 = vsel %vm66, %v135, 0
  %151 = vmatprep.subr.bf16.mxu0 0
  %152 = vmatpush1.bf16.msra.mxu0 %v144
  %153 = vmatprep.subr.bf16.mxu0 0
  %154 = vmatpush1.bf16.msra.mxu0 %v145
  %155 = vmatprep.subr.bf16.mxu0 0
  %156 = vmatpush1.bf16.msra.mxu0 0
  %157 = vmatprep.subr.bf16.mxu0 0
  %158 = vmatpush1.bf16.msra.mxu0 0
  %159 = vmatprep.subr.bf16.mxu0 0
  %160 = vmatpush1.bf16.msra.mxu0 0
  %161 = vmatprep.subr.bf16.mxu0 0
  %162 = vmatpush1.bf16.msra.mxu0 0
  %163 = vmatprep.subr.bf16.mxu0 0
  %164 = vmatpush1.bf16.msra.mxu0 0
  %165 = vmatprep.subr.bf16.mxu0 0
  %166 = vmatpush1.bf16.msra.mxu0 0
  %167 = vmatprep.subr.bf16.mxu0 0
  %168 = vmatpush1.bf16.msra.mxu0 0
  %169 = vmatprep.subr.bf16.mxu0 0
  %170 = vmatpush1.bf16.msra.mxu0 0
  %171 = vmatprep.subr.bf16.mxu0 0
  %172 = vmatpush1.bf16.msra.mxu0 0
  %173 = vmatprep.subr.bf16.mxu0 0
  %174 = vmatpush1.bf16.msra.mxu0 0
  %175 = vmatprep.subr.bf16.mxu0 0
  %176 = vmatpush1.bf16.msra.mxu0 0
  %177 = vmatprep.subr.bf16.mxu0 0
  %178 = vmatpush1.bf16.msra.mxu0 0
  %179 = vmatprep.subr.bf16.mxu0 0
  %180 = vmatpush1.bf16.msra.mxu0 0
  %181 = vmatprep.subr.bf16.mxu0 0
  %182 = vmatpush1.bf16.msra.mxu0 0
  %183 = vmatprep.mubr.bf16.mxu0 0
  %184 = vmatmul.mubr.bf16.gmra.mrb[0].mxu0 %v149
  %v185 = vpop.f32.mrb[0].mxu0
  %v186 = vadd.f32 %v130, %v185
  %v187 = vpop.f32.mrb[0].mxu0
  %v188 = vpop.f32.mrb[0].mxu0
  %v189 = vadd.f32 %v130, %v188
  %v190 = vpop.f32.mrb[0].mxu0
  %191 = vdwg.mxu0
  %v192 = vpack.c.bf16 %v189, %v186
  %v193 = vld [vmem:[%s4] sm:$0xf]
  %v194 = vld [vmem:[%s4 + $0x4] sm:$0xf]
  %v195 = vld [vmem:[%s4 + $0x8] sm:$0xf]
  %v196 = vld [vmem:[%s4 + $0xc] sm:$0xf]
  %v197 = vlaneseq
  %v198 = vshrl.u32 %v197, 7
  %v199 = vsub.s32 0, %v198
  %v200 = vrot.slane %v37, %v199
  %v205 = vunpack.c.l.b16 %v193
  %v206 = vunpack.c.l.b16 %v194
  %v207 = vunpack.c.l.b16 %v195
  %v208 = vunpack.c.l.b16 %v196
  %v209 = vpack.c.b16 %v206, %v205
  %v210 = vpack.c.b16 %v208, %v207
  %213 = vmatprep.subr.bf16.mxu0 0
  %214 = vmatpush1.bf16.msra.mxu0 %v209
  %215 = vmatprep.subr.bf16.mxu0 0
  %216 = vmatpush1.bf16.msra.mxu0 %v210
  %217 = vmatprep.subr.bf16.mxu0 0
  %218 = vmatpush1.bf16.msra.mxu0 0
  %219 = vmatprep.subr.bf16.mxu0 0
  %220 = vmatpush1.bf16.msra.mxu0 0
  %221 = vmatprep.subr.bf16.mxu0 0
  %222 = vmatpush1.bf16.msra.mxu0 0
  %223 = vmatprep.subr.bf16.mxu0 0
  %224 = vmatpush1.bf16.msra.mxu0 0
  %225 = vmatprep.subr.bf16.mxu0 0
  %226 = vmatpush1.bf16.msra.mxu0 0
  %227 = vmatprep.subr.bf16.mxu0 0
  %228 = vmatpush1.bf16.msra.mxu0 0
  %229 = vmatprep.subr.bf16.mxu0 0
  %230 = vmatpush1.bf16.msra.mxu0 0
  %231 = vmatprep.subr.bf16.mxu0 0
  %232 = vmatpush1.bf16.msra.mxu0 0
  %233 = vmatprep.subr.bf16.mxu0 0
  %234 = vmatpush1.bf16.msra.mxu0 0
  %235 = vmatprep.subr.bf16.mxu0 0
  %236 = vmatpush1.bf16.msra.mxu0 0
  %237 = vmatprep.subr.bf16.mxu0 0
  %238 = vmatpush1.bf16.msra.mxu0 0
  %239 = vmatprep.subr.bf16.mxu0 0
  %240 = vmatpush1.bf16.msra.mxu0 0
  %241 = vmatprep.subr.bf16.mxu0 0
  %242 = vmatpush1.bf16.msra.mxu0 0
  %243 = vmatprep.subr.bf16.mxu0 0
  %244 = vmatpush1.bf16.msra.mxu0 0
  %245 = vmatprep.mubr.bf16.mxu0 0
  %246 = vmatmul.mubr.bf16.gmra.mrb[0].mxu0 %v149
  %v247 = vpop.f32.mrb[0].mxu0
  %v248 = vadd.f32 %v200, %v247
  %v249 = vpop.f32.mrb[0].mxu0
  %v250 = vpop.f32.mrb[0].mxu0
  %v251 = vadd.f32 %v200, %v250
  %v252 = vpop.f32.mrb[0].mxu0
  %253 = vdwg.mxu0
  %v254 = vpack.c.bf16 %v251, %v248
  %vm255 = vcmask 31744
  %v257 = vsel %vm255, %v121, 0
  %v260 = vsel %vm255, %v122, 0
  %v263 = vsel %vm255, %v192, 0
  %265 = vmatprep.subr.bf16.mxu0 0
  %266 = vmatpush1.bf16.xpose.msra.mxu0 %v263
  %267 = vmatprep.subr.bf16.mxu0 0
  %268 = vmatpush1.bf16.xpose.msra.mxu0 0
  %269 = vmatprep.subr.bf16.mxu0 0
  %270 = vmatpush1.bf16.xpose.msra.mxu0 0
  %271 = vmatprep.subr.bf16.mxu0 0
  %272 = vmatpush1.bf16.xpose.msra.mxu0 0
  %273 = vmatprep.subr.bf16.mxu0 0
  %274 = vmatpush1.bf16.xpose.msra.mxu0 0
  %275 = vmatprep.subr.bf16.mxu0 0
  %276 = vmatpush1.bf16.xpose.msra.mxu0 0
  %277 = vmatprep.subr.bf16.mxu0 0
  %278 = vmatpush1.bf16.xpose.msra.mxu0 0
  %279 = vmatprep.subr.bf16.mxu0 0
  %280 = vmatpush1.bf16.xpose.msra.mxu0 0
  %281 = vmatprep.subr.bf16.mxu0 0
  %282 = vmatpush1.bf16.xpose.msra.mxu0 0
  %283 = vmatprep.subr.bf16.mxu0 0
  %284 = vmatpush1.bf16.xpose.msra.mxu0 0
  %285 = vmatprep.subr.bf16.mxu0 0
  %286 = vmatpush1.bf16.xpose.msra.mxu0 0
  %287 = vmatprep.subr.bf16.mxu0 0
  %288 = vmatpush1.bf16.xpose.msra.mxu0 0
  %289 = vmatprep.subr.bf16.mxu0 0
  %290 = vmatpush1.bf16.xpose.msra.mxu0 0
  %291 = vmatprep.subr.bf16.mxu0 0
  %292 = vmatpush1.bf16.xpose.msra.mxu0 0
  %293 = vmatprep.subr.bf16.mxu0 0
  %294 = vmatpush1.bf16.xpose.msra.mxu0 0
  %295 = vmatprep.subr.bf16.mxu0 0
  %296 = vmatpush1.bf16.xpose.msra.mxu0 0
  %297 = vmatprep.mubr.bf16.mxu0 0
  %298 = vmatmul.mubr.bf16.gmra.mrb[0].mxu0 %v257
  %v299 = vpop.f32.mrb[0].mxu0
  %v300 = vadd.f32 0.0, %v299
  %v301 = vpop.f32.mrb[0].mxu0
  %v302 = vpop.f32.mrb[0].mxu0
  %v303 = vadd.f32 0.0, %v302
  %v304 = vpop.f32.mrb[0].mxu0
  %305 = vmatprep.mubr.bf16.mxu0 0
  %306 = vmatmul.mubr.bf16.gmra.mrb[0].mxu0 %v260
  %v307 = vpop.f32.mrb[0].mxu0
  %v308 = vadd.f32 0.0, %v307
  %v309 = vpop.f32.mrb[0].mxu0
  %v310 = vpop.f32.mrb[0].mxu0
  %v311 = vpop.f32.mrb[0].mxu0
  %312 = vdwg.mxu0
  %v313 = vmul.f32 %v300, 0.5
  %v314 = vmul.f32 %v303, 0.5
  %v315 = vmul.f32 %v308, 0.5
  %vm316 = vcmask 97280
  %v317 = vsel %vm316, %v313, -inf
  %318 = vmax.xlane.f32.xlu0 %v317
  %v319 = vpop.xlane.xlu0 %318
  %v320 = vsel %vm316, %v314, -inf
  %321 = vmax.xlane.f32.xlu0 %v320
  %v322 = vpop.xlane.xlu0 %321
  %vm323 = vcmask 93184
  %v324 = vsel %vm323, %v315, -inf
  %325 = vmax.xlane.f32.xlu0 %v324
  %v326 = vpop.xlane.xlu0 %325
  %v327 = vsub.f32 %v313, %v319
  %v328 = vsub.f32 %v314, %v322
  %v329 = vsub.f32 %v315, %v326
  %v330 = vmul.f32 %v327, 1.442695
  %v331 = vpow.pop %v330
  %v332 = vmul.f32 %v328, 1.442695
  %v333 = vpow.pop %v332
  %v334 = vmul.f32 %v329, 1.442695
  %v335 = vpow.pop %v334
  %v336 = vsel %vm316, %v331, 0.0
  %337 = vadd.xlane.f32.xlu0 %v336
  %v338 = vpop.xlane.xlu0 %337
  %v339 = vsel %vm316, %v333, 0.0
  %340 = vadd.xlane.f32.xlu0 %v339
  %v341 = vpop.xlane.xlu0 %340
  %v342 = vsel %vm323, %v335, 0.0
  %343 = vadd.xlane.f32.xlu0 %v342
  %v344 = vpop.xlane.xlu0 %343
  %v345 = vrcp.pop %v338
  %v346 = vrcp.pop %v341
  %v347 = vrcp.pop %v344
  %v348 = vmul.f32 %v331, %v345
  %v349 = vmul.f32 %v333, %v346
  %v350 = vmul.f32 %v335, %v347
  %v351 = vpack.c.bf16 %v349, %v348
  %v352 = vpack.c.bf16 %v350, %v350
  %v354 = vsel %vm316, %v351, 0
  %v357 = vsel %vm316, %v352, 0
  %vm359 = vcmask 1045504
  %v361 = vsel %vm359, %v254, 0
  %363 = vmatprep.subr.bf16.mxu0 0
  %364 = vmatpush1.bf16.msra.mxu0 %v361
  %365 = vmatprep.subr.bf16.mxu0 0
  %366 = vmatpush1.bf16.msra.mxu0 0
  %367 = vmatprep.subr.bf16.mxu0 0
  %368 = vmatpush1.bf16.msra.mxu0 0
  %369 = vmatprep.subr.bf16.mxu0 0
  %370 = vmatpush1.bf16.msra.mxu0 0
  %371 = vmatprep.subr.bf16.mxu0 0
  %372 = vmatpush1.bf16.msra.mxu0 0
  %373 = vmatprep.subr.bf16.mxu0 0
  %374 = vmatpush1.bf16.msra.mxu0 0
  %375 = vmatprep.subr.bf16.mxu0 0
  %376 = vmatpush1.bf16.msra.mxu0 0
  %377 = vmatprep.subr.bf16.mxu0 0
  %378 = vmatpush1.bf16.msra.mxu0 0
  %379 = vmatprep.subr.bf16.mxu0 0
  %380 = vmatpush1.bf16.msra.mxu0 0
  %381 = vmatprep.subr.bf16.mxu0 0
  %382 = vmatpush1.bf16.msra.mxu0 0
  %383 = vmatprep.subr.bf16.mxu0 0
  %384 = vmatpush1.bf16.msra.mxu0 0
  %385 = vmatprep.subr.bf16.mxu0 0
  %386 = vmatpush1.bf16.msra.mxu0 0
  %387 = vmatprep.subr.bf16.mxu0 0
  %388 = vmatpush1.bf16.msra.mxu0 0
  %389 = vmatprep.subr.bf16.mxu0 0
  %390 = vmatpush1.bf16.msra.mxu0 0
  %391 = vmatprep.subr.bf16.mxu0 0
  %392 = vmatpush1.bf16.msra.mxu0 0
  %393 = vmatprep.subr.bf16.mxu0 0
  %394 = vmatpush1.bf16.msra.mxu0 0
  %395 = vmatprep.mubr.bf16.mxu0 0
  %396 = vmatmul.mubr.bf16.gmra.mrb[0].mxu0 %v354
  %v397 = vpop.f32.mrb[0].mxu0
  %v398 = vadd.f32 0.0, %v397
  %v399 = vpop.f32.mrb[0].mxu0
  %v400 = vpop.f32.mrb[0].mxu0
  %v401 = vadd.f32 0.0, %v400
  %v402 = vpop.f32.mrb[0].mxu0
  %403 = vmatprep.mubr.bf16.mxu0 0
  %404 = vmatmul.mubr.bf16.gmra.mrb[0].mxu0 %v357
  %v405 = vpop.f32.mrb[0].mxu0
  %v406 = vadd.f32 0.0, %v405
  %v407 = vpop.f32.mrb[0].mxu0
  %v408 = vpop.f32.mrb[0].mxu0
  %v409 = vpop.f32.mrb[0].mxu0
  %410 = vdwg.mxu0
  %411 = vst.msk [vmem:[#allocation2] sm:$0xff] %vm255, %v398
  %412 = vst.msk [vmem:[#allocation2 + $0x8] sm:$0xff] %vm255, %v401
  %vm413 = vcmask 27648
  %414 = vst.msk [vmem:[#allocation2 + $0x10] sm:$0xf] %vm413, %v406
  %417 = vrot.lane.b32.xlu0 %v121, 124
  %v418 = vpop.permute.xlu0 %417
  %419 = vrot.lane.b32.xlu0 %v122, 124
  %v420 = vpop.permute.xlu0 %419
  %422 = vrot.lane.b32.xlu0 %v192, 124
  %v423 = vpop.permute.xlu0 %422
  %v425 = vsel %vm255, %v418, 0
  %v428 = vsel %vm255, %v420, 0
  %v431 = vsel %vm255, %v423, 0
  %433 = vmatprep.subr.bf16.mxu0 0
  %434 = vmatpush1.bf16.xpose.msra.mxu0 %v431
  %435 = vmatprep.subr.bf16.mxu0 0
  %436 = vmatpush1.bf16.xpose.msra.mxu0 0
  %437 = vmatprep.subr.bf16.mxu0 0
  %438 = vmatpush1.bf16.xpose.msra.mxu0 0
  %439 = vmatprep.subr.bf16.mxu0 0
  %440 = vmatpush1.bf16.xpose.msra.mxu0 0
  %441 = vmatprep.subr.bf16.mxu0 0
  %442 = vmatpush1.bf16.xpose.msra.mxu0 0
  %443 = vmatprep.subr.bf16.mxu0 0
  %444 = vmatpush1.bf16.xpose.msra.mxu0 0
  %445 = vmatprep.subr.bf16.mxu0 0
  %446 = vmatpush1.bf16.xpose.msra.mxu0 0
  %447 = vmatprep.subr.bf16.mxu0 0
  %448 = vmatpush1.bf16.xpose.msra.mxu0 0
  %449 = vmatprep.subr.bf16.mxu0 0
  %450 = vmatpush1.bf16.xpose.msra.mxu0 0
  %451 = vmatprep.subr.bf16.mxu0 0
  %452 = vmatpush1.bf16.xpose.msra.mxu0 0
  %453 = vmatprep.subr.bf16.mxu0 0
  %454 = vmatpush1.bf16.xpose.msra.mxu0 0
  %455 = vmatprep.subr.bf16.mxu0 0
  %456 = vmatpush1.bf16.xpose.msra.mxu0 0
  %457 = vmatprep.subr.bf16.mxu0 0
  %458 = vmatpush1.bf16.xpose.msra.mxu0 0
  %459 = vmatprep.subr.bf16.mxu0 0
  %460 = vmatpush1.bf16.xpose.msra.mxu0 0
  %461 = vmatprep.subr.bf16.mxu0 0
  %462 = vmatpush1.bf16.xpose.msra.mxu0 0
  %463 = vmatprep.subr.bf16.mxu0 0
  %464 = vmatpush1.bf16.xpose.msra.mxu0 0
  %465 = vmatprep.mubr.bf16.mxu0 0
  %466 = vmatmul.mubr.bf16.gmra.mrb[0].mxu0 %v425
  %v467 = vpop.f32.mrb[0].mxu0
  %v468 = vadd.f32 0.0, %v467
  %v469 = vpop.f32.mrb[0].mxu0
  %v470 = vpop.f32.mrb[0].mxu0
  %v471 = vadd.f32 0.0, %v470
  %v472 = vpop.f32.mrb[0].mxu0
  %473 = vmatprep.mubr.bf16.mxu0 0
  %474 = vmatmul.mubr.bf16.gmra.mrb[0].mxu0 %v428
  %v475 = vpop.f32.mrb[0].mxu0
  %v476 = vadd.f32 0.0, %v475
  %v477 = vpop.f32.mrb[0].mxu0
  %v478 = vpop.f32.mrb[0].mxu0
  %v479 = vpop.f32.mrb[0].mxu0
  %480 = vdwg.mxu0
  %v481 = vmul.f32 %v468, 0.5
  %v482 = vmul.f32 %v471, 0.5
  %v483 = vmul.f32 %v476, 0.5
  %v484 = vsel %vm316, %v481, -inf
  %485 = vmax.xlane.f32.xlu0 %v484
  %v486 = vpop.xlane.xlu0 %485
  %v487 = vsel %vm316, %v482, -inf
  %488 = vmax.xlane.f32.xlu0 %v487
  %v489 = vpop.xlane.xlu0 %488
  %v490 = vsel %vm323, %v483, -inf
  %491 = vmax.xlane.f32.xlu0 %v490
  %v492 = vpop.xlane.xlu0 %491
  %v493 = vsub.f32 %v481, %v486
  %v494 = vsub.f32 %v482, %v489
  %v495 = vsub.f32 %v483, %v492
  %v496 = vmul.f32 %v493, 1.442695
  %v497 = vpow.pop %v496
  %v498 = vmul.f32 %v494, 1.442695
  %v499 = vpow.pop %v498
  %v500 = vmul.f32 %v495, 1.442695
  %v501 = vpow.pop %v500
  %v502 = vsel %vm316, %v497, 0.0
  %503 = vadd.xlane.f32.xlu0 %v502
  %v504 = vpop.xlane.xlu0 %503
  %v505 = vsel %vm316, %v499, 0.0
  %506 = vadd.xlane.f32.xlu0 %v505
  %v507 = vpop.xlane.xlu0 %506
  %v508 = vsel %vm323, %v501, 0.0
  %509 = vadd.xlane.f32.xlu0 %v508
  %v510 = vpop.xlane.xlu0 %509
  %v511 = vrcp.pop %v504
  %v512 = vrcp.pop %v507
  %v513 = vrcp.pop %v510
  %v514 = vmul.f32 %v497, %v511
  %v515 = vmul.f32 %v499, %v512
  %v516 = vmul.f32 %v501, %v513
  %v517 = vpack.c.bf16 %v515, %v514
  %v518 = vpack.c.bf16 %v516, %v516
  %520 = vrot.lane.b32.xlu0 %v254, 124
  %v521 = vpop.permute.xlu0 %520
  %v523 = vsel %vm316, %v517, 0
  %v526 = vsel %vm316, %v518, 0
  %v529 = vsel %vm359, %v521, 0
  %531 = vmatprep.subr.bf16.mxu0 0
  %532 = vmatpush1.bf16.msra.mxu0 %v529
  %533 = vmatprep.subr.bf16.mxu0 0
  %534 = vmatpush1.bf16.msra.mxu0 0
  %535 = vmatprep.subr.bf16.mxu0 0
  %536 = vmatpush1.bf16.msra.mxu0 0
  %537 = vmatprep.subr.bf16.mxu0 0
  %538 = vmatpush1.bf16.msra.mxu0 0
  %539 = vmatprep.subr.bf16.mxu0 0
  %540 = vmatpush1.bf16.msra.mxu0 0
  %541 = vmatprep.subr.bf16.mxu0 0
  %542 = vmatpush1.bf16.msra.mxu0 0
  %543 = vmatprep.subr.bf16.mxu0 0
  %544 = vmatpush1.bf16.msra.mxu0 0
  %545 = vmatprep.subr.bf16.mxu0 0
  %546 = vmatpush1.bf16.msra.mxu0 0
  %547 = vmatprep.subr.bf16.mxu0 0
  %548 = vmatpush1.bf16.msra.mxu0 0
  %549 = vmatprep.subr.bf16.mxu0 0
  %550 = vmatpush1.bf16.msra.mxu0 0
  %551 = vmatprep.subr.bf16.mxu0 0
  %552 = vmatpush1.bf16.msra.mxu0 0
  %553 = vmatprep.subr.bf16.mxu0 0
  %554 = vmatpush1.bf16.msra.mxu0 0
  %555 = vmatprep.subr.bf16.mxu0 0
  %556 = vmatpush1.bf16.msra.mxu0 0
  %557 = vmatprep.subr.bf16.mxu0 0
  %558 = vmatpush1.bf16.msra.mxu0 0
  %559 = vmatprep.subr.bf16.mxu0 0
  %560 = vmatpush1.bf16.msra.mxu0 0
  %561 = vmatprep.subr.bf16.mxu0 0
  %562 = vmatpush1.bf16.msra.mxu0 0
  %563 = vmatprep.mubr.bf16.mxu0 0
  %564 = vmatmul.mubr.bf16.gmra.mrb[0].mxu0 %v523
  %v565 = vpop.f32.mrb[0].mxu0
  %v566 = vadd.f32 0.0, %v565
  %v567 = vpop.f32.mrb[0].mxu0
  %v568 = vpop.f32.mrb[0].mxu0
  %v569 = vadd.f32 0.0, %v568
  %v570 = vpop.f32.mrb[0].mxu0
  %571 = vmatprep.mubr.bf16.mxu0 0
  %572 = vmatmul.mubr.bf16.gmra.mrb[0].mxu0 %v526
  %v573 = vpop.f32.mrb[0].mxu0
  %v574 = vadd.f32 0.0, %v573
  %v575 = vpop.f32.mrb[0].mxu0
  %v576 = vpop.f32.mrb[0].mxu0
  %v577 = vpop.f32.mrb[0].mxu0
  %578 = vdwg.mxu0
  %582 = vrot.lane.b32.xlu0 %v566, 4
  %v583 = vpop.permute.xlu0 %582
  %584 = vrot.lane.b32.xlu0 %v569, 4
  %v585 = vpop.permute.xlu0 %584
  %586 = vrot.lane.b32.xlu0 %v574, 4
  %v587 = vpop.permute.xlu0 %586
  %vm591 = vcmask 64544
  %592 = vst.msk [vmem:[#allocation2] sm:$0xff] %vm591, %v583
  %593 = vst.msk [vmem:[#allocation2 + $0x8] sm:$0xff] %vm591, %v585
  %vm594 = vcmask 60448
  %595 = vst.msk [vmem:[#allocation2 + $0x10] sm:$0xf] %vm594, %v587
  %596 = vrot.lane.b32.xlu0 %v121, 120
  %v597 = vpop.permute.xlu0 %596
  %598 = vrot.lane.b32.xlu0 %v122, 120
  %v599 = vpop.permute.xlu0 %598
  %600 = vrot.lane.b32.xlu0 %v192, 120
  %v601 = vpop.permute.xlu0 %600
  %v603 = vsel %vm255, %v597, 0
  %v606 = vsel %vm255, %v599, 0
  %v609 = vsel %vm255, %v601, 0
  %611 = vmatprep.subr.bf16.mxu0 0
  %612 = vmatpush1.bf16.xpose.msra.mxu0 %v609
  %613 = vmatprep.subr.bf16.mxu0 0
  %614 = vmatpush1.bf16.xpose.msra.mxu0 0
  %615 = vmatprep.subr.bf16.mxu0 0
  %616 = vmatpush1.bf16.xpose.msra.mxu0 0
  %617 = vmatprep.subr.bf16.mxu0 0
  %618 = vmatpush1.bf16.xpose.msra.mxu0 0
  %619 = vmatprep.subr.bf16.mxu0 0
  %620 = vmatpush1.bf16.xpose.msra.mxu0 0
  %621 = vmatprep.subr.bf16.mxu0 0
  %622 = vmatpush1.bf16.xpose.msra.mxu0 0
  %623 = vmatprep.subr.bf16.mxu0 0
  %624 = vmatpush1.bf16.xpose.msra.mxu0 0
  %625 = vmatprep.subr.bf16.mxu0 0
  %626 = vmatpush1.bf16.xpose.msra.mxu0 0
  %627 = vmatprep.subr.bf16.mxu0 0
  %628 = vmatpush1.bf16.xpose.msra.mxu0 0
  %629 = vmatprep.subr.bf16.mxu0 0
  %630 = vmatpush1.bf16.xpose.msra.mxu0 0
  %631 = vmatprep.subr.bf16.mxu0 0
  %632 = vmatpush1.bf16.xpose.msra.mxu0 0
  %633 = vmatprep.subr.bf16.mxu0 0
  %634 = vmatpush1.bf16.xpose.msra.mxu0 0
  %635 = vmatprep.subr.bf16.mxu0 0
  %636 = vmatpush1.bf16.xpose.msra.mxu0 0
  %637 = vmatprep.subr.bf16.mxu0 0
  %638 = vmatpush1.bf16.xpose.msra.mxu0 0
  %639 = vmatprep.subr.bf16.mxu0 0
  %640 = vmatpush1.bf16.xpose.msra.mxu0 0
  %641 = vmatprep.subr.bf16.mxu0 0
  %642 = vmatpush1.bf16.xpose.msra.mxu0 0
  %643 = vmatprep.mubr.bf16.mxu0 0
  %644 = vmatmul.mubr.bf16.gmra.mrb[0].mxu0 %v603
  %v645 = vpop.f32.mrb[0].mxu0
  %v646 = vadd.f32 0.0, %v645
  %v647 = vpop.f32.mrb[0].mxu0
  %v648 = vpop.f32.mrb[0].mxu0
  %v649 = vadd.f32 0.0, %v648
  %v650 = vpop.f32.mrb[0].mxu0
  %651 = vmatprep.mubr.bf16.mxu0 0
  %652 = vmatmul.mubr.bf16.gmra.mrb[0].mxu0 %v606
  %v653 = vpop.f32.mrb[0].mxu0
  %v654 = vadd.f32 0.0, %v653
  %v655 = vpop.f32.mrb[0].mxu0
  %v656 = vpop.f32.mrb[0].mxu0
  %v657 = vpop.f32.mrb[0].mxu0
  %658 = vdwg.mxu0
  %v659 = vmul.f32 %v646, 0.5
  %v660 = vmul.f32 %v649, 0.5
  %v661 = vmul.f32 %v654, 0.5
  %v662 = vsel %vm316, %v659, -inf
  %663 = vmax.xlane.f32.xlu0 %v662
  %v664 = vpop.xlane.xlu0 %663
  %v665 = vsel %vm316, %v660, -inf
  %666 = vmax.xlane.f32.xlu0 %v665
  %v667 = vpop.xlane.xlu0 %666
  %v668 = vsel %vm323, %v661, -inf
  %669 = vmax.xlane.f32.xlu0 %v668
  %v670 = vpop.xlane.xlu0 %669
  %v671 = vsub.f32 %v659, %v664
  %v672 = vsub.f32 %v660, %v667
  %v673 = vsub.f32 %v661, %v670
  %v674 = vmul.f32 %v671, 1.442695
  %v675 = vpow.pop %v674
  %v676 = vmul.f32 %v672, 1.442695
  %v677 = vpow.pop %v676
  %v678 = vmul.f32 %v673, 1.442695
  %v679 = vpow.pop %v678
  %v680 = vsel %vm316, %v675, 0.0
  %681 = vadd.xlane.f32.xlu0 %v680
  %v682 = vpop.xlane.xlu0 %681
  %v683 = vsel %vm316, %v677, 0.0
  %684 = vadd.xlane.f32.xlu0 %v683
  %v685 = vpop.xlane.xlu0 %684
  %v686 = vsel %vm323, %v679, 0.0
  %687 = vadd.xlane.f32.xlu0 %v686
  %v688 = vpop.xlane.xlu0 %687
  %v689 = vrcp.pop %v682
  %v690 = vrcp.pop %v685
  %v691 = vrcp.pop %v688
  %v692 = vmul.f32 %v675, %v689
  %v693 = vmul.f32 %v677, %v690
  %v694 = vmul.f32 %v679, %v691
  %v695 = vpack.c.bf16 %v693, %v692
  %v696 = vpack.c.bf16 %v694, %v694
  %697 = vrot.lane.b32.xlu0 %v254, 120
  %v698 = vpop.permute.xlu0 %697
  %v700 = vsel %vm316, %v695, 0
  %v703 = vsel %vm316, %v696, 0
  %v706 = vsel %vm359, %v698, 0
  %708 = vmatprep.subr.bf16.mxu0 0
  %709 = vmatpush1.bf16.msra.mxu0 %v706
  %710 = vmatprep.subr.bf16.mxu0 0
  %711 = vmatpush1.bf16.msra.mxu0 0
  %712 = vmatprep.subr.bf16.mxu0 0
  %713 = vmatpush1.bf16.msra.mxu0 0
  %714 = vmatprep.subr.bf16.mxu0 0
  %715 = vmatpush1.bf16.msra.mxu0 0
  %716 = vmatprep.subr.bf16.mxu0 0
  %717 = vmatpush1.bf16.msra.mxu0 0
  %718 = vmatprep.subr.bf16.mxu0 0
  %719 = vmatpush1.bf16.msra.mxu0 0
  %720 = vmatprep.subr.bf16.mxu0 0
  %721 = vmatpush1.bf16.msra.mxu0 0
  %722 = vmatprep.subr.bf16.mxu0 0
  %723 = vmatpush1.bf16.msra.mxu0 0
  %724 = vmatprep.subr.bf16.mxu0 0
  %725 = vmatpush1.bf16.msra.mxu0 0
  %726 = vmatprep.subr.bf16.mxu0 0
  %727 = vmatpush1.bf16.msra.mxu0 0
  %728 = vmatprep.subr.bf16.mxu0 0
  %729 = vmatpush1.bf16.msra.mxu0 0
  %730 = vmatprep.subr.bf16.mxu0 0
  %731 = vmatpush1.bf16.msra.mxu0 0
  %732 = vmatprep.subr.bf16.mxu0 0
  %733 = vmatpush1.bf16.msra.mxu0 0
  %734 = vmatprep.subr.bf16.mxu0 0
  %735 = vmatpush1.bf16.msra.mxu0 0
  %736 = vmatprep.subr.bf16.mxu0 0
  %737 = vmatpush1.bf16.msra.mxu0 0
  %738 = vmatprep.subr.bf16.mxu0 0
  %739 = vmatpush1.bf16.msra.mxu0 0
  %740 = vmatprep.mubr.bf16.mxu0 0
  %741 = vmatmul.mubr.bf16.gmra.mrb[0].mxu0 %v700
  %v742 = vpop.f32.mrb[0].mxu0
  %v743 = vadd.f32 0.0, %v742
  %v744 = vpop.f32.mrb[0].mxu0
  %v745 = vpop.f32.mrb[0].mxu0
  %v746 = vadd.f32 0.0, %v745
  %v747 = vpop.f32.mrb[0].mxu0
  %748 = vmatprep.mubr.bf16.mxu0 0
  %749 = vmatmul.mubr.bf16.gmra.mrb[0].mxu0 %v703
  %v750 = vpop.f32.mrb[0].mxu0
  %v751 = vadd.f32 0.0, %v750
  %v752 = vpop.f32.mrb[0].mxu0
  %v753 = vpop.f32.mrb[0].mxu0
  %v754 = vpop.f32.mrb[0].mxu0
  %755 = vdwg.mxu0
  %759 = vrot.lane.b32.xlu0 %v743, 8
  %v760 = vpop.permute.xlu0 %759
  %761 = vrot.lane.b32.xlu0 %v746, 8
  %v762 = vpop.permute.xlu0 %761
  %763 = vrot.lane.b32.xlu0 %v751, 8
  %v764 = vpop.permute.xlu0 %763
  %vm768 = vcmask 97344
  %769 = vst.msk [vmem:[#allocation2] sm:$0xff] %vm768, %v760
  %770 = vst.msk [vmem:[#allocation2 + $0x8] sm:$0xff] %vm768, %v762
  %vm771 = vcmask 93248
  %772 = vst.msk [vmem:[#allocation2 + $0x10] sm:$0xf] %vm771, %v764
  %773 = vrot.lane.b32.xlu0 %v121, 116
  %v774 = vpop.permute.xlu0 %773
  %775 = vrot.lane.b32.xlu0 %v122, 116
  %v776 = vpop.permute.xlu0 %775
  %777 = vrot.lane.b32.xlu0 %v192, 116
  %v778 = vpop.permute.xlu0 %777
  %v780 = vsel %vm255, %v774, 0
  %v783 = vsel %vm255, %v776, 0
  %v786 = vsel %vm255, %v778, 0
  %788 = vmatprep.subr.bf16.mxu0 0
  %789 = vmatpush1.bf16.xpose.msra.mxu0 %v786
  %790 = vmatprep.subr.bf16.mxu0 0
  %791 = vmatpush1.bf16.xpose.msra.mxu0 0
  %792 = vmatprep.subr.bf16.mxu0 0
  %793 = vmatpush1.bf16.xpose.msra.mxu0 0
  %794 = vmatprep.subr.bf16.mxu0 0
  %795 = vmatpush1.bf16.xpose.msra.mxu0 0
  %796 = vmatprep.subr.bf16.mxu0 0
  %797 = vmatpush1.bf16.xpose.msra.mxu0 0
  %798 = vmatprep.subr.bf16.mxu0 0
  %799 = vmatpush1.bf16.xpose.msra.mxu0 0
  %800 = vmatprep.subr.bf16.mxu0 0
  %801 = vmatpush1.bf16.xpose.msra.mxu0 0
  %802 = vmatprep.subr.bf16.mxu0 0
  %803 = vmatpush1.bf16.xpose.msra.mxu0 0
  %804 = vmatprep.subr.bf16.mxu0 0
  %805 = vmatpush1.bf16.xpose.msra.mxu0 0
  %806 = vmatprep.subr.bf16.mxu0 0
  %807 = vmatpush1.bf16.xpose.msra.mxu0 0
  %808 = vmatprep.subr.bf16.mxu0 0
  %809 = vmatpush1.bf16.xpose.msra.mxu0 0
  %810 = vmatprep.subr.bf16.mxu0 0
  %811 = vmatpush1.bf16.xpose.msra.mxu0 0
  %812 = vmatprep.subr.bf16.mxu0 0
  %813 = vmatpush1.bf16.xpose.msra.mxu0 0
  %814 = vmatprep.subr.bf16.mxu0 0
  %815 = vmatpush1.bf16.xpose.msra.mxu0 0
  %816 = vmatprep.subr.bf16.mxu0 0
  %817 = vmatpush1.bf16.xpose.msra.mxu0 0
  %818 = vmatprep.subr.bf16.mxu0 0
  %819 = vmatpush1.bf16.xpose.msra.mxu0 0
  %820 = vmatprep.mubr.bf16.mxu0 0
  %821 = vmatmul.mubr.bf16.gmra.mrb[0].mxu0 %v780
  %v822 = vpop.f32.mrb[0].mxu0
  %v823 = vadd.f32 0.0, %v822
  %v824 = vpop.f32.mrb[0].mxu0
  %v825 = vpop.f32.mrb[0].mxu0
  %v826 = vadd.f32 0.0, %v825
  %v827 = vpop.f32.mrb[0].mxu0
  %828 = vmatprep.mubr.bf16.mxu0 0
  %829 = vmatmul.mubr.bf16.gmra.mrb[0].mxu0 %v783
  %v830 = vpop.f32.mrb[0].mxu0
  %v831 = vadd.f32 0.0, %v830
  %v832 = vpop.f32.mrb[0].mxu0
  %v833 = vpop.f32.mrb[0].mxu0
  %v834 = vpop.f32.mrb[0].mxu0
  %835 = vdwg.mxu0
  %v836 = vmul.f32 %v823, 0.5
  %v837 = vmul.f32 %v826, 0.5
  %v838 = vmul.f32 %v831, 0.5
  %v839 = vsel %vm316, %v836, -inf
  %840 = vmax.xlane.f32.xlu0 %v839
  %v841 = vpop.xlane.xlu0 %840
  %v842 = vsel %vm316, %v837, -inf
  %843 = vmax.xlane.f32.xlu0 %v842
  %v844 = vpop.xlane.xlu0 %843
  %v845 = vsel %vm323, %v838, -inf
  %846 = vmax.xlane.f32.xlu0 %v845
  %v847 = vpop.xlane.xlu0 %846
  %v848 = vsub.f32 %v836, %v841
  %v849 = vsub.f32 %v837, %v844
  %v850 = vsub.f32 %v838, %v847
  %v851 = vmul.f32 %v848, 1.442695
  %v852 = vpow.pop %v851
  %v853 = vmul.f32 %v849, 1.442695
  %v854 = vpow.pop %v853
  %v855 = vmul.f32 %v850, 1.442695
  %v856 = vpow.pop %v855
  %v857 = vsel %vm316, %v852, 0.0
  %858 = vadd.xlane.f32.xlu0 %v857
  %v859 = vpop.xlane.xlu0 %858
  %v860 = vsel %vm316, %v854, 0.0
  %861 = vadd.xlane.f32.xlu0 %v860
  %v862 = vpop.xlane.xlu0 %861
  %v863 = vsel %vm323, %v856, 0.0
  %864 = vadd.xlane.f32.xlu0 %v863
  %v865 = vpop.xlane.xlu0 %864
  %v866 = vrcp.pop %v859
  %v867 = vrcp.pop %v862
  %v868 = vrcp.pop %v865
  %v869 = vmul.f32 %v852, %v866
  %v870 = vmul.f32 %v854, %v867
  %v871 = vmul.f32 %v856, %v868
  %v872 = vpack.c.bf16 %v870, %v869
  %v873 = vpack.c.bf16 %v871, %v871
  %874 = vrot.lane.b32.xlu0 %v254, 116
  %v875 = vpop.permute.xlu0 %874
  %v877 = vsel %vm316, %v872, 0
  %v880 = vsel %vm316, %v873, 0
  %v883 = vsel %vm359, %v875, 0
  %885 = vmatprep.subr.bf16.mxu0 0
  %886 = vmatpush1.bf16.msra.mxu0 %v883
  %887 = vmatprep.subr.bf16.mxu0 0
  %888 = vmatpush1.bf16.msra.mxu0 0
  %889 = vmatprep.subr.bf16.mxu0 0
  %890 = vmatpush1.bf16.msra.mxu0 0
  %891 = vmatprep.subr.bf16.mxu0 0
  %892 = vmatpush1.bf16.msra.mxu0 0
  %893 = vmatprep.subr.bf16.mxu0 0
  %894 = vmatpush1.bf16.msra.mxu0 0
  %895 = vmatprep.subr.bf16.mxu0 0
  %896 = vmatpush1.bf16.msra.mxu0 0
  %897 = vmatprep.subr.bf16.mxu0 0
  %898 = vmatpush1.bf16.msra.mxu0 0
  %899 = vmatprep.subr.bf16.mxu0 0
  %900 = vmatpush1.bf16.msra.mxu0 0
  %901 = vmatprep.subr.bf16.mxu0 0
  %902 = vmatpush1.bf16.msra.mxu0 0
  %903 = vmatprep.subr.bf16.mxu0 0
  %904 = vmatpush1.bf16.msra.mxu0 0
  %905 = vmatprep.subr.bf16.mxu0 0
  %906 = vmatpush1.bf16.msra.mxu0 0
  %907 = vmatprep.subr.bf16.mxu0 0
  %908 = vmatpush1.bf16.msra.mxu0 0
  %909 = vmatprep.subr.bf16.mxu0 0
  %910 = vmatpush1.bf16.msra.mxu0 0
  %911 = vmatprep.subr.bf16.mxu0 0
  %912 = vmatpush1.bf16.msra.mxu0 0
  %913 = vmatprep.subr.bf16.mxu0 0
  %914 = vmatpush1.bf16.msra.mxu0 0
  %915 = vmatprep.subr.bf16.mxu0 0
  %916 = vmatpush1.bf16.msra.mxu0 0
  %917 = vmatprep.mubr.bf16.mxu0 0
  %918 = vmatmul.mubr.bf16.gmra.mrb[0].mxu0 %v877
  %v919 = vpop.f32.mrb[0].mxu0
  %v920 = vadd.f32 0.0, %v919
  %v921 = vpop.f32.mrb[0].mxu0
  %v922 = vpop.f32.mrb[0].mxu0
  %v923 = vadd.f32 0.0, %v922
  %v924 = vpop.f32.mrb[0].mxu0
  %925 = vmatprep.mubr.bf16.mxu0 0
  %926 = vmatmul.mubr.bf16.gmra.mrb[0].mxu0 %v880
  %v927 = vpop.f32.mrb[0].mxu0
  %v928 = vadd.f32 0.0, %v927
  %v929 = vpop.f32.mrb[0].mxu0
  %v930 = vpop.f32.mrb[0].mxu0
  %v931 = vpop.f32.mrb[0].mxu0
  %932 = vdwg.mxu0
  %936 = vrot.lane.b32.xlu0 %v920, 12
  %v937 = vpop.permute.xlu0 %936
  %938 = vrot.lane.b32.xlu0 %v923, 12
  %v939 = vpop.permute.xlu0 %938
  %940 = vrot.lane.b32.xlu0 %v928, 12
  %v941 = vpop.permute.xlu0 %940
  %vm945 = vcmask 130144
  %946 = vst.msk [vmem:[#allocation2] sm:$0xff] %vm945, %v937
  %947 = vst.msk [vmem:[#allocation2 + $0x8] sm:$0xff] %vm945, %v939
  %vm948 = vcmask 126048
  %949 = vst.msk [vmem:[#allocation2 + $0x10] sm:$0xf] %vm948, %v941
  %950 = vrot.lane.b32.xlu0 %v121, 112
  %v951 = vpop.permute.xlu0 %950
  %952 = vrot.lane.b32.xlu0 %v122, 112
  %v953 = vpop.permute.xlu0 %952
  %954 = vrot.lane.b32.xlu0 %v192, 112
  %v955 = vpop.permute.xlu0 %954
  %v957 = vsel %vm255, %v951, 0
  %v960 = vsel %vm255, %v953, 0
  %v963 = vsel %vm255, %v955, 0
  %965 = vmatprep.subr.bf16.mxu0 0
  %966 = vmatpush1.bf16.xpose.msra.mxu0 %v963
  %967 = vmatprep.subr.bf16.mxu0 0
  %968 = vmatpush1.bf16.xpose.msra.mxu0 0
  %969 = vmatprep.subr.bf16.mxu0 0
  %970 = vmatpush1.bf16.xpose.msra.mxu0 0
  %971 = vmatprep.subr.bf16.mxu0 0
  %972 = vmatpush1.bf16.xpose.msra.mxu0 0
  %973 = vmatprep.subr.bf16.mxu0 0
  %974 = vmatpush1.bf16.xpose.msra.mxu0 0
  %975 = vmatprep.subr.bf16.mxu0 0
  %976 = vmatpush1.bf16.xpose.msra.mxu0 0
  %977 = vmatprep.subr.bf16.mxu0 0
  %978 = vmatpush1.bf16.xpose.msra.mxu0 0
  %979 = vmatprep.subr.bf16.mxu0 0
  %980 = vmatpush1.bf16.xpose.msra.mxu0 0
  %981 = vmatprep.subr.bf16.mxu0 0
  %982 = vmatpush1.bf16.xpose.msra.mxu0 0
  %983 = vmatprep.subr.bf16.mxu0 0
  %984 = vmatpush1.bf16.xpose.msra.mxu0 0
  %985 = vmatprep.subr.bf16.mxu0 0
  %986 = vmatpush1.bf16.xpose.msra.mxu0 0
  %987 = vmatprep.subr.bf16.mxu0 0
  %988 = vmatpush1.bf16.xpose.msra.mxu0 0
  %989 = vmatprep.subr.bf16.mxu0 0
  %990 = vmatpush1.bf16.xpose.msra.mxu0 0
  %991 = vmatprep.subr.bf16.mxu0 0
  %992 = vmatpush1.bf16.xpose.msra.mxu0 0
  %993 = vmatprep.subr.bf16.mxu0 0
  %994 = vmatpush1.bf16.xpose.msra.mxu0 0
  %995 = vmatprep.subr.bf16.mxu0 0
  %996 = vmatpush1.bf16.xpose.msra.mxu0 0
  %997 = vmatprep.mubr.bf16.mxu0 0
  %998 = vmatmul.mubr.bf16.gmra.mrb[0].mxu0 %v957
  %v999 = vpop.f32.mrb[0].mxu0
  %v1000 = vadd.f32 0.0, %v999
  %v1001 = vpop.f32.mrb[0].mxu0
  %v1002 = vpop.f32.mrb[0].mxu0
  %v1003 = vadd.f32 0.0, %v1002
  %v1004 = vpop.f32.mrb[0].mxu0
  %1005 = vmatprep.mubr.bf16.mxu0 0
  %1006 = vmatmul.mubr.bf16.gmra.mrb[0].mxu0 %v960
  %v1007 = vpop.f32.mrb[0].mxu0
  %v1008 = vadd.f32 0.0, %v1007
  %v1009 = vpop.f32.mrb[0].mxu0
  %v1010 = vpop.f32.mrb[0].mxu0
  %v1011 = vpop.f32.mrb[0].mxu0
  %1012 = vdwg.mxu0
  %v1013 = vmul.f32 %v1000, 0.5
  %v1014 = vmul.f32 %v1003, 0.5
  %v1015 = vmul.f32 %v1008, 0.5
  %v1016 = vsel %vm316, %v1013, -inf
  %1017 = vmax.xlane.f32.xlu0 %v1016
  %v1018 = vpop.xlane.xlu0 %1017
  %v1019 = vsel %vm316, %v1014, -inf
  %1020 = vmax.xlane.f32.xlu0 %v1019
  %v1021 = vpop.xlane.xlu0 %1020
  %v1022 = vsel %vm323, %v1015, -inf
  %1023 = vmax.xlane.f32.xlu0 %v1022
  %v1024 = vpop.xlane.xlu0 %1023
  %v1025 = vsub.f32 %v1013, %v1018
  %v1026 = vsub.f32 %v1014, %v1021
  %v1027 = vsub.f32 %v1015, %v1024
  %v1028 = vmul.f32 %v1025, 1.442695
  %v1029 = vpow.pop %v1028
  %v1030 = vmul.f32 %v1026, 1.442695
  %v1031 = vpow.pop %v1030
  %v1032 = vmul.f32 %v1027, 1.442695
  %v1033 = vpow.pop %v1032
  %v1034 = vsel %vm316, %v1029, 0.0
  %1035 = vadd.xlane.f32.xlu0 %v1034
  %v1036 = vpop.xlane.xlu0 %1035
  %v1037 = vsel %vm316, %v1031, 0.0
  %1038 = vadd.xlane.f32.xlu0 %v1037
  %v1039 = vpop.xlane.xlu0 %1038
  %v1040 = vsel %vm323, %v1033, 0.0
  %1041 = vadd.xlane.f32.xlu0 %v1040
  %v1042 = vpop.xlane.xlu0 %1041
  %v1043 = vrcp.pop %v1036
  %v1044 = vrcp.pop %v1039
  %v1045 = vrcp.pop %v1042
  %v1046 = vmul.f32 %v1029, %v1043
  %v1047 = vmul.f32 %v1031, %v1044
  %v1048 = vmul.f32 %v1033, %v1045
  %v1049 = vpack.c.bf16 %v1047, %v1046
  %v1050 = vpack.c.bf16 %v1048, %v1048
  %1051 = vrot.lane.b32.xlu0 %v254, 112
  %v1052 = vpop.permute.xlu0 %1051
  %v1054 = vsel %vm316, %v1049, 0
  %v1057 = vsel %vm316, %v1050, 0
  %v1060 = vsel %vm359, %v1052, 0
  %1062 = vmatprep.subr.bf16.mxu0 0
  %1063 = vmatpush1.bf16.msra.mxu0 %v1060
  %1064 = vmatprep.subr.bf16.mxu0 0
  %1065 = vmatpush1.bf16.msra.mxu0 0
  %1066 = vmatprep.subr.bf16.mxu0 0
  %1067 = vmatpush1.bf16.msra.mxu0 0
  %1068 = vmatprep.subr.bf16.mxu0 0
  %1069 = vmatpush1.bf16.msra.mxu0 0
  %1070 = vmatprep.subr.bf16.mxu0 0
  %1071 = vmatpush1.bf16.msra.mxu0 0
  %1072 = vmatprep.subr.bf16.mxu0 0
  %1073 = vmatpush1.bf16.msra.mxu0 0
  %1074 = vmatprep.subr.bf16.mxu0 0
  %1075 = vmatpush1.bf16.msra.mxu0 0
  %1076 = vmatprep.subr.bf16.mxu0 0
  %1077 = vmatpush1.bf16.msra.mxu0 0
  %1078 = vmatprep.subr.bf16.mxu0 0
  %1079 = vmatpush1.bf16.msra.mxu0 0
  %1080 = vmatprep.subr.bf16.mxu0 0
  %1081 = vmatpush1.bf16.msra.mxu0 0
  %1082 = vmatprep.subr.bf16.mxu0 0
  %1083 = vmatpush1.bf16.msra.mxu0 0
  %1084 = vmatprep.subr.bf16.mxu0 0
  %1085 = vmatpush1.bf16.msra.mxu0 0
  %1086 = vmatprep.subr.bf16.mxu0 0
  %1087 = vmatpush1.bf16.msra.mxu0 0
  %1088 = vmatprep.subr.bf16.mxu0 0
  %1089 = vmatpush1.bf16.msra.mxu0 0
  %1090 = vmatprep.subr.bf16.mxu0 0
  %1091 = vmatpush1.bf16.msra.mxu0 0
  %1092 = vmatprep.subr.bf16.mxu0 0
  %1093 = vmatpush1.bf16.msra.mxu0 0
  %1094 = vmatprep.mubr.bf16.mxu0 0
  %1095 = vmatmul.mubr.bf16.gmra.mrb[0].mxu0 %v1054
  %v1096 = vpop.f32.mrb[0].mxu0
  %v1097 = vadd.f32 0.0, %v1096
  %v1098 = vpop.f32.mrb[0].mxu0
  %v1099 = vpop.f32.mrb[0].mxu0
  %v1100 = vadd.f32 0.0, %v1099
  %v1101 = vpop.f32.mrb[0].mxu0
  %1102 = vmatprep.mubr.bf16.mxu0 0
  %1103 = vmatmul.mubr.bf16.gmra.mrb[0].mxu0 %v1057
  %v1104 = vpop.f32.mrb[0].mxu0
  %v1105 = vadd.f32 0.0, %v1104
  %v1106 = vpop.f32.mrb[0].mxu0
  %v1107 = vpop.f32.mrb[0].mxu0
  %v1108 = vpop.f32.mrb[0].mxu0
  %1109 = vdwg.mxu0
  %1113 = vrot.lane.b32.xlu0 %v1097, 16
  %v1114 = vpop.permute.xlu0 %1113
  %1115 = vrot.lane.b32.xlu0 %v1100, 16
  %v1116 = vpop.permute.xlu0 %1115
  %1117 = vrot.lane.b32.xlu0 %v1105, 16
  %v1118 = vpop.permute.xlu0 %1117
  %vm1122 = vcmask 162944
  %1123 = vst.msk [vmem:[#allocation2] sm:$0xff] %vm1122, %v1114
  %1124 = vst.msk [vmem:[#allocation2 + $0x8] sm:$0xff] %vm1122, %v1116
  %vm1125 = vcmask 158848
  %1126 = vst.msk [vmem:[#allocation2 + $0x10] sm:$0xf] %vm1125, %v1118
  %1127 = vrot.lane.b32.xlu0 %v121, 108
  %v1128 = vpop.permute.xlu0 %1127
  %1129 = vrot.lane.b32.xlu0 %v122, 108
  %v1130 = vpop.permute.xlu0 %1129
  %1131 = vrot.lane.b32.xlu0 %v192, 108
  %v1132 = vpop.permute.xlu0 %1131
  %v1134 = vsel %vm255, %v1128, 0
  %v1137 = vsel %vm255, %v1130, 0
  %v1140 = vsel %vm255, %v1132, 0
  %1142 = vmatprep.subr.bf16.mxu0 0
  %1143 = vmatpush1.bf16.xpose.msra.mxu0 %v1140
  %1144 = vmatprep.subr.bf16.mxu0 0
  %1145 = vmatpush1.bf16.xpose.msra.mxu0 0
  %1146 = vmatprep.subr.bf16.mxu0 0
  %1147 = vmatpush1.bf16.xpose.msra.mxu0 0
  %1148 = vmatprep.subr.bf16.mxu0 0
  %1149 = vmatpush1.bf16.xpose.msra.mxu0 0
  %1150 = vmatprep.subr.bf16.mxu0 0
  %1151 = vmatpush1.bf16.xpose.msra.mxu0 0
  %1152 = vmatprep.subr.bf16.mxu0 0
  %1153 = vmatpush1.bf16.xpose.msra.mxu0 0
  %1154 = vmatprep.subr.bf16.mxu0 0
  %1155 = vmatpush1.bf16.xpose.msra.mxu0 0
  %1156 = vmatprep.subr.bf16.mxu0 0
  %1157 = vmatpush1.bf16.xpose.msra.mxu0 0
  %1158 = vmatprep.subr.bf16.mxu0 0
  %1159 = vmatpush1.bf16.xpose.msra.mxu0 0
  %1160 = vmatprep.subr.bf16.mxu0 0
  %1161 = vmatpush1.bf16.xpose.msra.mxu0 0
  %1162 = vmatprep.subr.bf16.mxu0 0
  %1163 = vmatpush1.bf16.xpose.msra.mxu0 0
  %1164 = vmatprep.subr.bf16.mxu0 0
  %1165 = vmatpush1.bf16.xpose.msra.mxu0 0
  %1166 = vmatprep.subr.bf16.mxu0 0
  %1167 = vmatpush1.bf16.xpose.msra.mxu0 0
  %1168 = vmatprep.subr.bf16.mxu0 0
  %1169 = vmatpush1.bf16.xpose.msra.mxu0 0
  %1170 = vmatprep.subr.bf16.mxu0 0
  %1171 = vmatpush1.bf16.xpose.msra.mxu0 0
  %1172 = vmatprep.subr.bf16.mxu0 0
  %1173 = vmatpush1.bf16.xpose.msra.mxu0 0
  %1174 = vmatprep.mubr.bf16.mxu0 0
  %1175 = vmatmul.mubr.bf16.gmra.mrb[0].mxu0 %v1134
  %v1176 = vpop.f32.mrb[0].mxu0
  %v1177 = vadd.f32 0.0, %v1176
  %v1178 = vpop.f32.mrb[0].mxu0
  %v1179 = vpop.f32.mrb[0].mxu0
  %v1180 = vadd.f32 0.0, %v1179
  %v1181 = vpop.f32.mrb[0].mxu0
  %1182 = vmatprep.mubr.bf16.mxu0 0
  %1183 = vmatmul.mubr.bf16.gmra.mrb[0].mxu0 %v1137
  %v1184 = vpop.f32.mrb[0].mxu0
  %v1185 = vadd.f32 0.0, %v1184
  %v1186 = vpop.f32.mrb[0].mxu0
  %v1187 = vpop.f32.mrb[0].mxu0
  %v1188 = vpop.f32.mrb[0].mxu0
  %1189 = vdwg.mxu0
  %v1190 = vmul.f32 %v1177, 0.5
  %v1191 = vmul.f32 %v1180, 0.5
  %v1192 = vmul.f32 %v1185, 0.5
  %v1193 = vsel %vm316, %v1190, -inf
  %1194 = vmax.xlane.f32.xlu0 %v1193
  %v1195 = vpop.xlane.xlu0 %1194
  %v1196 = vsel %vm316, %v1191, -inf
  %1197 = vmax.xlane.f32.xlu0 %v1196
  %v1198 = vpop.xlane.xlu0 %1197
  %v1199 = vsel %vm323, %v1192, -inf
  %1200 = vmax.xlane.f32.xlu0 %v1199
  %v1201 = vpop.xlane.xlu0 %1200
  %v1202 = vsub.f32 %v1190, %v1195
  %v1203 = vsub.f32 %v1191, %v1198
  %v1204 = vsub.f32 %v1192, %v1201
  %v1205 = vmul.f32 %v1202, 1.442695
  %v1206 = vpow.pop %v1205
  %v1207 = vmul.f32 %v1203, 1.442695
  %v1208 = vpow.pop %v1207
  %v1209 = vmul.f32 %v1204, 1.442695
  %v1210 = vpow.pop %v1209
  %v1211 = vsel %vm316, %v1206, 0.0
  %1212 = vadd.xlane.f32.xlu0 %v1211
  %v1213 = vpop.xlane.xlu0 %1212
  %v1214 = vsel %vm316, %v1208, 0.0
  %1215 = vadd.xlane.f32.xlu0 %v1214
  %v1216 = vpop.xlane.xlu0 %1215
  %v1217 = vsel %vm323, %v1210, 0.0
  %1218 = vadd.xlane.f32.xlu0 %v1217
  %v1219 = vpop.xlane.xlu0 %1218
  %v1220 = vrcp.pop %v1213
  %v1221 = vrcp.pop %v1216
  %v1222 = vrcp.pop %v1219
  %v1223 = vmul.f32 %v1206, %v1220
  %v1224 = vmul.f32 %v1208, %v1221
  %v1225 = vmul.f32 %v1210, %v1222
  %v1226 = vpack.c.bf16 %v1224, %v1223
  %v1227 = vpack.c.bf16 %v1225, %v1225
  %1228 = vrot.lane.b32.xlu0 %v254, 108
  %v1229 = vpop.permute.xlu0 %1228
  %v1231 = vsel %vm316, %v1226, 0
  %v1234 = vsel %vm316, %v1227, 0
  %v1237 = vsel %vm359, %v1229, 0
  %1239 = vmatprep.subr.bf16.mxu0 0
  %1240 = vmatpush1.bf16.msra.mxu0 %v1237
  %1241 = vmatprep.subr.bf16.mxu0 0
  %1242 = vmatpush1.bf16.msra.mxu0 0
  %1243 = vmatprep.subr.bf16.mxu0 0
  %1244 = vmatpush1.bf16.msra.mxu0 0
  %1245 = vmatprep.subr.bf16.mxu0 0
  %1246 = vmatpush1.bf16.msra.mxu0 0
  %1247 = vmatprep.subr.bf16.mxu0 0
  %1248 = vmatpush1.bf16.msra.mxu0 0
  %1249 = vmatprep.subr.bf16.mxu0 0
  %1250 = vmatpush1.bf16.msra.mxu0 0
  %1251 = vmatprep.subr.bf16.mxu0 0
  %1252 = vmatpush1.bf16.msra.mxu0 0
  %1253 = vmatprep.subr.bf16.mxu0 0
  %1254 = vmatpush1.bf16.msra.mxu0 0
  %1255 = vmatprep.subr.bf16.mxu0 0
  %1256 = vmatpush1.bf16.msra.mxu0 0
  %1257 = vmatprep.subr.bf16.mxu0 0
  %1258 = vmatpush1.bf16.msra.mxu0 0
  %1259 = vmatprep.subr.bf16.mxu0 0
  %1260 = vmatpush1.bf16.msra.mxu0 0
  %1261 = vmatprep.subr.bf16.mxu0 0
  %1262 = vmatpush1.bf16.msra.mxu0 0
  %1263 = vmatprep.subr.bf16.mxu0 0
  %1264 = vmatpush1.bf16.msra.mxu0 0
  %1265 = vmatprep.subr.bf16.mxu0 0
  %1266 = vmatpush1.bf16.msra.mxu0 0
  %1267 = vmatprep.subr.bf16.mxu0 0
  %1268 = vmatpush1.bf16.msra.mxu0 0
  %1269 = vmatprep.subr.bf16.mxu0 0
  %1270 = vmatpush1.bf16.msra.mxu0 0
  %1271 = vmatprep.mubr.bf16.mxu0 0
  %1272 = vmatmul.mubr.bf16.gmra.mrb[0].mxu0 %v1231
  %v1273 = vpop.f32.mrb[0].mxu0
  %v1274 = vadd.f32 0.0, %v1273
  %v1275 = vpop.f32.mrb[0].mxu0
  %v1276 = vpop.f32.mrb[0].mxu0
  %v1277 = vadd.f32 0.0, %v1276
  %v1278 = vpop.f32.mrb[0].mxu0
  %1279 = vmatprep.mubr.bf16.mxu0 0
  %1280 = vmatmul.mubr.bf16.gmra.mrb[0].mxu0 %v1234
  %v1281 = vpop.f32.mrb[0].mxu0
  %v1282 = vadd.f32 0.0, %v1281
  %v1283 = vpop.f32.mrb[0].mxu0
  %v1284 = vpop.f32.mrb[0].mxu0
  %v1285 = vpop.f32.mrb[0].mxu0
  %1286 = vdwg.mxu0
  %1290 = vrot.lane.b32.xlu0 %v1274, 20
  %v1291 = vpop.permute.xlu0 %1290
  %1292 = vrot.lane.b32.xlu0 %v1277, 20
  %v1293 = vpop.permute.xlu0 %1292
  %1294 = vrot.lane.b32.xlu0 %v1282, 20
  %v1295 = vpop.permute.xlu0 %1294
  %vm1299 = vcmask 195744
  %1300 = vst.msk [vmem:[#allocation2] sm:$0xff] %vm1299, %v1291
  %1301 = vst.msk [vmem:[#allocation2 + $0x8] sm:$0xff] %vm1299, %v1293
  %vm1302 = vcmask 191648
  %1303 = vst.msk [vmem:[#allocation2 + $0x10] sm:$0xf] %vm1302, %v1295
  %1304 = vrot.lane.b32.xlu0 %v121, 104
  %v1305 = vpop.permute.xlu0 %1304
  %1306 = vrot.lane.b32.xlu0 %v122, 104
  %v1307 = vpop.permute.xlu0 %1306
  %1308 = vrot.lane.b32.xlu0 %v192, 104
  %v1309 = vpop.permute.xlu0 %1308
  %v1311 = vsel %vm255, %v1305, 0
  %v1314 = vsel %vm255, %v1307, 0
  %v1317 = vsel %vm255, %v1309, 0
  %1319 = vmatprep.subr.bf16.mxu0 0
  %1320 = vmatpush1.bf16.xpose.msra.mxu0 %v1317
  %1321 = vmatprep.subr.bf16.mxu0 0
  %1322 = vmatpush1.bf16.xpose.msra.mxu0 0
  %1323 = vmatprep.subr.bf16.mxu0 0
  %1324 = vmatpush1.bf16.xpose.msra.mxu0 0
  %1325 = vmatprep.subr.bf16.mxu0 0
  %1326 = vmatpush1.bf16.xpose.msra.mxu0 0
  %1327 = vmatprep.subr.bf16.mxu0 0
  %1328 = vmatpush1.bf16.xpose.msra.mxu0 0
  %1329 = vmatprep.subr.bf16.mxu0 0
  %1330 = vmatpush1.bf16.xpose.msra.mxu0 0
  %1331 = vmatprep.subr.bf16.mxu0 0
  %1332 = vmatpush1.bf16.xpose.msra.mxu0 0
  %1333 = vmatprep.subr.bf16.mxu0 0
  %1334 = vmatpush1.bf16.xpose.msra.mxu0 0
  %1335 = vmatprep.subr.bf16.mxu0 0
  %1336 = vmatpush1.bf16.xpose.msra.mxu0 0
  %1337 = vmatprep.subr.bf16.mxu0 0
  %1338 = vmatpush1.bf16.xpose.msra.mxu0 0
  %1339 = vmatprep.subr.bf16.mxu0 0
  %1340 = vmatpush1.bf16.xpose.msra.mxu0 0
  %1341 = vmatprep.subr.bf16.mxu0 0
  %1342 = vmatpush1.bf16.xpose.msra.mxu0 0
  %1343 = vmatprep.subr.bf16.mxu0 0
  %1344 = vmatpush1.bf16.xpose.msra.mxu0 0
  %1345 = vmatprep.subr.bf16.mxu0 0
  %1346 = vmatpush1.bf16.xpose.msra.mxu0 0
  %1347 = vmatprep.subr.bf16.mxu0 0
  %1348 = vmatpush1.bf16.xpose.msra.mxu0 0
  %1349 = vmatprep.subr.bf16.mxu0 0
  %1350 = vmatpush1.bf16.xpose.msra.mxu0 0
  %1351 = vmatprep.mubr.bf16.mxu0 0
  %1352 = vmatmul.mubr.bf16.gmra.mrb[0].mxu0 %v1311
  %v1353 = vpop.f32.mrb[0].mxu0
  %v1354 = vadd.f32 0.0, %v1353
  %v1355 = vpop.f32.mrb[0].mxu0
  %v1356 = vpop.f32.mrb[0].mxu0
  %v1357 = vadd.f32 0.0, %v1356
  %v1358 = vpop.f32.mrb[0].mxu0
  %1359 = vmatprep.mubr.bf16.mxu0 0
  %1360 = vmatmul.mubr.bf16.gmra.mrb[0].mxu0 %v1314
  %v1361 = vpop.f32.mrb[0].mxu0
  %v1362 = vadd.f32 0.0, %v1361
  %v1363 = vpop.f32.mrb[0].mxu0
  %v1364 = vpop.f32.mrb[0].mxu0
  %v1365 = vpop.f32.mrb[0].mxu0
  %1366 = vdwg.mxu0
  %v1367 = vmul.f32 %v1354, 0.5
  %v1368 = vmul.f32 %v1357, 0.5
  %v1369 = vmul.f32 %v1362, 0.5
  %v1370 = vsel %vm316, %v1367, -inf
  %1371 = vmax.xlane.f32.xlu0 %v1370
  %v1372 = vpop.xlane.xlu0 %1371
  %v1373 = vsel %vm316, %v1368, -inf
  %1374 = vmax.xlane.f32.xlu0 %v1373
  %v1375 = vpop.xlane.xlu0 %1374
  %v1376 = vsel %vm323, %v1369, -inf
  %1377 = vmax.xlane.f32.xlu0 %v1376
  %v1378 = vpop.xlane.xlu0 %1377
  %v1379 = vsub.f32 %v1367, %v1372
  %v1380 = vsub.f32 %v1368, %v1375
  %v1381 = vsub.f32 %v1369, %v1378
  %v1382 = vmul.f32 %v1379, 1.442695
  %v1383 = vpow.pop %v1382
  %v1384 = vmul.f32 %v1380, 1.442695
  %v1385 = vpow.pop %v1384
  %v1386 = vmul.f32 %v1381, 1.442695
  %v1387 = vpow.pop %v1386
  %v1388 = vsel %vm316, %v1383, 0.0
  %1389 = vadd.xlane.f32.xlu0 %v1388
  %v1390 = vpop.xlane.xlu0 %1389
  %v1391 = vsel %vm316, %v1385, 0.0
  %1392 = vadd.xlane.f32.xlu0 %v1391
  %v1393 = vpop.xlane.xlu0 %1392
  %v1394 = vsel %vm323, %v1387, 0.0
  %1395 = vadd.xlane.f32.xlu0 %v1394
  %v1396 = vpop.xlane.xlu0 %1395
  %v1397 = vrcp.pop %v1390
  %v1398 = vrcp.pop %v1393
  %v1399 = vrcp.pop %v1396
  %v1400 = vmul.f32 %v1383, %v1397
  %v1401 = vmul.f32 %v1385, %v1398
  %v1402 = vmul.f32 %v1387, %v1399
  %v1403 = vpack.c.bf16 %v1401, %v1400
  %v1404 = vpack.c.bf16 %v1402, %v1402
  %1405 = vrot.lane.b32.xlu0 %v254, 104
  %v1406 = vpop.permute.xlu0 %1405
  %v1408 = vsel %vm316, %v1403, 0
  %v1411 = vsel %vm316, %v1404, 0
  %v1414 = vsel %vm359, %v1406, 0
  %1416 = vmatprep.subr.bf16.mxu0 0
  %1417 = vmatpush1.bf16.msra.mxu0 %v1414
  %1418 = vmatprep.subr.bf16.mxu0 0
  %1419 = vmatpush1.bf16.msra.mxu0 0
  %1420 = vmatprep.subr.bf16.mxu0 0
  %1421 = vmatpush1.bf16.msra.mxu0 0
  %1422 = vmatprep.subr.bf16.mxu0 0
  %1423 = vmatpush1.bf16.msra.mxu0 0
  %1424 = vmatprep.subr.bf16.mxu0 0
  %1425 = vmatpush1.bf16.msra.mxu0 0
  %1426 = vmatprep.subr.bf16.mxu0 0
  %1427 = vmatpush1.bf16.msra.mxu0 0
  %1428 = vmatprep.subr.bf16.mxu0 0
  %1429 = vmatpush1.bf16.msra.mxu0 0
  %1430 = vmatprep.subr.bf16.mxu0 0
  %1431 = vmatpush1.bf16.msra.mxu0 0
  %1432 = vmatprep.subr.bf16.mxu0 0
  %1433 = vmatpush1.bf16.msra.mxu0 0
  %1434 = vmatprep.subr.bf16.mxu0 0
  %1435 = vmatpush1.bf16.msra.mxu0 0
  %1436 = vmatprep.subr.bf16.mxu0 0
  %1437 = vmatpush1.bf16.msra.mxu0 0
  %1438 = vmatprep.subr.bf16.mxu0 0
  %1439 = vmatpush1.bf16.msra.mxu0 0
  %1440 = vmatprep.subr.bf16.mxu0 0
  %1441 = vmatpush1.bf16.msra.mxu0 0
  %1442 = vmatprep.subr.bf16.mxu0 0
  %1443 = vmatpush1.bf16.msra.mxu0 0
  %1444 = vmatprep.subr.bf16.mxu0 0
  %1445 = vmatpush1.bf16.msra.mxu0 0
  %1446 = vmatprep.subr.bf16.mxu0 0
  %1447 = vmatpush1.bf16.msra.mxu0 0
  %1448 = vmatprep.mubr.bf16.mxu0 0
  %1449 = vmatmul.mubr.bf16.gmra.mrb[0].mxu0 %v1408
  %v1450 = vpop.f32.mrb[0].mxu0
  %v1451 = vadd.f32 0.0, %v1450
  %v1452 = vpop.f32.mrb[0].mxu0
  %v1453 = vpop.f32.mrb[0].mxu0
  %v1454 = vadd.f32 0.0, %v1453
  %v1455 = vpop.f32.mrb[0].mxu0
  %1456 = vmatprep.mubr.bf16.mxu0 0
  %1457 = vmatmul.mubr.bf16.gmra.mrb[0].mxu0 %v1411
  %v1458 = vpop.f32.mrb[0].mxu0
  %v1459 = vadd.f32 0.0, %v1458
  %v1460 = vpop.f32.mrb[0].mxu0
  %v1461 = vpop.f32.mrb[0].mxu0
  %v1462 = vpop.f32.mrb[0].mxu0
  %1463 = vdwg.mxu0
  %1467 = vrot.lane.b32.xlu0 %v1451, 24
  %v1468 = vpop.permute.xlu0 %1467
  %1469 = vrot.lane.b32.xlu0 %v1454, 24
  %v1470 = vpop.permute.xlu0 %1469
  %1471 = vrot.lane.b32.xlu0 %v1459, 24
  %v1472 = vpop.permute.xlu0 %1471
  %vm1476 = vcmask 228544
  %1477 = vst.msk [vmem:[#allocation2] sm:$0xff] %vm1476, %v1468
  %1478 = vst.msk [vmem:[#allocation2 + $0x8] sm:$0xff] %vm1476, %v1470
  %vm1479 = vcmask 224448
  %1480 = vst.msk [vmem:[#allocation2 + $0x10] sm:$0xf] %vm1479, %v1472
  %1481 = vrot.lane.b32.xlu0 %v121, 100
  %v1482 = vpop.permute.xlu0 %1481
  %1483 = vrot.lane.b32.xlu0 %v122, 100
  %v1484 = vpop.permute.xlu0 %1483
  %1485 = vrot.lane.b32.xlu0 %v192, 100
  %v1486 = vpop.permute.xlu0 %1485
  %v1488 = vsel %vm255, %v1482, 0
  %v1491 = vsel %vm255, %v1484, 0
  %v1494 = vsel %vm255, %v1486, 0
  %1496 = vmatprep.subr.bf16.mxu0 0
  %1497 = vmatpush1.bf16.xpose.msra.mxu0 %v1494
  %1498 = vmatprep.subr.bf16.mxu0 0
  %1499 = vmatpush1.bf16.xpose.msra.mxu0 0
  %1500 = vmatprep.subr.bf16.mxu0 0
  %1501 = vmatpush1.bf16.xpose.msra.mxu0 0
  %1502 = vmatprep.subr.bf16.mxu0 0
  %1503 = vmatpush1.bf16.xpose.msra.mxu0 0
  %1504 = vmatprep.subr.bf16.mxu0 0
  %1505 = vmatpush1.bf16.xpose.msra.mxu0 0
  %1506 = vmatprep.subr.bf16.mxu0 0
  %1507 = vmatpush1.bf16.xpose.msra.mxu0 0
  %1508 = vmatprep.subr.bf16.mxu0 0
  %1509 = vmatpush1.bf16.xpose.msra.mxu0 0
  %1510 = vmatprep.subr.bf16.mxu0 0
  %1511 = vmatpush1.bf16.xpose.msra.mxu0 0
  %1512 = vmatprep.subr.bf16.mxu0 0
  %1513 = vmatpush1.bf16.xpose.msra.mxu0 0
  %1514 = vmatprep.subr.bf16.mxu0 0
  %1515 = vmatpush1.bf16.xpose.msra.mxu0 0
  %1516 = vmatprep.subr.bf16.mxu0 0
  %1517 = vmatpush1.bf16.xpose.msra.mxu0 0
  %1518 = vmatprep.subr.bf16.mxu0 0
  %1519 = vmatpush1.bf16.xpose.msra.mxu0 0
  %1520 = vmatprep.subr.bf16.mxu0 0
  %1521 = vmatpush1.bf16.xpose.msra.mxu0 0
  %1522 = vmatprep.subr.bf16.mxu0 0
  %1523 = vmatpush1.bf16.xpose.msra.mxu0 0
  %1524 = vmatprep.subr.bf16.mxu0 0
  %1525 = vmatpush1.bf16.xpose.msra.mxu0 0
  %1526 = vmatprep.subr.bf16.mxu0 0
  %1527 = vmatpush1.bf16.xpose.msra.mxu0 0
  %1528 = vmatprep.mubr.bf16.mxu0 0
  %1529 = vmatmul.mubr.bf16.gmra.mrb[0].mxu0 %v1488
  %v1530 = vpop.f32.mrb[0].mxu0
  %v1531 = vadd.f32 0.0, %v1530
  %v1532 = vpop.f32.mrb[0].mxu0
  %v1533 = vpop.f32.mrb[0].mxu0
  %v1534 = vadd.f32 0.0, %v1533
  %v1535 = vpop.f32.mrb[0].mxu0
  %1536 = vmatprep.mubr.bf16.mxu0 0
  %1537 = vmatmul.mubr.bf16.gmra.mrb[0].mxu0 %v1491
  %v1538 = vpop.f32.mrb[0].mxu0
  %v1539 = vadd.f32 0.0, %v1538
  %v1540 = vpop.f32.mrb[0].mxu0
  %v1541 = vpop.f32.mrb[0].mxu0
  %v1542 = vpop.f32.mrb[0].mxu0
  %1543 = vdwg.mxu0
  %v1544 = vmul.f32 %v1531, 0.5
  %v1545 = vmul.f32 %v1534, 0.5
  %v1546 = vmul.f32 %v1539, 0.5
  %v1547 = vsel %vm316, %v1544, -inf
  %1548 = vmax.xlane.f32.xlu0 %v1547
  %v1549 = vpop.xlane.xlu0 %1548
  %v1550 = vsel %vm316, %v1545, -inf
  %1551 = vmax.xlane.f32.xlu0 %v1550
  %v1552 = vpop.xlane.xlu0 %1551
  %v1553 = vsel %vm323, %v1546, -inf
  %1554 = vmax.xlane.f32.xlu0 %v1553
  %v1555 = vpop.xlane.xlu0 %1554
  %v1556 = vsub.f32 %v1544, %v1549
  %v1557 = vsub.f32 %v1545, %v1552
  %v1558 = vsub.f32 %v1546, %v1555
  %v1559 = vmul.f32 %v1556, 1.442695
  %v1560 = vpow.pop %v1559
  %v1561 = vmul.f32 %v1557, 1.442695
  %v1562 = vpow.pop %v1561
  %v1563 = vmul.f32 %v1558, 1.442695
  %v1564 = vpow.pop %v1563
  %v1565 = vsel %vm316, %v1560, 0.0
  %1566 = vadd.xlane.f32.xlu0 %v1565
  %v1567 = vpop.xlane.xlu0 %1566
  %v1568 = vsel %vm316, %v1562, 0.0
  %1569 = vadd.xlane.f32.xlu0 %v1568
  %v1570 = vpop.xlane.xlu0 %1569
  %v1571 = vsel %vm323, %v1564, 0.0
  %1572 = vadd.xlane.f32.xlu0 %v1571
  %v1573 = vpop.xlane.xlu0 %1572
  %v1574 = vrcp.pop %v1567
  %v1575 = vrcp.pop %v1570
  %v1576 = vrcp.pop %v1573
  %v1577 = vmul.f32 %v1560, %v1574
  %v1578 = vmul.f32 %v1562, %v1575
  %v1579 = vmul.f32 %v1564, %v1576
  %v1580 = vpack.c.bf16 %v1578, %v1577
  %v1581 = vpack.c.bf16 %v1579, %v1579
  %1582 = vrot.lane.b32.xlu0 %v254, 100
  %v1583 = vpop.permute.xlu0 %1582
  %v1585 = vsel %vm316, %v1580, 0
  %v1588 = vsel %vm316, %v1581, 0
  %v1591 = vsel %vm359, %v1583, 0
  %1593 = vmatprep.subr.bf16.mxu0 0
  %1594 = vmatpush1.bf16.msra.mxu0 %v1591
  %1595 = vmatprep.subr.bf16.mxu0 0
  %1596 = vmatpush1.bf16.msra.mxu0 0
  %1597 = vmatprep.subr.bf16.mxu0 0
  %1598 = vmatpush1.bf16.msra.mxu0 0
  %1599 = vmatprep.subr.bf16.mxu0 0
  %1600 = vmatpush1.bf16.msra.mxu0 0
  %1601 = vmatprep.subr.bf16.mxu0 0
  %1602 = vmatpush1.bf16.msra.mxu0 0
  %1603 = vmatprep.subr.bf16.mxu0 0
  %1604 = vmatpush1.bf16.msra.mxu0 0
  %1605 = vmatprep.subr.bf16.mxu0 0
  %1606 = vmatpush1.bf16.msra.mxu0 0
  %1607 = vmatprep.subr.bf16.mxu0 0
  %1608 = vmatpush1.bf16.msra.mxu0 0
  %1609 = vmatprep.subr.bf16.mxu0 0
  %1610 = vmatpush1.bf16.msra.mxu0 0
  %1611 = vmatprep.subr.bf16.mxu0 0
  %1612 = vmatpush1.bf16.msra.mxu0 0
  %1613 = vmatprep.subr.bf16.mxu0 0
  %1614 = vmatpush1.bf16.msra.mxu0 0
  %1615 = vmatprep.subr.bf16.mxu0 0
  %1616 = vmatpush1.bf16.msra.mxu0 0
  %1617 = vmatprep.subr.bf16.mxu0 0
  %1618 = vmatpush1.bf16.msra.mxu0 0
  %1619 = vmatprep.subr.bf16.mxu0 0
  %1620 = vmatpush1.bf16.msra.mxu0 0
  %1621 = vmatprep.subr.bf16.mxu0 0
  %1622 = vmatpush1.bf16.msra.mxu0 0
  %1623 = vmatprep.subr.bf16.mxu0 0
  %1624 = vmatpush1.bf16.msra.mxu0 0
  %1625 = vmatprep.mubr.bf16.mxu0 0
  %1626 = vmatmul.mubr.bf16.gmra.mrb[0].mxu0 %v1585
  %v1627 = vpop.f32.mrb[0].mxu0
  %v1628 = vadd.f32 0.0, %v1627
  %v1629 = vpop.f32.mrb[0].mxu0
  %v1630 = vpop.f32.mrb[0].mxu0
  %v1631 = vadd.f32 0.0, %v1630
  %v1632 = vpop.f32.mrb[0].mxu0
  %1633 = vmatprep.mubr.bf16.mxu0 0
  %1634 = vmatmul.mubr.bf16.gmra.mrb[0].mxu0 %v1588
  %v1635 = vpop.f32.mrb[0].mxu0
  %v1636 = vadd.f32 0.0, %v1635
  %v1637 = vpop.f32.mrb[0].mxu0
  %v1638 = vpop.f32.mrb[0].mxu0
  %v1639 = vpop.f32.mrb[0].mxu0
  %1640 = vdwg.mxu0
  %1644 = vrot.lane.b32.xlu0 %v1628, 28
  %v1645 = vpop.permute.xlu0 %1644
  %1646 = vrot.lane.b32.xlu0 %v1631, 28
  %v1647 = vpop.permute.xlu0 %1646
  %1648 = vrot.lane.b32.xlu0 %v1636, 28
  %v1649 = vpop.permute.xlu0 %1648
  %vm1653 = vcmask 261344
  %1654 = vst.msk [vmem:[#allocation2] sm:$0xff] %vm1653, %v1645
  %1655 = vst.msk [vmem:[#allocation2 + $0x8] sm:$0xff] %vm1653, %v1647
  %vm1656 = vcmask 257248
  %1657 = vst.msk [vmem:[#allocation2 + $0x10] sm:$0xf] %vm1656, %v1649
  %v1658 = vld [vmem:[#allocation2] sm:$0xff]
  %v1659 = vld [vmem:[#allocation2 + $0x8] sm:$0xff]
  %v1660 = vld [vmem:[#allocation2 + $0x10] sm:$0xf]
  %v1661 = vpack.c.bf16 %v1659, %v1658
  %v1662 = vpack.c.bf16 %v1660, %v1660
  %v1663 = vld [vmem:[%s5] sm:$0xf]
  %v1664 = vld [vmem:[%s5 + $0x4] sm:$0xf]
  %v1665 = vld [vmem:[%s5 + $0x8] sm:$0xf]
  %v1666 = vld [vmem:[%s5 + $0xc] sm:$0xf]
  %v1667 = vld [vmem:[%s7] sm:$0x1]
  %v1669 = vlaneseq
  %v1670 = vshrl.u32 %v1669, 7
  %v1671 = vsub.s32 0, %v1670
  %v1672 = vrot.slane %v1667, %v1671
  %v1678 = vunpack.c.l.b16 %v1663
  %v1679 = vunpack.c.l.b16 %v1664
  %v1680 = vunpack.c.l.b16 %v1665
  %v1681 = vunpack.c.l.b16 %v1666
  %v1682 = vpack.c.b16 %v1679, %v1678
  %v1683 = vpack.c.b16 %v1681, %v1680
  %v1687 = vsel %vm66, %v1661, 0
  %v1690 = vsel %vm66, %v1662, 0
  %1692 = vmatprep.subr.bf16.mxu0 0
  %1693 = vmatpush1.bf16.msra.mxu0 %v1682
  %1694 = vmatprep.subr.bf16.mxu0 0
  %1695 = vmatpush1.bf16.msra.mxu0 %v1683
  %1696 = vmatprep.subr.bf16.mxu0 0
  %1697 = vmatpush1.bf16.msra.mxu0 0
  %1698 = vmatprep.subr.bf16.mxu0 0
  %1699 = vmatpush1.bf16.msra.mxu0 0
  %1700 = vmatprep.subr.bf16.mxu0 0
  %1701 = vmatpush1.bf16.msra.mxu0 0
  %1702 = vmatprep.subr.bf16.mxu0 0
  %1703 = vmatpush1.bf16.msra.mxu0 0
  %1704 = vmatprep.subr.bf16.mxu0 0
  %1705 = vmatpush1.bf16.msra.mxu0 0
  %1706 = vmatprep.subr.bf16.mxu0 0
  %1707 = vmatpush1.bf16.msra.mxu0 0
  %1708 = vmatprep.subr.bf16.mxu0 0
  %1709 = vmatpush1.bf16.msra.mxu0 0
  %1710 = vmatprep.subr.bf16.mxu0 0
  %1711 = vmatpush1.bf16.msra.mxu0 0
  %1712 = vmatprep.subr.bf16.mxu0 0
  %1713 = vmatpush1.bf16.msra.mxu0 0
  %1714 = vmatprep.subr.bf16.mxu0 0
  %1715 = vmatpush1.bf16.msra.mxu0 0
  %1716 = vmatprep.subr.bf16.mxu0 0
  %1717 = vmatpush1.bf16.msra.mxu0 0
  %1718 = vmatprep.subr.bf16.mxu0 0
  %1719 = vmatpush1.bf16.msra.mxu0 0
  %1720 = vmatprep.subr.bf16.mxu0 0
  %1721 = vmatpush1.bf16.msra.mxu0 0
  %1722 = vmatprep.subr.bf16.mxu0 0
  %1723 = vmatpush1.bf16.msra.mxu0 0
  %1724 = vmatprep.mubr.bf16.mxu0 0
  %1725 = vmatmul.mubr.bf16.gmra.mrb[0].mxu0 %v1687
  %v1726 = vpop.f32.mrb[0].mxu0
  %v1727 = vadd.f32 %v1672, %v1726
  %v1728 = vpop.f32.mrb[0].mxu0
  %v1729 = vpop.f32.mrb[0].mxu0
  %v1730 = vadd.f32 %v1672, %v1729
  %v1731 = vpop.f32.mrb[0].mxu0
  %1732 = vmatprep.mubr.bf16.mxu0 0
  %1733 = vmatmul.mubr.bf16.gmra.mrb[0].mxu0 %v1690
  %v1734 = vpop.f32.mrb[0].mxu0
  %v1735 = vadd.f32 %v1672, %v1734
  %v1736 = vpop.f32.mrb[0].mxu0
  %v1737 = vpop.f32.mrb[0].mxu0
  %v1738 = vpop.f32.mrb[0].mxu0
  %1739 = vdwg.mxu0
  %v1740 = vpack.c.bf16 %v1730, %v1727
  %v1741 = vpack.c.bf16 %v1735, %v1735
  %v1744 = vunpack.c.l.b16 %v1740
  %v1745 = vunpack.c.h.b16 %v1740
  %v1746 = vunpack.c.l.b16 %v1741
  %v1747 = vpack.c.b16 %v1744, %v1744
  %v1748 = vpack.c.b16 %v1745, %v1745
  %v1749 = vpack.c.b16 %v1746, %v1746
  %1753 = vst [vmem:[%s8] sm:$0xf] %v1747
  %1754 = vst [vmem:[%s8 + $0x4] sm:$0xf] %v1748
  %1755 = vst [vmem:[%s8 + $0x8] sm:$0x3] %v1749
  // Predicated region
  $region34: #{gacfv5_forward.10} parent=0 // pred_check
    _
  $region35: #{gacfv5_forward.10} parent=0 // pred_check_branch
    %1757 = sbr.rel (0) target = $region37
  $region36: #{gacfv5_forward.10} parent=0 // pred_region
    _
  $region37: #{gacfv5_forward.10} parent=0 // pred_fallthru
    _
  // Predicated region
  $region38: #{gacfv5_forward.10} parent=0 // pred_check
    _
  $region39: #{gacfv5_forward.10} parent=0 // pred_check_branch
    %1759 = sbr.rel (0) target = $region41
  $region40: #{gacfv5_forward.10} parent=0 // pred_region
    _
  $region41: #{gacfv5_forward.10} parent=0 // pred_fallthru
    _

// kernel: gacfv5_forward.12
$region0: #{gacfv5_forward.12}
  #allocation0 [shape = 'u32[]', space=smem, size = 0x4, offset = 0x4, fixed_abs, tag = 'smem constant byte address 0x4 - core index']
  #allocation1 [shape = 'u32[144,128]{1,0:T(1,128)}', space=vmem, size = 0x12000, scoped, tag = 'internal scratch']
  %s0 = inlined_call_operand.vmem [shape: bf16[32,16], index: 0, kind: input, shape index: {}]
  %s1 = inlined_call_operand.vmem [shape: bf16[16,128], index: 1, kind: input, shape index: {}]
  %s2 = inlined_call_operand.vmem [shape: bf16[32,128], index: 2, kind: output, shape index: {}]
  %s3 = sld [smem:[#allocation0]]
  $region18: #{gacfv5_forward.12} parent=0
    _
  %s5 = ssub.s32 1, %s3
  %s6 = scalar_select 0, %s5, %s3
  // Predicated region
  $region2: #{gacfv5_forward.12} parent=0 // pred_check
    _
  $region3: #{gacfv5_forward.12} parent=0 // pred_check_branch
    %8 = sbr.rel (0) target = $region5
  $region4: #{gacfv5_forward.12} parent=0 // pred_region
    _
  $region5: #{gacfv5_forward.12} parent=0 // pred_fallthru
    _
  // Predicated region
  $region6: #{gacfv5_forward.12} parent=0 // pred_check
    _
  $region7: #{gacfv5_forward.12} parent=0 // pred_check_branch
    %10 = sbr.rel (0) target = $region9
  $region8: #{gacfv5_forward.12} parent=0 // pred_region
    _
  $region9: #{gacfv5_forward.12} parent=0 // pred_fallthru
    _
  %v12 = vld [vmem:[%s0] sm:$0xf]
  %v13 = vld [vmem:[%s0 + $0x4] sm:$0xf]
  %v14 = vld [vmem:[%s0 + $0x8] sm:$0xf]
  %v15 = vld [vmem:[%s0 + $0xc] sm:$0xf]
  %v16 = vld [vmem:[%s1] sm:$0xf]
  %v17 = vld [vmem:[%s1 + $0x4] sm:$0xf]
  %v22 = vunpack.c.l.b16 %v12
  %v23 = vunpack.c.l.b16 %v13
  %v24 = vunpack.c.l.b16 %v14
  %v25 = vunpack.c.l.b16 %v15
  %v26 = vpack.c.b16 %v23, %v22
  %v27 = vpack.c.b16 %v25, %v24
  %v30 = vunpack.c.l.b16 %v16
  %v31 = vunpack.c.l.b16 %v17
  %v32 = vpack.c.b16 %v31, %v30
  %vm34 = vcmask 130048
  %v36 = vsel %vm34, %v26, 0
  %v39 = vsel %vm34, %v27, 0
  %41 = vmatprep.subr.bf16.mxu0 0
  %42 = vmatpush1.bf16.msra.mxu0 %v32
  %43 = vmatprep.subr.bf16.mxu0 0
  %44 = vmatpush1.bf16.msra.mxu0 0
  %45 = vmatprep.subr.bf16.mxu0 0
  %46 = vmatpush1.bf16.msra.mxu0 0
  %47 = vmatprep.subr.bf16.mxu0 0
  %48 = vmatpush1.bf16.msra.mxu0 0
  %49 = vmatprep.subr.bf16.mxu0 0
  %50 = vmatpush1.bf16.msra.mxu0 0
  %51 = vmatprep.subr.bf16.mxu0 0
  %52 = vmatpush1.bf16.msra.mxu0 0
  %53 = vmatprep.subr.bf16.mxu0 0
  %54 = vmatpush1.bf16.msra.mxu0 0
  %55 = vmatprep.subr.bf16.mxu0 0
  %56 = vmatpush1.bf16.msra.mxu0 0
  %57 = vmatprep.subr.bf16.mxu0 0
  %58 = vmatpush1.bf16.msra.mxu0 0
  %59 = vmatprep.subr.bf16.mxu0 0
  %60 = vmatpush1.bf16.msra.mxu0 0
  %61 = vmatprep.subr.bf16.mxu0 0
  %62 = vmatpush1.bf16.msra.mxu0 0
  %63 = vmatprep.subr.bf16.mxu0 0
  %64 = vmatpush1.bf16.msra.mxu0 0
  %65 = vmatprep.subr.bf16.mxu0 0
  %66 = vmatpush1.bf16.msra.mxu0 0
  %67 = vmatprep.subr.bf16.mxu0 0
  %68 = vmatpush1.bf16.msra.mxu0 0
  %69 = vmatprep.subr.bf16.mxu0 0
  %70 = vmatpush1.bf16.msra.mxu0 0
  %71 = vmatprep.subr.bf16.mxu0 0
  %72 = vmatpush1.bf16.msra.mxu0 0
  %73 = vmatprep.mubr.bf16.mxu0 0
  %74 = vmatmul.mubr.bf16.gmra.mrb[0].mxu0 %v36
  %v75 = vpop.f32.mrb[0].mxu0
  %v76 = vadd.f32 0.0, %v75
  %v77 = vpop.f32.mrb[0].mxu0
  %v78 = vpop.f32.mrb[0].mxu0
  %v79 = vadd.f32 0.0, %v78
  %v80 = vpop.f32.mrb[0].mxu0
  %81 = vmatprep.mubr.bf16.mxu0 0
  %82 = vmatmul.mubr.bf16.gmra.mrb[0].mxu0 %v39
  %v83 = vpop.f32.mrb[0].mxu0
  %v84 = vadd.f32 0.0, %v83
  %v85 = vpop.f32.mrb[0].mxu0
  %v86 = vpop.f32.mrb[0].mxu0
  %v87 = vadd.f32 0.0, %v86
  %v88 = vpop.f32.mrb[0].mxu0
  %89 = vdwg.mxu0
  %v90 = vpack.c.bf16 %v79, %v76
  %v91 = vpack.c.bf16 %v87, %v84
  %v94 = vunpack.c.l.b16 %v90
  %v95 = vunpack.c.h.b16 %v90
  %v96 = vunpack.c.l.b16 %v91
  %v97 = vunpack.c.h.b16 %v91
  %v98 = vpack.c.b16 %v94, %v94
  %v99 = vpack.c.b16 %v95, %v95
  %v100 = vpack.c.b16 %v96, %v96
  %v101 = vpack.c.b16 %v97, %v97
  %106 = vst [vmem:[%s2] sm:$0xf] %v98
  %107 = vst [vmem:[%s2 + $0x4] sm:$0xf] %v99
  %108 = vst [vmem:[%s2 + $0x8] sm:$0xf] %v100
  %109 = vst [vmem:[%s2 + $0xc] sm:$0xf] %v101
  // Predicated region
  $region10: #{gacfv5_forward.12} parent=0 // pred_check
    _
  $region11: #{gacfv5_forward.12} parent=0 // pred_check_branch
    %111 = sbr.rel (0) target = $region13
  $region12: #{gacfv5_forward.12} parent=0 // pred_region
    _
  $region13: #{gacfv5_forward.12} parent=0 // pred_fallthru
    _
  // Predicated region
  $region14: #{gacfv5_forward.12} parent=0 // pred_check
    _
  $region15: #{gacfv5_forward.12} parent=0 // pred_check_branch
    %113 = sbr.rel (0) target = $region17
  $region16: #{gacfv5_forward.12} parent=0 // pred_region
    _
  $region17: #{gacfv5_forward.12} parent=0 // pred_fallthru
    _

// kernel: gacfv5_forward.13
$region0: #{gacfv5_forward.13}
  #allocation0 [shape = 'u32[]', space=smem, size = 0x4, offset = 0x4, fixed_abs, tag = 'smem constant byte address 0x4 - core index']
  #allocation1 [shape = 'u32[144,128]{1,0:T(1,128)}', space=vmem, size = 0x12000, scoped, tag = 'internal scratch']
  #allocation2 [shape = 'f32[12,16]{1,0:T(8,128)}', space=vmem, size = 0x2000, scoped, tag = 'scratch operand']
  %s0 = inlined_call_operand.vmem [shape: bf16[12,16], index: 0, kind: input, shape index: {}]
  %s1 = inlined_call_operand.vmem [shape: bf16[20,16], index: 1, kind: input, shape index: {}]
  %s2 = inlined_call_operand.vmem [shape: bf16[16,16], index: 2, kind: input, shape index: {}]
  %s3 = inlined_call_operand.vmem [shape: bf16[16,16], index: 3, kind: input, shape index: {}]
  %s4 = inlined_call_operand.vmem [shape: bf16[16,16], index: 4, kind: input, shape index: {}]
  %s5 = inlined_call_operand.vmem [shape: bf16[16,128], index: 5, kind: input, shape index: {}]
  %s6 = inlined_call_operand.vmem [shape: f32[3,16], index: 6, kind: input, shape index: {}]
  %s7 = inlined_call_operand.vmem [shape: f32[1,128], index: 7, kind: input, shape index: {}]
  %s8 = inlined_call_operand.vmem [shape: bf16[12,128], index: 8, kind: output, shape index: {}]
  %s9 = sld [smem:[#allocation0]]
  $region42: #{gacfv5_forward.13} parent=0
    _
  %s11 = ssub.s32 1, %s9
  %s12 = scalar_select 0, %s11, %s9
  // Predicated region
  $region2: #{gacfv5_forward.13} parent=0 // pred_check
    _
  $region3: #{gacfv5_forward.13} parent=0 // pred_check_branch
    %14 = sbr.rel (0) target = $region5
  $region4: #{gacfv5_forward.13} parent=0 // pred_region
    _
  $region5: #{gacfv5_forward.13} parent=0 // pred_fallthru
    _
  // Predicated region
  $region6: #{gacfv5_forward.13} parent=0 // pred_check
    _
  $region7: #{gacfv5_forward.13} parent=0 // pred_check_branch
    %16 = sbr.rel (0) target = $region9
  $region8: #{gacfv5_forward.13} parent=0 // pred_region
    _
  $region9: #{gacfv5_forward.13} parent=0 // pred_fallthru
    _
  // Predicated region
  $region10: #{gacfv5_forward.13} parent=0 // pred_check
    _
  $region11: #{gacfv5_forward.13} parent=0 // pred_check_branch
    %18 = sbr.rel (0) target = $region13
  $region12: #{gacfv5_forward.13} parent=0 // pred_region
    _
  $region13: #{gacfv5_forward.13} parent=0 // pred_fallthru
    _
  // Predicated region
  $region14: #{gacfv5_forward.13} parent=0 // pred_check
    _
  $region15: #{gacfv5_forward.13} parent=0 // pred_check_branch
    %20 = sbr.rel (0) target = $region17
  $region16: #{gacfv5_forward.13} parent=0 // pred_region
    _
  $region17: #{gacfv5_forward.13} parent=0 // pred_fallthru
    _
  // Predicated region
  $region18: #{gacfv5_forward.13} parent=0 // pred_check
    _
  $region19: #{gacfv5_forward.13} parent=0 // pred_check_branch
    %22 = sbr.rel (0) target = $region21
  $region20: #{gacfv5_forward.13} parent=0 // pred_region
    _
  $region21: #{gacfv5_forward.13} parent=0 // pred_fallthru
    _
  // Predicated region
  $region22: #{gacfv5_forward.13} parent=0 // pred_check
    _
  $region23: #{gacfv5_forward.13} parent=0 // pred_check_branch
    %24 = sbr.rel (0) target = $region25
  $region24: #{gacfv5_forward.13} parent=0 // pred_region
    _
  $region25: #{gacfv5_forward.13} parent=0 // pred_fallthru
    _
  // Predicated region
  $region26: #{gacfv5_forward.13} parent=0 // pred_check
    _
  $region27: #{gacfv5_forward.13} parent=0 // pred_check_branch
    %26 = sbr.rel (0) target = $region29
  $region28: #{gacfv5_forward.13} parent=0 // pred_region
    _
  $region29: #{gacfv5_forward.13} parent=0 // pred_fallthru
    _
  // Predicated region
  $region30: #{gacfv5_forward.13} parent=0 // pred_check
    _
  $region31: #{gacfv5_forward.13} parent=0 // pred_check_branch
    %28 = sbr.rel (0) target = $region33
  $region32: #{gacfv5_forward.13} parent=0 // pred_region
    _
  $region33: #{gacfv5_forward.13} parent=0 // pred_fallthru
    _
  %v30 = vld [vmem:[%s0] sm:$0xf]
  %v31 = vld [vmem:[%s0 + $0x4] sm:$0x3]
  %v32 = vld [vmem:[%s1] sm:$0xf]
  %v33 = vld [vmem:[%s1 + $0x4] sm:$0xf]
  %v34 = vld [vmem:[%s1 + $0x8] sm:$0x3]
  %v35 = vld [vmem:[%s6] sm:$0x1]
  %v36 = vld [vmem:[%s6 + $0x1] sm:$0x1]
  %v37 = vld [vmem:[%s6 + $0x2] sm:$0x1]
  %v38 = vld [vmem:[%s2] sm:$0xf]
  %v39 = vld [vmem:[%s2 + $0x4] sm:$0xf]
  %v40 = vlaneseq
  %v41 = vshrl.u32 %v40, 7
  %v42 = vsub.s32 0, %v41
  %v43 = vrot.slane %v35, %v42
  %v46 = vunpack.c.l.b16 %v30
  %v47 = vunpack.c.l.b16 %v31
  %v48 = vpack.c.b16 %v47, %v46
  %v51 = vunpack.c.l.b16 %v38
  %v52 = vunpack.c.l.b16 %v39
  %v53 = vpack.c.b16 %v52, %v51
  %vm55 = vcmask 130048
  %v57 = vsel %vm55, %v48, 0
  %59 = vmatprep.subr.bf16.mxu0 0
  %60 = vmatpush1.bf16.msra.mxu0 %v53
  %61 = vmatprep.subr.bf16.mxu0 0
  %62 = vmatpush1.bf16.msra.mxu0 0
  %63 = vmatprep.subr.bf16.mxu0 0
  %64 = vmatpush1.bf16.msra.mxu0 0
  %65 = vmatprep.subr.bf16.mxu0 0
  %66 = vmatpush1.bf16.msra.mxu0 0
  %67 = vmatprep.subr.bf16.mxu0 0
  %68 = vmatpush1.bf16.msra.mxu0 0
  %69 = vmatprep.subr.bf16.mxu0 0
  %70 = vmatpush1.bf16.msra.mxu0 0
  %71 = vmatprep.subr.bf16.mxu0 0
  %72 = vmatpush1.bf16.msra.mxu0 0
  %73 = vmatprep.subr.bf16.mxu0 0
  %74 = vmatpush1.bf16.msra.mxu0 0
  %75 = vmatprep.subr.bf16.mxu0 0
  %76 = vmatpush1.bf16.msra.mxu0 0
  %77 = vmatprep.subr.bf16.mxu0 0
  %78 = vmatpush1.bf16.msra.mxu0 0
  %79 = vmatprep.subr.bf16.mxu0 0
  %80 = vmatpush1.bf16.msra.mxu0 0
  %81 = vmatprep.subr.bf16.mxu0 0
  %82 = vmatpush1.bf16.msra.mxu0 0
  %83 = vmatprep.subr.bf16.mxu0 0
  %84 = vmatpush1.bf16.msra.mxu0 0
  %85 = vmatprep.subr.bf16.mxu0 0
  %86 = vmatpush1.bf16.msra.mxu0 0
  %87 = vmatprep.subr.bf16.mxu0 0
  %88 = vmatpush1.bf16.msra.mxu0 0
  %89 = vmatprep.subr.bf16.mxu0 0
  %90 = vmatpush1.bf16.msra.mxu0 0
  %91 = vmatprep.mubr.bf16.mxu0 0
  %92 = vmatmul.mubr.bf16.gmra.mrb[0].mxu0 %v57
  %v93 = vpop.f32.mrb[0].mxu0
  %v94 = vadd.f32 %v43, %v93
  %v95 = vpop.f32.mrb[0].mxu0
  %v96 = vpop.f32.mrb[0].mxu0
  %v97 = vadd.f32 %v43, %v96
  %v98 = vpop.f32.mrb[0].mxu0
  %99 = vdwg.mxu0
  %v100 = vpack.c.bf16 %v97, %v94
  %v101 = vld [vmem:[%s3] sm:$0xf]
  %v102 = vld [vmem:[%s3 + $0x4] sm:$0xf]
  %v103 = vlaneseq
  %v104 = vshrl.u32 %v103, 7
  %v105 = vsub.s32 0, %v104
  %v106 = vrot.slane %v36, %v105
  %v110 = vunpack.c.l.b16 %v32
  %v111 = vunpack.c.l.b16 %v33
  %v112 = vunpack.c.l.b16 %v34
  %v113 = vpack.c.b16 %v111, %v110
  %v114 = vpack.c.b16 %v112, %v112
  %v117 = vunpack.c.l.b16 %v101
  %v118 = vunpack.c.l.b16 %v102
  %v119 = vpack.c.b16 %v118, %v117
  %v122 = vsel %vm55, %v113, 0
  %v125 = vsel %vm55, %v114, 0
  %127 = vmatprep.subr.bf16.mxu0 0
  %128 = vmatpush1.bf16.msra.mxu0 %v119
  %129 = vmatprep.subr.bf16.mxu0 0
  %130 = vmatpush1.bf16.msra.mxu0 0
  %131 = vmatprep.subr.bf16.mxu0 0
  %132 = vmatpush1.bf16.msra.mxu0 0
  %133 = vmatprep.subr.bf16.mxu0 0
  %134 = vmatpush1.bf16.msra.mxu0 0
  %135 = vmatprep.subr.bf16.mxu0 0
  %136 = vmatpush1.bf16.msra.mxu0 0
  %137 = vmatprep.subr.bf16.mxu0 0
  %138 = vmatpush1.bf16.msra.mxu0 0
  %139 = vmatprep.subr.bf16.mxu0 0
  %140 = vmatpush1.bf16.msra.mxu0 0
  %141 = vmatprep.subr.bf16.mxu0 0
  %142 = vmatpush1.bf16.msra.mxu0 0
  %143 = vmatprep.subr.bf16.mxu0 0
  %144 = vmatpush1.bf16.msra.mxu0 0
  %145 = vmatprep.subr.bf16.mxu0 0
  %146 = vmatpush1.bf16.msra.mxu0 0
  %147 = vmatprep.subr.bf16.mxu0 0
  %148 = vmatpush1.bf16.msra.mxu0 0
  %149 = vmatprep.subr.bf16.mxu0 0
  %150 = vmatpush1.bf16.msra.mxu0 0
  %151 = vmatprep.subr.bf16.mxu0 0
  %152 = vmatpush1.bf16.msra.mxu0 0
  %153 = vmatprep.subr.bf16.mxu0 0
  %154 = vmatpush1.bf16.msra.mxu0 0
  %155 = vmatprep.subr.bf16.mxu0 0
  %156 = vmatpush1.bf16.msra.mxu0 0
  %157 = vmatprep.subr.bf16.mxu0 0
  %158 = vmatpush1.bf16.msra.mxu0 0
  %159 = vmatprep.mubr.bf16.mxu0 0
  %160 = vmatmul.mubr.bf16.gmra.mrb[0].mxu0 %v122
  %v161 = vpop.f32.mrb[0].mxu0
  %v162 = vadd.f32 %v106, %v161
  %v163 = vpop.f32.mrb[0].mxu0
  %v164 = vpop.f32.mrb[0].mxu0
  %v165 = vadd.f32 %v106, %v164
  %v166 = vpop.f32.mrb[0].mxu0
  %167 = vmatprep.mubr.bf16.mxu0 0
  %168 = vmatmul.mubr.bf16.gmra.mrb[0].mxu0 %v125
  %v169 = vpop.f32.mrb[0].mxu0
  %v170 = vadd.f32 %v106, %v169
  %v171 = vpop.f32.mrb[0].mxu0
  %v172 = vpop.f32.mrb[0].mxu0
  %v173 = vpop.f32.mrb[0].mxu0
  %174 = vdwg.mxu0
  %v175 = vpack.c.bf16 %v165, %v162
  %v176 = vpack.c.bf16 %v170, %v170
  %v177 = vld [vmem:[%s4] sm:$0xf]
  %v178 = vld [vmem:[%s4 + $0x4] sm:$0xf]
  %v179 = vlaneseq
  %v180 = vshrl.u32 %v179, 7
  %v181 = vsub.s32 0, %v180
  %v182 = vrot.slane %v37, %v181
  %v185 = vunpack.c.l.b16 %v177
  %v186 = vunpack.c.l.b16 %v178
  %v187 = vpack.c.b16 %v186, %v185
  %189 = vmatprep.subr.bf16.mxu0 0
  %190 = vmatpush1.bf16.msra.mxu0 %v187
  %191 = vmatprep.subr.bf16.mxu0 0
  %192 = vmatpush1.bf16.msra.mxu0 0
  %193 = vmatprep.subr.bf16.mxu0 0
  %194 = vmatpush1.bf16.msra.mxu0 0
  %195 = vmatprep.subr.bf16.mxu0 0
  %196 = vmatpush1.bf16.msra.mxu0 0
  %197 = vmatprep.subr.bf16.mxu0 0
  %198 = vmatpush1.bf16.msra.mxu0 0
  %199 = vmatprep.subr.bf16.mxu0 0
  %200 = vmatpush1.bf16.msra.mxu0 0
  %201 = vmatprep.subr.bf16.mxu0 0
  %202 = vmatpush1.bf16.msra.mxu0 0
  %203 = vmatprep.subr.bf16.mxu0 0
  %204 = vmatpush1.bf16.msra.mxu0 0
  %205 = vmatprep.subr.bf16.mxu0 0
  %206 = vmatpush1.bf16.msra.mxu0 0
  %207 = vmatprep.subr.bf16.mxu0 0
  %208 = vmatpush1.bf16.msra.mxu0 0
  %209 = vmatprep.subr.bf16.mxu0 0
  %210 = vmatpush1.bf16.msra.mxu0 0
  %211 = vmatprep.subr.bf16.mxu0 0
  %212 = vmatpush1.bf16.msra.mxu0 0
  %213 = vmatprep.subr.bf16.mxu0 0
  %214 = vmatpush1.bf16.msra.mxu0 0
  %215 = vmatprep.subr.bf16.mxu0 0
  %216 = vmatpush1.bf16.msra.mxu0 0
  %217 = vmatprep.subr.bf16.mxu0 0
  %218 = vmatpush1.bf16.msra.mxu0 0
  %219 = vmatprep.subr.bf16.mxu0 0
  %220 = vmatpush1.bf16.msra.mxu0 0
  %221 = vmatprep.mubr.bf16.mxu0 0
  %222 = vmatmul.mubr.bf16.gmra.mrb[0].mxu0 %v122
  %v223 = vpop.f32.mrb[0].mxu0
  %v224 = vadd.f32 %v182, %v223
  %v225 = vpop.f32.mrb[0].mxu0
  %v226 = vpop.f32.mrb[0].mxu0
  %v227 = vadd.f32 %v182, %v226
  %v228 = vpop.f32.mrb[0].mxu0
  %229 = vmatprep.mubr.bf16.mxu0 0
  %230 = vmatmul.mubr.bf16.gmra.mrb[0].mxu0 %v125
  %v231 = vpop.f32.mrb[0].mxu0
  %v232 = vadd.f32 %v182, %v231
  %v233 = vpop.f32.mrb[0].mxu0
  %v234 = vpop.f32.mrb[0].mxu0
  %v235 = vpop.f32.mrb[0].mxu0
  %236 = vdwg.mxu0
  %v237 = vpack.c.bf16 %v227, %v224
  %v238 = vpack.c.bf16 %v232, %v232
  %vm239 = vcmask 15360
  %v241 = vsel %vm239, %v100, 0
  %v244 = vsel %vm239, %v175, 0
  %v247 = vsel %vm239, %v176, 0
  %249 = vmatprep.subr.bf16.mxu0 0
  %250 = vmatpush1.bf16.xpose.msra.mxu0 %v244
  %251 = vmatprep.subr.bf16.mxu0 0
  %252 = vmatpush1.bf16.xpose.msra.mxu0 %v247
  %253 = vmatprep.subr.bf16.mxu0 0
  %254 = vmatpush1.bf16.xpose.msra.mxu0 0
  %255 = vmatprep.subr.bf16.mxu0 0
  %256 = vmatpush1.bf16.xpose.msra.mxu0 0
  %257 = vmatprep.subr.bf16.mxu0 0
  %258 = vmatpush1.bf16.xpose.msra.mxu0 0
  %259 = vmatprep.subr.bf16.mxu0 0
  %260 = vmatpush1.bf16.xpose.msra.mxu0 0
  %261 = vmatprep.subr.bf16.mxu0 0
  %262 = vmatpush1.bf16.xpose.msra.mxu0 0
  %263 = vmatprep.subr.bf16.mxu0 0
  %264 = vmatpush1.bf16.xpose.msra.mxu0 0
  %265 = vmatprep.subr.bf16.mxu0 0
  %266 = vmatpush1.bf16.xpose.msra.mxu0 0
  %267 = vmatprep.subr.bf16.mxu0 0
  %268 = vmatpush1.bf16.xpose.msra.mxu0 0
  %269 = vmatprep.subr.bf16.mxu0 0
  %270 = vmatpush1.bf16.xpose.msra.mxu0 0
  %271 = vmatprep.subr.bf16.mxu0 0
  %272 = vmatpush1.bf16.xpose.msra.mxu0 0
  %273 = vmatprep.subr.bf16.mxu0 0
  %274 = vmatpush1.bf16.xpose.msra.mxu0 0
  %275 = vmatprep.subr.bf16.mxu0 0
  %276 = vmatpush1.bf16.xpose.msra.mxu0 0
  %277 = vmatprep.subr.bf16.mxu0 0
  %278 = vmatpush1.bf16.xpose.msra.mxu0 0
  %279 = vmatprep.subr.bf16.mxu0 0
  %280 = vmatpush1.bf16.xpose.msra.mxu0 0
  %281 = vmatprep.mubr.bf16.mxu0 0
  %282 = vmatmul.mubr.bf16.gmra.mrb[0].mxu0 %v241
  %v283 = vpop.f32.mrb[0].mxu0
  %v284 = vadd.f32 0.0, %v283
  %v285 = vpop.f32.mrb[0].mxu0
  %v286 = vpop.f32.mrb[0].mxu0
  %v287 = vadd.f32 0.0, %v286
  %v288 = vpop.f32.mrb[0].mxu0
  %289 = vdwg.mxu0
  %v290 = vmul.f32 %v284, 0.70710677
  %v291 = vmul.f32 %v287, 0.70710677
  %vm292 = vcmask 162816
  %v293 = vsel %vm292, %v290, -inf
  %294 = vmax.xlane.f32.xlu0 %v293
  %v295 = vpop.xlane.xlu0 %294
  %vm296 = vcmask 158720
  %v297 = vsel %vm296, %v291, -inf
  %298 = vmax.xlane.f32.xlu0 %v297
  %v299 = vpop.xlane.xlu0 %298
  %v300 = vsub.f32 %v290, %v295
  %v301 = vsub.f32 %v291, %v299
  %v302 = vmul.f32 %v300, 1.442695
  %v303 = vpow.pop %v302
  %v304 = vmul.f32 %v301, 1.442695
  %v305 = vpow.pop %v304
  %v306 = vsel %vm292, %v303, 0.0
  %307 = vadd.xlane.f32.xlu0 %v306
  %v308 = vpop.xlane.xlu0 %307
  %v309 = vsel %vm296, %v305, 0.0
  %310 = vadd.xlane.f32.xlu0 %v309
  %v311 = vpop.xlane.xlu0 %310
  %v312 = vrcp.pop %v308
  %v313 = vrcp.pop %v311
  %v314 = vmul.f32 %v303, %v312
  %v315 = vmul.f32 %v305, %v313
  %v316 = vpack.c.bf16 %v315, %v314
  %v318 = vsel %vm292, %v316, 0
  %vm320 = vcmask 1041408
  %v322 = vsel %vm320, %v238, 0
  %324 = vmatprep.subr.bf16.mxu0 0
  %325 = vmatpush1.bf16.msra.mxu0 %v237
  %326 = vmatprep.subr.bf16.mxu0 0
  %327 = vmatpush1.bf16.msra.mxu0 %v322
  %328 = vmatprep.subr.bf16.mxu0 0
  %329 = vmatpush1.bf16.msra.mxu0 0
  %330 = vmatprep.subr.bf16.mxu0 0
  %331 = vmatpush1.bf16.msra.mxu0 0
  %332 = vmatprep.subr.bf16.mxu0 0
  %333 = vmatpush1.bf16.msra.mxu0 0
  %334 = vmatprep.subr.bf16.mxu0 0
  %335 = vmatpush1.bf16.msra.mxu0 0
  %336 = vmatprep.subr.bf16.mxu0 0
  %337 = vmatpush1.bf16.msra.mxu0 0
  %338 = vmatprep.subr.bf16.mxu0 0
  %339 = vmatpush1.bf16.msra.mxu0 0
  %340 = vmatprep.subr.bf16.mxu0 0
  %341 = vmatpush1.bf16.msra.mxu0 0
  %342 = vmatprep.subr.bf16.mxu0 0
  %343 = vmatpush1.bf16.msra.mxu0 0
  %344 = vmatprep.subr.bf16.mxu0 0
  %345 = vmatpush1.bf16.msra.mxu0 0
  %346 = vmatprep.subr.bf16.mxu0 0
  %347 = vmatpush1.bf16.msra.mxu0 0
  %348 = vmatprep.subr.bf16.mxu0 0
  %349 = vmatpush1.bf16.msra.mxu0 0
  %350 = vmatprep.subr.bf16.mxu0 0
  %351 = vmatpush1.bf16.msra.mxu0 0
  %352 = vmatprep.subr.bf16.mxu0 0
  %353 = vmatpush1.bf16.msra.mxu0 0
  %354 = vmatprep.subr.bf16.mxu0 0
  %355 = vmatpush1.bf16.msra.mxu0 0
  %356 = vmatprep.mubr.bf16.mxu0 0
  %357 = vmatmul.mubr.bf16.gmra.mrb[0].mxu0 %v318
  %v358 = vpop.f32.mrb[0].mxu0
  %v359 = vadd.f32 0.0, %v358
  %v360 = vpop.f32.mrb[0].mxu0
  %v361 = vpop.f32.mrb[0].mxu0
  %v362 = vadd.f32 0.0, %v361
  %v363 = vpop.f32.mrb[0].mxu0
  %364 = vdwg.mxu0
  %365 = vst.msk [vmem:[#allocation2] sm:$0xff] %vm239, %v359
  %vm366 = vcmask 11264
  %367 = vst.msk [vmem:[#allocation2 + $0x8] sm:$0xf] %vm366, %v362
  %369 = vrot.lane.b32.xlu0 %v100, 126
  %v370 = vpop.permute.xlu0 %369
  %373 = vrot.lane.b32.xlu0 %v175, 126
  %v374 = vpop.permute.xlu0 %373
  %375 = vrot.lane.b32.xlu0 %v176, 126
  %v376 = vpop.permute.xlu0 %375
  %v378 = vsel %vm239, %v370, 0
  %v381 = vsel %vm239, %v374, 0
  %v384 = vsel %vm239, %v376, 0
  %386 = vmatprep.subr.bf16.mxu0 0
  %387 = vmatpush1.bf16.xpose.msra.mxu0 %v381
  %388 = vmatprep.subr.bf16.mxu0 0
  %389 = vmatpush1.bf16.xpose.msra.mxu0 %v384
  %390 = vmatprep.subr.bf16.mxu0 0
  %391 = vmatpush1.bf16.xpose.msra.mxu0 0
  %392 = vmatprep.subr.bf16.mxu0 0
  %393 = vmatpush1.bf16.xpose.msra.mxu0 0
  %394 = vmatprep.subr.bf16.mxu0 0
  %395 = vmatpush1.bf16.xpose.msra.mxu0 0
  %396 = vmatprep.subr.bf16.mxu0 0
  %397 = vmatpush1.bf16.xpose.msra.mxu0 0
  %398 = vmatprep.subr.bf16.mxu0 0
  %399 = vmatpush1.bf16.xpose.msra.mxu0 0
  %400 = vmatprep.subr.bf16.mxu0 0
  %401 = vmatpush1.bf16.xpose.msra.mxu0 0
  %402 = vmatprep.subr.bf16.mxu0 0
  %403 = vmatpush1.bf16.xpose.msra.mxu0 0
  %404 = vmatprep.subr.bf16.mxu0 0
  %405 = vmatpush1.bf16.xpose.msra.mxu0 0
  %406 = vmatprep.subr.bf16.mxu0 0
  %407 = vmatpush1.bf16.xpose.msra.mxu0 0
  %408 = vmatprep.subr.bf16.mxu0 0
  %409 = vmatpush1.bf16.xpose.msra.mxu0 0
  %410 = vmatprep.subr.bf16.mxu0 0
  %411 = vmatpush1.bf16.xpose.msra.mxu0 0
  %412 = vmatprep.subr.bf16.mxu0 0
  %413 = vmatpush1.bf16.xpose.msra.mxu0 0
  %414 = vmatprep.subr.bf16.mxu0 0
  %415 = vmatpush1.bf16.xpose.msra.mxu0 0
  %416 = vmatprep.subr.bf16.mxu0 0
  %417 = vmatpush1.bf16.xpose.msra.mxu0 0
  %418 = vmatprep.mubr.bf16.mxu0 0
  %419 = vmatmul.mubr.bf16.gmra.mrb[0].mxu0 %v378
  %v420 = vpop.f32.mrb[0].mxu0
  %v421 = vadd.f32 0.0, %v420
  %v422 = vpop.f32.mrb[0].mxu0
  %v423 = vpop.f32.mrb[0].mxu0
  %v424 = vadd.f32 0.0, %v423
  %v425 = vpop.f32.mrb[0].mxu0
  %426 = vdwg.mxu0
  %v427 = vmul.f32 %v421, 0.70710677
  %v428 = vmul.f32 %v424, 0.70710677
  %v429 = vsel %vm292, %v427, -inf
  %430 = vmax.xlane.f32.xlu0 %v429
  %v431 = vpop.xlane.xlu0 %430
  %v432 = vsel %vm296, %v428, -inf
  %433 = vmax.xlane.f32.xlu0 %v432
  %v434 = vpop.xlane.xlu0 %433
  %v435 = vsub.f32 %v427, %v431
  %v436 = vsub.f32 %v428, %v434
  %v437 = vmul.f32 %v435, 1.442695
  %v438 = vpow.pop %v437
  %v439 = vmul.f32 %v436, 1.442695
  %v440 = vpow.pop %v439
  %v441 = vsel %vm292, %v438, 0.0
  %442 = vadd.xlane.f32.xlu0 %v441
  %v443 = vpop.xlane.xlu0 %442
  %v444 = vsel %vm296, %v440, 0.0
  %445 = vadd.xlane.f32.xlu0 %v444
  %v446 = vpop.xlane.xlu0 %445
  %v447 = vrcp.pop %v443
  %v448 = vrcp.pop %v446
  %v449 = vmul.f32 %v438, %v447
  %v450 = vmul.f32 %v440, %v448
  %v451 = vpack.c.bf16 %v450, %v449
  %454 = vrot.lane.b32.xlu0 %v237, 126
  %v455 = vpop.permute.xlu0 %454
  %456 = vrot.lane.b32.xlu0 %v238, 126
  %v457 = vpop.permute.xlu0 %456
  %v460 = vsel %vm292, %v451, 0
  %v463 = vsel %vm320, %v457, 0
  %465 = vmatprep.subr.bf16.mxu0 0
  %466 = vmatpush1.bf16.msra.mxu0 %v455
  %467 = vmatprep.subr.bf16.mxu0 0
  %468 = vmatpush1.bf16.msra.mxu0 %v463
  %469 = vmatprep.subr.bf16.mxu0 0
  %470 = vmatpush1.bf16.msra.mxu0 0
  %471 = vmatprep.subr.bf16.mxu0 0
  %472 = vmatpush1.bf16.msra.mxu0 0
  %473 = vmatprep.subr.bf16.mxu0 0
  %474 = vmatpush1.bf16.msra.mxu0 0
  %475 = vmatprep.subr.bf16.mxu0 0
  %476 = vmatpush1.bf16.msra.mxu0 0
  %477 = vmatprep.subr.bf16.mxu0 0
  %478 = vmatpush1.bf16.msra.mxu0 0
  %479 = vmatprep.subr.bf16.mxu0 0
  %480 = vmatpush1.bf16.msra.mxu0 0
  %481 = vmatprep.subr.bf16.mxu0 0
  %482 = vmatpush1.bf16.msra.mxu0 0
  %483 = vmatprep.subr.bf16.mxu0 0
  %484 = vmatpush1.bf16.msra.mxu0 0
  %485 = vmatprep.subr.bf16.mxu0 0
  %486 = vmatpush1.bf16.msra.mxu0 0
  %487 = vmatprep.subr.bf16.mxu0 0
  %488 = vmatpush1.bf16.msra.mxu0 0
  %489 = vmatprep.subr.bf16.mxu0 0
  %490 = vmatpush1.bf16.msra.mxu0 0
  %491 = vmatprep.subr.bf16.mxu0 0
  %492 = vmatpush1.bf16.msra.mxu0 0
  %493 = vmatprep.subr.bf16.mxu0 0
  %494 = vmatpush1.bf16.msra.mxu0 0
  %495 = vmatprep.subr.bf16.mxu0 0
  %496 = vmatpush1.bf16.msra.mxu0 0
  %497 = vmatprep.mubr.bf16.mxu0 0
  %498 = vmatmul.mubr.bf16.gmra.mrb[0].mxu0 %v460
  %v499 = vpop.f32.mrb[0].mxu0
  %v500 = vadd.f32 0.0, %v499
  %v501 = vpop.f32.mrb[0].mxu0
  %v502 = vpop.f32.mrb[0].mxu0
  %v503 = vadd.f32 0.0, %v502
  %v504 = vpop.f32.mrb[0].mxu0
  %505 = vdwg.mxu0
  %508 = vrot.lane.b32.xlu0 %v500, 2
  %v509 = vpop.permute.xlu0 %508
  %510 = vrot.lane.b32.xlu0 %v503, 2
  %v511 = vpop.permute.xlu0 %510
  %vm514 = vcmask 31760
  %515 = vst.msk [vmem:[#allocation2] sm:$0xff] %vm514, %v509
  %vm516 = vcmask 27664
  %517 = vst.msk [vmem:[#allocation2 + $0x8] sm:$0xf] %vm516, %v511
  %518 = vrot.lane.b32.xlu0 %v100, 124
  %v519 = vpop.permute.xlu0 %518
  %520 = vrot.lane.b32.xlu0 %v175, 124
  %v521 = vpop.permute.xlu0 %520
  %522 = vrot.lane.b32.xlu0 %v176, 124
  %v523 = vpop.permute.xlu0 %522
  %v525 = vsel %vm239, %v519, 0
  %v528 = vsel %vm239, %v521, 0
  %v531 = vsel %vm239, %v523, 0
  %533 = vmatprep.subr.bf16.mxu0 0
  %534 = vmatpush1.bf16.xpose.msra.mxu0 %v528
  %535 = vmatprep.subr.bf16.mxu0 0
  %536 = vmatpush1.bf16.xpose.msra.mxu0 %v531
  %537 = vmatprep.subr.bf16.mxu0 0
  %538 = vmatpush1.bf16.xpose.msra.mxu0 0
  %539 = vmatprep.subr.bf16.mxu0 0
  %540 = vmatpush1.bf16.xpose.msra.mxu0 0
  %541 = vmatprep.subr.bf16.mxu0 0
  %542 = vmatpush1.bf16.xpose.msra.mxu0 0
  %543 = vmatprep.subr.bf16.mxu0 0
  %544 = vmatpush1.bf16.xpose.msra.mxu0 0
  %545 = vmatprep.subr.bf16.mxu0 0
  %546 = vmatpush1.bf16.xpose.msra.mxu0 0
  %547 = vmatprep.subr.bf16.mxu0 0
  %548 = vmatpush1.bf16.xpose.msra.mxu0 0
  %549 = vmatprep.subr.bf16.mxu0 0
  %550 = vmatpush1.bf16.xpose.msra.mxu0 0
  %551 = vmatprep.subr.bf16.mxu0 0
  %552 = vmatpush1.bf16.xpose.msra.mxu0 0
  %553 = vmatprep.subr.bf16.mxu0 0
  %554 = vmatpush1.bf16.xpose.msra.mxu0 0
  %555 = vmatprep.subr.bf16.mxu0 0
  %556 = vmatpush1.bf16.xpose.msra.mxu0 0
  %557 = vmatprep.subr.bf16.mxu0 0
  %558 = vmatpush1.bf16.xpose.msra.mxu0 0
  %559 = vmatprep.subr.bf16.mxu0 0
  %560 = vmatpush1.bf16.xpose.msra.mxu0 0
  %561 = vmatprep.subr.bf16.mxu0 0
  %562 = vmatpush1.bf16.xpose.msra.mxu0 0
  %563 = vmatprep.subr.bf16.mxu0 0
  %564 = vmatpush1.bf16.xpose.msra.mxu0 0
  %565 = vmatprep.mubr.bf16.mxu0 0
  %566 = vmatmul.mubr.bf16.gmra.mrb[0].mxu0 %v525
  %v567 = vpop.f32.mrb[0].mxu0
  %v568 = vadd.f32 0.0, %v567
  %v569 = vpop.f32.mrb[0].mxu0
  %v570 = vpop.f32.mrb[0].mxu0
  %v571 = vadd.f32 0.0, %v570
  %v572 = vpop.f32.mrb[0].mxu0
  %573 = vdwg.mxu0
  %v574 = vmul.f32 %v568, 0.70710677
  %v575 = vmul.f32 %v571, 0.70710677
  %v576 = vsel %vm292, %v574, -inf
  %577 = vmax.xlane.f32.xlu0 %v576
  %v578 = vpop.xlane.xlu0 %577
  %v579 = vsel %vm296, %v575, -inf
  %580 = vmax.xlane.f32.xlu0 %v579
  %v581 = vpop.xlane.xlu0 %580
  %v582 = vsub.f32 %v574, %v578
  %v583 = vsub.f32 %v575, %v581
  %v584 = vmul.f32 %v582, 1.442695
  %v585 = vpow.pop %v584
  %v586 = vmul.f32 %v583, 1.442695
  %v587 = vpow.pop %v586
  %v588 = vsel %vm292, %v585, 0.0
  %589 = vadd.xlane.f32.xlu0 %v588
  %v590 = vpop.xlane.xlu0 %589
  %v591 = vsel %vm296, %v587, 0.0
  %592 = vadd.xlane.f32.xlu0 %v591
  %v593 = vpop.xlane.xlu0 %592
  %v594 = vrcp.pop %v590
  %v595 = vrcp.pop %v593
  %v596 = vmul.f32 %v585, %v594
  %v597 = vmul.f32 %v587, %v595
  %v598 = vpack.c.bf16 %v597, %v596
  %599 = vrot.lane.b32.xlu0 %v237, 124
  %v600 = vpop.permute.xlu0 %599
  %601 = vrot.lane.b32.xlu0 %v238, 124
  %v602 = vpop.permute.xlu0 %601
  %v605 = vsel %vm292, %v598, 0
  %v608 = vsel %vm320, %v602, 0
  %610 = vmatprep.subr.bf16.mxu0 0
  %611 = vmatpush1.bf16.msra.mxu0 %v600
  %612 = vmatprep.subr.bf16.mxu0 0
  %613 = vmatpush1.bf16.msra.mxu0 %v608
  %614 = vmatprep.subr.bf16.mxu0 0
  %615 = vmatpush1.bf16.msra.mxu0 0
  %616 = vmatprep.subr.bf16.mxu0 0
  %617 = vmatpush1.bf16.msra.mxu0 0
  %618 = vmatprep.subr.bf16.mxu0 0
  %619 = vmatpush1.bf16.msra.mxu0 0
  %620 = vmatprep.subr.bf16.mxu0 0
  %621 = vmatpush1.bf16.msra.mxu0 0
  %622 = vmatprep.subr.bf16.mxu0 0
  %623 = vmatpush1.bf16.msra.mxu0 0
  %624 = vmatprep.subr.bf16.mxu0 0
  %625 = vmatpush1.bf16.msra.mxu0 0
  %626 = vmatprep.subr.bf16.mxu0 0
  %627 = vmatpush1.bf16.msra.mxu0 0
  %628 = vmatprep.subr.bf16.mxu0 0
  %629 = vmatpush1.bf16.msra.mxu0 0
  %630 = vmatprep.subr.bf16.mxu0 0
  %631 = vmatpush1.bf16.msra.mxu0 0
  %632 = vmatprep.subr.bf16.mxu0 0
  %633 = vmatpush1.bf16.msra.mxu0 0
  %634 = vmatprep.subr.bf16.mxu0 0
  %635 = vmatpush1.bf16.msra.mxu0 0
  %636 = vmatprep.subr.bf16.mxu0 0
  %637 = vmatpush1.bf16.msra.mxu0 0
  %638 = vmatprep.subr.bf16.mxu0 0
  %639 = vmatpush1.bf16.msra.mxu0 0
  %640 = vmatprep.subr.bf16.mxu0 0
  %641 = vmatpush1.bf16.msra.mxu0 0
  %642 = vmatprep.mubr.bf16.mxu0 0
  %643 = vmatmul.mubr.bf16.gmra.mrb[0].mxu0 %v605
  %v644 = vpop.f32.mrb[0].mxu0
  %v645 = vadd.f32 0.0, %v644
  %v646 = vpop.f32.mrb[0].mxu0
  %v647 = vpop.f32.mrb[0].mxu0
  %v648 = vadd.f32 0.0, %v647
  %v649 = vpop.f32.mrb[0].mxu0
  %650 = vdwg.mxu0
  %653 = vrot.lane.b32.xlu0 %v645, 4
  %v654 = vpop.permute.xlu0 %653
  %655 = vrot.lane.b32.xlu0 %v648, 4
  %v656 = vpop.permute.xlu0 %655
  %vm659 = vcmask 48160
  %660 = vst.msk [vmem:[#allocation2] sm:$0xff] %vm659, %v654
  %vm661 = vcmask 44064
  %662 = vst.msk [vmem:[#allocation2 + $0x8] sm:$0xf] %vm661, %v656
  %663 = vrot.lane.b32.xlu0 %v100, 122
  %v664 = vpop.permute.xlu0 %663
  %665 = vrot.lane.b32.xlu0 %v175, 122
  %v666 = vpop.permute.xlu0 %665
  %667 = vrot.lane.b32.xlu0 %v176, 122
  %v668 = vpop.permute.xlu0 %667
  %v670 = vsel %vm239, %v664, 0
  %v673 = vsel %vm239, %v666, 0
  %v676 = vsel %vm239, %v668, 0
  %678 = vmatprep.subr.bf16.mxu0 0
  %679 = vmatpush1.bf16.xpose.msra.mxu0 %v673
  %680 = vmatprep.subr.bf16.mxu0 0
  %681 = vmatpush1.bf16.xpose.msra.mxu0 %v676
  %682 = vmatprep.subr.bf16.mxu0 0
  %683 = vmatpush1.bf16.xpose.msra.mxu0 0
  %684 = vmatprep.subr.bf16.mxu0 0
  %685 = vmatpush1.bf16.xpose.msra.mxu0 0
  %686 = vmatprep.subr.bf16.mxu0 0
  %687 = vmatpush1.bf16.xpose.msra.mxu0 0
  %688 = vmatprep.subr.bf16.mxu0 0
  %689 = vmatpush1.bf16.xpose.msra.mxu0 0
  %690 = vmatprep.subr.bf16.mxu0 0
  %691 = vmatpush1.bf16.xpose.msra.mxu0 0
  %692 = vmatprep.subr.bf16.mxu0 0
  %693 = vmatpush1.bf16.xpose.msra.mxu0 0
  %694 = vmatprep.subr.bf16.mxu0 0
  %695 = vmatpush1.bf16.xpose.msra.mxu0 0
  %696 = vmatprep.subr.bf16.mxu0 0
  %697 = vmatpush1.bf16.xpose.msra.mxu0 0
  %698 = vmatprep.subr.bf16.mxu0 0
  %699 = vmatpush1.bf16.xpose.msra.mxu0 0
  %700 = vmatprep.subr.bf16.mxu0 0
  %701 = vmatpush1.bf16.xpose.msra.mxu0 0
  %702 = vmatprep.subr.bf16.mxu0 0
  %703 = vmatpush1.bf16.xpose.msra.mxu0 0
  %704 = vmatprep.subr.bf16.mxu0 0
  %705 = vmatpush1.bf16.xpose.msra.mxu0 0
  %706 = vmatprep.subr.bf16.mxu0 0
  %707 = vmatpush1.bf16.xpose.msra.mxu0 0
  %708 = vmatprep.subr.bf16.mxu0 0
  %709 = vmatpush1.bf16.xpose.msra.mxu0 0
  %710 = vmatprep.mubr.bf16.mxu0 0
  %711 = vmatmul.mubr.bf16.gmra.mrb[0].mxu0 %v670
  %v712 = vpop.f32.mrb[0].mxu0
  %v713 = vadd.f32 0.0, %v712
  %v714 = vpop.f32.mrb[0].mxu0
  %v715 = vpop.f32.mrb[0].mxu0
  %v716 = vadd.f32 0.0, %v715
  %v717 = vpop.f32.mrb[0].mxu0
  %718 = vdwg.mxu0
  %v719 = vmul.f32 %v713, 0.70710677
  %v720 = vmul.f32 %v716, 0.70710677
  %v721 = vsel %vm292, %v719, -inf
  %722 = vmax.xlane.f32.xlu0 %v721
  %v723 = vpop.xlane.xlu0 %722
  %v724 = vsel %vm296, %v720, -inf
  %725 = vmax.xlane.f32.xlu0 %v724
  %v726 = vpop.xlane.xlu0 %725
  %v727 = vsub.f32 %v719, %v723
  %v728 = vsub.f32 %v720, %v726
  %v729 = vmul.f32 %v727, 1.442695
  %v730 = vpow.pop %v729
  %v731 = vmul.f32 %v728, 1.442695
  %v732 = vpow.pop %v731
  %v733 = vsel %vm292, %v730, 0.0
  %734 = vadd.xlane.f32.xlu0 %v733
  %v735 = vpop.xlane.xlu0 %734
  %v736 = vsel %vm296, %v732, 0.0
  %737 = vadd.xlane.f32.xlu0 %v736
  %v738 = vpop.xlane.xlu0 %737
  %v739 = vrcp.pop %v735
  %v740 = vrcp.pop %v738
  %v741 = vmul.f32 %v730, %v739
  %v742 = vmul.f32 %v732, %v740
  %v743 = vpack.c.bf16 %v742, %v741
  %744 = vrot.lane.b32.xlu0 %v237, 122
  %v745 = vpop.permute.xlu0 %744
  %746 = vrot.lane.b32.xlu0 %v238, 122
  %v747 = vpop.permute.xlu0 %746
  %v750 = vsel %vm292, %v743, 0
  %v753 = vsel %vm320, %v747, 0
  %755 = vmatprep.subr.bf16.mxu0 0
  %756 = vmatpush1.bf16.msra.mxu0 %v745
  %757 = vmatprep.subr.bf16.mxu0 0
  %758 = vmatpush1.bf16.msra.mxu0 %v753
  %759 = vmatprep.subr.bf16.mxu0 0
  %760 = vmatpush1.bf16.msra.mxu0 0
  %761 = vmatprep.subr.bf16.mxu0 0
  %762 = vmatpush1.bf16.msra.mxu0 0
  %763 = vmatprep.subr.bf16.mxu0 0
  %764 = vmatpush1.bf16.msra.mxu0 0
  %765 = vmatprep.subr.bf16.mxu0 0
  %766 = vmatpush1.bf16.msra.mxu0 0
  %767 = vmatprep.subr.bf16.mxu0 0
  %768 = vmatpush1.bf16.msra.mxu0 0
  %769 = vmatprep.subr.bf16.mxu0 0
  %770 = vmatpush1.bf16.msra.mxu0 0
  %771 = vmatprep.subr.bf16.mxu0 0
  %772 = vmatpush1.bf16.msra.mxu0 0
  %773 = vmatprep.subr.bf16.mxu0 0
  %774 = vmatpush1.bf16.msra.mxu0 0
  %775 = vmatprep.subr.bf16.mxu0 0
  %776 = vmatpush1.bf16.msra.mxu0 0
  %777 = vmatprep.subr.bf16.mxu0 0
  %778 = vmatpush1.bf16.msra.mxu0 0
  %779 = vmatprep.subr.bf16.mxu0 0
  %780 = vmatpush1.bf16.msra.mxu0 0
  %781 = vmatprep.subr.bf16.mxu0 0
  %782 = vmatpush1.bf16.msra.mxu0 0
  %783 = vmatprep.subr.bf16.mxu0 0
  %784 = vmatpush1.bf16.msra.mxu0 0
  %785 = vmatprep.subr.bf16.mxu0 0
  %786 = vmatpush1.bf16.msra.mxu0 0
  %787 = vmatprep.mubr.bf16.mxu0 0
  %788 = vmatmul.mubr.bf16.gmra.mrb[0].mxu0 %v750
  %v789 = vpop.f32.mrb[0].mxu0
  %v790 = vadd.f32 0.0, %v789
  %v791 = vpop.f32.mrb[0].mxu0
  %v792 = vpop.f32.mrb[0].mxu0
  %v793 = vadd.f32 0.0, %v792
  %v794 = vpop.f32.mrb[0].mxu0
  %795 = vdwg.mxu0
  %798 = vrot.lane.b32.xlu0 %v790, 6
  %v799 = vpop.permute.xlu0 %798
  %800 = vrot.lane.b32.xlu0 %v793, 6
  %v801 = vpop.permute.xlu0 %800
  %vm804 = vcmask 64560
  %805 = vst.msk [vmem:[#allocation2] sm:$0xff] %vm804, %v799
  %vm806 = vcmask 60464
  %807 = vst.msk [vmem:[#allocation2 + $0x8] sm:$0xf] %vm806, %v801
  %808 = vrot.lane.b32.xlu0 %v100, 120
  %v809 = vpop.permute.xlu0 %808
  %810 = vrot.lane.b32.xlu0 %v175, 120
  %v811 = vpop.permute.xlu0 %810
  %812 = vrot.lane.b32.xlu0 %v176, 120
  %v813 = vpop.permute.xlu0 %812
  %v815 = vsel %vm239, %v809, 0
  %v818 = vsel %vm239, %v811, 0
  %v821 = vsel %vm239, %v813, 0
  %823 = vmatprep.subr.bf16.mxu0 0
  %824 = vmatpush1.bf16.xpose.msra.mxu0 %v818
  %825 = vmatprep.subr.bf16.mxu0 0
  %826 = vmatpush1.bf16.xpose.msra.mxu0 %v821
  %827 = vmatprep.subr.bf16.mxu0 0
  %828 = vmatpush1.bf16.xpose.msra.mxu0 0
  %829 = vmatprep.subr.bf16.mxu0 0
  %830 = vmatpush1.bf16.xpose.msra.mxu0 0
  %831 = vmatprep.subr.bf16.mxu0 0
  %832 = vmatpush1.bf16.xpose.msra.mxu0 0
  %833 = vmatprep.subr.bf16.mxu0 0
  %834 = vmatpush1.bf16.xpose.msra.mxu0 0
  %835 = vmatprep.subr.bf16.mxu0 0
  %836 = vmatpush1.bf16.xpose.msra.mxu0 0
  %837 = vmatprep.subr.bf16.mxu0 0
  %838 = vmatpush1.bf16.xpose.msra.mxu0 0
  %839 = vmatprep.subr.bf16.mxu0 0
  %840 = vmatpush1.bf16.xpose.msra.mxu0 0
  %841 = vmatprep.subr.bf16.mxu0 0
  %842 = vmatpush1.bf16.xpose.msra.mxu0 0
  %843 = vmatprep.subr.bf16.mxu0 0
  %844 = vmatpush1.bf16.xpose.msra.mxu0 0
  %845 = vmatprep.subr.bf16.mxu0 0
  %846 = vmatpush1.bf16.xpose.msra.mxu0 0
  %847 = vmatprep.subr.bf16.mxu0 0
  %848 = vmatpush1.bf16.xpose.msra.mxu0 0
  %849 = vmatprep.subr.bf16.mxu0 0
  %850 = vmatpush1.bf16.xpose.msra.mxu0 0
  %851 = vmatprep.subr.bf16.mxu0 0
  %852 = vmatpush1.bf16.xpose.msra.mxu0 0
  %853 = vmatprep.subr.bf16.mxu0 0
  %854 = vmatpush1.bf16.xpose.msra.mxu0 0
  %855 = vmatprep.mubr.bf16.mxu0 0
  %856 = vmatmul.mubr.bf16.gmra.mrb[0].mxu0 %v815
  %v857 = vpop.f32.mrb[0].mxu0
  %v858 = vadd.f32 0.0, %v857
  %v859 = vpop.f32.mrb[0].mxu0
  %v860 = vpop.f32.mrb[0].mxu0
  %v861 = vadd.f32 0.0, %v860
  %v862 = vpop.f32.mrb[0].mxu0
  %863 = vdwg.mxu0
  %v864 = vmul.f32 %v858, 0.70710677
  %v865 = vmul.f32 %v861, 0.70710677
  %v866 = vsel %vm292, %v864, -inf
  %867 = vmax.xlane.f32.xlu0 %v866
  %v868 = vpop.xlane.xlu0 %867
  %v869 = vsel %vm296, %v865, -inf
  %870 = vmax.xlane.f32.xlu0 %v869
  %v871 = vpop.xlane.xlu0 %870
  %v872 = vsub.f32 %v864, %v868
  %v873 = vsub.f32 %v865, %v871
  %v874 = vmul.f32 %v872, 1.442695
  %v875 = vpow.pop %v874
  %v876 = vmul.f32 %v873, 1.442695
  %v877 = vpow.pop %v876
  %v878 = vsel %vm292, %v875, 0.0
  %879 = vadd.xlane.f32.xlu0 %v878
  %v880 = vpop.xlane.xlu0 %879
  %v881 = vsel %vm296, %v877, 0.0
  %882 = vadd.xlane.f32.xlu0 %v881
  %v883 = vpop.xlane.xlu0 %882
  %v884 = vrcp.pop %v880
  %v885 = vrcp.pop %v883
  %v886 = vmul.f32 %v875, %v884
  %v887 = vmul.f32 %v877, %v885
  %v888 = vpack.c.bf16 %v887, %v886
  %889 = vrot.lane.b32.xlu0 %v237, 120
  %v890 = vpop.permute.xlu0 %889
  %891 = vrot.lane.b32.xlu0 %v238, 120
  %v892 = vpop.permute.xlu0 %891
  %v895 = vsel %vm292, %v888, 0
  %v898 = vsel %vm320, %v892, 0
  %900 = vmatprep.subr.bf16.mxu0 0
  %901 = vmatpush1.bf16.msra.mxu0 %v890
  %902 = vmatprep.subr.bf16.mxu0 0
  %903 = vmatpush1.bf16.msra.mxu0 %v898
  %904 = vmatprep.subr.bf16.mxu0 0
  %905 = vmatpush1.bf16.msra.mxu0 0
  %906 = vmatprep.subr.bf16.mxu0 0
  %907 = vmatpush1.bf16.msra.mxu0 0
  %908 = vmatprep.subr.bf16.mxu0 0
  %909 = vmatpush1.bf16.msra.mxu0 0
  %910 = vmatprep.subr.bf16.mxu0 0
  %911 = vmatpush1.bf16.msra.mxu0 0
  %912 = vmatprep.subr.bf16.mxu0 0
  %913 = vmatpush1.bf16.msra.mxu0 0
  %914 = vmatprep.subr.bf16.mxu0 0
  %915 = vmatpush1.bf16.msra.mxu0 0
  %916 = vmatprep.subr.bf16.mxu0 0
  %917 = vmatpush1.bf16.msra.mxu0 0
  %918 = vmatprep.subr.bf16.mxu0 0
  %919 = vmatpush1.bf16.msra.mxu0 0
  %920 = vmatprep.subr.bf16.mxu0 0
  %921 = vmatpush1.bf16.msra.mxu0 0
  %922 = vmatprep.subr.bf16.mxu0 0
  %923 = vmatpush1.bf16.msra.mxu0 0
  %924 = vmatprep.subr.bf16.mxu0 0
  %925 = vmatpush1.bf16.msra.mxu0 0
  %926 = vmatprep.subr.bf16.mxu0 0
  %927 = vmatpush1.bf16.msra.mxu0 0
  %928 = vmatprep.subr.bf16.mxu0 0
  %929 = vmatpush1.bf16.msra.mxu0 0
  %930 = vmatprep.subr.bf16.mxu0 0
  %931 = vmatpush1.bf16.msra.mxu0 0
  %932 = vmatprep.mubr.bf16.mxu0 0
  %933 = vmatmul.mubr.bf16.gmra.mrb[0].mxu0 %v895
  %v934 = vpop.f32.mrb[0].mxu0
  %v935 = vadd.f32 0.0, %v934
  %v936 = vpop.f32.mrb[0].mxu0
  %v937 = vpop.f32.mrb[0].mxu0
  %v938 = vadd.f32 0.0, %v937
  %v939 = vpop.f32.mrb[0].mxu0
  %940 = vdwg.mxu0
  %943 = vrot.lane.b32.xlu0 %v935, 8
  %v944 = vpop.permute.xlu0 %943
  %945 = vrot.lane.b32.xlu0 %v938, 8
  %v946 = vpop.permute.xlu0 %945
  %vm949 = vcmask 80960
  %950 = vst.msk [vmem:[#allocation2] sm:$0xff] %vm949, %v944
  %vm951 = vcmask 76864
  %952 = vst.msk [vmem:[#allocation2 + $0x8] sm:$0xf] %vm951, %v946
  %953 = vrot.lane.b32.xlu0 %v100, 118
  %v954 = vpop.permute.xlu0 %953
  %955 = vrot.lane.b32.xlu0 %v175, 118
  %v956 = vpop.permute.xlu0 %955
  %957 = vrot.lane.b32.xlu0 %v176, 118
  %v958 = vpop.permute.xlu0 %957
  %v960 = vsel %vm239, %v954, 0
  %v963 = vsel %vm239, %v956, 0
  %v966 = vsel %vm239, %v958, 0
  %968 = vmatprep.subr.bf16.mxu0 0
  %969 = vmatpush1.bf16.xpose.msra.mxu0 %v963
  %970 = vmatprep.subr.bf16.mxu0 0
  %971 = vmatpush1.bf16.xpose.msra.mxu0 %v966
  %972 = vmatprep.subr.bf16.mxu0 0
  %973 = vmatpush1.bf16.xpose.msra.mxu0 0
  %974 = vmatprep.subr.bf16.mxu0 0
  %975 = vmatpush1.bf16.xpose.msra.mxu0 0
  %976 = vmatprep.subr.bf16.mxu0 0
  %977 = vmatpush1.bf16.xpose.msra.mxu0 0
  %978 = vmatprep.subr.bf16.mxu0 0
  %979 = vmatpush1.bf16.xpose.msra.mxu0 0
  %980 = vmatprep.subr.bf16.mxu0 0
  %981 = vmatpush1.bf16.xpose.msra.mxu0 0
  %982 = vmatprep.subr.bf16.mxu0 0
  %983 = vmatpush1.bf16.xpose.msra.mxu0 0
  %984 = vmatprep.subr.bf16.mxu0 0
  %985 = vmatpush1.bf16.xpose.msra.mxu0 0
  %986 = vmatprep.subr.bf16.mxu0 0
  %987 = vmatpush1.bf16.xpose.msra.mxu0 0
  %988 = vmatprep.subr.bf16.mxu0 0
  %989 = vmatpush1.bf16.xpose.msra.mxu0 0
  %990 = vmatprep.subr.bf16.mxu0 0
  %991 = vmatpush1.bf16.xpose.msra.mxu0 0
  %992 = vmatprep.subr.bf16.mxu0 0
  %993 = vmatpush1.bf16.xpose.msra.mxu0 0
  %994 = vmatprep.subr.bf16.mxu0 0
  %995 = vmatpush1.bf16.xpose.msra.mxu0 0
  %996 = vmatprep.subr.bf16.mxu0 0
  %997 = vmatpush1.bf16.xpose.msra.mxu0 0
  %998 = vmatprep.subr.bf16.mxu0 0
  %999 = vmatpush1.bf16.xpose.msra.mxu0 0
  %1000 = vmatprep.mubr.bf16.mxu0 0
  %1001 = vmatmul.mubr.bf16.gmra.mrb[0].mxu0 %v960
  %v1002 = vpop.f32.mrb[0].mxu0
  %v1003 = vadd.f32 0.0, %v1002
  %v1004 = vpop.f32.mrb[0].mxu0
  %v1005 = vpop.f32.mrb[0].mxu0
  %v1006 = vadd.f32 0.0, %v1005
  %v1007 = vpop.f32.mrb[0].mxu0
  %1008 = vdwg.mxu0
  %v1009 = vmul.f32 %v1003, 0.70710677
  %v1010 = vmul.f32 %v1006, 0.70710677
  %v1011 = vsel %vm292, %v1009, -inf
  %1012 = vmax.xlane.f32.xlu0 %v1011
  %v1013 = vpop.xlane.xlu0 %1012
  %v1014 = vsel %vm296, %v1010, -inf
  %1015 = vmax.xlane.f32.xlu0 %v1014
  %v1016 = vpop.xlane.xlu0 %1015
  %v1017 = vsub.f32 %v1009, %v1013
  %v1018 = vsub.f32 %v1010, %v1016
  %v1019 = vmul.f32 %v1017, 1.442695
  %v1020 = vpow.pop %v1019
  %v1021 = vmul.f32 %v1018, 1.442695
  %v1022 = vpow.pop %v1021
  %v1023 = vsel %vm292, %v1020, 0.0
  %1024 = vadd.xlane.f32.xlu0 %v1023
  %v1025 = vpop.xlane.xlu0 %1024
  %v1026 = vsel %vm296, %v1022, 0.0
  %1027 = vadd.xlane.f32.xlu0 %v1026
  %v1028 = vpop.xlane.xlu0 %1027
  %v1029 = vrcp.pop %v1025
  %v1030 = vrcp.pop %v1028
  %v1031 = vmul.f32 %v1020, %v1029
  %v1032 = vmul.f32 %v1022, %v1030
  %v1033 = vpack.c.bf16 %v1032, %v1031
  %1034 = vrot.lane.b32.xlu0 %v237, 118
  %v1035 = vpop.permute.xlu0 %1034
  %1036 = vrot.lane.b32.xlu0 %v238, 118
  %v1037 = vpop.permute.xlu0 %1036
  %v1040 = vsel %vm292, %v1033, 0
  %v1043 = vsel %vm320, %v1037, 0
  %1045 = vmatprep.subr.bf16.mxu0 0
  %1046 = vmatpush1.bf16.msra.mxu0 %v1035
  %1047 = vmatprep.subr.bf16.mxu0 0
  %1048 = vmatpush1.bf16.msra.mxu0 %v1043
  %1049 = vmatprep.subr.bf16.mxu0 0
  %1050 = vmatpush1.bf16.msra.mxu0 0
  %1051 = vmatprep.subr.bf16.mxu0 0
  %1052 = vmatpush1.bf16.msra.mxu0 0
  %1053 = vmatprep.subr.bf16.mxu0 0
  %1054 = vmatpush1.bf16.msra.mxu0 0
  %1055 = vmatprep.subr.bf16.mxu0 0
  %1056 = vmatpush1.bf16.msra.mxu0 0
  %1057 = vmatprep.subr.bf16.mxu0 0
  %1058 = vmatpush1.bf16.msra.mxu0 0
  %1059 = vmatprep.subr.bf16.mxu0 0
  %1060 = vmatpush1.bf16.msra.mxu0 0
  %1061 = vmatprep.subr.bf16.mxu0 0
  %1062 = vmatpush1.bf16.msra.mxu0 0
  %1063 = vmatprep.subr.bf16.mxu0 0
  %1064 = vmatpush1.bf16.msra.mxu0 0
  %1065 = vmatprep.subr.bf16.mxu0 0
  %1066 = vmatpush1.bf16.msra.mxu0 0
  %1067 = vmatprep.subr.bf16.mxu0 0
  %1068 = vmatpush1.bf16.msra.mxu0 0
  %1069 = vmatprep.subr.bf16.mxu0 0
  %1070 = vmatpush1.bf16.msra.mxu0 0
  %1071 = vmatprep.subr.bf16.mxu0 0
  %1072 = vmatpush1.bf16.msra.mxu0 0
  %1073 = vmatprep.subr.bf16.mxu0 0
  %1074 = vmatpush1.bf16.msra.mxu0 0
  %1075 = vmatprep.subr.bf16.mxu0 0
  %1076 = vmatpush1.bf16.msra.mxu0 0
  %1077 = vmatprep.mubr.bf16.mxu0 0
  %1078 = vmatmul.mubr.bf16.gmra.mrb[0].mxu0 %v1040
  %v1079 = vpop.f32.mrb[0].mxu0
  %v1080 = vadd.f32 0.0, %v1079
  %v1081 = vpop.f32.mrb[0].mxu0
  %v1082 = vpop.f32.mrb[0].mxu0
  %v1083 = vadd.f32 0.0, %v1082
  %v1084 = vpop.f32.mrb[0].mxu0
  %1085 = vdwg.mxu0
  %1088 = vrot.lane.b32.xlu0 %v1080, 10
  %v1089 = vpop.permute.xlu0 %1088
  %1090 = vrot.lane.b32.xlu0 %v1083, 10
  %v1091 = vpop.permute.xlu0 %1090
  %vm1094 = vcmask 97360
  %1095 = vst.msk [vmem:[#allocation2] sm:$0xff] %vm1094, %v1089
  %vm1096 = vcmask 93264
  %1097 = vst.msk [vmem:[#allocation2 + $0x8] sm:$0xf] %vm1096, %v1091
  %1098 = vrot.lane.b32.xlu0 %v100, 116
  %v1099 = vpop.permute.xlu0 %1098
  %1100 = vrot.lane.b32.xlu0 %v175, 116
  %v1101 = vpop.permute.xlu0 %1100
  %1102 = vrot.lane.b32.xlu0 %v176, 116
  %v1103 = vpop.permute.xlu0 %1102
  %v1105 = vsel %vm239, %v1099, 0
  %v1108 = vsel %vm239, %v1101, 0
  %v1111 = vsel %vm239, %v1103, 0
  %1113 = vmatprep.subr.bf16.mxu0 0
  %1114 = vmatpush1.bf16.xpose.msra.mxu0 %v1108
  %1115 = vmatprep.subr.bf16.mxu0 0
  %1116 = vmatpush1.bf16.xpose.msra.mxu0 %v1111
  %1117 = vmatprep.subr.bf16.mxu0 0
  %1118 = vmatpush1.bf16.xpose.msra.mxu0 0
  %1119 = vmatprep.subr.bf16.mxu0 0
  %1120 = vmatpush1.bf16.xpose.msra.mxu0 0
  %1121 = vmatprep.subr.bf16.mxu0 0
  %1122 = vmatpush1.bf16.xpose.msra.mxu0 0
  %1123 = vmatprep.subr.bf16.mxu0 0
  %1124 = vmatpush1.bf16.xpose.msra.mxu0 0
  %1125 = vmatprep.subr.bf16.mxu0 0
  %1126 = vmatpush1.bf16.xpose.msra.mxu0 0
  %1127 = vmatprep.subr.bf16.mxu0 0
  %1128 = vmatpush1.bf16.xpose.msra.mxu0 0
  %1129 = vmatprep.subr.bf16.mxu0 0
  %1130 = vmatpush1.bf16.xpose.msra.mxu0 0
  %1131 = vmatprep.subr.bf16.mxu0 0
  %1132 = vmatpush1.bf16.xpose.msra.mxu0 0
  %1133 = vmatprep.subr.bf16.mxu0 0
  %1134 = vmatpush1.bf16.xpose.msra.mxu0 0
  %1135 = vmatprep.subr.bf16.mxu0 0
  %1136 = vmatpush1.bf16.xpose.msra.mxu0 0
  %1137 = vmatprep.subr.bf16.mxu0 0
  %1138 = vmatpush1.bf16.xpose.msra.mxu0 0
  %1139 = vmatprep.subr.bf16.mxu0 0
  %1140 = vmatpush1.bf16.xpose.msra.mxu0 0
  %1141 = vmatprep.subr.bf16.mxu0 0
  %1142 = vmatpush1.bf16.xpose.msra.mxu0 0
  %1143 = vmatprep.subr.bf16.mxu0 0
  %1144 = vmatpush1.bf16.xpose.msra.mxu0 0
  %1145 = vmatprep.mubr.bf16.mxu0 0
  %1146 = vmatmul.mubr.bf16.gmra.mrb[0].mxu0 %v1105
  %v1147 = vpop.f32.mrb[0].mxu0
  %v1148 = vadd.f32 0.0, %v1147
  %v1149 = vpop.f32.mrb[0].mxu0
  %v1150 = vpop.f32.mrb[0].mxu0
  %v1151 = vadd.f32 0.0, %v1150
  %v1152 = vpop.f32.mrb[0].mxu0
  %1153 = vdwg.mxu0
  %v1154 = vmul.f32 %v1148, 0.70710677
  %v1155 = vmul.f32 %v1151, 0.70710677
  %v1156 = vsel %vm292, %v1154, -inf
  %1157 = vmax.xlane.f32.xlu0 %v1156
  %v1158 = vpop.xlane.xlu0 %1157
  %v1159 = vsel %vm296, %v1155, -inf
  %1160 = vmax.xlane.f32.xlu0 %v1159
  %v1161 = vpop.xlane.xlu0 %1160
  %v1162 = vsub.f32 %v1154, %v1158
  %v1163 = vsub.f32 %v1155, %v1161
  %v1164 = vmul.f32 %v1162, 1.442695
  %v1165 = vpow.pop %v1164
  %v1166 = vmul.f32 %v1163, 1.442695
  %v1167 = vpow.pop %v1166
  %v1168 = vsel %vm292, %v1165, 0.0
  %1169 = vadd.xlane.f32.xlu0 %v1168
  %v1170 = vpop.xlane.xlu0 %1169
  %v1171 = vsel %vm296, %v1167, 0.0
  %1172 = vadd.xlane.f32.xlu0 %v1171
  %v1173 = vpop.xlane.xlu0 %1172
  %v1174 = vrcp.pop %v1170
  %v1175 = vrcp.pop %v1173
  %v1176 = vmul.f32 %v1165, %v1174
  %v1177 = vmul.f32 %v1167, %v1175
  %v1178 = vpack.c.bf16 %v1177, %v1176
  %1179 = vrot.lane.b32.xlu0 %v237, 116
  %v1180 = vpop.permute.xlu0 %1179
  %1181 = vrot.lane.b32.xlu0 %v238, 116
  %v1182 = vpop.permute.xlu0 %1181
  %v1185 = vsel %vm292, %v1178, 0
  %v1188 = vsel %vm320, %v1182, 0
  %1190 = vmatprep.subr.bf16.mxu0 0
  %1191 = vmatpush1.bf16.msra.mxu0 %v1180
  %1192 = vmatprep.subr.bf16.mxu0 0
  %1193 = vmatpush1.bf16.msra.mxu0 %v1188
  %1194 = vmatprep.subr.bf16.mxu0 0
  %1195 = vmatpush1.bf16.msra.mxu0 0
  %1196 = vmatprep.subr.bf16.mxu0 0
  %1197 = vmatpush1.bf16.msra.mxu0 0
  %1198 = vmatprep.subr.bf16.mxu0 0
  %1199 = vmatpush1.bf16.msra.mxu0 0
  %1200 = vmatprep.subr.bf16.mxu0 0
  %1201 = vmatpush1.bf16.msra.mxu0 0
  %1202 = vmatprep.subr.bf16.mxu0 0
  %1203 = vmatpush1.bf16.msra.mxu0 0
  %1204 = vmatprep.subr.bf16.mxu0 0
  %1205 = vmatpush1.bf16.msra.mxu0 0
  %1206 = vmatprep.subr.bf16.mxu0 0
  %1207 = vmatpush1.bf16.msra.mxu0 0
  %1208 = vmatprep.subr.bf16.mxu0 0
  %1209 = vmatpush1.bf16.msra.mxu0 0
  %1210 = vmatprep.subr.bf16.mxu0 0
  %1211 = vmatpush1.bf16.msra.mxu0 0
  %1212 = vmatprep.subr.bf16.mxu0 0
  %1213 = vmatpush1.bf16.msra.mxu0 0
  %1214 = vmatprep.subr.bf16.mxu0 0
  %1215 = vmatpush1.bf16.msra.mxu0 0
  %1216 = vmatprep.subr.bf16.mxu0 0
  %1217 = vmatpush1.bf16.msra.mxu0 0
  %1218 = vmatprep.subr.bf16.mxu0 0
  %1219 = vmatpush1.bf16.msra.mxu0 0
  %1220 = vmatprep.subr.bf16.mxu0 0
  %1221 = vmatpush1.bf16.msra.mxu0 0
  %1222 = vmatprep.mubr.bf16.mxu0 0
  %1223 = vmatmul.mubr.bf16.gmra.mrb[0].mxu0 %v1185
  %v1224 = vpop.f32.mrb[0].mxu0
  %v1225 = vadd.f32 0.0, %v1224
  %v1226 = vpop.f32.mrb[0].mxu0
  %v1227 = vpop.f32.mrb[0].mxu0
  %v1228 = vadd.f32 0.0, %v1227
  %v1229 = vpop.f32.mrb[0].mxu0
  %1230 = vdwg.mxu0
  %1233 = vrot.lane.b32.xlu0 %v1225, 12
  %v1234 = vpop.permute.xlu0 %1233
  %1235 = vrot.lane.b32.xlu0 %v1228, 12
  %v1236 = vpop.permute.xlu0 %1235
  %vm1239 = vcmask 113760
  %1240 = vst.msk [vmem:[#allocation2] sm:$0xff] %vm1239, %v1234
  %vm1241 = vcmask 109664
  %1242 = vst.msk [vmem:[#allocation2 + $0x8] sm:$0xf] %vm1241, %v1236
  %1243 = vrot.lane.b32.xlu0 %v100, 114
  %v1244 = vpop.permute.xlu0 %1243
  %1245 = vrot.lane.b32.xlu0 %v175, 114
  %v1246 = vpop.permute.xlu0 %1245
  %1247 = vrot.lane.b32.xlu0 %v176, 114
  %v1248 = vpop.permute.xlu0 %1247
  %v1250 = vsel %vm239, %v1244, 0
  %v1253 = vsel %vm239, %v1246, 0
  %v1256 = vsel %vm239, %v1248, 0
  %1258 = vmatprep.subr.bf16.mxu0 0
  %1259 = vmatpush1.bf16.xpose.msra.mxu0 %v1253
  %1260 = vmatprep.subr.bf16.mxu0 0
  %1261 = vmatpush1.bf16.xpose.msra.mxu0 %v1256
  %1262 = vmatprep.subr.bf16.mxu0 0
  %1263 = vmatpush1.bf16.xpose.msra.mxu0 0
  %1264 = vmatprep.subr.bf16.mxu0 0
  %1265 = vmatpush1.bf16.xpose.msra.mxu0 0
  %1266 = vmatprep.subr.bf16.mxu0 0
  %1267 = vmatpush1.bf16.xpose.msra.mxu0 0
  %1268 = vmatprep.subr.bf16.mxu0 0
  %1269 = vmatpush1.bf16.xpose.msra.mxu0 0
  %1270 = vmatprep.subr.bf16.mxu0 0
  %1271 = vmatpush1.bf16.xpose.msra.mxu0 0
  %1272 = vmatprep.subr.bf16.mxu0 0
  %1273 = vmatpush1.bf16.xpose.msra.mxu0 0
  %1274 = vmatprep.subr.bf16.mxu0 0
  %1275 = vmatpush1.bf16.xpose.msra.mxu0 0
  %1276 = vmatprep.subr.bf16.mxu0 0
  %1277 = vmatpush1.bf16.xpose.msra.mxu0 0
  %1278 = vmatprep.subr.bf16.mxu0 0
  %1279 = vmatpush1.bf16.xpose.msra.mxu0 0
  %1280 = vmatprep.subr.bf16.mxu0 0
  %1281 = vmatpush1.bf16.xpose.msra.mxu0 0
  %1282 = vmatprep.subr.bf16.mxu0 0
  %1283 = vmatpush1.bf16.xpose.msra.mxu0 0
  %1284 = vmatprep.subr.bf16.mxu0 0
  %1285 = vmatpush1.bf16.xpose.msra.mxu0 0
  %1286 = vmatprep.subr.bf16.mxu0 0
  %1287 = vmatpush1.bf16.xpose.msra.mxu0 0
  %1288 = vmatprep.subr.bf16.mxu0 0
  %1289 = vmatpush1.bf16.xpose.msra.mxu0 0
  %1290 = vmatprep.mubr.bf16.mxu0 0
  %1291 = vmatmul.mubr.bf16.gmra.mrb[0].mxu0 %v1250
  %v1292 = vpop.f32.mrb[0].mxu0
  %v1293 = vadd.f32 0.0, %v1292
  %v1294 = vpop.f32.mrb[0].mxu0
  %v1295 = vpop.f32.mrb[0].mxu0
  %v1296 = vadd.f32 0.0, %v1295
  %v1297 = vpop.f32.mrb[0].mxu0
  %1298 = vdwg.mxu0
  %v1299 = vmul.f32 %v1293, 0.70710677
  %v1300 = vmul.f32 %v1296, 0.70710677
  %v1301 = vsel %vm292, %v1299, -inf
  %1302 = vmax.xlane.f32.xlu0 %v1301
  %v1303 = vpop.xlane.xlu0 %1302
  %v1304 = vsel %vm296, %v1300, -inf
  %1305 = vmax.xlane.f32.xlu0 %v1304
  %v1306 = vpop.xlane.xlu0 %1305
  %v1307 = vsub.f32 %v1299, %v1303
  %v1308 = vsub.f32 %v1300, %v1306
  %v1309 = vmul.f32 %v1307, 1.442695
  %v1310 = vpow.pop %v1309
  %v1311 = vmul.f32 %v1308, 1.442695
  %v1312 = vpow.pop %v1311
  %v1313 = vsel %vm292, %v1310, 0.0
  %1314 = vadd.xlane.f32.xlu0 %v1313
  %v1315 = vpop.xlane.xlu0 %1314
  %v1316 = vsel %vm296, %v1312, 0.0
  %1317 = vadd.xlane.f32.xlu0 %v1316
  %v1318 = vpop.xlane.xlu0 %1317
  %v1319 = vrcp.pop %v1315
  %v1320 = vrcp.pop %v1318
  %v1321 = vmul.f32 %v1310, %v1319
  %v1322 = vmul.f32 %v1312, %v1320
  %v1323 = vpack.c.bf16 %v1322, %v1321
  %1324 = vrot.lane.b32.xlu0 %v237, 114
  %v1325 = vpop.permute.xlu0 %1324
  %1326 = vrot.lane.b32.xlu0 %v238, 114
  %v1327 = vpop.permute.xlu0 %1326
  %v1330 = vsel %vm292, %v1323, 0
  %v1333 = vsel %vm320, %v1327, 0
  %1335 = vmatprep.subr.bf16.mxu0 0
  %1336 = vmatpush1.bf16.msra.mxu0 %v1325
  %1337 = vmatprep.subr.bf16.mxu0 0
  %1338 = vmatpush1.bf16.msra.mxu0 %v1333
  %1339 = vmatprep.subr.bf16.mxu0 0
  %1340 = vmatpush1.bf16.msra.mxu0 0
  %1341 = vmatprep.subr.bf16.mxu0 0
  %1342 = vmatpush1.bf16.msra.mxu0 0
  %1343 = vmatprep.subr.bf16.mxu0 0
  %1344 = vmatpush1.bf16.msra.mxu0 0
  %1345 = vmatprep.subr.bf16.mxu0 0
  %1346 = vmatpush1.bf16.msra.mxu0 0
  %1347 = vmatprep.subr.bf16.mxu0 0
  %1348 = vmatpush1.bf16.msra.mxu0 0
  %1349 = vmatprep.subr.bf16.mxu0 0
  %1350 = vmatpush1.bf16.msra.mxu0 0
  %1351 = vmatprep.subr.bf16.mxu0 0
  %1352 = vmatpush1.bf16.msra.mxu0 0
  %1353 = vmatprep.subr.bf16.mxu0 0
  %1354 = vmatpush1.bf16.msra.mxu0 0
  %1355 = vmatprep.subr.bf16.mxu0 0
  %1356 = vmatpush1.bf16.msra.mxu0 0
  %1357 = vmatprep.subr.bf16.mxu0 0
  %1358 = vmatpush1.bf16.msra.mxu0 0
  %1359 = vmatprep.subr.bf16.mxu0 0
  %1360 = vmatpush1.bf16.msra.mxu0 0
  %1361 = vmatprep.subr.bf16.mxu0 0
  %1362 = vmatpush1.bf16.msra.mxu0 0
  %1363 = vmatprep.subr.bf16.mxu0 0
  %1364 = vmatpush1.bf16.msra.mxu0 0
  %1365 = vmatprep.subr.bf16.mxu0 0
  %1366 = vmatpush1.bf16.msra.mxu0 0
  %1367 = vmatprep.mubr.bf16.mxu0 0
  %1368 = vmatmul.mubr.bf16.gmra.mrb[0].mxu0 %v1330
  %v1369 = vpop.f32.mrb[0].mxu0
  %v1370 = vadd.f32 0.0, %v1369
  %v1371 = vpop.f32.mrb[0].mxu0
  %v1372 = vpop.f32.mrb[0].mxu0
  %v1373 = vadd.f32 0.0, %v1372
  %v1374 = vpop.f32.mrb[0].mxu0
  %1375 = vdwg.mxu0
  %1378 = vrot.lane.b32.xlu0 %v1370, 14
  %v1379 = vpop.permute.xlu0 %1378
  %1380 = vrot.lane.b32.xlu0 %v1373, 14
  %v1381 = vpop.permute.xlu0 %1380
  %vm1384 = vcmask 130160
  %1385 = vst.msk [vmem:[#allocation2] sm:$0xff] %vm1384, %v1379
  %vm1386 = vcmask 126064
  %1387 = vst.msk [vmem:[#allocation2 + $0x8] sm:$0xf] %vm1386, %v1381
  %v1388 = vld [vmem:[#allocation2] sm:$0xff]
  %v1389 = vld [vmem:[#allocation2 + $0x8] sm:$0xf]
  %v1390 = vpack.c.bf16 %v1389, %v1388
  %v1391 = vld [vmem:[%s5] sm:$0xf]
  %v1392 = vld [vmem:[%s5 + $0x4] sm:$0xf]
  %v1393 = vld [vmem:[%s7] sm:$0x1]
  %v1395 = vlaneseq
  %v1396 = vshrl.u32 %v1395, 7
  %v1397 = vsub.s32 0, %v1396
  %v1398 = vrot.slane %v1393, %v1397
  %v1402 = vunpack.c.l.b16 %v1391
  %v1403 = vunpack.c.l.b16 %v1392
  %v1404 = vpack.c.b16 %v1403, %v1402
  %v1407 = vsel %vm55, %v1390, 0
  %1409 = vmatprep.subr.bf16.mxu0 0
  %1410 = vmatpush1.bf16.msra.mxu0 %v1404
  %1411 = vmatprep.subr.bf16.mxu0 0
  %1412 = vmatpush1.bf16.msra.mxu0 0
  %1413 = vmatprep.subr.bf16.mxu0 0
  %1414 = vmatpush1.bf16.msra.mxu0 0
  %1415 = vmatprep.subr.bf16.mxu0 0
  %1416 = vmatpush1.bf16.msra.mxu0 0
  %1417 = vmatprep.subr.bf16.mxu0 0
  %1418 = vmatpush1.bf16.msra.mxu0 0
  %1419 = vmatprep.subr.bf16.mxu0 0
  %1420 = vmatpush1.bf16.msra.mxu0 0
  %1421 = vmatprep.subr.bf16.mxu0 0
  %1422 = vmatpush1.bf16.msra.mxu0 0
  %1423 = vmatprep.subr.bf16.mxu0 0
  %1424 = vmatpush1.bf16.msra.mxu0 0
  %1425 = vmatprep.subr.bf16.mxu0 0
  %1426 = vmatpush1.bf16.msra.mxu0 0
  %1427 = vmatprep.subr.bf16.mxu0 0
  %1428 = vmatpush1.bf16.msra.mxu0 0
  %1429 = vmatprep.subr.bf16.mxu0 0
  %1430 = vmatpush1.bf16.msra.mxu0 0
  %1431 = vmatprep.subr.bf16.mxu0 0
  %1432 = vmatpush1.bf16.msra.mxu0 0
  %1433 = vmatprep.subr.bf16.mxu0 0
  %1434 = vmatpush1.bf16.msra.mxu0 0
  %1435 = vmatprep.subr.bf16.mxu0 0
  %1436 = vmatpush1.bf16.msra.mxu0 0
  %1437 = vmatprep.subr.bf16.mxu0 0
  %1438 = vmatpush1.bf16.msra.mxu0 0
  %1439 = vmatprep.subr.bf16.mxu0 0
  %1440 = vmatpush1.bf16.msra.mxu0 0
  %1441 = vmatprep.mubr.bf16.mxu0 0
  %1442 = vmatmul.mubr.bf16.gmra.mrb[0].mxu0 %v1407
  %v1443 = vpop.f32.mrb[0].mxu0
  %v1444 = vadd.f32 %v1398, %v1443
  %v1445 = vpop.f32.mrb[0].mxu0
  %v1446 = vpop.f32.mrb[0].mxu0
  %v1447 = vadd.f32 %v1398, %v1446
  %v1448 = vpop.f32.mrb[0].mxu0
  %1449 = vdwg.mxu0
  %v1450 = vpack.c.bf16 %v1447, %v1444
  %v1452 = vunpack.c.l.b16 %v1450
  %v1453 = vunpack.c.h.b16 %v1450
  %v1454 = vpack.c.b16 %v1452, %v1452
  %v1455 = vpack.c.b16 %v1453, %v1453
  %1458 = vst [vmem:[%s8] sm:$0xf] %v1454
  %1459 = vst [vmem:[%s8 + $0x4] sm:$0x3] %v1455
  // Predicated region
  $region34: #{gacfv5_forward.13} parent=0 // pred_check
    _
  $region35: #{gacfv5_forward.13} parent=0 // pred_check_branch
    %1461 = sbr.rel (0) target = $region37
  $region36: #{gacfv5_forward.13} parent=0 // pred_region
    _
  $region37: #{gacfv5_forward.13} parent=0 // pred_fallthru
    _
  // Predicated region
  $region38: #{gacfv5_forward.13} parent=0 // pred_check
    _
  $region39: #{gacfv5_forward.13} parent=0 // pred_check_branch
    %1463 = sbr.rel (0) target = $region41
  $region40: #{gacfv5_forward.13} parent=0 // pred_region
    _
  $region41: #{gacfv5_forward.13} parent=0 // pred_fallthru
    _

// kernel: gacfv5_forward.14
$region0: #{gacfv5_forward.14}
  #allocation0 [shape = 'u32[]', space=smem, size = 0x4, offset = 0x4, fixed_abs, tag = 'smem constant byte address 0x4 - core index']
  #allocation1 [shape = 'u32[144,128]{1,0:T(1,128)}', space=vmem, size = 0x12000, scoped, tag = 'internal scratch']
  #allocation2 [shape = 'f32[20,16]{1,0:T(8,128)}', space=vmem, size = 0x3000, scoped, tag = 'scratch operand']
  %s0 = inlined_call_operand.vmem [shape: bf16[20,16], index: 0, kind: input, shape index: {}]
  %s1 = inlined_call_operand.vmem [shape: bf16[12,16], index: 1, kind: input, shape index: {}]
  %s2 = inlined_call_operand.vmem [shape: bf16[16,16], index: 2, kind: input, shape index: {}]
  %s3 = inlined_call_operand.vmem [shape: bf16[16,16], index: 3, kind: input, shape index: {}]
  %s4 = inlined_call_operand.vmem [shape: bf16[16,16], index: 4, kind: input, shape index: {}]
  %s5 = inlined_call_operand.vmem [shape: bf16[16,128], index: 5, kind: input, shape index: {}]
  %s6 = inlined_call_operand.vmem [shape: f32[3,16], index: 6, kind: input, shape index: {}]
  %s7 = inlined_call_operand.vmem [shape: f32[1,128], index: 7, kind: input, shape index: {}]
  %s8 = inlined_call_operand.vmem [shape: bf16[20,128], index: 8, kind: output, shape index: {}]
  %s9 = sld [smem:[#allocation0]]
  $region42: #{gacfv5_forward.14} parent=0
    _
  %s11 = ssub.s32 1, %s9
  %s12 = scalar_select 0, %s11, %s9
  // Predicated region
  $region2: #{gacfv5_forward.14} parent=0 // pred_check
    _
  $region3: #{gacfv5_forward.14} parent=0 // pred_check_branch
    %14 = sbr.rel (0) target = $region5
  $region4: #{gacfv5_forward.14} parent=0 // pred_region
    _
  $region5: #{gacfv5_forward.14} parent=0 // pred_fallthru
    _
  // Predicated region
  $region6: #{gacfv5_forward.14} parent=0 // pred_check
    _
  $region7: #{gacfv5_forward.14} parent=0 // pred_check_branch
    %16 = sbr.rel (0) target = $region9
  $region8: #{gacfv5_forward.14} parent=0 // pred_region
    _
  $region9: #{gacfv5_forward.14} parent=0 // pred_fallthru
    _
  // Predicated region
  $region10: #{gacfv5_forward.14} parent=0 // pred_check
    _
  $region11: #{gacfv5_forward.14} parent=0 // pred_check_branch
    %18 = sbr.rel (0) target = $region13
  $region12: #{gacfv5_forward.14} parent=0 // pred_region
    _
  $region13: #{gacfv5_forward.14} parent=0 // pred_fallthru
    _
  // Predicated region
  $region14: #{gacfv5_forward.14} parent=0 // pred_check
    _
  $region15: #{gacfv5_forward.14} parent=0 // pred_check_branch
    %20 = sbr.rel (0) target = $region17
  $region16: #{gacfv5_forward.14} parent=0 // pred_region
    _
  $region17: #{gacfv5_forward.14} parent=0 // pred_fallthru
    _
  // Predicated region
  $region18: #{gacfv5_forward.14} parent=0 // pred_check
    _
  $region19: #{gacfv5_forward.14} parent=0 // pred_check_branch
    %22 = sbr.rel (0) target = $region21
  $region20: #{gacfv5_forward.14} parent=0 // pred_region
    _
  $region21: #{gacfv5_forward.14} parent=0 // pred_fallthru
    _
  // Predicated region
  $region22: #{gacfv5_forward.14} parent=0 // pred_check
    _
  $region23: #{gacfv5_forward.14} parent=0 // pred_check_branch
    %24 = sbr.rel (0) target = $region25
  $region24: #{gacfv5_forward.14} parent=0 // pred_region
    _
  $region25: #{gacfv5_forward.14} parent=0 // pred_fallthru
    _
  // Predicated region
  $region26: #{gacfv5_forward.14} parent=0 // pred_check
    _
  $region27: #{gacfv5_forward.14} parent=0 // pred_check_branch
    %26 = sbr.rel (0) target = $region29
  $region28: #{gacfv5_forward.14} parent=0 // pred_region
    _
  $region29: #{gacfv5_forward.14} parent=0 // pred_fallthru
    _
  // Predicated region
  $region30: #{gacfv5_forward.14} parent=0 // pred_check
    _
  $region31: #{gacfv5_forward.14} parent=0 // pred_check_branch
    %28 = sbr.rel (0) target = $region33
  $region32: #{gacfv5_forward.14} parent=0 // pred_region
    _
  $region33: #{gacfv5_forward.14} parent=0 // pred_fallthru
    _
  %v30 = vld [vmem:[%s0] sm:$0xf]
  %v31 = vld [vmem:[%s0 + $0x4] sm:$0xf]
  %v32 = vld [vmem:[%s0 + $0x8] sm:$0x3]
  %v33 = vld [vmem:[%s1] sm:$0xf]
  %v34 = vld [vmem:[%s1 + $0x4] sm:$0x3]
  %v35 = vld [vmem:[%s6] sm:$0x1]
  %v36 = vld [vmem:[%s6 + $0x1] sm:$0x1]
  %v37 = vld [vmem:[%s6 + $0x2] sm:$0x1]
  %v38 = vld [vmem:[%s2] sm:$0xf]
  %v39 = vld [vmem:[%s2 + $0x4] sm:$0xf]
  %v40 = vlaneseq
  %v41 = vshrl.u32 %v40, 7
  %v42 = vsub.s32 0, %v41
  %v43 = vrot.slane %v35, %v42
  %v47 = vunpack.c.l.b16 %v30
  %v48 = vunpack.c.l.b16 %v31
  %v49 = vunpack.c.l.b16 %v32
  %v50 = vpack.c.b16 %v48, %v47
  %v51 = vpack.c.b16 %v49, %v49
  %v54 = vunpack.c.l.b16 %v38
  %v55 = vunpack.c.l.b16 %v39
  %v56 = vpack.c.b16 %v55, %v54
  %vm58 = vcmask 130048
  %v60 = vsel %vm58, %v50, 0
  %v63 = vsel %vm58, %v51, 0
  %65 = vmatprep.subr.bf16.mxu0 0
  %66 = vmatpush1.bf16.msra.mxu0 %v56
  %67 = vmatprep.subr.bf16.mxu0 0
  %68 = vmatpush1.bf16.msra.mxu0 0
  %69 = vmatprep.subr.bf16.mxu0 0
  %70 = vmatpush1.bf16.msra.mxu0 0
  %71 = vmatprep.subr.bf16.mxu0 0
  %72 = vmatpush1.bf16.msra.mxu0 0
  %73 = vmatprep.subr.bf16.mxu0 0
  %74 = vmatpush1.bf16.msra.mxu0 0
  %75 = vmatprep.subr.bf16.mxu0 0
  %76 = vmatpush1.bf16.msra.mxu0 0
  %77 = vmatprep.subr.bf16.mxu0 0
  %78 = vmatpush1.bf16.msra.mxu0 0
  %79 = vmatprep.subr.bf16.mxu0 0
  %80 = vmatpush1.bf16.msra.mxu0 0
  %81 = vmatprep.subr.bf16.mxu0 0
  %82 = vmatpush1.bf16.msra.mxu0 0
  %83 = vmatprep.subr.bf16.mxu0 0
  %84 = vmatpush1.bf16.msra.mxu0 0
  %85 = vmatprep.subr.bf16.mxu0 0
  %86 = vmatpush1.bf16.msra.mxu0 0
  %87 = vmatprep.subr.bf16.mxu0 0
  %88 = vmatpush1.bf16.msra.mxu0 0
  %89 = vmatprep.subr.bf16.mxu0 0
  %90 = vmatpush1.bf16.msra.mxu0 0
  %91 = vmatprep.subr.bf16.mxu0 0
  %92 = vmatpush1.bf16.msra.mxu0 0
  %93 = vmatprep.subr.bf16.mxu0 0
  %94 = vmatpush1.bf16.msra.mxu0 0
  %95 = vmatprep.subr.bf16.mxu0 0
  %96 = vmatpush1.bf16.msra.mxu0 0
  %97 = vmatprep.mubr.bf16.mxu0 0
  %98 = vmatmul.mubr.bf16.gmra.mrb[0].mxu0 %v60
  %v99 = vpop.f32.mrb[0].mxu0
  %v100 = vadd.f32 %v43, %v99
  %v101 = vpop.f32.mrb[0].mxu0
  %v102 = vpop.f32.mrb[0].mxu0
  %v103 = vadd.f32 %v43, %v102
  %v104 = vpop.f32.mrb[0].mxu0
  %105 = vmatprep.mubr.bf16.mxu0 0
  %106 = vmatmul.mubr.bf16.gmra.mrb[0].mxu0 %v63
  %v107 = vpop.f32.mrb[0].mxu0
  %v108 = vadd.f32 %v43, %v107
  %v109 = vpop.f32.mrb[0].mxu0
  %v110 = vpop.f32.mrb[0].mxu0
  %v111 = vpop.f32.mrb[0].mxu0
  %112 = vdwg.mxu0
  %v113 = vpack.c.bf16 %v103, %v100
  %v114 = vpack.c.bf16 %v108, %v108
  %v115 = vld [vmem:[%s3] sm:$0xf]
  %v116 = vld [vmem:[%s3 + $0x4] sm:$0xf]
  %v117 = vlaneseq
  %v118 = vshrl.u32 %v117, 7
  %v119 = vsub.s32 0, %v118
  %v120 = vrot.slane %v36, %v119
  %v123 = vunpack.c.l.b16 %v33
  %v124 = vunpack.c.l.b16 %v34
  %v125 = vpack.c.b16 %v124, %v123
  %v128 = vunpack.c.l.b16 %v115
  %v129 = vunpack.c.l.b16 %v116
  %v130 = vpack.c.b16 %v129, %v128
  %v133 = vsel %vm58, %v125, 0
  %135 = vmatprep.subr.bf16.mxu0 0
  %136 = vmatpush1.bf16.msra.mxu0 %v130
  %137 = vmatprep.subr.bf16.mxu0 0
  %138 = vmatpush1.bf16.msra.mxu0 0
  %139 = vmatprep.subr.bf16.mxu0 0
  %140 = vmatpush1.bf16.msra.mxu0 0
  %141 = vmatprep.subr.bf16.mxu0 0
  %142 = vmatpush1.bf16.msra.mxu0 0
  %143 = vmatprep.subr.bf16.mxu0 0
  %144 = vmatpush1.bf16.msra.mxu0 0
  %145 = vmatprep.subr.bf16.mxu0 0
  %146 = vmatpush1.bf16.msra.mxu0 0
  %147 = vmatprep.subr.bf16.mxu0 0
  %148 = vmatpush1.bf16.msra.mxu0 0
  %149 = vmatprep.subr.bf16.mxu0 0
  %150 = vmatpush1.bf16.msra.mxu0 0
  %151 = vmatprep.subr.bf16.mxu0 0
  %152 = vmatpush1.bf16.msra.mxu0 0
  %153 = vmatprep.subr.bf16.mxu0 0
  %154 = vmatpush1.bf16.msra.mxu0 0
  %155 = vmatprep.subr.bf16.mxu0 0
  %156 = vmatpush1.bf16.msra.mxu0 0
  %157 = vmatprep.subr.bf16.mxu0 0
  %158 = vmatpush1.bf16.msra.mxu0 0
  %159 = vmatprep.subr.bf16.mxu0 0
  %160 = vmatpush1.bf16.msra.mxu0 0
  %161 = vmatprep.subr.bf16.mxu0 0
  %162 = vmatpush1.bf16.msra.mxu0 0
  %163 = vmatprep.subr.bf16.mxu0 0
  %164 = vmatpush1.bf16.msra.mxu0 0
  %165 = vmatprep.subr.bf16.mxu0 0
  %166 = vmatpush1.bf16.msra.mxu0 0
  %167 = vmatprep.mubr.bf16.mxu0 0
  %168 = vmatmul.mubr.bf16.gmra.mrb[0].mxu0 %v133
  %v169 = vpop.f32.mrb[0].mxu0
  %v170 = vadd.f32 %v120, %v169
  %v171 = vpop.f32.mrb[0].mxu0
  %v172 = vpop.f32.mrb[0].mxu0
  %v173 = vadd.f32 %v120, %v172
  %v174 = vpop.f32.mrb[0].mxu0
  %175 = vdwg.mxu0
  %v176 = vpack.c.bf16 %v173, %v170
  %v177 = vld [vmem:[%s4] sm:$0xf]
  %v178 = vld [vmem:[%s4 + $0x4] sm:$0xf]
  %v179 = vlaneseq
  %v180 = vshrl.u32 %v179, 7
  %v181 = vsub.s32 0, %v180
  %v182 = vrot.slane %v37, %v181
  %v185 = vunpack.c.l.b16 %v177
  %v186 = vunpack.c.l.b16 %v178
  %v187 = vpack.c.b16 %v186, %v185
  %189 = vmatprep.subr.bf16.mxu0 0
  %190 = vmatpush1.bf16.msra.mxu0 %v187
  %191 = vmatprep.subr.bf16.mxu0 0
  %192 = vmatpush1.bf16.msra.mxu0 0
  %193 = vmatprep.subr.bf16.mxu0 0
  %194 = vmatpush1.bf16.msra.mxu0 0
  %195 = vmatprep.subr.bf16.mxu0 0
  %196 = vmatpush1.bf16.msra.mxu0 0
  %197 = vmatprep.subr.bf16.mxu0 0
  %198 = vmatpush1.bf16.msra.mxu0 0
  %199 = vmatprep.subr.bf16.mxu0 0
  %200 = vmatpush1.bf16.msra.mxu0 0
  %201 = vmatprep.subr.bf16.mxu0 0
  %202 = vmatpush1.bf16.msra.mxu0 0
  %203 = vmatprep.subr.bf16.mxu0 0
  %204 = vmatpush1.bf16.msra.mxu0 0
  %205 = vmatprep.subr.bf16.mxu0 0
  %206 = vmatpush1.bf16.msra.mxu0 0
  %207 = vmatprep.subr.bf16.mxu0 0
  %208 = vmatpush1.bf16.msra.mxu0 0
  %209 = vmatprep.subr.bf16.mxu0 0
  %210 = vmatpush1.bf16.msra.mxu0 0
  %211 = vmatprep.subr.bf16.mxu0 0
  %212 = vmatpush1.bf16.msra.mxu0 0
  %213 = vmatprep.subr.bf16.mxu0 0
  %214 = vmatpush1.bf16.msra.mxu0 0
  %215 = vmatprep.subr.bf16.mxu0 0
  %216 = vmatpush1.bf16.msra.mxu0 0
  %217 = vmatprep.subr.bf16.mxu0 0
  %218 = vmatpush1.bf16.msra.mxu0 0
  %219 = vmatprep.subr.bf16.mxu0 0
  %220 = vmatpush1.bf16.msra.mxu0 0
  %221 = vmatprep.mubr.bf16.mxu0 0
  %222 = vmatmul.mubr.bf16.gmra.mrb[0].mxu0 %v133
  %v223 = vpop.f32.mrb[0].mxu0
  %v224 = vadd.f32 %v182, %v223
  %v225 = vpop.f32.mrb[0].mxu0
  %v226 = vpop.f32.mrb[0].mxu0
  %v227 = vadd.f32 %v182, %v226
  %v228 = vpop.f32.mrb[0].mxu0
  %229 = vdwg.mxu0
  %v230 = vpack.c.bf16 %v227, %v224
  %vm231 = vcmask 15360
  %v233 = vsel %vm231, %v113, 0
  %v236 = vsel %vm231, %v114, 0
  %v239 = vsel %vm231, %v176, 0
  %241 = vmatprep.subr.bf16.mxu0 0
  %242 = vmatpush1.bf16.xpose.msra.mxu0 %v239
  %243 = vmatprep.subr.bf16.mxu0 0
  %244 = vmatpush1.bf16.xpose.msra.mxu0 0
  %245 = vmatprep.subr.bf16.mxu0 0
  %246 = vmatpush1.bf16.xpose.msra.mxu0 0
  %247 = vmatprep.subr.bf16.mxu0 0
  %248 = vmatpush1.bf16.xpose.msra.mxu0 0
  %249 = vmatprep.subr.bf16.mxu0 0
  %250 = vmatpush1.bf16.xpose.msra.mxu0 0
  %251 = vmatprep.subr.bf16.mxu0 0
  %252 = vmatpush1.bf16.xpose.msra.mxu0 0
  %253 = vmatprep.subr.bf16.mxu0 0
  %254 = vmatpush1.bf16.xpose.msra.mxu0 0
  %255 = vmatprep.subr.bf16.mxu0 0
  %256 = vmatpush1.bf16.xpose.msra.mxu0 0
  %257 = vmatprep.subr.bf16.mxu0 0
  %258 = vmatpush1.bf16.xpose.msra.mxu0 0
  %259 = vmatprep.subr.bf16.mxu0 0
  %260 = vmatpush1.bf16.xpose.msra.mxu0 0
  %261 = vmatprep.subr.bf16.mxu0 0
  %262 = vmatpush1.bf16.xpose.msra.mxu0 0
  %263 = vmatprep.subr.bf16.mxu0 0
  %264 = vmatpush1.bf16.xpose.msra.mxu0 0
  %265 = vmatprep.subr.bf16.mxu0 0
  %266 = vmatpush1.bf16.xpose.msra.mxu0 0
  %267 = vmatprep.subr.bf16.mxu0 0
  %268 = vmatpush1.bf16.xpose.msra.mxu0 0
  %269 = vmatprep.subr.bf16.mxu0 0
  %270 = vmatpush1.bf16.xpose.msra.mxu0 0
  %271 = vmatprep.subr.bf16.mxu0 0
  %272 = vmatpush1.bf16.xpose.msra.mxu0 0
  %273 = vmatprep.mubr.bf16.mxu0 0
  %274 = vmatmul.mubr.bf16.gmra.mrb[0].mxu0 %v233
  %v275 = vpop.f32.mrb[0].mxu0
  %v276 = vadd.f32 0.0, %v275
  %v277 = vpop.f32.mrb[0].mxu0
  %v278 = vpop.f32.mrb[0].mxu0
  %v279 = vadd.f32 0.0, %v278
  %v280 = vpop.f32.mrb[0].mxu0
  %281 = vmatprep.mubr.bf16.mxu0 0
  %282 = vmatmul.mubr.bf16.gmra.mrb[0].mxu0 %v236
  %v283 = vpop.f32.mrb[0].mxu0
  %v284 = vadd.f32 0.0, %v283
  %v285 = vpop.f32.mrb[0].mxu0
  %v286 = vpop.f32.mrb[0].mxu0
  %v287 = vpop.f32.mrb[0].mxu0
  %288 = vdwg.mxu0
  %v289 = vmul.f32 %v276, 0.70710677
  %v290 = vmul.f32 %v279, 0.70710677
  %v291 = vmul.f32 %v284, 0.70710677
  %vm292 = vcmask 97280
  %v293 = vsel %vm292, %v289, -inf
  %294 = vmax.xlane.f32.xlu0 %v293
  %v295 = vpop.xlane.xlu0 %294
  %v296 = vsel %vm292, %v290, -inf
  %297 = vmax.xlane.f32.xlu0 %v296
  %v298 = vpop.xlane.xlu0 %297
  %vm299 = vcmask 93184
  %v300 = vsel %vm299, %v291, -inf
  %301 = vmax.xlane.f32.xlu0 %v300
  %v302 = vpop.xlane.xlu0 %301
  %v303 = vsub.f32 %v289, %v295
  %v304 = vsub.f32 %v290, %v298
  %v305 = vsub.f32 %v291, %v302
  %v306 = vmul.f32 %v303, 1.442695
  %v307 = vpow.pop %v306
  %v308 = vmul.f32 %v304, 1.442695
  %v309 = vpow.pop %v308
  %v310 = vmul.f32 %v305, 1.442695
  %v311 = vpow.pop %v310
  %v312 = vsel %vm292, %v307, 0.0
  %313 = vadd.xlane.f32.xlu0 %v312
  %v314 = vpop.xlane.xlu0 %313
  %v315 = vsel %vm292, %v309, 0.0
  %316 = vadd.xlane.f32.xlu0 %v315
  %v317 = vpop.xlane.xlu0 %316
  %v318 = vsel %vm299, %v311, 0.0
  %319 = vadd.xlane.f32.xlu0 %v318
  %v320 = vpop.xlane.xlu0 %319
  %v321 = vrcp.pop %v314
  %v322 = vrcp.pop %v317
  %v323 = vrcp.pop %v320
  %v324 = vmul.f32 %v307, %v321
  %v325 = vmul.f32 %v309, %v322
  %v326 = vmul.f32 %v311, %v323
  %v327 = vpack.c.bf16 %v325, %v324
  %v328 = vpack.c.bf16 %v326, %v326
  %v330 = vsel %vm292, %v327, 0
  %v333 = vsel %vm292, %v328, 0
  %vm335 = vcmask 1045504
  %v337 = vsel %vm335, %v230, 0
  %339 = vmatprep.subr.bf16.mxu0 0
  %340 = vmatpush1.bf16.msra.mxu0 %v337
  %341 = vmatprep.subr.bf16.mxu0 0
  %342 = vmatpush1.bf16.msra.mxu0 0
  %343 = vmatprep.subr.bf16.mxu0 0
  %344 = vmatpush1.bf16.msra.mxu0 0
  %345 = vmatprep.subr.bf16.mxu0 0
  %346 = vmatpush1.bf16.msra.mxu0 0
  %347 = vmatprep.subr.bf16.mxu0 0
  %348 = vmatpush1.bf16.msra.mxu0 0
  %349 = vmatprep.subr.bf16.mxu0 0
  %350 = vmatpush1.bf16.msra.mxu0 0
  %351 = vmatprep.subr.bf16.mxu0 0
  %352 = vmatpush1.bf16.msra.mxu0 0
  %353 = vmatprep.subr.bf16.mxu0 0
  %354 = vmatpush1.bf16.msra.mxu0 0
  %355 = vmatprep.subr.bf16.mxu0 0
  %356 = vmatpush1.bf16.msra.mxu0 0
  %357 = vmatprep.subr.bf16.mxu0 0
  %358 = vmatpush1.bf16.msra.mxu0 0
  %359 = vmatprep.subr.bf16.mxu0 0
  %360 = vmatpush1.bf16.msra.mxu0 0
  %361 = vmatprep.subr.bf16.mxu0 0
  %362 = vmatpush1.bf16.msra.mxu0 0
  %363 = vmatprep.subr.bf16.mxu0 0
  %364 = vmatpush1.bf16.msra.mxu0 0
  %365 = vmatprep.subr.bf16.mxu0 0
  %366 = vmatpush1.bf16.msra.mxu0 0
  %367 = vmatprep.subr.bf16.mxu0 0
  %368 = vmatpush1.bf16.msra.mxu0 0
  %369 = vmatprep.subr.bf16.mxu0 0
  %370 = vmatpush1.bf16.msra.mxu0 0
  %371 = vmatprep.mubr.bf16.mxu0 0
  %372 = vmatmul.mubr.bf16.gmra.mrb[0].mxu0 %v330
  %v373 = vpop.f32.mrb[0].mxu0
  %v374 = vadd.f32 0.0, %v373
  %v375 = vpop.f32.mrb[0].mxu0
  %v376 = vpop.f32.mrb[0].mxu0
  %v377 = vadd.f32 0.0, %v376
  %v378 = vpop.f32.mrb[0].mxu0
  %379 = vmatprep.mubr.bf16.mxu0 0
  %380 = vmatmul.mubr.bf16.gmra.mrb[0].mxu0 %v333
  %v381 = vpop.f32.mrb[0].mxu0
  %v382 = vadd.f32 0.0, %v381
  %v383 = vpop.f32.mrb[0].mxu0
  %v384 = vpop.f32.mrb[0].mxu0
  %v385 = vpop.f32.mrb[0].mxu0
  %386 = vdwg.mxu0
  %387 = vst.msk [vmem:[#allocation2] sm:$0xff] %vm231, %v374
  %388 = vst.msk [vmem:[#allocation2 + $0x8] sm:$0xff] %vm231, %v377
  %vm389 = vcmask 11264
  %390 = vst.msk [vmem:[#allocation2 + $0x10] sm:$0xf] %vm389, %v382
  %393 = vrot.lane.b32.xlu0 %v113, 126
  %v394 = vpop.permute.xlu0 %393
  %395 = vrot.lane.b32.xlu0 %v114, 126
  %v396 = vpop.permute.xlu0 %395
  %398 = vrot.lane.b32.xlu0 %v176, 126
  %v399 = vpop.permute.xlu0 %398
  %v401 = vsel %vm231, %v394, 0
  %v404 = vsel %vm231, %v396, 0
  %v407 = vsel %vm231, %v399, 0
  %409 = vmatprep.subr.bf16.mxu0 0
  %410 = vmatpush1.bf16.xpose.msra.mxu0 %v407
  %411 = vmatprep.subr.bf16.mxu0 0
  %412 = vmatpush1.bf16.xpose.msra.mxu0 0
  %413 = vmatprep.subr.bf16.mxu0 0
  %414 = vmatpush1.bf16.xpose.msra.mxu0 0
  %415 = vmatprep.subr.bf16.mxu0 0
  %416 = vmatpush1.bf16.xpose.msra.mxu0 0
  %417 = vmatprep.subr.bf16.mxu0 0
  %418 = vmatpush1.bf16.xpose.msra.mxu0 0
  %419 = vmatprep.subr.bf16.mxu0 0
  %420 = vmatpush1.bf16.xpose.msra.mxu0 0
  %421 = vmatprep.subr.bf16.mxu0 0
  %422 = vmatpush1.bf16.xpose.msra.mxu0 0
  %423 = vmatprep.subr.bf16.mxu0 0
  %424 = vmatpush1.bf16.xpose.msra.mxu0 0
  %425 = vmatprep.subr.bf16.mxu0 0
  %426 = vmatpush1.bf16.xpose.msra.mxu0 0
  %427 = vmatprep.subr.bf16.mxu0 0
  %428 = vmatpush1.bf16.xpose.msra.mxu0 0
  %429 = vmatprep.subr.bf16.mxu0 0
  %430 = vmatpush1.bf16.xpose.msra.mxu0 0
  %431 = vmatprep.subr.bf16.mxu0 0
  %432 = vmatpush1.bf16.xpose.msra.mxu0 0
  %433 = vmatprep.subr.bf16.mxu0 0
  %434 = vmatpush1.bf16.xpose.msra.mxu0 0
  %435 = vmatprep.subr.bf16.mxu0 0
  %436 = vmatpush1.bf16.xpose.msra.mxu0 0
  %437 = vmatprep.subr.bf16.mxu0 0
  %438 = vmatpush1.bf16.xpose.msra.mxu0 0
  %439 = vmatprep.subr.bf16.mxu0 0
  %440 = vmatpush1.bf16.xpose.msra.mxu0 0
  %441 = vmatprep.mubr.bf16.mxu0 0
  %442 = vmatmul.mubr.bf16.gmra.mrb[0].mxu0 %v401
  %v443 = vpop.f32.mrb[0].mxu0
  %v444 = vadd.f32 0.0, %v443
  %v445 = vpop.f32.mrb[0].mxu0
  %v446 = vpop.f32.mrb[0].mxu0
  %v447 = vadd.f32 0.0, %v446
  %v448 = vpop.f32.mrb[0].mxu0
  %449 = vmatprep.mubr.bf16.mxu0 0
  %450 = vmatmul.mubr.bf16.gmra.mrb[0].mxu0 %v404
  %v451 = vpop.f32.mrb[0].mxu0
  %v452 = vadd.f32 0.0, %v451
  %v453 = vpop.f32.mrb[0].mxu0
  %v454 = vpop.f32.mrb[0].mxu0
  %v455 = vpop.f32.mrb[0].mxu0
  %456 = vdwg.mxu0
  %v457 = vmul.f32 %v444, 0.70710677
  %v458 = vmul.f32 %v447, 0.70710677
  %v459 = vmul.f32 %v452, 0.70710677
  %v460 = vsel %vm292, %v457, -inf
  %461 = vmax.xlane.f32.xlu0 %v460
  %v462 = vpop.xlane.xlu0 %461
  %v463 = vsel %vm292, %v458, -inf
  %464 = vmax.xlane.f32.xlu0 %v463
  %v465 = vpop.xlane.xlu0 %464
  %v466 = vsel %vm299, %v459, -inf
  %467 = vmax.xlane.f32.xlu0 %v466
  %v468 = vpop.xlane.xlu0 %467
  %v469 = vsub.f32 %v457, %v462
  %v470 = vsub.f32 %v458, %v465
  %v471 = vsub.f32 %v459, %v468
  %v472 = vmul.f32 %v469, 1.442695
  %v473 = vpow.pop %v472
  %v474 = vmul.f32 %v470, 1.442695
  %v475 = vpow.pop %v474
  %v476 = vmul.f32 %v471, 1.442695
  %v477 = vpow.pop %v476
  %v478 = vsel %vm292, %v473, 0.0
  %479 = vadd.xlane.f32.xlu0 %v478
  %v480 = vpop.xlane.xlu0 %479
  %v481 = vsel %vm292, %v475, 0.0
  %482 = vadd.xlane.f32.xlu0 %v481
  %v483 = vpop.xlane.xlu0 %482
  %v484 = vsel %vm299, %v477, 0.0
  %485 = vadd.xlane.f32.xlu0 %v484
  %v486 = vpop.xlane.xlu0 %485
  %v487 = vrcp.pop %v480
  %v488 = vrcp.pop %v483
  %v489 = vrcp.pop %v486
  %v490 = vmul.f32 %v473, %v487
  %v491 = vmul.f32 %v475, %v488
  %v492 = vmul.f32 %v477, %v489
  %v493 = vpack.c.bf16 %v491, %v490
  %v494 = vpack.c.bf16 %v492, %v492
  %496 = vrot.lane.b32.xlu0 %v230, 126
  %v497 = vpop.permute.xlu0 %496
  %v499 = vsel %vm292, %v493, 0
  %v502 = vsel %vm292, %v494, 0
  %v505 = vsel %vm335, %v497, 0
  %507 = vmatprep.subr.bf16.mxu0 0
  %508 = vmatpush1.bf16.msra.mxu0 %v505
  %509 = vmatprep.subr.bf16.mxu0 0
  %510 = vmatpush1.bf16.msra.mxu0 0
  %511 = vmatprep.subr.bf16.mxu0 0
  %512 = vmatpush1.bf16.msra.mxu0 0
  %513 = vmatprep.subr.bf16.mxu0 0
  %514 = vmatpush1.bf16.msra.mxu0 0
  %515 = vmatprep.subr.bf16.mxu0 0
  %516 = vmatpush1.bf16.msra.mxu0 0
  %517 = vmatprep.subr.bf16.mxu0 0
  %518 = vmatpush1.bf16.msra.mxu0 0
  %519 = vmatprep.subr.bf16.mxu0 0
  %520 = vmatpush1.bf16.msra.mxu0 0
  %521 = vmatprep.subr.bf16.mxu0 0
  %522 = vmatpush1.bf16.msra.mxu0 0
  %523 = vmatprep.subr.bf16.mxu0 0
  %524 = vmatpush1.bf16.msra.mxu0 0
  %525 = vmatprep.subr.bf16.mxu0 0
  %526 = vmatpush1.bf16.msra.mxu0 0
  %527 = vmatprep.subr.bf16.mxu0 0
  %528 = vmatpush1.bf16.msra.mxu0 0
  %529 = vmatprep.subr.bf16.mxu0 0
  %530 = vmatpush1.bf16.msra.mxu0 0
  %531 = vmatprep.subr.bf16.mxu0 0
  %532 = vmatpush1.bf16.msra.mxu0 0
  %533 = vmatprep.subr.bf16.mxu0 0
  %534 = vmatpush1.bf16.msra.mxu0 0
  %535 = vmatprep.subr.bf16.mxu0 0
  %536 = vmatpush1.bf16.msra.mxu0 0
  %537 = vmatprep.subr.bf16.mxu0 0
  %538 = vmatpush1.bf16.msra.mxu0 0
  %539 = vmatprep.mubr.bf16.mxu0 0
  %540 = vmatmul.mubr.bf16.gmra.mrb[0].mxu0 %v499
  %v541 = vpop.f32.mrb[0].mxu0
  %v542 = vadd.f32 0.0, %v541
  %v543 = vpop.f32.mrb[0].mxu0
  %v544 = vpop.f32.mrb[0].mxu0
  %v545 = vadd.f32 0.0, %v544
  %v546 = vpop.f32.mrb[0].mxu0
  %547 = vmatprep.mubr.bf16.mxu0 0
  %548 = vmatmul.mubr.bf16.gmra.mrb[0].mxu0 %v502
  %v549 = vpop.f32.mrb[0].mxu0
  %v550 = vadd.f32 0.0, %v549
  %v551 = vpop.f32.mrb[0].mxu0
  %v552 = vpop.f32.mrb[0].mxu0
  %v553 = vpop.f32.mrb[0].mxu0
  %554 = vdwg.mxu0
  %558 = vrot.lane.b32.xlu0 %v542, 2
  %v559 = vpop.permute.xlu0 %558
  %560 = vrot.lane.b32.xlu0 %v545, 2
  %v561 = vpop.permute.xlu0 %560
  %562 = vrot.lane.b32.xlu0 %v550, 2
  %v563 = vpop.permute.xlu0 %562
  %vm567 = vcmask 31760
  %568 = vst.msk [vmem:[#allocation2] sm:$0xff] %vm567, %v559
  %569 = vst.msk [vmem:[#allocation2 + $0x8] sm:$0xff] %vm567, %v561
  %vm570 = vcmask 27664
  %571 = vst.msk [vmem:[#allocation2 + $0x10] sm:$0xf] %vm570, %v563
  %572 = vrot.lane.b32.xlu0 %v113, 124
  %v573 = vpop.permute.xlu0 %572
  %574 = vrot.lane.b32.xlu0 %v114, 124
  %v575 = vpop.permute.xlu0 %574
  %576 = vrot.lane.b32.xlu0 %v176, 124
  %v577 = vpop.permute.xlu0 %576
  %v579 = vsel %vm231, %v573, 0
  %v582 = vsel %vm231, %v575, 0
  %v585 = vsel %vm231, %v577, 0
  %587 = vmatprep.subr.bf16.mxu0 0
  %588 = vmatpush1.bf16.xpose.msra.mxu0 %v585
  %589 = vmatprep.subr.bf16.mxu0 0
  %590 = vmatpush1.bf16.xpose.msra.mxu0 0
  %591 = vmatprep.subr.bf16.mxu0 0
  %592 = vmatpush1.bf16.xpose.msra.mxu0 0
  %593 = vmatprep.subr.bf16.mxu0 0
  %594 = vmatpush1.bf16.xpose.msra.mxu0 0
  %595 = vmatprep.subr.bf16.mxu0 0
  %596 = vmatpush1.bf16.xpose.msra.mxu0 0
  %597 = vmatprep.subr.bf16.mxu0 0
  %598 = vmatpush1.bf16.xpose.msra.mxu0 0
  %599 = vmatprep.subr.bf16.mxu0 0
  %600 = vmatpush1.bf16.xpose.msra.mxu0 0
  %601 = vmatprep.subr.bf16.mxu0 0
  %602 = vmatpush1.bf16.xpose.msra.mxu0 0
  %603 = vmatprep.subr.bf16.mxu0 0
  %604 = vmatpush1.bf16.xpose.msra.mxu0 0
  %605 = vmatprep.subr.bf16.mxu0 0
  %606 = vmatpush1.bf16.xpose.msra.mxu0 0
  %607 = vmatprep.subr.bf16.mxu0 0
  %608 = vmatpush1.bf16.xpose.msra.mxu0 0
  %609 = vmatprep.subr.bf16.mxu0 0
  %610 = vmatpush1.bf16.xpose.msra.mxu0 0
  %611 = vmatprep.subr.bf16.mxu0 0
  %612 = vmatpush1.bf16.xpose.msra.mxu0 0
  %613 = vmatprep.subr.bf16.mxu0 0
  %614 = vmatpush1.bf16.xpose.msra.mxu0 0
  %615 = vmatprep.subr.bf16.mxu0 0
  %616 = vmatpush1.bf16.xpose.msra.mxu0 0
  %617 = vmatprep.subr.bf16.mxu0 0
  %618 = vmatpush1.bf16.xpose.msra.mxu0 0
  %619 = vmatprep.mubr.bf16.mxu0 0
  %620 = vmatmul.mubr.bf16.gmra.mrb[0].mxu0 %v579
  %v621 = vpop.f32.mrb[0].mxu0
  %v622 = vadd.f32 0.0, %v621
  %v623 = vpop.f32.mrb[0].mxu0
  %v624 = vpop.f32.mrb[0].mxu0
  %v625 = vadd.f32 0.0, %v624
  %v626 = vpop.f32.mrb[0].mxu0
  %627 = vmatprep.mubr.bf16.mxu0 0
  %628 = vmatmul.mubr.bf16.gmra.mrb[0].mxu0 %v582
  %v629 = vpop.f32.mrb[0].mxu0
  %v630 = vadd.f32 0.0, %v629
  %v631 = vpop.f32.mrb[0].mxu0
  %v632 = vpop.f32.mrb[0].mxu0
  %v633 = vpop.f32.mrb[0].mxu0
  %634 = vdwg.mxu0
  %v635 = vmul.f32 %v622, 0.70710677
  %v636 = vmul.f32 %v625, 0.70710677
  %v637 = vmul.f32 %v630, 0.70710677
  %v638 = vsel %vm292, %v635, -inf
  %639 = vmax.xlane.f32.xlu0 %v638
  %v640 = vpop.xlane.xlu0 %639
  %v641 = vsel %vm292, %v636, -inf
  %642 = vmax.xlane.f32.xlu0 %v641
  %v643 = vpop.xlane.xlu0 %642
  %v644 = vsel %vm299, %v637, -inf
  %645 = vmax.xlane.f32.xlu0 %v644
  %v646 = vpop.xlane.xlu0 %645
  %v647 = vsub.f32 %v635, %v640
  %v648 = vsub.f32 %v636, %v643
  %v649 = vsub.f32 %v637, %v646
  %v650 = vmul.f32 %v647, 1.442695
  %v651 = vpow.pop %v650
  %v652 = vmul.f32 %v648, 1.442695
  %v653 = vpow.pop %v652
  %v654 = vmul.f32 %v649, 1.442695
  %v655 = vpow.pop %v654
  %v656 = vsel %vm292, %v651, 0.0
  %657 = vadd.xlane.f32.xlu0 %v656
  %v658 = vpop.xlane.xlu0 %657
  %v659 = vsel %vm292, %v653, 0.0
  %660 = vadd.xlane.f32.xlu0 %v659
  %v661 = vpop.xlane.xlu0 %660
  %v662 = vsel %vm299, %v655, 0.0
  %663 = vadd.xlane.f32.xlu0 %v662
  %v664 = vpop.xlane.xlu0 %663
  %v665 = vrcp.pop %v658
  %v666 = vrcp.pop %v661
  %v667 = vrcp.pop %v664
  %v668 = vmul.f32 %v651, %v665
  %v669 = vmul.f32 %v653, %v666
  %v670 = vmul.f32 %v655, %v667
  %v671 = vpack.c.bf16 %v669, %v668
  %v672 = vpack.c.bf16 %v670, %v670
  %673 = vrot.lane.b32.xlu0 %v230, 124
  %v674 = vpop.permute.xlu0 %673
  %v676 = vsel %vm292, %v671, 0
  %v679 = vsel %vm292, %v672, 0
  %v682 = vsel %vm335, %v674, 0
  %684 = vmatprep.subr.bf16.mxu0 0
  %685 = vmatpush1.bf16.msra.mxu0 %v682
  %686 = vmatprep.subr.bf16.mxu0 0
  %687 = vmatpush1.bf16.msra.mxu0 0
  %688 = vmatprep.subr.bf16.mxu0 0
  %689 = vmatpush1.bf16.msra.mxu0 0
  %690 = vmatprep.subr.bf16.mxu0 0
  %691 = vmatpush1.bf16.msra.mxu0 0
  %692 = vmatprep.subr.bf16.mxu0 0
  %693 = vmatpush1.bf16.msra.mxu0 0
  %694 = vmatprep.subr.bf16.mxu0 0
  %695 = vmatpush1.bf16.msra.mxu0 0
  %696 = vmatprep.subr.bf16.mxu0 0
  %697 = vmatpush1.bf16.msra.mxu0 0
  %698 = vmatprep.subr.bf16.mxu0 0
  %699 = vmatpush1.bf16.msra.mxu0 0
  %700 = vmatprep.subr.bf16.mxu0 0
  %701 = vmatpush1.bf16.msra.mxu0 0
  %702 = vmatprep.subr.bf16.mxu0 0
  %703 = vmatpush1.bf16.msra.mxu0 0
  %704 = vmatprep.subr.bf16.mxu0 0
  %705 = vmatpush1.bf16.msra.mxu0 0
  %706 = vmatprep.subr.bf16.mxu0 0
  %707 = vmatpush1.bf16.msra.mxu0 0
  %708 = vmatprep.subr.bf16.mxu0 0
  %709 = vmatpush1.bf16.msra.mxu0 0
  %710 = vmatprep.subr.bf16.mxu0 0
  %711 = vmatpush1.bf16.msra.mxu0 0
  %712 = vmatprep.subr.bf16.mxu0 0
  %713 = vmatpush1.bf16.msra.mxu0 0
  %714 = vmatprep.subr.bf16.mxu0 0
  %715 = vmatpush1.bf16.msra.mxu0 0
  %716 = vmatprep.mubr.bf16.mxu0 0
  %717 = vmatmul.mubr.bf16.gmra.mrb[0].mxu0 %v676
  %v718 = vpop.f32.mrb[0].mxu0
  %v719 = vadd.f32 0.0, %v718
  %v720 = vpop.f32.mrb[0].mxu0
  %v721 = vpop.f32.mrb[0].mxu0
  %v722 = vadd.f32 0.0, %v721
  %v723 = vpop.f32.mrb[0].mxu0
  %724 = vmatprep.mubr.bf16.mxu0 0
  %725 = vmatmul.mubr.bf16.gmra.mrb[0].mxu0 %v679
  %v726 = vpop.f32.mrb[0].mxu0
  %v727 = vadd.f32 0.0, %v726
  %v728 = vpop.f32.mrb[0].mxu0
  %v729 = vpop.f32.mrb[0].mxu0
  %v730 = vpop.f32.mrb[0].mxu0
  %731 = vdwg.mxu0
  %735 = vrot.lane.b32.xlu0 %v719, 4
  %v736 = vpop.permute.xlu0 %735
  %737 = vrot.lane.b32.xlu0 %v722, 4
  %v738 = vpop.permute.xlu0 %737
  %739 = vrot.lane.b32.xlu0 %v727, 4
  %v740 = vpop.permute.xlu0 %739
  %vm744 = vcmask 48160
  %745 = vst.msk [vmem:[#allocation2] sm:$0xff] %vm744, %v736
  %746 = vst.msk [vmem:[#allocation2 + $0x8] sm:$0xff] %vm744, %v738
  %vm747 = vcmask 44064
  %748 = vst.msk [vmem:[#allocation2 + $0x10] sm:$0xf] %vm747, %v740
  %749 = vrot.lane.b32.xlu0 %v113, 122
  %v750 = vpop.permute.xlu0 %749
  %751 = vrot.lane.b32.xlu0 %v114, 122
  %v752 = vpop.permute.xlu0 %751
  %753 = vrot.lane.b32.xlu0 %v176, 122
  %v754 = vpop.permute.xlu0 %753
  %v756 = vsel %vm231, %v750, 0
  %v759 = vsel %vm231, %v752, 0
  %v762 = vsel %vm231, %v754, 0
  %764 = vmatprep.subr.bf16.mxu0 0
  %765 = vmatpush1.bf16.xpose.msra.mxu0 %v762
  %766 = vmatprep.subr.bf16.mxu0 0
  %767 = vmatpush1.bf16.xpose.msra.mxu0 0
  %768 = vmatprep.subr.bf16.mxu0 0
  %769 = vmatpush1.bf16.xpose.msra.mxu0 0
  %770 = vmatprep.subr.bf16.mxu0 0
  %771 = vmatpush1.bf16.xpose.msra.mxu0 0
  %772 = vmatprep.subr.bf16.mxu0 0
  %773 = vmatpush1.bf16.xpose.msra.mxu0 0
  %774 = vmatprep.subr.bf16.mxu0 0
  %775 = vmatpush1.bf16.xpose.msra.mxu0 0
  %776 = vmatprep.subr.bf16.mxu0 0
  %777 = vmatpush1.bf16.xpose.msra.mxu0 0
  %778 = vmatprep.subr.bf16.mxu0 0
  %779 = vmatpush1.bf16.xpose.msra.mxu0 0
  %780 = vmatprep.subr.bf16.mxu0 0
  %781 = vmatpush1.bf16.xpose.msra.mxu0 0
  %782 = vmatprep.subr.bf16.mxu0 0
  %783 = vmatpush1.bf16.xpose.msra.mxu0 0
  %784 = vmatprep.subr.bf16.mxu0 0
  %785 = vmatpush1.bf16.xpose.msra.mxu0 0
  %786 = vmatprep.subr.bf16.mxu0 0
  %787 = vmatpush1.bf16.xpose.msra.mxu0 0
  %788 = vmatprep.subr.bf16.mxu0 0
  %789 = vmatpush1.bf16.xpose.msra.mxu0 0
  %790 = vmatprep.subr.bf16.mxu0 0
  %791 = vmatpush1.bf16.xpose.msra.mxu0 0
  %792 = vmatprep.subr.bf16.mxu0 0
  %793 = vmatpush1.bf16.xpose.msra.mxu0 0
  %794 = vmatprep.subr.bf16.mxu0 0
  %795 = vmatpush1.bf16.xpose.msra.mxu0 0
  %796 = vmatprep.mubr.bf16.mxu0 0
  %797 = vmatmul.mubr.bf16.gmra.mrb[0].mxu0 %v756
  %v798 = vpop.f32.mrb[0].mxu0
  %v799 = vadd.f32 0.0, %v798
  %v800 = vpop.f32.mrb[0].mxu0
  %v801 = vpop.f32.mrb[0].mxu0
  %v802 = vadd.f32 0.0, %v801
  %v803 = vpop.f32.mrb[0].mxu0
  %804 = vmatprep.mubr.bf16.mxu0 0
  %805 = vmatmul.mubr.bf16.gmra.mrb[0].mxu0 %v759
  %v806 = vpop.f32.mrb[0].mxu0
  %v807 = vadd.f32 0.0, %v806
  %v808 = vpop.f32.mrb[0].mxu0
  %v809 = vpop.f32.mrb[0].mxu0
  %v810 = vpop.f32.mrb[0].mxu0
  %811 = vdwg.mxu0
  %v812 = vmul.f32 %v799, 0.70710677
  %v813 = vmul.f32 %v802, 0.70710677
  %v814 = vmul.f32 %v807, 0.70710677
  %v815 = vsel %vm292, %v812, -inf
  %816 = vmax.xlane.f32.xlu0 %v815
  %v817 = vpop.xlane.xlu0 %816
  %v818 = vsel %vm292, %v813, -inf
  %819 = vmax.xlane.f32.xlu0 %v818
  %v820 = vpop.xlane.xlu0 %819
  %v821 = vsel %vm299, %v814, -inf
  %822 = vmax.xlane.f32.xlu0 %v821
  %v823 = vpop.xlane.xlu0 %822
  %v824 = vsub.f32 %v812, %v817
  %v825 = vsub.f32 %v813, %v820
  %v826 = vsub.f32 %v814, %v823
  %v827 = vmul.f32 %v824, 1.442695
  %v828 = vpow.pop %v827
  %v829 = vmul.f32 %v825, 1.442695
  %v830 = vpow.pop %v829
  %v831 = vmul.f32 %v826, 1.442695
  %v832 = vpow.pop %v831
  %v833 = vsel %vm292, %v828, 0.0
  %834 = vadd.xlane.f32.xlu0 %v833
  %v835 = vpop.xlane.xlu0 %834
  %v836 = vsel %vm292, %v830, 0.0
  %837 = vadd.xlane.f32.xlu0 %v836
  %v838 = vpop.xlane.xlu0 %837
  %v839 = vsel %vm299, %v832, 0.0
  %840 = vadd.xlane.f32.xlu0 %v839
  %v841 = vpop.xlane.xlu0 %840
  %v842 = vrcp.pop %v835
  %v843 = vrcp.pop %v838
  %v844 = vrcp.pop %v841
  %v845 = vmul.f32 %v828, %v842
  %v846 = vmul.f32 %v830, %v843
  %v847 = vmul.f32 %v832, %v844
  %v848 = vpack.c.bf16 %v846, %v845
  %v849 = vpack.c.bf16 %v847, %v847
  %850 = vrot.lane.b32.xlu0 %v230, 122
  %v851 = vpop.permute.xlu0 %850
  %v853 = vsel %vm292, %v848, 0
  %v856 = vsel %vm292, %v849, 0
  %v859 = vsel %vm335, %v851, 0
  %861 = vmatprep.subr.bf16.mxu0 0
  %862 = vmatpush1.bf16.msra.mxu0 %v859
  %863 = vmatprep.subr.bf16.mxu0 0
  %864 = vmatpush1.bf16.msra.mxu0 0
  %865 = vmatprep.subr.bf16.mxu0 0
  %866 = vmatpush1.bf16.msra.mxu0 0
  %867 = vmatprep.subr.bf16.mxu0 0
  %868 = vmatpush1.bf16.msra.mxu0 0
  %869 = vmatprep.subr.bf16.mxu0 0
  %870 = vmatpush1.bf16.msra.mxu0 0
  %871 = vmatprep.subr.bf16.mxu0 0
  %872 = vmatpush1.bf16.msra.mxu0 0
  %873 = vmatprep.subr.bf16.mxu0 0
  %874 = vmatpush1.bf16.msra.mxu0 0
  %875 = vmatprep.subr.bf16.mxu0 0
  %876 = vmatpush1.bf16.msra.mxu0 0
  %877 = vmatprep.subr.bf16.mxu0 0
  %878 = vmatpush1.bf16.msra.mxu0 0
  %879 = vmatprep.subr.bf16.mxu0 0
  %880 = vmatpush1.bf16.msra.mxu0 0
  %881 = vmatprep.subr.bf16.mxu0 0
  %882 = vmatpush1.bf16.msra.mxu0 0
  %883 = vmatprep.subr.bf16.mxu0 0
  %884 = vmatpush1.bf16.msra.mxu0 0
  %885 = vmatprep.subr.bf16.mxu0 0
  %886 = vmatpush1.bf16.msra.mxu0 0
  %887 = vmatprep.subr.bf16.mxu0 0
  %888 = vmatpush1.bf16.msra.mxu0 0
  %889 = vmatprep.subr.bf16.mxu0 0
  %890 = vmatpush1.bf16.msra.mxu0 0
  %891 = vmatprep.subr.bf16.mxu0 0
  %892 = vmatpush1.bf16.msra.mxu0 0
  %893 = vmatprep.mubr.bf16.mxu0 0
  %894 = vmatmul.mubr.bf16.gmra.mrb[0].mxu0 %v853
  %v895 = vpop.f32.mrb[0].mxu0
  %v896 = vadd.f32 0.0, %v895
  %v897 = vpop.f32.mrb[0].mxu0
  %v898 = vpop.f32.mrb[0].mxu0
  %v899 = vadd.f32 0.0, %v898
  %v900 = vpop.f32.mrb[0].mxu0
  %901 = vmatprep.mubr.bf16.mxu0 0
  %902 = vmatmul.mubr.bf16.gmra.mrb[0].mxu0 %v856
  %v903 = vpop.f32.mrb[0].mxu0
  %v904 = vadd.f32 0.0, %v903
  %v905 = vpop.f32.mrb[0].mxu0
  %v906 = vpop.f32.mrb[0].mxu0
  %v907 = vpop.f32.mrb[0].mxu0
  %908 = vdwg.mxu0
  %912 = vrot.lane.b32.xlu0 %v896, 6
  %v913 = vpop.permute.xlu0 %912
  %914 = vrot.lane.b32.xlu0 %v899, 6
  %v915 = vpop.permute.xlu0 %914
  %916 = vrot.lane.b32.xlu0 %v904, 6
  %v917 = vpop.permute.xlu0 %916
  %vm921 = vcmask 64560
  %922 = vst.msk [vmem:[#allocation2] sm:$0xff] %vm921, %v913
  %923 = vst.msk [vmem:[#allocation2 + $0x8] sm:$0xff] %vm921, %v915
  %vm924 = vcmask 60464
  %925 = vst.msk [vmem:[#allocation2 + $0x10] sm:$0xf] %vm924, %v917
  %926 = vrot.lane.b32.xlu0 %v113, 120
  %v927 = vpop.permute.xlu0 %926
  %928 = vrot.lane.b32.xlu0 %v114, 120
  %v929 = vpop.permute.xlu0 %928
  %930 = vrot.lane.b32.xlu0 %v176, 120
  %v931 = vpop.permute.xlu0 %930
  %v933 = vsel %vm231, %v927, 0
  %v936 = vsel %vm231, %v929, 0
  %v939 = vsel %vm231, %v931, 0
  %941 = vmatprep.subr.bf16.mxu0 0
  %942 = vmatpush1.bf16.xpose.msra.mxu0 %v939
  %943 = vmatprep.subr.bf16.mxu0 0
  %944 = vmatpush1.bf16.xpose.msra.mxu0 0
  %945 = vmatprep.subr.bf16.mxu0 0
  %946 = vmatpush1.bf16.xpose.msra.mxu0 0
  %947 = vmatprep.subr.bf16.mxu0 0
  %948 = vmatpush1.bf16.xpose.msra.mxu0 0
  %949 = vmatprep.subr.bf16.mxu0 0
  %950 = vmatpush1.bf16.xpose.msra.mxu0 0
  %951 = vmatprep.subr.bf16.mxu0 0
  %952 = vmatpush1.bf16.xpose.msra.mxu0 0
  %953 = vmatprep.subr.bf16.mxu0 0
  %954 = vmatpush1.bf16.xpose.msra.mxu0 0
  %955 = vmatprep.subr.bf16.mxu0 0
  %956 = vmatpush1.bf16.xpose.msra.mxu0 0
  %957 = vmatprep.subr.bf16.mxu0 0
  %958 = vmatpush1.bf16.xpose.msra.mxu0 0
  %959 = vmatprep.subr.bf16.mxu0 0
  %960 = vmatpush1.bf16.xpose.msra.mxu0 0
  %961 = vmatprep.subr.bf16.mxu0 0
  %962 = vmatpush1.bf16.xpose.msra.mxu0 0
  %963 = vmatprep.subr.bf16.mxu0 0
  %964 = vmatpush1.bf16.xpose.msra.mxu0 0
  %965 = vmatprep.subr.bf16.mxu0 0
  %966 = vmatpush1.bf16.xpose.msra.mxu0 0
  %967 = vmatprep.subr.bf16.mxu0 0
  %968 = vmatpush1.bf16.xpose.msra.mxu0 0
  %969 = vmatprep.subr.bf16.mxu0 0
  %970 = vmatpush1.bf16.xpose.msra.mxu0 0
  %971 = vmatprep.subr.bf16.mxu0 0
  %972 = vmatpush1.bf16.xpose.msra.mxu0 0
  %973 = vmatprep.mubr.bf16.mxu0 0
  %974 = vmatmul.mubr.bf16.gmra.mrb[0].mxu0 %v933
  %v975 = vpop.f32.mrb[0].mxu0
  %v976 = vadd.f32 0.0, %v975
  %v977 = vpop.f32.mrb[0].mxu0
  %v978 = vpop.f32.mrb[0].mxu0
  %v979 = vadd.f32 0.0, %v978
  %v980 = vpop.f32.mrb[0].mxu0
  %981 = vmatprep.mubr.bf16.mxu0 0
  %982 = vmatmul.mubr.bf16.gmra.mrb[0].mxu0 %v936
  %v983 = vpop.f32.mrb[0].mxu0
  %v984 = vadd.f32 0.0, %v983
  %v985 = vpop.f32.mrb[0].mxu0
  %v986 = vpop.f32.mrb[0].mxu0
  %v987 = vpop.f32.mrb[0].mxu0
  %988 = vdwg.mxu0
  %v989 = vmul.f32 %v976, 0.70710677
  %v990 = vmul.f32 %v979, 0.70710677
  %v991 = vmul.f32 %v984, 0.70710677
  %v992 = vsel %vm292, %v989, -inf
  %993 = vmax.xlane.f32.xlu0 %v992
  %v994 = vpop.xlane.xlu0 %993
  %v995 = vsel %vm292, %v990, -inf
  %996 = vmax.xlane.f32.xlu0 %v995
  %v997 = vpop.xlane.xlu0 %996
  %v998 = vsel %vm299, %v991, -inf
  %999 = vmax.xlane.f32.xlu0 %v998
  %v1000 = vpop.xlane.xlu0 %999
  %v1001 = vsub.f32 %v989, %v994
  %v1002 = vsub.f32 %v990, %v997
  %v1003 = vsub.f32 %v991, %v1000
  %v1004 = vmul.f32 %v1001, 1.442695
  %v1005 = vpow.pop %v1004
  %v1006 = vmul.f32 %v1002, 1.442695
  %v1007 = vpow.pop %v1006
  %v1008 = vmul.f32 %v1003, 1.442695
  %v1009 = vpow.pop %v1008
  %v1010 = vsel %vm292, %v1005, 0.0
  %1011 = vadd.xlane.f32.xlu0 %v1010
  %v1012 = vpop.xlane.xlu0 %1011
  %v1013 = vsel %vm292, %v1007, 0.0
  %1014 = vadd.xlane.f32.xlu0 %v1013
  %v1015 = vpop.xlane.xlu0 %1014
  %v1016 = vsel %vm299, %v1009, 0.0
  %1017 = vadd.xlane.f32.xlu0 %v1016
  %v1018 = vpop.xlane.xlu0 %1017
  %v1019 = vrcp.pop %v1012
  %v1020 = vrcp.pop %v1015
  %v1021 = vrcp.pop %v1018
  %v1022 = vmul.f32 %v1005, %v1019
  %v1023 = vmul.f32 %v1007, %v1020
  %v1024 = vmul.f32 %v1009, %v1021
  %v1025 = vpack.c.bf16 %v1023, %v1022
  %v1026 = vpack.c.bf16 %v1024, %v1024
  %1027 = vrot.lane.b32.xlu0 %v230, 120
  %v1028 = vpop.permute.xlu0 %1027
  %v1030 = vsel %vm292, %v1025, 0
  %v1033 = vsel %vm292, %v1026, 0
  %v1036 = vsel %vm335, %v1028, 0
  %1038 = vmatprep.subr.bf16.mxu0 0
  %1039 = vmatpush1.bf16.msra.mxu0 %v1036
  %1040 = vmatprep.subr.bf16.mxu0 0
  %1041 = vmatpush1.bf16.msra.mxu0 0
  %1042 = vmatprep.subr.bf16.mxu0 0
  %1043 = vmatpush1.bf16.msra.mxu0 0
  %1044 = vmatprep.subr.bf16.mxu0 0
  %1045 = vmatpush1.bf16.msra.mxu0 0
  %1046 = vmatprep.subr.bf16.mxu0 0
  %1047 = vmatpush1.bf16.msra.mxu0 0
  %1048 = vmatprep.subr.bf16.mxu0 0
  %1049 = vmatpush1.bf16.msra.mxu0 0
  %1050 = vmatprep.subr.bf16.mxu0 0
  %1051 = vmatpush1.bf16.msra.mxu0 0
  %1052 = vmatprep.subr.bf16.mxu0 0
  %1053 = vmatpush1.bf16.msra.mxu0 0
  %1054 = vmatprep.subr.bf16.mxu0 0
  %1055 = vmatpush1.bf16.msra.mxu0 0
  %1056 = vmatprep.subr.bf16.mxu0 0
  %1057 = vmatpush1.bf16.msra.mxu0 0
  %1058 = vmatprep.subr.bf16.mxu0 0
  %1059 = vmatpush1.bf16.msra.mxu0 0
  %1060 = vmatprep.subr.bf16.mxu0 0
  %1061 = vmatpush1.bf16.msra.mxu0 0
  %1062 = vmatprep.subr.bf16.mxu0 0
  %1063 = vmatpush1.bf16.msra.mxu0 0
  %1064 = vmatprep.subr.bf16.mxu0 0
  %1065 = vmatpush1.bf16.msra.mxu0 0
  %1066 = vmatprep.subr.bf16.mxu0 0
  %1067 = vmatpush1.bf16.msra.mxu0 0
  %1068 = vmatprep.subr.bf16.mxu0 0
  %1069 = vmatpush1.bf16.msra.mxu0 0
  %1070 = vmatprep.mubr.bf16.mxu0 0
  %1071 = vmatmul.mubr.bf16.gmra.mrb[0].mxu0 %v1030
  %v1072 = vpop.f32.mrb[0].mxu0
  %v1073 = vadd.f32 0.0, %v1072
  %v1074 = vpop.f32.mrb[0].mxu0
  %v1075 = vpop.f32.mrb[0].mxu0
  %v1076 = vadd.f32 0.0, %v1075
  %v1077 = vpop.f32.mrb[0].mxu0
  %1078 = vmatprep.mubr.bf16.mxu0 0
  %1079 = vmatmul.mubr.bf16.gmra.mrb[0].mxu0 %v1033
  %v1080 = vpop.f32.mrb[0].mxu0
  %v1081 = vadd.f32 0.0, %v1080
  %v1082 = vpop.f32.mrb[0].mxu0
  %v1083 = vpop.f32.mrb[0].mxu0
  %v1084 = vpop.f32.mrb[0].mxu0
  %1085 = vdwg.mxu0
  %1089 = vrot.lane.b32.xlu0 %v1073, 8
  %v1090 = vpop.permute.xlu0 %1089
  %1091 = vrot.lane.b32.xlu0 %v1076, 8
  %v1092 = vpop.permute.xlu0 %1091
  %1093 = vrot.lane.b32.xlu0 %v1081, 8
  %v1094 = vpop.permute.xlu0 %1093
  %vm1098 = vcmask 80960
  %1099 = vst.msk [vmem:[#allocation2] sm:$0xff] %vm1098, %v1090
  %1100 = vst.msk [vmem:[#allocation2 + $0x8] sm:$0xff] %vm1098, %v1092
  %vm1101 = vcmask 76864
  %1102 = vst.msk [vmem:[#allocation2 + $0x10] sm:$0xf] %vm1101, %v1094
  %1103 = vrot.lane.b32.xlu0 %v113, 118
  %v1104 = vpop.permute.xlu0 %1103
  %1105 = vrot.lane.b32.xlu0 %v114, 118
  %v1106 = vpop.permute.xlu0 %1105
  %1107 = vrot.lane.b32.xlu0 %v176, 118
  %v1108 = vpop.permute.xlu0 %1107
  %v1110 = vsel %vm231, %v1104, 0
  %v1113 = vsel %vm231, %v1106, 0
  %v1116 = vsel %vm231, %v1108, 0
  %1118 = vmatprep.subr.bf16.mxu0 0
  %1119 = vmatpush1.bf16.xpose.msra.mxu0 %v1116
  %1120 = vmatprep.subr.bf16.mxu0 0
  %1121 = vmatpush1.bf16.xpose.msra.mxu0 0
  %1122 = vmatprep.subr.bf16.mxu0 0
  %1123 = vmatpush1.bf16.xpose.msra.mxu0 0
  %1124 = vmatprep.subr.bf16.mxu0 0
  %1125 = vmatpush1.bf16.xpose.msra.mxu0 0
  %1126 = vmatprep.subr.bf16.mxu0 0
  %1127 = vmatpush1.bf16.xpose.msra.mxu0 0
  %1128 = vmatprep.subr.bf16.mxu0 0
  %1129 = vmatpush1.bf16.xpose.msra.mxu0 0
  %1130 = vmatprep.subr.bf16.mxu0 0
  %1131 = vmatpush1.bf16.xpose.msra.mxu0 0
  %1132 = vmatprep.subr.bf16.mxu0 0
  %1133 = vmatpush1.bf16.xpose.msra.mxu0 0
  %1134 = vmatprep.subr.bf16.mxu0 0
  %1135 = vmatpush1.bf16.xpose.msra.mxu0 0
  %1136 = vmatprep.subr.bf16.mxu0 0
  %1137 = vmatpush1.bf16.xpose.msra.mxu0 0
  %1138 = vmatprep.subr.bf16.mxu0 0
  %1139 = vmatpush1.bf16.xpose.msra.mxu0 0
  %1140 = vmatprep.subr.bf16.mxu0 0
  %1141 = vmatpush1.bf16.xpose.msra.mxu0 0
  %1142 = vmatprep.subr.bf16.mxu0 0
  %1143 = vmatpush1.bf16.xpose.msra.mxu0 0
  %1144 = vmatprep.subr.bf16.mxu0 0
  %1145 = vmatpush1.bf16.xpose.msra.mxu0 0
  %1146 = vmatprep.subr.bf16.mxu0 0
  %1147 = vmatpush1.bf16.xpose.msra.mxu0 0
  %1148 = vmatprep.subr.bf16.mxu0 0
  %1149 = vmatpush1.bf16.xpose.msra.mxu0 0
  %1150 = vmatprep.mubr.bf16.mxu0 0
  %1151 = vmatmul.mubr.bf16.gmra.mrb[0].mxu0 %v1110
  %v1152 = vpop.f32.mrb[0].mxu0
  %v1153 = vadd.f32 0.0, %v1152
  %v1154 = vpop.f32.mrb[0].mxu0
  %v1155 = vpop.f32.mrb[0].mxu0
  %v1156 = vadd.f32 0.0, %v1155
  %v1157 = vpop.f32.mrb[0].mxu0
  %1158 = vmatprep.mubr.bf16.mxu0 0
  %1159 = vmatmul.mubr.bf16.gmra.mrb[0].mxu0 %v1113
  %v1160 = vpop.f32.mrb[0].mxu0
  %v1161 = vadd.f32 0.0, %v1160
  %v1162 = vpop.f32.mrb[0].mxu0
  %v1163 = vpop.f32.mrb[0].mxu0
  %v1164 = vpop.f32.mrb[0].mxu0
  %1165 = vdwg.mxu0
  %v1166 = vmul.f32 %v1153, 0.70710677
  %v1167 = vmul.f32 %v1156, 0.70710677
  %v1168 = vmul.f32 %v1161, 0.70710677
  %v1169 = vsel %vm292, %v1166, -inf
  %1170 = vmax.xlane.f32.xlu0 %v1169
  %v1171 = vpop.xlane.xlu0 %1170
  %v1172 = vsel %vm292, %v1167, -inf
  %1173 = vmax.xlane.f32.xlu0 %v1172
  %v1174 = vpop.xlane.xlu0 %1173
  %v1175 = vsel %vm299, %v1168, -inf
  %1176 = vmax.xlane.f32.xlu0 %v1175
  %v1177 = vpop.xlane.xlu0 %1176
  %v1178 = vsub.f32 %v1166, %v1171
  %v1179 = vsub.f32 %v1167, %v1174
  %v1180 = vsub.f32 %v1168, %v1177
  %v1181 = vmul.f32 %v1178, 1.442695
  %v1182 = vpow.pop %v1181
  %v1183 = vmul.f32 %v1179, 1.442695
  %v1184 = vpow.pop %v1183
  %v1185 = vmul.f32 %v1180, 1.442695
  %v1186 = vpow.pop %v1185
  %v1187 = vsel %vm292, %v1182, 0.0
  %1188 = vadd.xlane.f32.xlu0 %v1187
  %v1189 = vpop.xlane.xlu0 %1188
  %v1190 = vsel %vm292, %v1184, 0.0
  %1191 = vadd.xlane.f32.xlu0 %v1190
  %v1192 = vpop.xlane.xlu0 %1191
  %v1193 = vsel %vm299, %v1186, 0.0
  %1194 = vadd.xlane.f32.xlu0 %v1193
  %v1195 = vpop.xlane.xlu0 %1194
  %v1196 = vrcp.pop %v1189
  %v1197 = vrcp.pop %v1192
  %v1198 = vrcp.pop %v1195
  %v1199 = vmul.f32 %v1182, %v1196
  %v1200 = vmul.f32 %v1184, %v1197
  %v1201 = vmul.f32 %v1186, %v1198
  %v1202 = vpack.c.bf16 %v1200, %v1199
  %v1203 = vpack.c.bf16 %v1201, %v1201
  %1204 = vrot.lane.b32.xlu0 %v230, 118
  %v1205 = vpop.permute.xlu0 %1204
  %v1207 = vsel %vm292, %v1202, 0
  %v1210 = vsel %vm292, %v1203, 0
  %v1213 = vsel %vm335, %v1205, 0
  %1215 = vmatprep.subr.bf16.mxu0 0
  %1216 = vmatpush1.bf16.msra.mxu0 %v1213
  %1217 = vmatprep.subr.bf16.mxu0 0
  %1218 = vmatpush1.bf16.msra.mxu0 0
  %1219 = vmatprep.subr.bf16.mxu0 0
  %1220 = vmatpush1.bf16.msra.mxu0 0
  %1221 = vmatprep.subr.bf16.mxu0 0
  %1222 = vmatpush1.bf16.msra.mxu0 0
  %1223 = vmatprep.subr.bf16.mxu0 0
  %1224 = vmatpush1.bf16.msra.mxu0 0
  %1225 = vmatprep.subr.bf16.mxu0 0
  %1226 = vmatpush1.bf16.msra.mxu0 0
  %1227 = vmatprep.subr.bf16.mxu0 0
  %1228 = vmatpush1.bf16.msra.mxu0 0
  %1229 = vmatprep.subr.bf16.mxu0 0
  %1230 = vmatpush1.bf16.msra.mxu0 0
  %1231 = vmatprep.subr.bf16.mxu0 0
  %1232 = vmatpush1.bf16.msra.mxu0 0
  %1233 = vmatprep.subr.bf16.mxu0 0
  %1234 = vmatpush1.bf16.msra.mxu0 0
  %1235 = vmatprep.subr.bf16.mxu0 0
  %1236 = vmatpush1.bf16.msra.mxu0 0
  %1237 = vmatprep.subr.bf16.mxu0 0
  %1238 = vmatpush1.bf16.msra.mxu0 0
  %1239 = vmatprep.subr.bf16.mxu0 0
  %1240 = vmatpush1.bf16.msra.mxu0 0
  %1241 = vmatprep.subr.bf16.mxu0 0
  %1242 = vmatpush1.bf16.msra.mxu0 0
  %1243 = vmatprep.subr.bf16.mxu0 0
  %1244 = vmatpush1.bf16.msra.mxu0 0
  %1245 = vmatprep.subr.bf16.mxu0 0
  %1246 = vmatpush1.bf16.msra.mxu0 0
  %1247 = vmatprep.mubr.bf16.mxu0 0
  %1248 = vmatmul.mubr.bf16.gmra.mrb[0].mxu0 %v1207
  %v1249 = vpop.f32.mrb[0].mxu0
  %v1250 = vadd.f32 0.0, %v1249
  %v1251 = vpop.f32.mrb[0].mxu0
  %v1252 = vpop.f32.mrb[0].mxu0
  %v1253 = vadd.f32 0.0, %v1252
  %v1254 = vpop.f32.mrb[0].mxu0
  %1255 = vmatprep.mubr.bf16.mxu0 0
  %1256 = vmatmul.mubr.bf16.gmra.mrb[0].mxu0 %v1210
  %v1257 = vpop.f32.mrb[0].mxu0
  %v1258 = vadd.f32 0.0, %v1257
  %v1259 = vpop.f32.mrb[0].mxu0
  %v1260 = vpop.f32.mrb[0].mxu0
  %v1261 = vpop.f32.mrb[0].mxu0
  %1262 = vdwg.mxu0
  %1266 = vrot.lane.b32.xlu0 %v1250, 10
  %v1267 = vpop.permute.xlu0 %1266
  %1268 = vrot.lane.b32.xlu0 %v1253, 10
  %v1269 = vpop.permute.xlu0 %1268
  %1270 = vrot.lane.b32.xlu0 %v1258, 10
  %v1271 = vpop.permute.xlu0 %1270
  %vm1275 = vcmask 97360
  %1276 = vst.msk [vmem:[#allocation2] sm:$0xff] %vm1275, %v1267
  %1277 = vst.msk [vmem:[#allocation2 + $0x8] sm:$0xff] %vm1275, %v1269
  %vm1278 = vcmask 93264
  %1279 = vst.msk [vmem:[#allocation2 + $0x10] sm:$0xf] %vm1278, %v1271
  %1280 = vrot.lane.b32.xlu0 %v113, 116
  %v1281 = vpop.permute.xlu0 %1280
  %1282 = vrot.lane.b32.xlu0 %v114, 116
  %v1283 = vpop.permute.xlu0 %1282
  %1284 = vrot.lane.b32.xlu0 %v176, 116
  %v1285 = vpop.permute.xlu0 %1284
  %v1287 = vsel %vm231, %v1281, 0
  %v1290 = vsel %vm231, %v1283, 0
  %v1293 = vsel %vm231, %v1285, 0
  %1295 = vmatprep.subr.bf16.mxu0 0
  %1296 = vmatpush1.bf16.xpose.msra.mxu0 %v1293
  %1297 = vmatprep.subr.bf16.mxu0 0
  %1298 = vmatpush1.bf16.xpose.msra.mxu0 0
  %1299 = vmatprep.subr.bf16.mxu0 0
  %1300 = vmatpush1.bf16.xpose.msra.mxu0 0
  %1301 = vmatprep.subr.bf16.mxu0 0
  %1302 = vmatpush1.bf16.xpose.msra.mxu0 0
  %1303 = vmatprep.subr.bf16.mxu0 0
  %1304 = vmatpush1.bf16.xpose.msra.mxu0 0
  %1305 = vmatprep.subr.bf16.mxu0 0
  %1306 = vmatpush1.bf16.xpose.msra.mxu0 0
  %1307 = vmatprep.subr.bf16.mxu0 0
  %1308 = vmatpush1.bf16.xpose.msra.mxu0 0
  %1309 = vmatprep.subr.bf16.mxu0 0
  %1310 = vmatpush1.bf16.xpose.msra.mxu0 0
  %1311 = vmatprep.subr.bf16.mxu0 0
  %1312 = vmatpush1.bf16.xpose.msra.mxu0 0
  %1313 = vmatprep.subr.bf16.mxu0 0
  %1314 = vmatpush1.bf16.xpose.msra.mxu0 0
  %1315 = vmatprep.subr.bf16.mxu0 0
  %1316 = vmatpush1.bf16.xpose.msra.mxu0 0
  %1317 = vmatprep.subr.bf16.mxu0 0
  %1318 = vmatpush1.bf16.xpose.msra.mxu0 0
  %1319 = vmatprep.subr.bf16.mxu0 0
  %1320 = vmatpush1.bf16.xpose.msra.mxu0 0
  %1321 = vmatprep.subr.bf16.mxu0 0
  %1322 = vmatpush1.bf16.xpose.msra.mxu0 0
  %1323 = vmatprep.subr.bf16.mxu0 0
  %1324 = vmatpush1.bf16.xpose.msra.mxu0 0
  %1325 = vmatprep.subr.bf16.mxu0 0
  %1326 = vmatpush1.bf16.xpose.msra.mxu0 0
  %1327 = vmatprep.mubr.bf16.mxu0 0
  %1328 = vmatmul.mubr.bf16.gmra.mrb[0].mxu0 %v1287
  %v1329 = vpop.f32.mrb[0].mxu0
  %v1330 = vadd.f32 0.0, %v1329
  %v1331 = vpop.f32.mrb[0].mxu0
  %v1332 = vpop.f32.mrb[0].mxu0
  %v1333 = vadd.f32 0.0, %v1332
  %v1334 = vpop.f32.mrb[0].mxu0
  %1335 = vmatprep.mubr.bf16.mxu0 0
  %1336 = vmatmul.mubr.bf16.gmra.mrb[0].mxu0 %v1290
  %v1337 = vpop.f32.mrb[0].mxu0
  %v1338 = vadd.f32 0.0, %v1337
  %v1339 = vpop.f32.mrb[0].mxu0
  %v1340 = vpop.f32.mrb[0].mxu0
  %v1341 = vpop.f32.mrb[0].mxu0
  %1342 = vdwg.mxu0
  %v1343 = vmul.f32 %v1330, 0.70710677
  %v1344 = vmul.f32 %v1333, 0.70710677
  %v1345 = vmul.f32 %v1338, 0.70710677
  %v1346 = vsel %vm292, %v1343, -inf
  %1347 = vmax.xlane.f32.xlu0 %v1346
  %v1348 = vpop.xlane.xlu0 %1347
  %v1349 = vsel %vm292, %v1344, -inf
  %1350 = vmax.xlane.f32.xlu0 %v1349
  %v1351 = vpop.xlane.xlu0 %1350
  %v1352 = vsel %vm299, %v1345, -inf
  %1353 = vmax.xlane.f32.xlu0 %v1352
  %v1354 = vpop.xlane.xlu0 %1353
  %v1355 = vsub.f32 %v1343, %v1348
  %v1356 = vsub.f32 %v1344, %v1351
  %v1357 = vsub.f32 %v1345, %v1354
  %v1358 = vmul.f32 %v1355, 1.442695
  %v1359 = vpow.pop %v1358
  %v1360 = vmul.f32 %v1356, 1.442695
  %v1361 = vpow.pop %v1360
  %v1362 = vmul.f32 %v1357, 1.442695
  %v1363 = vpow.pop %v1362
  %v1364 = vsel %vm292, %v1359, 0.0
  %1365 = vadd.xlane.f32.xlu0 %v1364
  %v1366 = vpop.xlane.xlu0 %1365
  %v1367 = vsel %vm292, %v1361, 0.0
  %1368 = vadd.xlane.f32.xlu0 %v1367
  %v1369 = vpop.xlane.xlu0 %1368
  %v1370 = vsel %vm299, %v1363, 0.0
  %1371 = vadd.xlane.f32.xlu0 %v1370
  %v1372 = vpop.xlane.xlu0 %1371
  %v1373 = vrcp.pop %v1366
  %v1374 = vrcp.pop %v1369
  %v1375 = vrcp.pop %v1372
  %v1376 = vmul.f32 %v1359, %v1373
  %v1377 = vmul.f32 %v1361, %v1374
  %v1378 = vmul.f32 %v1363, %v1375
  %v1379 = vpack.c.bf16 %v1377, %v1376
  %v1380 = vpack.c.bf16 %v1378, %v1378
  %1381 = vrot.lane.b32.xlu0 %v230, 116
  %v1382 = vpop.permute.xlu0 %1381
  %v1384 = vsel %vm292, %v1379, 0
  %v1387 = vsel %vm292, %v1380, 0
  %v1390 = vsel %vm335, %v1382, 0
  %1392 = vmatprep.subr.bf16.mxu0 0
  %1393 = vmatpush1.bf16.msra.mxu0 %v1390
  %1394 = vmatprep.subr.bf16.mxu0 0
  %1395 = vmatpush1.bf16.msra.mxu0 0
  %1396 = vmatprep.subr.bf16.mxu0 0
  %1397 = vmatpush1.bf16.msra.mxu0 0
  %1398 = vmatprep.subr.bf16.mxu0 0
  %1399 = vmatpush1.bf16.msra.mxu0 0
  %1400 = vmatprep.subr.bf16.mxu0 0
  %1401 = vmatpush1.bf16.msra.mxu0 0
  %1402 = vmatprep.subr.bf16.mxu0 0
  %1403 = vmatpush1.bf16.msra.mxu0 0
  %1404 = vmatprep.subr.bf16.mxu0 0
  %1405 = vmatpush1.bf16.msra.mxu0 0
  %1406 = vmatprep.subr.bf16.mxu0 0
  %1407 = vmatpush1.bf16.msra.mxu0 0
  %1408 = vmatprep.subr.bf16.mxu0 0
  %1409 = vmatpush1.bf16.msra.mxu0 0
  %1410 = vmatprep.subr.bf16.mxu0 0
  %1411 = vmatpush1.bf16.msra.mxu0 0
  %1412 = vmatprep.subr.bf16.mxu0 0
  %1413 = vmatpush1.bf16.msra.mxu0 0
  %1414 = vmatprep.subr.bf16.mxu0 0
  %1415 = vmatpush1.bf16.msra.mxu0 0
  %1416 = vmatprep.subr.bf16.mxu0 0
  %1417 = vmatpush1.bf16.msra.mxu0 0
  %1418 = vmatprep.subr.bf16.mxu0 0
  %1419 = vmatpush1.bf16.msra.mxu0 0
  %1420 = vmatprep.subr.bf16.mxu0 0
  %1421 = vmatpush1.bf16.msra.mxu0 0
  %1422 = vmatprep.subr.bf16.mxu0 0
  %1423 = vmatpush1.bf16.msra.mxu0 0
  %1424 = vmatprep.mubr.bf16.mxu0 0
  %1425 = vmatmul.mubr.bf16.gmra.mrb[0].mxu0 %v1384
  %v1426 = vpop.f32.mrb[0].mxu0
  %v1427 = vadd.f32 0.0, %v1426
  %v1428 = vpop.f32.mrb[0].mxu0
  %v1429 = vpop.f32.mrb[0].mxu0
  %v1430 = vadd.f32 0.0, %v1429
  %v1431 = vpop.f32.mrb[0].mxu0
  %1432 = vmatprep.mubr.bf16.mxu0 0
  %1433 = vmatmul.mubr.bf16.gmra.mrb[0].mxu0 %v1387
  %v1434 = vpop.f32.mrb[0].mxu0
  %v1435 = vadd.f32 0.0, %v1434
  %v1436 = vpop.f32.mrb[0].mxu0
  %v1437 = vpop.f32.mrb[0].mxu0
  %v1438 = vpop.f32.mrb[0].mxu0
  %1439 = vdwg.mxu0
  %1443 = vrot.lane.b32.xlu0 %v1427, 12
  %v1444 = vpop.permute.xlu0 %1443
  %1445 = vrot.lane.b32.xlu0 %v1430, 12
  %v1446 = vpop.permute.xlu0 %1445
  %1447 = vrot.lane.b32.xlu0 %v1435, 12
  %v1448 = vpop.permute.xlu0 %1447
  %vm1452 = vcmask 113760
  %1453 = vst.msk [vmem:[#allocation2] sm:$0xff] %vm1452, %v1444
  %1454 = vst.msk [vmem:[#allocation2 + $0x8] sm:$0xff] %vm1452, %v1446
  %vm1455 = vcmask 109664
  %1456 = vst.msk [vmem:[#allocation2 + $0x10] sm:$0xf] %vm1455, %v1448
  %1457 = vrot.lane.b32.xlu0 %v113, 114
  %v1458 = vpop.permute.xlu0 %1457
  %1459 = vrot.lane.b32.xlu0 %v114, 114
  %v1460 = vpop.permute.xlu0 %1459
  %1461 = vrot.lane.b32.xlu0 %v176, 114
  %v1462 = vpop.permute.xlu0 %1461
  %v1464 = vsel %vm231, %v1458, 0
  %v1467 = vsel %vm231, %v1460, 0
  %v1470 = vsel %vm231, %v1462, 0
  %1472 = vmatprep.subr.bf16.mxu0 0
  %1473 = vmatpush1.bf16.xpose.msra.mxu0 %v1470
  %1474 = vmatprep.subr.bf16.mxu0 0
  %1475 = vmatpush1.bf16.xpose.msra.mxu0 0
  %1476 = vmatprep.subr.bf16.mxu0 0
  %1477 = vmatpush1.bf16.xpose.msra.mxu0 0
  %1478 = vmatprep.subr.bf16.mxu0 0
  %1479 = vmatpush1.bf16.xpose.msra.mxu0 0
  %1480 = vmatprep.subr.bf16.mxu0 0
  %1481 = vmatpush1.bf16.xpose.msra.mxu0 0
  %1482 = vmatprep.subr.bf16.mxu0 0
  %1483 = vmatpush1.bf16.xpose.msra.mxu0 0
  %1484 = vmatprep.subr.bf16.mxu0 0
  %1485 = vmatpush1.bf16.xpose.msra.mxu0 0
  %1486 = vmatprep.subr.bf16.mxu0 0
  %1487 = vmatpush1.bf16.xpose.msra.mxu0 0
  %1488 = vmatprep.subr.bf16.mxu0 0
  %1489 = vmatpush1.bf16.xpose.msra.mxu0 0
  %1490 = vmatprep.subr.bf16.mxu0 0
  %1491 = vmatpush1.bf16.xpose.msra.mxu0 0
  %1492 = vmatprep.subr.bf16.mxu0 0
  %1493 = vmatpush1.bf16.xpose.msra.mxu0 0
  %1494 = vmatprep.subr.bf16.mxu0 0
  %1495 = vmatpush1.bf16.xpose.msra.mxu0 0
  %1496 = vmatprep.subr.bf16.mxu0 0
  %1497 = vmatpush1.bf16.xpose.msra.mxu0 0
  %1498 = vmatprep.subr.bf16.mxu0 0
  %1499 = vmatpush1.bf16.xpose.msra.mxu0 0
  %1500 = vmatprep.subr.bf16.mxu0 0
  %1501 = vmatpush1.bf16.xpose.msra.mxu0 0
  %1502 = vmatprep.subr.bf16.mxu0 0
  %1503 = vmatpush1.bf16.xpose.msra.mxu0 0
  %1504 = vmatprep.mubr.bf16.mxu0 0
  %1505 = vmatmul.mubr.bf16.gmra.mrb[0].mxu0 %v1464
  %v1506 = vpop.f32.mrb[0].mxu0
  %v1507 = vadd.f32 0.0, %v1506
  %v1508 = vpop.f32.mrb[0].mxu0
  %v1509 = vpop.f32.mrb[0].mxu0
  %v1510 = vadd.f32 0.0, %v1509
  %v1511 = vpop.f32.mrb[0].mxu0
  %1512 = vmatprep.mubr.bf16.mxu0 0
  %1513 = vmatmul.mubr.bf16.gmra.mrb[0].mxu0 %v1467
  %v1514 = vpop.f32.mrb[0].mxu0
  %v1515 = vadd.f32 0.0, %v1514
  %v1516 = vpop.f32.mrb[0].mxu0
  %v1517 = vpop.f32.mrb[0].mxu0
  %v1518 = vpop.f32.mrb[0].mxu0
  %1519 = vdwg.mxu0
  %v1520 = vmul.f32 %v1507, 0.70710677
  %v1521 = vmul.f32 %v1510, 0.70710677
  %v1522 = vmul.f32 %v1515, 0.70710677
  %v1523 = vsel %vm292, %v1520, -inf
  %1524 = vmax.xlane.f32.xlu0 %v1523
  %v1525 = vpop.xlane.xlu0 %1524
  %v1526 = vsel %vm292, %v1521, -inf
  %1527 = vmax.xlane.f32.xlu0 %v1526
  %v1528 = vpop.xlane.xlu0 %1527
  %v1529 = vsel %vm299, %v1522, -inf
  %1530 = vmax.xlane.f32.xlu0 %v1529
  %v1531 = vpop.xlane.xlu0 %1530
  %v1532 = vsub.f32 %v1520, %v1525
  %v1533 = vsub.f32 %v1521, %v1528
  %v1534 = vsub.f32 %v1522, %v1531
  %v1535 = vmul.f32 %v1532, 1.442695
  %v1536 = vpow.pop %v1535
  %v1537 = vmul.f32 %v1533, 1.442695
  %v1538 = vpow.pop %v1537
  %v1539 = vmul.f32 %v1534, 1.442695
  %v1540 = vpow.pop %v1539
  %v1541 = vsel %vm292, %v1536, 0.0
  %1542 = vadd.xlane.f32.xlu0 %v1541
  %v1543 = vpop.xlane.xlu0 %1542
  %v1544 = vsel %vm292, %v1538, 0.0
  %1545 = vadd.xlane.f32.xlu0 %v1544
  %v1546 = vpop.xlane.xlu0 %1545
  %v1547 = vsel %vm299, %v1540, 0.0
  %1548 = vadd.xlane.f32.xlu0 %v1547
  %v1549 = vpop.xlane.xlu0 %1548
  %v1550 = vrcp.pop %v1543
  %v1551 = vrcp.pop %v1546
  %v1552 = vrcp.pop %v1549
  %v1553 = vmul.f32 %v1536, %v1550
  %v1554 = vmul.f32 %v1538, %v1551
  %v1555 = vmul.f32 %v1540, %v1552
  %v1556 = vpack.c.bf16 %v1554, %v1553
  %v1557 = vpack.c.bf16 %v1555, %v1555
  %1558 = vrot.lane.b32.xlu0 %v230, 114
  %v1559 = vpop.permute.xlu0 %1558
  %v1561 = vsel %vm292, %v1556, 0
  %v1564 = vsel %vm292, %v1557, 0
  %v1567 = vsel %vm335, %v1559, 0
  %1569 = vmatprep.subr.bf16.mxu0 0
  %1570 = vmatpush1.bf16.msra.mxu0 %v1567
  %1571 = vmatprep.subr.bf16.mxu0 0
  %1572 = vmatpush1.bf16.msra.mxu0 0
  %1573 = vmatprep.subr.bf16.mxu0 0
  %1574 = vmatpush1.bf16.msra.mxu0 0
  %1575 = vmatprep.subr.bf16.mxu0 0
  %1576 = vmatpush1.bf16.msra.mxu0 0
  %1577 = vmatprep.subr.bf16.mxu0 0
  %1578 = vmatpush1.bf16.msra.mxu0 0
  %1579 = vmatprep.subr.bf16.mxu0 0
  %1580 = vmatpush1.bf16.msra.mxu0 0
  %1581 = vmatprep.subr.bf16.mxu0 0
  %1582 = vmatpush1.bf16.msra.mxu0 0
  %1583 = vmatprep.subr.bf16.mxu0 0
  %1584 = vmatpush1.bf16.msra.mxu0 0
  %1585 = vmatprep.subr.bf16.mxu0 0
  %1586 = vmatpush1.bf16.msra.mxu0 0
  %1587 = vmatprep.subr.bf16.mxu0 0
  %1588 = vmatpush1.bf16.msra.mxu0 0
  %1589 = vmatprep.subr.bf16.mxu0 0
  %1590 = vmatpush1.bf16.msra.mxu0 0
  %1591 = vmatprep.subr.bf16.mxu0 0
  %1592 = vmatpush1.bf16.msra.mxu0 0
  %1593 = vmatprep.subr.bf16.mxu0 0
  %1594 = vmatpush1.bf16.msra.mxu0 0
  %1595 = vmatprep.subr.bf16.mxu0 0
  %1596 = vmatpush1.bf16.msra.mxu0 0
  %1597 = vmatprep.subr.bf16.mxu0 0
  %1598 = vmatpush1.bf16.msra.mxu0 0
  %1599 = vmatprep.subr.bf16.mxu0 0
  %1600 = vmatpush1.bf16.msra.mxu0 0
  %1601 = vmatprep.mubr.bf16.mxu0 0
  %1602 = vmatmul.mubr.bf16.gmra.mrb[0].mxu0 %v1561
  %v1603 = vpop.f32.mrb[0].mxu0
  %v1604 = vadd.f32 0.0, %v1603
  %v1605 = vpop.f32.mrb[0].mxu0
  %v1606 = vpop.f32.mrb[0].mxu0
  %v1607 = vadd.f32 0.0, %v1606
  %v1608 = vpop.f32.mrb[0].mxu0
  %1609 = vmatprep.mubr.bf16.mxu0 0
  %1610 = vmatmul.mubr.bf16.gmra.mrb[0].mxu0 %v1564
  %v1611 = vpop.f32.mrb[0].mxu0
  %v1612 = vadd.f32 0.0, %v1611
  %v1613 = vpop.f32.mrb[0].mxu0
  %v1614 = vpop.f32.mrb[0].mxu0
  %v1615 = vpop.f32.mrb[0].mxu0
  %1616 = vdwg.mxu0
  %1620 = vrot.lane.b32.xlu0 %v1604, 14
  %v1621 = vpop.permute.xlu0 %1620
  %1622 = vrot.lane.b32.xlu0 %v1607, 14
  %v1623 = vpop.permute.xlu0 %1622
  %1624 = vrot.lane.b32.xlu0 %v1612, 14
  %v1625 = vpop.permute.xlu0 %1624
  %vm1629 = vcmask 130160
  %1630 = vst.msk [vmem:[#allocation2] sm:$0xff] %vm1629, %v1621
  %1631 = vst.msk [vmem:[#allocation2 + $0x8] sm:$0xff] %vm1629, %v1623
  %vm1632 = vcmask 126064
  %1633 = vst.msk [vmem:[#allocation2 + $0x10] sm:$0xf] %vm1632, %v1625
  %v1634 = vld [vmem:[#allocation2] sm:$0xff]
  %v1635 = vld [vmem:[#allocation2 + $0x8] sm:$0xff]
  %v1636 = vld [vmem:[#allocation2 + $0x10] sm:$0xf]
  %v1637 = vpack.c.bf16 %v1635, %v1634
  %v1638 = vpack.c.bf16 %v1636, %v1636
  %v1639 = vld [vmem:[%s5] sm:$0xf]
  %v1640 = vld [vmem:[%s5 + $0x4] sm:$0xf]
  %v1641 = vld [vmem:[%s7] sm:$0x1]
  %v1643 = vlaneseq
  %v1644 = vshrl.u32 %v1643, 7
  %v1645 = vsub.s32 0, %v1644
  %v1646 = vrot.slane %v1641, %v1645
  %v1650 = vunpack.c.l.b16 %v1639
  %v1651 = vunpack.c.l.b16 %v1640
  %v1652 = vpack.c.b16 %v1651, %v1650
  %v1655 = vsel %vm58, %v1637, 0
  %v1658 = vsel %vm58, %v1638, 0
  %1660 = vmatprep.subr.bf16.mxu0 0
  %1661 = vmatpush1.bf16.msra.mxu0 %v1652
  %1662 = vmatprep.subr.bf16.mxu0 0
  %1663 = vmatpush1.bf16.msra.mxu0 0
  %1664 = vmatprep.subr.bf16.mxu0 0
  %1665 = vmatpush1.bf16.msra.mxu0 0
  %1666 = vmatprep.subr.bf16.mxu0 0
  %1667 = vmatpush1.bf16.msra.mxu0 0
  %1668 = vmatprep.subr.bf16.mxu0 0
  %1669 = vmatpush1.bf16.msra.mxu0 0
  %1670 = vmatprep.subr.bf16.mxu0 0
  %1671 = vmatpush1.bf16.msra.mxu0 0
  %1672 = vmatprep.subr.bf16.mxu0 0
  %1673 = vmatpush1.bf16.msra.mxu0 0
  %1674 = vmatprep.subr.bf16.mxu0 0
  %1675 = vmatpush1.bf16.msra.mxu0 0
  %1676 = vmatprep.subr.bf16.mxu0 0
  %1677 = vmatpush1.bf16.msra.mxu0 0
  %1678 = vmatprep.subr.bf16.mxu0 0
  %1679 = vmatpush1.bf16.msra.mxu0 0
  %1680 = vmatprep.subr.bf16.mxu0 0
  %1681 = vmatpush1.bf16.msra.mxu0 0
  %1682 = vmatprep.subr.bf16.mxu0 0
  %1683 = vmatpush1.bf16.msra.mxu0 0
  %1684 = vmatprep.subr.bf16.mxu0 0
  %1685 = vmatpush1.bf16.msra.mxu0 0
  %1686 = vmatprep.subr.bf16.mxu0 0
  %1687 = vmatpush1.bf16.msra.mxu0 0
  %1688 = vmatprep.subr.bf16.mxu0 0
  %1689 = vmatpush1.bf16.msra.mxu0 0
  %1690 = vmatprep.subr.bf16.mxu0 0
  %1691 = vmatpush1.bf16.msra.mxu0 0
  %1692 = vmatprep.mubr.bf16.mxu0 0
  %1693 = vmatmul.mubr.bf16.gmra.mrb[0].mxu0 %v1655
  %v1694 = vpop.f32.mrb[0].mxu0
  %v1695 = vadd.f32 %v1646, %v1694
  %v1696 = vpop.f32.mrb[0].mxu0
  %v1697 = vpop.f32.mrb[0].mxu0
  %v1698 = vadd.f32 %v1646, %v1697
  %v1699 = vpop.f32.mrb[0].mxu0
  %1700 = vmatprep.mubr.bf16.mxu0 0
  %1701 = vmatmul.mubr.bf16.gmra.mrb[0].mxu0 %v1658
  %v1702 = vpop.f32.mrb[0].mxu0
  %v1703 = vadd.f32 %v1646, %v1702
  %v1704 = vpop.f32.mrb[0].mxu0
  %v1705 = vpop.f32.mrb[0].mxu0
  %v1706 = vpop.f32.mrb[0].mxu0
  %1707 = vdwg.mxu0
  %v1708 = vpack.c.bf16 %v1698, %v1695
  %v1709 = vpack.c.bf16 %v1703, %v1703
  %v1712 = vunpack.c.l.b16 %v1708
  %v1713 = vunpack.c.h.b16 %v1708
  %v1714 = vunpack.c.l.b16 %v1709
  %v1715 = vpack.c.b16 %v1712, %v1712
  %v1716 = vpack.c.b16 %v1713, %v1713
  %v1717 = vpack.c.b16 %v1714, %v1714
  %1721 = vst [vmem:[%s8] sm:$0xf] %v1715
  %1722 = vst [vmem:[%s8 + $0x4] sm:$0xf] %v1716
  %1723 = vst [vmem:[%s8 + $0x8] sm:$0x3] %v1717
  // Predicated region
  $region34: #{gacfv5_forward.14} parent=0 // pred_check
    _
  $region35: #{gacfv5_forward.14} parent=0 // pred_check_branch
    %1725 = sbr.rel (0) target = $region37
  $region36: #{gacfv5_forward.14} parent=0 // pred_region
    _
  $region37: #{gacfv5_forward.14} parent=0 // pred_fallthru
    _
  // Predicated region
  $region38: #{gacfv5_forward.14} parent=0 // pred_check
    _
  $region39: #{gacfv5_forward.14} parent=0 // pred_check_branch
    %1727 = sbr.rel (0) target = $region41
  $region40: #{gacfv5_forward.14} parent=0 // pred_region
    _
  $region41: #{gacfv5_forward.14} parent=0 // pred_fallthru
    _

</llo_original>
